<compile_context>
chip_gen: v6e
topology: v6e:2x2x1
jax: 0.10.0
libtpu: 0.0.40
codegen_flags: <defaults>
</compile_context>

<pallas_src>
import math
from functools import partial

import numpy as np
import jax
import jax.numpy as jnp
from jax.experimental import pallas as pl
from jax.experimental.pallas import tpu as pltpu

LN_EPS = 1e-12              # ESM1bLayerNorm eps
_SQRT2 = math.sqrt(2.0)
NEG_BIAS = -1e9             # finite additive key-padding mask (no NaN risk)

_VMEM_LIMIT = None


# ------------------------------ small helpers -------------------------------
def _vmem_limit():
    """Per-generation VMEM budget: ~75% of physical capacity."""
    global _VMEM_LIMIT
    if _VMEM_LIMIT is None:
        try:
            cap = int(pltpu.get_tpu_info().vmem_capacity_bytes)
        except Exception:                      # CPU / interpret fallback
            cap = 128 * 1024 * 1024
        _VMEM_LIMIT = (cap // 4) * 3           # 48 MiB on v7x, 96 MiB on v5e/v6e
    return _VMEM_LIMIT


def _pad128(n):
    return ((n + 127) // 128) * 128


def _pad_len(T):
    # Pad the sequence so row tiles stay sublane/lane friendly.
    if T >= 128:
        return _pad128(T)
    return ((T + 7) // 8) * 8


def _row_tile(T, cap=512):
    for t in (512, 256, 128):
        if t <= cap and T % t == 0:
            return t
    return T


def _ffn_tile(F):
    for t in (2048, 1536, 1280, 1024, 768, 512, 384, 256, 128):
        if F % t == 0:
            return t
    return F


def _head_block(H):
    if H <= 4:
        return H
    for hb in (4, 3, 2):
        if H % hb == 0:
            return hb
    return 1


def _const_spec(shape):
    # Constant-index weight spec (block index never changes -> DMA'd once).
    zeros = (0,) * len(shape)
    return pl.BlockSpec(shape, lambda *_, z=zeros: z)


# ----------------------------- in-kernel math --------------------------------
def _erf(x):
    # Abramowitz & Stegun 7.1.26 polynomial, |err| < 1.5e-7.
    # TODO(synk): Mosaic has no native erf lowering; exact-GELU uses this poly.
    a1, a2, a3, a4, a5 = (0.254829592, -0.284496736, 1.421413741,
                          -1.453152027, 1.061405429)
    p = 0.3275911
    s = jnp.where(x >= 0.0, 1.0, -1.0)
    ax = jnp.abs(x)
    t = pl.reciprocal(1.0 + p * ax, approx=True)          # EUP slot
    poly = ((((a5 * t + a4) * t + a3) * t + a2) * t + a1) * t
    return s * (1.0 - poly * jnp.exp(-ax * ax))


def _gelu(x):
    # ESM gelu: x * 0.5 * (1 + erf(x / sqrt(2)))
    return x * 0.5 * (1.0 + _erf(x / _SQRT2))


def _layer_norm(x, w, b):
    # ESM1bLayerNorm: biased variance, eps=1e-12, affine.  rsqrt -> EUP.
    mean = jnp.mean(x, axis=-1, keepdims=True)
    xc = x - mean
    var = jnp.mean(xc * xc, axis=-1, keepdims=True)
    return xc * jax.lax.rsqrt(var + LN_EPS) * w + b


def _ln_jax(x, w, b):
    mean = jnp.mean(x, axis=-1, keepdims=True)
    xc = x - mean
    var = jnp.mean(xc * xc, axis=-1, keepdims=True)
    return xc / jnp.sqrt(var + LN_EPS) * w + b


# --------------- kernel A: LN1 + QKV proj + rotary + head split --------------
def _qkv_kernel(x_ref, ln1w_ref, ln1b_ref, wq_ref, bq_ref, wk_ref, bk_ref,
                wv_ref, bv_ref, cos_ref, sin_ref, q_ref, k_ref, v_ref,
                *, num_heads, head_dim):
    x = x_ref[0]                                              # (tq, E) f32
    h = _layer_norm(x, ln1w_ref[...], ln1b_ref[...]).astype(jnp.bfloat16)
    # d^-0.5 query scale is folded into wq / bq at init.
    q = jnp.dot(h, wq_ref[...], preferred_element_type=jnp.float32) + bq_ref[...]
    k = jnp.dot(h, wk_ref[...], preferred_element_type=jnp.float32) + bk_ref[...]
    v = jnp.dot(h, wv_ref[...], preferred_element_type=jnp.float32) + bv_ref[...]
    cos = cos_ref[...]                                        # (tq, d/2)
    sin = sin_ref[...]
    d, d2 = head_dim, head_dim // 2
    for hh in range(num_heads):                               # static unroll
        lo = hh * d
        q1, q2 = q[:, lo:lo + d2], q[:, lo + d2:lo + d]
        k1, k2 = k[:, lo:lo + d2], k[:, lo + d2:lo + d]
        # rotary (roll-free): out = [x1*cos - x2*sin , x2*cos + x1*sin]
        q_ref[0, hh] = jnp.concatenate(
            [q1 * cos - q2 * sin, q2 * cos + q1 * sin], axis=-1
        ).astype(jnp.bfloat16)
        k_ref[0, hh] = jnp.concatenate(
            [k1 * cos - k2 * sin, k2 * cos + k1 * sin], axis=-1
        ).astype(jnp.bfloat16)
        v_ref[0, hh] = v[:, lo:lo + d].astype(jnp.bfloat16)


def qkv_proj(x, cos_h, sin_h, lp, num_heads):
    B, T, E = x.shape
    d = E // num_heads
    d2 = d // 2
    tq = _row_tile(T)
    x_spec = pl.BlockSpec((1, tq, E), lambda b, t: (b, t, 0))
    rot_spec = pl.BlockSpec((tq, d2), lambda b, t: (t, 0))
    hd_spec = pl.BlockSpec((1, num_heads, tq, d), lambda b, t: (b, 0, t, 0))
    out_shape = jax.ShapeDtypeStruct((B, num_heads, T, d), jnp.bfloat16)
    return pl.pallas_call(
        partial(_qkv_kernel, num_heads=num_heads, head_dim=d),
        out_shape=(out_shape, out_shape, out_shape),
        grid_spec=pltpu.PrefetchScalarGridSpec(
            num_scalar_prefetch=0,
            grid=(B, T // tq),
            in_specs=[x_spec,
                      _const_spec((1, E)), _const_spec((1, E)),
                      _const_spec((E, E)), _const_spec((1, E)),
                      _const_spec((E, E)), _const_spec((1, E)),
                      _const_spec((E, E)), _const_spec((1, E)),
                      rot_spec, rot_spec],
            out_specs=(hd_spec, hd_spec, hd_spec)),
        compiler_params=pltpu.CompilerParams(
            dimension_semantics=("parallel", "parallel"),
            vmem_limit_bytes=_vmem_limit()),
    )(x, lp["ln1_w"], lp["ln1_b"], lp["wq"], lp["bq"],
      lp["wk"], lp["bk"], lp["wv"], lp["bv"], cos_h, sin_h)


# ------------------- kernel B: head-batched softmax attention ----------------
def _attention_kernel(q_ref, k_ref, v_ref, bias_ref, o_ref):
    q = q_ref[0]                          # (hb, tq, d) bf16 (scaled + rotated)
    k = k_ref[0]                          # (hb, T, d) bf16 (rotated)
    v = v_ref[0]                          # (hb, T, d) bf16
    bias = bias_ref[...]                  # (1, 1, T) additive (0 / -1e9)

    sc = jnp.einsum("hqd,hkd->hqk", q, k,
                    preferred_element_type=jnp.float32)        # (hb, tq, T)
    sc = sc + bias
    sc = sc - jnp.max(sc, axis=-1, keepdims=True)
    p = jnp.exp(sc)
    inv_l = pl.reciprocal(jnp.sum(p, axis=-1, keepdims=True), approx=True)
    ctx = jnp.einsum("hqk,hkd->hqd", p.astype(jnp.bfloat16), v,
                     preferred_element_type=jnp.float32)       # (hb, tq, d)
    o_ref[0] = (ctx * inv_l).astype(jnp.bfloat16)


def attention_core(q, k, v, attn_bias):
    B, H, T, d = q.shape
    hb = _head_block(H)
    tq = _row_tile(T, cap=256)
    q_spec = pl.BlockSpec((1, hb, tq, d), lambda b, h, i: (b, h, i, 0))
    kv_spec = pl.BlockSpec((1, hb, T, d), lambda b, h, i: (b, h, 0, 0))
    b_spec = pl.BlockSpec((1, 1, T), lambda b, h, i: (b, 0, 0))
    # TODO(synk): for very long T, tile K/V flash-style (online softmax) to
    # bound the (hb,tq,T) score block; full-T K/V blocks are fine here.
    return pl.pallas_call(
        _attention_kernel,
        out_shape=jax.ShapeDtypeStruct((B, H, T, d), jnp.bfloat16),
        grid_spec=pltpu.PrefetchScalarGridSpec(
            num_scalar_prefetch=0,
            grid=(B, H // hb, T // tq),
            in_specs=[q_spec, kv_spec, kv_spec, b_spec],
            out_specs=q_spec),
        compiler_params=pltpu.CompilerParams(
            dimension_semantics=("parallel", "parallel", "parallel"),
            vmem_limit_bytes=_vmem_limit()),
    )(q, k, v, attn_bias)


# ------- kernel C: out-proj + residual + LN2 + F-tiled FFN + residual --------
def _outproj_ffn_kernel(x_ref, ctx_ref, wo_ref, bo_ref, ln2w_ref, ln2b_ref,
                        w1_ref, b1_ref, w2_ref, b2_ref, o_ref,
                        acc_ref, h_ref, res_ref, *, num_heads):
    f_idx = pl.program_id(2)

    @pl.when(f_idx == 0)
    def _():
        # gather heads back to (tq, E), out-proj, residual, LN2 -- once per tile
        ctx = jnp.concatenate([ctx_ref[0, hh] for hh in range(num_heads)],
                              axis=-1)                       # (tq, E) bf16
        attn_out = jnp.dot(ctx, wo_ref[...],
                           preferred_element_type=jnp.float32) + bo_ref[...]
        res = x_ref[0] + attn_out
        res_ref[...] = res
        h_ref[...] = _layer_norm(res, ln2w_ref[...],
                                 ln2b_ref[...]).astype(jnp.bfloat16)
        acc_ref[...] = jnp.zeros_like(acc_ref)

    ff = jnp.dot(h_ref[...], w1_ref[...],
                 preferred_element_type=jnp.float32) + b1_ref[...]  # (tq, tf)
    ff = _gelu(ff).astype(jnp.bfloat16)
    acc_ref[...] += jnp.dot(ff, w2_ref[...],
                            preferred_element_type=jnp.float32)     # (tq, E)

    @pl.when(f_idx == pl.num_programs(2) - 1)
    def _():
        o_ref[0] = res_ref[...] + acc_ref[...] + b2_ref[...]


def outproj_ffn(x, ctx, lp, num_heads):
    B, T, E = x.shape
    F = lp["w1"].shape[1]
    d = E // num_heads
    tq = _row_tile(T)
    tf = _ffn_tile(F)
    x_spec = pl.BlockSpec((1, tq, E), lambda b, t, f: (b, t, 0))
    ctx_spec = pl.BlockSpec((1, num_heads, tq, d), lambda b, t, f: (b, 0, t, 0))
    w1_spec = pl.BlockSpec((E, tf), lambda b, t, f: (0, f))
    b1_spec = pl.BlockSpec((1, tf), lambda b, t, f: (0, f))
    w2_spec = pl.BlockSpec((tf, E), lambda b, t, f: (f, 0))
    return pl.pallas_call(
        partial(_outproj_ffn_kernel, num_heads=num_heads),
        out_shape=jax.ShapeDtypeStruct((B, T, E), jnp.float32),
        grid_spec=pltpu.PrefetchScalarGridSpec(
            num_scalar_prefetch=0,
            grid=(B, T // tq, F // tf),
            in_specs=[x_spec, ctx_spec,
                      _const_spec((E, E)), _const_spec((1, E)),
                      _const_spec((1, E)), _const_spec((1, E)),
                      w1_spec, b1_spec, w2_spec, _const_spec((1, E))],
            out_specs=x_spec,
            scratch_shapes=[pltpu.VMEM((tq, E), jnp.float32),    # FFN accum
                            pltpu.VMEM((tq, E), jnp.bfloat16),   # LN2 output
                            pltpu.VMEM((tq, E), jnp.float32)]),  # residual
        compiler_params=pltpu.CompilerParams(
            dimension_semantics=("parallel", "parallel", "arbitrary"),
            vmem_limit_bytes=_vmem_limit()),
    )(x, ctx, lp["wo"], lp["bo"], lp["ln2_w"], lp["ln2_b"],
      lp["w1"], lp["b1"], lp["w2"], lp["b2"])


def transformer_layer(x, attn_bias, lp, cos_h, sin_h, num_heads):
    q, k, v = qkv_proj(x, cos_h, sin_h, lp, num_heads)   # (B,H,T,d) bf16
    ctx = attention_core(q, k, v, attn_bias)             # (B,H,T,d) bf16
    return outproj_ffn(x, ctx, lp, num_heads)            # (B,T,E)   f32


# ------------------------- final LN + Roberta LM head -------------------------
def _lm_head_kernel(x_ref, lnf_w, lnf_b, wd, bd, lnh_w, lnh_b, wout, bout,
                    o_ref):
    x = _layer_norm(x_ref[0], lnf_w[...], lnf_b[...])        # emb_layer_norm_after
    h = jnp.dot(x.astype(jnp.bfloat16), wd[...],
                preferred_element_type=jnp.float32) + bd[...]
    h = _gelu(h)
    h = _layer_norm(h, lnh_w[...], lnh_b[...])
    o_ref[0] = jnp.dot(h.astype(jnp.bfloat16), wout[...],
                       preferred_element_type=jnp.float32) + bout[...]


def lm_head(x, lm):
    B, T, E = x.shape
    Vp = lm["out_w"].shape[1]                                # lane-dense padded vocab
    tq = _row_tile(T)
    in_specs = [pl.BlockSpec((1, tq, E), lambda b, t: (b, t, 0)),
                _const_spec((1, E)), _const_spec((1, E)),
                _const_spec((E, E)), _const_spec((1, E)),
                _const_spec((1, E)), _const_spec((1, E)),
                _const_spec((E, Vp)), _const_spec((1, Vp))]
    return pl.pallas_call(
        _lm_head_kernel,
        out_shape=jax.ShapeDtypeStruct((B, T, Vp), jnp.float32),
        grid_spec=pltpu.PrefetchScalarGridSpec(
            num_scalar_prefetch=0,
            grid=(B, T // tq),
            in_specs=in_specs,
            out_specs=pl.BlockSpec((1, tq, Vp), lambda b, t: (b, t, 0))),
        compiler_params=pltpu.CompilerParams(
            dimension_semantics=("parallel", "parallel"),
            vmem_limit_bytes=_vmem_limit()),
    )(x, lm["ln_after_w"], lm["ln_after_b"], lm["dense_w"], lm["dense_b"],
      lm["lnh_w"], lm["lnh_b"], lm["out_w"], lm["out_b"])


# ------------------------------- glue (JAX) -----------------------------------
def rotary_tables(T, head_dim):
    # Half tables (T, d/2): cos/sin are duplicated across halves in ESM rotary.
    inv_freq = 1.0 / (10000.0 ** (np.arange(0, head_dim, 2, dtype=np.float32)
                                  / head_dim))
    t = np.arange(T, dtype=np.float32)
    freqs = np.einsum("i,j->ij", t, inv_freq)                # (T, d/2)
    return jnp.asarray(np.cos(freqs)), jnp.asarray(np.sin(freqs))


def init_params(key, cfg):
    E, V, L = cfg["embed_dim"], cfg["alphabet_size"], cfg["num_layers"]
    H = cfg["attention_heads"]
    F = 4 * E
    Vp = _pad128(V)
    scale = (E // H) ** -0.5

    def nrm(k, shape, s=0.02):
        return (s * jax.random.normal(k, shape)).astype(jnp.float32)

    def bf(a):
        return a.astype(jnp.bfloat16)

    keys = jax.random.split(key, 2 + L)
    embed = nrm(keys[0], (V, E))
    embed = embed.at[cfg["padding_idx"]].set(0.0)            # nn.Embedding padding row

    layers = []
    for li in range(L):
        lk = jax.random.split(keys[2 + li], 12)
        layers.append(dict(
            ln1_w=jnp.ones((1, E), jnp.float32), ln1_b=jnp.zeros((1, E), jnp.float32),
            # d^-0.5 query scale folded into wq / bq (static parameters).
            wq=bf(nrm(lk[0], (E, E)) * scale), bq=nrm(lk[1], (1, E)) * scale,
            wk=bf(nrm(lk[2], (E, E))), bk=nrm(lk[3], (1, E)),
            wv=bf(nrm(lk[4], (E, E))), bv=nrm(lk[5], (1, E)),
            wo=bf(nrm(lk[6], (E, E))), bo=nrm(lk[7], (1, E)),
            ln2_w=jnp.ones((1, E), jnp.float32), ln2_b=jnp.zeros((1, E), jnp.float32),
            w1=bf(nrm(lk[8], (E, F))), b1=nrm(lk[9], (1, F)),
            w2=bf(nrm(lk[10], (F, E))), b2=nrm(lk[11], (1, E)),
        ))

    # tied output projection = embed.T, padded to a 128-multiple vocab (bf16)
    out_w = jnp.zeros((E, Vp), jnp.bfloat16).at[:, :V].set(bf(embed.T))
    lm = dict(
        ln_after_w=jnp.ones((1, E), jnp.float32),
        ln_after_b=jnp.zeros((1, E), jnp.float32),
        dense_w=bf(nrm(keys[1], (E, E))),
        dense_b=jnp.zeros((1, E), jnp.float32),
        lnh_w=jnp.ones((1, E), jnp.float32),
        lnh_b=jnp.zeros((1, E), jnp.float32),
        out_w=out_w,
        out_b=jnp.zeros((1, Vp), jnp.float32),
    )
    return dict(embed=embed, layers=layers, lm=lm)


def esm2_forward(tokens, params, cfg, repr_layers=()):
    tokens = jnp.asarray(tokens, jnp.int32)
    B, T = tokens.shape
    H = cfg["attention_heads"]
    E = cfg["embed_dim"]
    V = cfg["alphabet_size"]
    head_dim = E // H

    padding_mask = tokens == cfg["padding_idx"]
    x = params["embed"][tokens]                              # embed_scale = 1

    if cfg["token_dropout"]:
        x = jnp.where((tokens == cfg["mask_idx"])[..., None], 0.0, x)
        mask_ratio_train = 0.15 * 0.8
        src_lengths = jnp.maximum(jnp.sum(~padding_mask, axis=-1), 1)
        mask_ratio_observed = (jnp.sum(tokens == cfg["mask_idx"], axis=-1)
                               .astype(x.dtype) / src_lengths)
        denom = jnp.maximum(1.0 - mask_ratio_observed, 1e-6)
        x = x * (1.0 - mask_ratio_train) / denom[:, None, None]

    x = x * (1.0 - padding_mask[..., None].astype(x.dtype))

    repr_layers = set(repr_layers)
    hidden = {}
    if 0 in repr_layers:
        hidden[0] = x

    # Pad T so the row tiles are (8,128)-friendly.  Padded key positions are
    # masked with a finite -1e9 bias (no NaN risk, no host sync); outputs are
    # sliced back to T.
    Tp = _pad_len(T)
    if Tp != T:
        x = jnp.pad(x, ((0, 0), (0, Tp - T), (0, 0)))
        pmask = jnp.pad(padding_mask, ((0, 0), (0, Tp - T)), constant_values=True)
    else:
        pmask = padding_mask
    attn_bias = (pmask.astype(jnp.float32) * NEG_BIAS)[:, None, :]

    cos_h, sin_h = rotary_tables(Tp, head_dim)               # (Tp, head_dim/2)

    for li, lp in enumerate(params["layers"]):
        x = transformer_layer(x, attn_bias, lp, cos_h, sin_h, H)
        if li + 1 in repr_layers:
            hidden[li + 1] = x[:, :T]

    # reference overwrites the last-layer representation with the post-LN x
    if cfg["num_layers"] in repr_layers:
        hidden[cfg["num_layers"]] = _ln_jax(
            x, params["lm"]["ln_after_w"], params["lm"]["ln_after_b"])[:, :T]

    logits = lm_head(x, params["lm"])[:, :T, :V]             # slice seq/vocab pad

    # TODO(synk): need_head_weights / return_contacts (ContactPredictionHead)
    # paths are not implemented; only logits + representations are produced.
    return {"logits": logits, "representations": hidden}


# ---------------------------------- main --------------------------------------
if __name__ == "__main__":
    cfg = dict(
        num_layers=2,
        embed_dim=128,
        attention_heads=4,
        alphabet_size=33,          # ESM-1b alphabet
        padding_idx=1,
        mask_idx=32,
        cls_idx=0,
        eos_idx=2,
        token_dropout=True,
    )
    B, T = 2, 8

    key = jax.random.PRNGKey(0)
    pkey, tkey = jax.random.split(key)
    params = init_params(pkey, cfg)

    body = np.array(jax.random.randint(tkey, (B, T), 4, 24), dtype=np.int32)
    body[:, 0] = cfg["cls_idx"]
    body[0, 3] = cfg["mask_idx"]       # one masked position (token-dropout path)
    body[0, T - 1] = cfg["eos_idx"]
    body[1, T - 2] = cfg["eos_idx"]
    body[1, T - 1] = cfg["padding_idx"]  # one padded position (padding-mask path)
    tokens = jnp.asarray(body)

    fwd = jax.jit(partial(esm2_forward, cfg=cfg,
                          repr_layers=(0, cfg["num_layers"])))
    out = fwd(tokens, params)
    jax.block_until_ready(out["logits"])
    assert out["logits"].shape == (B, T, cfg["alphabet_size"])
    assert out["representations"][cfg["num_layers"]].shape == (B, T, cfg["embed_dim"])
    print("KERNEL_OK")
</pallas_src>

<mosaic_0001>
module attributes {stable_mosaic.version = 11 : i64} {
  func.func @_attention_kernel(%arg0: i32, %arg1: i32, %arg2: i32, %arg3: memref<1x4x8x32xbf16, #tpu.memory_space<vmem>>, %arg4: memref<1x4x8x32xbf16, #tpu.memory_space<vmem>>, %arg5: memref<1x4x8x32xbf16, #tpu.memory_space<vmem>>, %arg6: memref<1x1x8xf32, #tpu.memory_space<vmem>>, %arg7: memref<1x4x8x32xbf16, #tpu.memory_space<vmem>>) attributes {dimension_semantics = [#tpu.dimension_semantics<parallel>, #tpu.dimension_semantics<parallel>, #tpu.dimension_semantics<parallel>], iteration_bounds = array<i64: 2, 1, 1>, scalar_prefetch = 0 : i64, scratch_operands = 0 : i64, tpu.core_type = #tpu.core_type<tc>, window_params = [{transform_indices = @transform_0, window_bounds = array<i64: 1, 4, 8, 32>}, {transform_indices = @transform_1, window_bounds = array<i64: 1, 4, 8, 32>}, {transform_indices = @transform_2, window_bounds = array<i64: 1, 4, 8, 32>}, {transform_indices = @transform_3, window_bounds = array<i64: 1, 1, 8>}, {transform_indices = @transform_4, window_bounds = array<i64: 1, 4, 8, 32>}]} {
    %c0 = arith.constant 0 : index
    %c0_0 = arith.constant 0 : index
    %c0_1 = arith.constant 0 : index
    %c0_2 = arith.constant 0 : index
    %0 = vector.load %arg3[%c0, %c0_0, %c0_1, %c0_2] : memref<1x4x8x32xbf16, #tpu.memory_space<vmem>>, vector<1x4x8x32xbf16>
    %1 = vector.shape_cast %0 : vector<1x4x8x32xbf16> to vector<4x8x32xbf16>
    %c0_3 = arith.constant 0 : index
    %c0_4 = arith.constant 0 : index
    %c0_5 = arith.constant 0 : index
    %c0_6 = arith.constant 0 : index
    %2 = vector.load %arg4[%c0_3, %c0_4, %c0_5, %c0_6] : memref<1x4x8x32xbf16, #tpu.memory_space<vmem>>, vector<1x4x8x32xbf16>
    %3 = vector.shape_cast %2 : vector<1x4x8x32xbf16> to vector<4x8x32xbf16>
    %c0_7 = arith.constant 0 : index
    %c0_8 = arith.constant 0 : index
    %c0_9 = arith.constant 0 : index
    %c0_10 = arith.constant 0 : index
    %4 = vector.load %arg5[%c0_7, %c0_8, %c0_9, %c0_10] : memref<1x4x8x32xbf16, #tpu.memory_space<vmem>>, vector<1x4x8x32xbf16>
    %5 = vector.shape_cast %4 : vector<1x4x8x32xbf16> to vector<4x8x32xbf16>
    %c0_11 = arith.constant 0 : index
    %c0_12 = arith.constant 0 : index
    %c0_13 = arith.constant 0 : index
    %6 = vector.load %arg6[%c0_11, %c0_12, %c0_13] : memref<1x1x8xf32, #tpu.memory_space<vmem>>, vector<1x1x8xf32>
    "tpu.trace_start"() <{level = 10 : i32, message = "hqd,hkd->hqk"}> : () -> ()
    %cst = arith.constant dense<0.000000e+00> : vector<4x8x8xf32>
    %7 = tpu.matmul %1, %3, %cst {dimension_numbers = #tpu.dot_dimension_numbers<[2], [2], [1], [1], [0, 0, 0, 1, 1, 1], [0], [0]>} : vector<4x8x32xbf16>, vector<4x8x32xbf16>, vector<4x8x8xf32> -> vector<4x8x8xf32>
    "tpu.trace_stop"() : () -> ()
    %8 = vector.broadcast %6 : vector<1x1x8xf32> to vector<4x8x8xf32>
    %9 = arith.addf %7, %8 : vector<4x8x8xf32>
    %cst_14 = arith.constant dense<0xFF800000> : vector<4x8xf32>
    %10 = vector.multi_reduction <maximumf>, %9, %cst_14 [2] : vector<4x8x8xf32> to vector<4x8xf32>
    %11 = vector.shape_cast %10 : vector<4x8xf32> to vector<4x8x1xf32>
    %12 = vector.broadcast %11 : vector<4x8x1xf32> to vector<4x8x8xf32>
    %13 = arith.subf %9, %12 : vector<4x8x8xf32>
    %14 = math.exp %13 : vector<4x8x8xf32>
    %cst_15 = arith.constant dense<0.000000e+00> : vector<4x8xf32>
    %15 = vector.multi_reduction <add>, %14, %cst_15 [2] : vector<4x8x8xf32> to vector<4x8xf32>
    %16 = vector.shape_cast %15 : vector<4x8xf32> to vector<4x8x1xf32>
    %17 = tpu.reciprocal %16 {approx = true} : vector<4x8x1xf32> -> vector<4x8x1xf32>
    %18 = arith.truncf %14 : vector<4x8x8xf32> to vector<4x8x8xbf16>
    "tpu.trace_start"() <{level = 10 : i32, message = "hqk,hkd->hqd"}> : () -> ()
    %cst_16 = arith.constant dense<0.000000e+00> : vector<4x8x32xf32>
    %19 = tpu.matmul %18, %5, %cst_16 {dimension_numbers = #tpu.dot_dimension_numbers<[2], [1], [1], [2], [0, 0, 0, 1, 1, 2], [0], [0]>} : vector<4x8x8xbf16>, vector<4x8x32xbf16>, vector<4x8x32xf32> -> vector<4x8x32xf32>
    "tpu.trace_stop"() : () -> ()
    %20 = vector.broadcast %17 : vector<4x8x1xf32> to vector<4x8x32xf32>
    %21 = arith.mulf %19, %20 : vector<4x8x32xf32>
    %22 = arith.truncf %21 : vector<4x8x32xf32> to vector<4x8x32xbf16>
    %c0_17 = arith.constant 0 : index
    %c0_18 = arith.constant 0 : index
    %c0_19 = arith.constant 0 : index
    %c0_20 = arith.constant 0 : index
    %23 = vector.load %arg7[%c0_17, %c0_18, %c0_19, %c0_20] : memref<1x4x8x32xbf16, #tpu.memory_space<vmem>>, vector<1x4x8x32xbf16>
    %24 = vector.shape_cast %23 : vector<1x4x8x32xbf16> to vector<4x8x32xbf16>
    %25 = vector.shape_cast %22 : vector<4x8x32xbf16> to vector<1x4x8x32xbf16>
    tpu.vector_store %arg7[%c0_17, %c0_18, %c0_19, %c0_20], %25 {strides = array<i32>} : memref<1x4x8x32xbf16, #tpu.memory_space<vmem>>, vector<1x4x8x32xbf16>,
    return
  }
  func.func @transform_0(%arg0: i32, %arg1: i32, %arg2: i32) -> (i32, i32, i32, i32) {
    %c0_i32 = arith.constant 0 : i32
    %c0_i32_0 = arith.constant 0 : i32
    return %arg0, %arg1, %arg2, %c0_i32 : i32, i32, i32, i32
  }
  func.func @transform_1(%arg0: i32, %arg1: i32, %arg2: i32) -> (i32, i32, i32, i32) {
    %c0_i32 = arith.constant 0 : i32
    %c0_i32_0 = arith.constant 0 : i32
    %c0_i32_1 = arith.constant 0 : i32
    return %arg0, %arg1, %c0_i32, %c0_i32_0 : i32, i32, i32, i32
  }
  func.func @transform_2(%arg0: i32, %arg1: i32, %arg2: i32) -> (i32, i32, i32, i32) {
    %c0_i32 = arith.constant 0 : i32
    %c0_i32_0 = arith.constant 0 : i32
    %c0_i32_1 = arith.constant 0 : i32
    return %arg0, %arg1, %c0_i32, %c0_i32_0 : i32, i32, i32, i32
  }
  func.func @transform_3(%arg0: i32, %arg1: i32, %arg2: i32) -> (i32, i32, i32) {
    %c0_i32 = arith.constant 0 : i32
    %c0_i32_0 = arith.constant 0 : i32
    %c0_i32_1 = arith.constant 0 : i32
    return %arg0, %c0_i32, %c0_i32_0 : i32, i32, i32
  }
  func.func @transform_4(%arg0: i32, %arg1: i32, %arg2: i32) -> (i32, i32, i32, i32) {
    %c0_i32 = arith.constant 0 : i32
    %c0_i32_0 = arith.constant 0 : i32
    return %arg0, %arg1, %arg2, %c0_i32 : i32, i32, i32, i32
  }
}

module attributes {stable_mosaic.version = 11 : i64} {
  func.func @_qkv_kernel(%arg0: i32, %arg1: i32, %arg2: memref<1x8x128xf32, #tpu.memory_space<vmem>>, %arg3: memref<1x128xf32, #tpu.memory_space<vmem>>, %arg4: memref<1x128xf32, #tpu.memory_space<vmem>>, %arg5: memref<128x128xbf16, #tpu.memory_space<vmem>>, %arg6: memref<1x128xf32, #tpu.memory_space<vmem>>, %arg7: memref<128x128xbf16, #tpu.memory_space<vmem>>, %arg8: memref<1x128xf32, #tpu.memory_space<vmem>>, %arg9: memref<128x128xbf16, #tpu.memory_space<vmem>>, %arg10: memref<1x128xf32, #tpu.memory_space<vmem>>, %arg11: memref<8x16xf32, #tpu.memory_space<vmem>>, %arg12: memref<8x16xf32, #tpu.memory_space<vmem>>, %arg13: memref<1x4x8x32xbf16, #tpu.memory_space<vmem>>, %arg14: memref<1x4x8x32xbf16, #tpu.memory_space<vmem>>, %arg15: memref<1x4x8x32xbf16, #tpu.memory_space<vmem>>) attributes {dimension_semantics = [#tpu.dimension_semantics<parallel>, #tpu.dimension_semantics<parallel>], iteration_bounds = array<i64: 2, 1>, scalar_prefetch = 0 : i64, scratch_operands = 0 : i64, tpu.core_type = #tpu.core_type<tc>, window_params = [{transform_indices = @transform_0, window_bounds = array<i64: 1, 8, 128>}, {pipeline_mode = #tpu.pipeline_mode<synchronous>, transform_indices = @transform_1, window_bounds = array<i64: 1, 128>}, {pipeline_mode = #tpu.pipeline_mode<synchronous>, transform_indices = @transform_2, window_bounds = array<i64: 1, 128>}, {pipeline_mode = #tpu.pipeline_mode<synchronous>, transform_indices = @transform_3, window_bounds = array<i64: 128, 128>}, {pipeline_mode = #tpu.pipeline_mode<synchronous>, transform_indices = @transform_4, window_bounds = array<i64: 1, 128>}, {pipeline_mode = #tpu.pipeline_mode<synchronous>, transform_indices = @transform_5, window_bounds = array<i64: 128, 128>}, {pipeline_mode = #tpu.pipeline_mode<synchronous>, transform_indices = @transform_6, window_bounds = array<i64: 1, 128>}, {pipeline_mode = #tpu.pipeline_mode<synchronous>, transform_indices = @transform_7, window_bounds = array<i64: 128, 128>}, {pipeline_mode = #tpu.pipeline_mode<synchronous>, transform_indices = @transform_8, window_bounds = array<i64: 1, 128>}, {transform_indices = @transform_9, window_bounds = array<i64: 8, 16>}, {transform_indices = @transform_10, window_bounds = array<i64: 8, 16>}, {transform_indices = @transform_11, window_bounds = array<i64: 1, 4, 8, 32>}, {transform_indices = @transform_12, window_bounds = array<i64: 1, 4, 8, 32>}, {transform_indices = @transform_13, window_bounds = array<i64: 1, 4, 8, 32>}]} {
    %c0 = arith.constant 0 : index
    %c0_0 = arith.constant 0 : index
    %c0_1 = arith.constant 0 : index
    %0 = vector.load %arg2[%c0, %c0_0, %c0_1] : memref<1x8x128xf32, #tpu.memory_space<vmem>>, vector<1x8x128xf32>
    %1 = vector.shape_cast %0 : vector<1x8x128xf32> to vector<8x128xf32>
    %c0_2 = arith.constant 0 : index
    %c0_3 = arith.constant 0 : index
    %2 = vector.load %arg3[%c0_2, %c0_3] : memref<1x128xf32, #tpu.memory_space<vmem>>, vector<1x128xf32>
    %c0_4 = arith.constant 0 : index
    %c0_5 = arith.constant 0 : index
    %3 = vector.load %arg4[%c0_4, %c0_5] : memref<1x128xf32, #tpu.memory_space<vmem>>, vector<1x128xf32>
    %cst = arith.constant dense<0.000000e+00> : vector<8xf32>
    %4 = vector.multi_reduction <add>, %1, %cst [1] : vector<8x128xf32> to vector<8xf32>
    %5 = vector.shape_cast %4 : vector<8xf32> to vector<8x1xf32>
    %cst_6 = arith.constant 1.280000e+02 : f32
    %6 = vector.broadcast %cst_6 : f32 to vector<8x1xf32>
    %7 = arith.divf %5, %6 : vector<8x1xf32>
    %8 = vector.broadcast %7 : vector<8x1xf32> to vector<8x128xf32>
    %9 = arith.subf %1, %8 : vector<8x128xf32>
    %10 = arith.mulf %9, %9 : vector<8x128xf32>
    %cst_7 = arith.constant dense<0.000000e+00> : vector<8xf32>
    %11 = vector.multi_reduction <add>, %10, %cst_7 [1] : vector<8x128xf32> to vector<8xf32>
    %12 = vector.shape_cast %11 : vector<8xf32> to vector<8x1xf32>
    %cst_8 = arith.constant 1.280000e+02 : f32
    %13 = vector.broadcast %cst_8 : f32 to vector<8x1xf32>
    %14 = arith.divf %12, %13 : vector<8x1xf32>
    %cst_9 = arith.constant 9.99999996E-13 : f32
    %15 = vector.broadcast %cst_9 : f32 to vector<8x1xf32>
    %16 = arith.addf %14, %15 : vector<8x1xf32>
    %17 = math.rsqrt %16 : vector<8x1xf32>
    %18 = vector.broadcast %17 : vector<8x1xf32> to vector<8x128xf32>
    %19 = arith.mulf %9, %18 : vector<8x128xf32>
    %20 = vector.broadcast %2 : vector<1x128xf32> to vector<8x128xf32>
    %21 = arith.mulf %19, %20 : vector<8x128xf32>
    %22 = vector.broadcast %3 : vector<1x128xf32> to vector<8x128xf32>
    %23 = arith.addf %21, %22 : vector<8x128xf32>
    %24 = arith.truncf %23 : vector<8x128xf32> to vector<8x128xbf16>
    %c0_10 = arith.constant 0 : index
    %c0_11 = arith.constant 0 : index
    %25 = vector.load %arg5[%c0_10, %c0_11] : memref<128x128xbf16, #tpu.memory_space<vmem>>, vector<128x128xbf16>
    %cst_12 = arith.constant dense<0.000000e+00> : vector<8x128xf32>
    %26 = tpu.matmul %24, %25, %cst_12 {dimension_numbers = #tpu.dot_dimension_numbers<[1], [0], [0], [1], [0, 0, 1, 1], [], []>} : vector<8x128xbf16>, vector<128x128xbf16>, vector<8x128xf32> -> vector<8x128xf32>
    %c0_13 = arith.constant 0 : index
    %c0_14 = arith.constant 0 : index
    %27 = vector.load %arg6[%c0_13, %c0_14] : memref<1x128xf32, #tpu.memory_space<vmem>>, vector<1x128xf32>
    %28 = vector.broadcast %27 : vector<1x128xf32> to vector<8x128xf32>
    %29 = arith.addf %26, %28 : vector<8x128xf32>
    %c0_15 = arith.constant 0 : index
    %c0_16 = arith.constant 0 : index
    %30 = vector.load %arg7[%c0_15, %c0_16] : memref<128x128xbf16, #tpu.memory_space<vmem>>, vector<128x128xbf16>
    %cst_17 = arith.constant dense<0.000000e+00> : vector<8x128xf32>
    %31 = tpu.matmul %24, %30, %cst_17 {dimension_numbers = #tpu.dot_dimension_numbers<[1], [0], [0], [1], [0, 0, 1, 1], [], []>} : vector<8x128xbf16>, vector<128x128xbf16>, vector<8x128xf32> -> vector<8x128xf32>
    %c0_18 = arith.constant 0 : index
    %c0_19 = arith.constant 0 : index
    %32 = vector.load %arg8[%c0_18, %c0_19] : memref<1x128xf32, #tpu.memory_space<vmem>>, vector<1x128xf32>
    %33 = vector.broadcast %32 : vector<1x128xf32> to vector<8x128xf32>
    %34 = arith.addf %31, %33 : vector<8x128xf32>
    %c0_20 = arith.constant 0 : index
    %c0_21 = arith.constant 0 : index
    %35 = vector.load %arg9[%c0_20, %c0_21] : memref<128x128xbf16, #tpu.memory_space<vmem>>, vector<128x128xbf16>
    %cst_22 = arith.constant dense<0.000000e+00> : vector<8x128xf32>
    %36 = tpu.matmul %24, %35, %cst_22 {dimension_numbers = #tpu.dot_dimension_numbers<[1], [0], [0], [1], [0, 0, 1, 1], [], []>} : vector<8x128xbf16>, vector<128x128xbf16>, vector<8x128xf32> -> vector<8x128xf32>
    %c0_23 = arith.constant 0 : index
    %c0_24 = arith.constant 0 : index
    %37 = vector.load %arg10[%c0_23, %c0_24] : memref<1x128xf32, #tpu.memory_space<vmem>>, vector<1x128xf32>
    %38 = vector.broadcast %37 : vector<1x128xf32> to vector<8x128xf32>
    %39 = arith.addf %36, %38 : vector<8x128xf32>
    %c0_25 = arith.constant 0 : index
    %c0_26 = arith.constant 0 : index
    %40 = vector.load %arg11[%c0_25, %c0_26] : memref<8x16xf32, #tpu.memory_space<vmem>>, vector<8x16xf32>
    %c0_27 = arith.constant 0 : index
    %c0_28 = arith.constant 0 : index
    %41 = vector.load %arg12[%c0_27, %c0_28] : memref<8x16xf32, #tpu.memory_space<vmem>>, vector<8x16xf32>
    %42 = vector.extract_strided_slice %29 {offsets = [0, 0], sizes = [8, 16], strides = [1, 1]} : vector<8x128xf32> to vector<8x16xf32>
    %43 = vector.extract_strided_slice %29 {offsets = [0, 16], sizes = [8, 16], strides = [1, 1]} : vector<8x128xf32> to vector<8x16xf32>
    %44 = vector.extract_strided_slice %34 {offsets = [0, 0], sizes = [8, 16], strides = [1, 1]} : vector<8x128xf32> to vector<8x16xf32>
    %45 = vector.extract_strided_slice %34 {offsets = [0, 16], sizes = [8, 16], strides = [1, 1]} : vector<8x128xf32> to vector<8x16xf32>
    %46 = arith.mulf %42, %40 : vector<8x16xf32>
    %47 = arith.mulf %43, %41 : vector<8x16xf32>
    %48 = arith.subf %46, %47 : vector<8x16xf32>
    %49 = arith.mulf %43, %40 : vector<8x16xf32>
    %50 = arith.mulf %42, %41 : vector<8x16xf32>
    %51 = arith.addf %49, %50 : vector<8x16xf32>
    %52 = tpu.concatenate %48, %51 in 1 : vector<8x16xf32>, vector<8x16xf32> -> vector<8x32xf32>
    %53 = arith.truncf %52 : vector<8x32xf32> to vector<8x32xbf16>
    %c0_29 = arith.constant 0 : index
    %c0_30 = arith.constant 0 : index
    %c0_31 = arith.constant 0 : index
    %c0_32 = arith.constant 0 : index
    %54 = vector.load %arg13[%c0_29, %c0_30, %c0_31, %c0_32] : memref<1x4x8x32xbf16, #tpu.memory_space<vmem>>, vector<1x1x8x32xbf16>
    %55 = vector.shape_cast %54 : vector<1x1x8x32xbf16> to vector<8x32xbf16>
    %56 = vector.shape_cast %53 : vector<8x32xbf16> to vector<1x1x8x32xbf16>
    tpu.vector_store %arg13[%c0_29, %c0_30, %c0_31, %c0_32], %56 {strides = array<i32>} : memref<1x4x8x32xbf16, #tpu.memory_space<vmem>>, vector<1x1x8x32xbf16>,
    %57 = arith.mulf %44, %40 : vector<8x16xf32>
    %58 = arith.mulf %45, %41 : vector<8x16xf32>
    %59 = arith.subf %57, %58 : vector<8x16xf32>
    %60 = arith.mulf %45, %40 : vector<8x16xf32>
    %61 = arith.mulf %44, %41 : vector<8x16xf32>
    %62 = arith.addf %60, %61 : vector<8x16xf32>
    %63 = tpu.concatenate %59, %62 in 1 : vector<8x16xf32>, vector<8x16xf32> -> vector<8x32xf32>
    %64 = arith.truncf %63 : vector<8x32xf32> to vector<8x32xbf16>
    %c0_33 = arith.constant 0 : index
    %c0_34 = arith.constant 0 : index
    %c0_35 = arith.constant 0 : index
    %c0_36 = arith.constant 0 : index
    %65 = vector.load %arg14[%c0_33, %c0_34, %c0_35, %c0_36] : memref<1x4x8x32xbf16, #tpu.memory_space<vmem>>, vector<1x1x8x32xbf16>
    %66 = vector.shape_cast %65 : vector<1x1x8x32xbf16> to vector<8x32xbf16>
    %67 = vector.shape_cast %64 : vector<8x32xbf16> to vector<1x1x8x32xbf16>
    tpu.vector_store %arg14[%c0_33, %c0_34, %c0_35, %c0_36], %67 {strides = array<i32>} : memref<1x4x8x32xbf16, #tpu.memory_space<vmem>>, vector<1x1x8x32xbf16>,
    %68 = vector.extract_strided_slice %39 {offsets = [0, 0], sizes = [8, 32], strides = [1, 1]} : vector<8x128xf32> to vector<8x32xf32>
    %69 = arith.truncf %68 : vector<8x32xf32> to vector<8x32xbf16>
    %c0_37 = arith.constant 0 : index
    %c0_38 = arith.constant 0 : index
    %c0_39 = arith.constant 0 : index
    %c0_40 = arith.constant 0 : index
    %70 = vector.load %arg15[%c0_37, %c0_38, %c0_39, %c0_40] : memref<1x4x8x32xbf16, #tpu.memory_space<vmem>>, vector<1x1x8x32xbf16>
    %71 = vector.shape_cast %70 : vector<1x1x8x32xbf16> to vector<8x32xbf16>
    %72 = vector.shape_cast %69 : vector<8x32xbf16> to vector<1x1x8x32xbf16>
    tpu.vector_store %arg15[%c0_37, %c0_38, %c0_39, %c0_40], %72 {strides = array<i32>} : memref<1x4x8x32xbf16, #tpu.memory_space<vmem>>, vector<1x1x8x32xbf16>,
    %73 = vector.extract_strided_slice %29 {offsets = [0, 32], sizes = [8, 16], strides = [1, 1]} : vector<8x128xf32> to vector<8x16xf32>
    %74 = vector.extract_strided_slice %29 {offsets = [0, 48], sizes = [8, 16], strides = [1, 1]} : vector<8x128xf32> to vector<8x16xf32>
    %75 = vector.extract_strided_slice %34 {offsets = [0, 32], sizes = [8, 16], strides = [1, 1]} : vector<8x128xf32> to vector<8x16xf32>
    %76 = vector.extract_strided_slice %34 {offsets = [0, 48], sizes = [8, 16], strides = [1, 1]} : vector<8x128xf32> to vector<8x16xf32>
    %77 = arith.mulf %73, %40 : vector<8x16xf32>
    %78 = arith.mulf %74, %41 : vector<8x16xf32>
    %79 = arith.subf %77, %78 : vector<8x16xf32>
    %80 = arith.mulf %74, %40 : vector<8x16xf32>
    %81 = arith.mulf %73, %41 : vector<8x16xf32>
    %82 = arith.addf %80, %81 : vector<8x16xf32>
    %83 = tpu.concatenate %79, %82 in 1 : vector<8x16xf32>, vector<8x16xf32> -> vector<8x32xf32>
    %84 = arith.truncf %83 : vector<8x32xf32> to vector<8x32xbf16>
    %c0_41 = arith.constant 0 : index
    %c1 = arith.constant 1 : index
    %c0_42 = arith.constant 0 : index
    %c0_43 = arith.constant 0 : index
    %85 = vector.load %arg13[%c0_41, %c1, %c0_42, %c0_43] : memref<1x4x8x32xbf16, #tpu.memory_space<vmem>>, vector<1x1x8x32xbf16>
    %86 = vector.shape_cast %85 : vector<1x1x8x32xbf16> to vector<8x32xbf16>
    %87 = vector.shape_cast %84 : vector<8x32xbf16> to vector<1x1x8x32xbf16>
    tpu.vector_store %arg13[%c0_41, %c1, %c0_42, %c0_43], %87 {strides = array<i32>} : memref<1x4x8x32xbf16, #tpu.memory_space<vmem>>, vector<1x1x8x32xbf16>,
    %88 = arith.mulf %75, %40 : vector<8x16xf32>
    %89 = arith.mulf %76, %41 : vector<8x16xf32>
    %90 = arith.subf %88, %89 : vector<8x16xf32>
    %91 = arith.mulf %76, %40 : vector<8x16xf32>
    %92 = arith.mulf %75, %41 : vector<8x16xf32>
    %93 = arith.addf %91, %92 : vector<8x16xf32>
    %94 = tpu.concatenate %90, %93 in 1 : vector<8x16xf32>, vector<8x16xf32> -> vector<8x32xf32>
    %95 = arith.truncf %94 : vector<8x32xf32> to vector<8x32xbf16>
    %c0_44 = arith.constant 0 : index
    %c1_45 = arith.constant 1 : index
    %c0_46 = arith.constant 0 : index
    %c0_47 = arith.constant 0 : index
    %96 = vector.load %arg14[%c0_44, %c1_45, %c0_46, %c0_47] : memref<1x4x8x32xbf16, #tpu.memory_space<vmem>>, vector<1x1x8x32xbf16>
    %97 = vector.shape_cast %96 : vector<1x1x8x32xbf16> to vector<8x32xbf16>
    %98 = vector.shape_cast %95 : vector<8x32xbf16> to vector<1x1x8x32xbf16>
    tpu.vector_store %arg14[%c0_44, %c1_45, %c0_46, %c0_47], %98 {strides = array<i32>} : memref<1x4x8x32xbf16, #tpu.memory_space<vmem>>, vector<1x1x8x32xbf16>,
    %99 = vector.extract_strided_slice %39 {offsets = [0, 32], sizes = [8, 32], strides = [1, 1]} : vector<8x128xf32> to vector<8x32xf32>
    %100 = arith.truncf %99 : vector<8x32xf32> to vector<8x32xbf16>
    %c0_48 = arith.constant 0 : index
    %c1_49 = arith.constant 1 : index
    %c0_50 = arith.constant 0 : index
    %c0_51 = arith.constant 0 : index
    %101 = vector.load %arg15[%c0_48, %c1_49, %c0_50, %c0_51] : memref<1x4x8x32xbf16, #tpu.memory_space<vmem>>, vector<1x1x8x32xbf16>
    %102 = vector.shape_cast %101 : vector<1x1x8x32xbf16> to vector<8x32xbf16>
    %103 = vector.shape_cast %100 : vector<8x32xbf16> to vector<1x1x8x32xbf16>
    tpu.vector_store %arg15[%c0_48, %c1_49, %c0_50, %c0_51], %103 {strides = array<i32>} : memref<1x4x8x32xbf16, #tpu.memory_space<vmem>>, vector<1x1x8x32xbf16>,
    %104 = vector.extract_strided_slice %29 {offsets = [0, 64], sizes = [8, 16], strides = [1, 1]} : vector<8x128xf32> to vector<8x16xf32>
    %105 = vector.extract_strided_slice %29 {offsets = [0, 80], sizes = [8, 16], strides = [1, 1]} : vector<8x128xf32> to vector<8x16xf32>
    %106 = vector.extract_strided_slice %34 {offsets = [0, 64], sizes = [8, 16], strides = [1, 1]} : vector<8x128xf32> to vector<8x16xf32>
    %107 = vector.extract_strided_slice %34 {offsets = [0, 80], sizes = [8, 16], strides = [1, 1]} : vector<8x128xf32> to vector<8x16xf32>
    %108 = arith.mulf %104, %40 : vector<8x16xf32>
    %109 = arith.mulf %105, %41 : vector<8x16xf32>
    %110 = arith.subf %108, %109 : vector<8x16xf32>
    %111 = arith.mulf %105, %40 : vector<8x16xf32>
    %112 = arith.mulf %104, %41 : vector<8x16xf32>
    %113 = arith.addf %111, %112 : vector<8x16xf32>
    %114 = tpu.concatenate %110, %113 in 1 : vector<8x16xf32>, vector<8x16xf32> -> vector<8x32xf32>
    %115 = arith.truncf %114 : vector<8x32xf32> to vector<8x32xbf16>
    %c0_52 = arith.constant 0 : index
    %c2 = arith.constant 2 : index
    %c0_53 = arith.constant 0 : index
    %c0_54 = arith.constant 0 : index
    %116 = vector.load %arg13[%c0_52, %c2, %c0_53, %c0_54] : memref<1x4x8x32xbf16, #tpu.memory_space<vmem>>, vector<1x1x8x32xbf16>
    %117 = vector.shape_cast %116 : vector<1x1x8x32xbf16> to vector<8x32xbf16>
    %118 = vector.shape_cast %115 : vector<8x32xbf16> to vector<1x1x8x32xbf16>
    tpu.vector_store %arg13[%c0_52, %c2, %c0_53, %c0_54], %118 {strides = array<i32>} : memref<1x4x8x32xbf16, #tpu.memory_space<vmem>>, vector<1x1x8x32xbf16>,
    %119 = arith.mulf %106, %40 : vector<8x16xf32>
    %120 = arith.mulf %107, %41 : vector<8x16xf32>
    %121 = arith.subf %119, %120 : vector<8x16xf32>
    %122 = arith.mulf %107, %40 : vector<8x16xf32>
    %123 = arith.mulf %106, %41 : vector<8x16xf32>
    %124 = arith.addf %122, %123 : vector<8x16xf32>
    %125 = tpu.concatenate %121, %124 in 1 : vector<8x16xf32>, vector<8x16xf32> -> vector<8x32xf32>
    %126 = arith.truncf %125 : vector<8x32xf32> to vector<8x32xbf16>
    %c0_55 = arith.constant 0 : index
    %c2_56 = arith.constant 2 : index
    %c0_57 = arith.constant 0 : index
    %c0_58 = arith.constant 0 : index
    %127 = vector.load %arg14[%c0_55, %c2_56, %c0_57, %c0_58] : memref<1x4x8x32xbf16, #tpu.memory_space<vmem>>, vector<1x1x8x32xbf16>
    %128 = vector.shape_cast %127 : vector<1x1x8x32xbf16> to vector<8x32xbf16>
    %129 = vector.shape_cast %126 : vector<8x32xbf16> to vector<1x1x8x32xbf16>
    tpu.vector_store %arg14[%c0_55, %c2_56, %c0_57, %c0_58], %129 {strides = array<i32>} : memref<1x4x8x32xbf16, #tpu.memory_space<vmem>>, vector<1x1x8x32xbf16>,
    %130 = vector.extract_strided_slice %39 {offsets = [0, 64], sizes = [8, 32], strides = [1, 1]} : vector<8x128xf32> to vector<8x32xf32>
    %131 = arith.truncf %130 : vector<8x32xf32> to vector<8x32xbf16>
    %c0_59 = arith.constant 0 : index
    %c2_60 = arith.constant 2 : index
    %c0_61 = arith.constant 0 : index
    %c0_62 = arith.constant 0 : index
    %132 = vector.load %arg15[%c0_59, %c2_60, %c0_61, %c0_62] : memref<1x4x8x32xbf16, #tpu.memory_space<vmem>>, vector<1x1x8x32xbf16>
    %133 = vector.shape_cast %132 : vector<1x1x8x32xbf16> to vector<8x32xbf16>
    %134 = vector.shape_cast %131 : vector<8x32xbf16> to vector<1x1x8x32xbf16>
    tpu.vector_store %arg15[%c0_59, %c2_60, %c0_61, %c0_62], %134 {strides = array<i32>} : memref<1x4x8x32xbf16, #tpu.memory_space<vmem>>, vector<1x1x8x32xbf16>,
    %135 = vector.extract_strided_slice %29 {offsets = [0, 96], sizes = [8, 16], strides = [1, 1]} : vector<8x128xf32> to vector<8x16xf32>
    %136 = vector.extract_strided_slice %29 {offsets = [0, 112], sizes = [8, 16], strides = [1, 1]} : vector<8x128xf32> to vector<8x16xf32>
    %137 = vector.extract_strided_slice %34 {offsets = [0, 96], sizes = [8, 16], strides = [1, 1]} : vector<8x128xf32> to vector<8x16xf32>
    %138 = vector.extract_strided_slice %34 {offsets = [0, 112], sizes = [8, 16], strides = [1, 1]} : vector<8x128xf32> to vector<8x16xf32>
    %139 = arith.mulf %135, %40 : vector<8x16xf32>
    %140 = arith.mulf %136, %41 : vector<8x16xf32>
    %141 = arith.subf %139, %140 : vector<8x16xf32>
    %142 = arith.mulf %136, %40 : vector<8x16xf32>
    %143 = arith.mulf %135, %41 : vector<8x16xf32>
    %144 = arith.addf %142, %143 : vector<8x16xf32>
    %145 = tpu.concatenate %141, %144 in 1 : vector<8x16xf32>, vector<8x16xf32> -> vector<8x32xf32>
    %146 = arith.truncf %145 : vector<8x32xf32> to vector<8x32xbf16>
    %c0_63 = arith.constant 0 : index
    %c3 = arith.constant 3 : index
    %c0_64 = arith.constant 0 : index
    %c0_65 = arith.constant 0 : index
    %147 = vector.load %arg13[%c0_63, %c3, %c0_64, %c0_65] : memref<1x4x8x32xbf16, #tpu.memory_space<vmem>>, vector<1x1x8x32xbf16>
    %148 = vector.shape_cast %147 : vector<1x1x8x32xbf16> to vector<8x32xbf16>
    %149 = vector.shape_cast %146 : vector<8x32xbf16> to vector<1x1x8x32xbf16>
    tpu.vector_store %arg13[%c0_63, %c3, %c0_64, %c0_65], %149 {strides = array<i32>} : memref<1x4x8x32xbf16, #tpu.memory_space<vmem>>, vector<1x1x8x32xbf16>,
    %150 = arith.mulf %137, %40 : vector<8x16xf32>
    %151 = arith.mulf %138, %41 : vector<8x16xf32>
    %152 = arith.subf %150, %151 : vector<8x16xf32>
    %153 = arith.mulf %138, %40 : vector<8x16xf32>
    %154 = arith.mulf %137, %41 : vector<8x16xf32>
    %155 = arith.addf %153, %154 : vector<8x16xf32>
    %156 = tpu.concatenate %152, %155 in 1 : vector<8x16xf32>, vector<8x16xf32> -> vector<8x32xf32>
    %157 = arith.truncf %156 : vector<8x32xf32> to vector<8x32xbf16>
    %c0_66 = arith.constant 0 : index
    %c3_67 = arith.constant 3 : index
    %c0_68 = arith.constant 0 : index
    %c0_69 = arith.constant 0 : index
    %158 = vector.load %arg14[%c0_66, %c3_67, %c0_68, %c0_69] : memref<1x4x8x32xbf16, #tpu.memory_space<vmem>>, vector<1x1x8x32xbf16>
    %159 = vector.shape_cast %158 : vector<1x1x8x32xbf16> to vector<8x32xbf16>
    %160 = vector.shape_cast %157 : vector<8x32xbf16> to vector<1x1x8x32xbf16>
    tpu.vector_store %arg14[%c0_66, %c3_67, %c0_68, %c0_69], %160 {strides = array<i32>} : memref<1x4x8x32xbf16, #tpu.memory_space<vmem>>, vector<1x1x8x32xbf16>,
    %161 = vector.extract_strided_slice %39 {offsets = [0, 96], sizes = [8, 32], strides = [1, 1]} : vector<8x128xf32> to vector<8x32xf32>
    %162 = arith.truncf %161 : vector<8x32xf32> to vector<8x32xbf16>
    %c0_70 = arith.constant 0 : index
    %c3_71 = arith.constant 3 : index
    %c0_72 = arith.constant 0 : index
    %c0_73 = arith.constant 0 : index
    %163 = vector.load %arg15[%c0_70, %c3_71, %c0_72, %c0_73] : memref<1x4x8x32xbf16, #tpu.memory_space<vmem>>, vector<1x1x8x32xbf16>
    %164 = vector.shape_cast %163 : vector<1x1x8x32xbf16> to vector<8x32xbf16>
    %165 = vector.shape_cast %162 : vector<8x32xbf16> to vector<1x1x8x32xbf16>
    tpu.vector_store %arg15[%c0_70, %c3_71, %c0_72, %c0_73], %165 {strides = array<i32>} : memref<1x4x8x32xbf16, #tpu.memory_space<vmem>>, vector<1x1x8x32xbf16>,
    return
  }
  func.func @transform_0(%arg0: i32, %arg1: i32) -> (i32, i32, i32) {
    %c0_i32 = arith.constant 0 : i32
    %c0_i32_0 = arith.constant 0 : i32
    return %arg0, %arg1, %c0_i32 : i32, i32, i32
  }
  func.func @transform_1(%arg0: i32, %arg1: i32) -> (i32, i32) {
    %c0_i32 = arith.constant 0 : i32
    %c0_i32_0 = arith.constant 0 : i32
    %c0_i32_1 = arith.constant 0 : i32
    return %c0_i32, %c0_i32_0 : i32, i32
  }
  func.func @transform_2(%arg0: i32, %arg1: i32) -> (i32, i32) {
    %c0_i32 = arith.constant 0 : i32
    %c0_i32_0 = arith.constant 0 : i32
    %c0_i32_1 = arith.constant 0 : i32
    return %c0_i32, %c0_i32_0 : i32, i32
  }
  func.func @transform_3(%arg0: i32, %arg1: i32) -> (i32, i32) {
    %c0_i32 = arith.constant 0 : i32
    %c0_i32_0 = arith.constant 0 : i32
    %c0_i32_1 = arith.constant 0 : i32
    return %c0_i32, %c0_i32_0 : i32, i32
  }
  func.func @transform_4(%arg0: i32, %arg1: i32) -> (i32, i32) {
    %c0_i32 = arith.constant 0 : i32
    %c0_i32_0 = arith.constant 0 : i32
    %c0_i32_1 = arith.constant 0 : i32
    return %c0_i32, %c0_i32_0 : i32, i32
  }
  func.func @transform_5(%arg0: i32, %arg1: i32) -> (i32, i32) {
    %c0_i32 = arith.constant 0 : i32
    %c0_i32_0 = arith.constant 0 : i32
    %c0_i32_1 = arith.constant 0 : i32
    return %c0_i32, %c0_i32_0 : i32, i32
  }
  func.func @transform_6(%arg0: i32, %arg1: i32) -> (i32, i32) {
    %c0_i32 = arith.constant 0 : i32
    %c0_i32_0 = arith.constant 0 : i32
    %c0_i32_1 = arith.constant 0 : i32
    return %c0_i32, %c0_i32_0 : i32, i32
  }
  func.func @transform_7(%arg0: i32, %arg1: i32) -> (i32, i32) {
    %c0_i32 = arith.constant 0 : i32
    %c0_i32_0 = arith.constant 0 : i32
    %c0_i32_1 = arith.constant 0 : i32
    return %c0_i32, %c0_i32_0 : i32, i32
  }
  func.func @transform_8(%arg0: i32, %arg1: i32) -> (i32, i32) {
    %c0_i32 = arith.constant 0 : i32
    %c0_i32_0 = arith.constant 0 : i32
    %c0_i32_1 = arith.constant 0 : i32
    return %c0_i32, %c0_i32_0 : i32, i32
  }
  func.func @transform_9(%arg0: i32, %arg1: i32) -> (i32, i32) {
    %c0_i32 = arith.constant 0 : i32
    %c0_i32_0 = arith.constant 0 : i32
    return %arg1, %c0_i32 : i32, i32
  }
  func.func @transform_10(%arg0: i32, %arg1: i32) -> (i32, i32) {
    %c0_i32 = arith.constant 0 : i32
    %c0_i32_0 = arith.constant 0 : i32
    return %arg1, %c0_i32 : i32, i32
  }
  func.func @transform_11(%arg0: i32, %arg1: i32) -> (i32, i32, i32, i32) {
    %c0_i32 = arith.constant 0 : i32
    %c0_i32_0 = arith.constant 0 : i32
    %c0_i32_1 = arith.constant 0 : i32
    return %arg0, %c0_i32, %arg1, %c0_i32_0 : i32, i32, i32, i32
  }
  func.func @transform_12(%arg0: i32, %arg1: i32) -> (i32, i32, i32, i32) {
    %c0_i32 = arith.constant 0 : i32
    %c0_i32_0 = arith.constant 0 : i32
    %c0_i32_1 = arith.constant 0 : i32
    return %arg0, %c0_i32, %arg1, %c0_i32_0 : i32, i32, i32, i32
  }
  func.func @transform_13(%arg0: i32, %arg1: i32) -> (i32, i32, i32, i32) {
    %c0_i32 = arith.constant 0 : i32
    %c0_i32_0 = arith.constant 0 : i32
    %c0_i32_1 = arith.constant 0 : i32
    return %arg0, %c0_i32, %arg1, %c0_i32_0 : i32, i32, i32, i32
  }
}

module attributes {stable_mosaic.version = 11 : i64} {
  func.func @_outproj_ffn_kernel(%arg0: i32, %arg1: i32, %arg2: i32, %arg3: memref<1x8x128xf32, #tpu.memory_space<vmem>>, %arg4: memref<1x4x8x32xbf16, #tpu.memory_space<vmem>>, %arg5: memref<128x128xbf16, #tpu.memory_space<vmem>>, %arg6: memref<1x128xf32, #tpu.memory_space<vmem>>, %arg7: memref<1x128xf32, #tpu.memory_space<vmem>>, %arg8: memref<1x128xf32, #tpu.memory_space<vmem>>, %arg9: memref<128x512xbf16, #tpu.memory_space<vmem>>, %arg10: memref<1x512xf32, #tpu.memory_space<vmem>>, %arg11: memref<512x128xbf16, #tpu.memory_space<vmem>>, %arg12: memref<1x128xf32, #tpu.memory_space<vmem>>, %arg13: memref<1x8x128xf32, #tpu.memory_space<vmem>>, %arg14: memref<8x128xf32, #tpu.memory_space<vmem>>, %arg15: memref<8x128xbf16, #tpu.memory_space<vmem>>, %arg16: memref<8x128xf32, #tpu.memory_space<vmem>>) attributes {dimension_semantics = [#tpu.dimension_semantics<parallel>, #tpu.dimension_semantics<parallel>, #tpu.dimension_semantics<arbitrary>], iteration_bounds = array<i64: 2, 1, 1>, scalar_prefetch = 0 : i64, scratch_operands = 3 : i64, tpu.core_type = #tpu.core_type<tc>, window_params = [{transform_indices = @transform_0, window_bounds = array<i64: 1, 8, 128>}, {transform_indices = @transform_1, window_bounds = array<i64: 1, 4, 8, 32>}, {pipeline_mode = #tpu.pipeline_mode<synchronous>, transform_indices = @transform_2, window_bounds = array<i64: 128, 128>}, {pipeline_mode = #tpu.pipeline_mode<synchronous>, transform_indices = @transform_3, window_bounds = array<i64: 1, 128>}, {pipeline_mode = #tpu.pipeline_mode<synchronous>, transform_indices = @transform_4, window_bounds = array<i64: 1, 128>}, {pipeline_mode = #tpu.pipeline_mode<synchronous>, transform_indices = @transform_5, window_bounds = array<i64: 1, 128>}, {transform_indices = @transform_6, window_bounds = array<i64: 128, 512>}, {transform_indices = @transform_7, window_bounds = array<i64: 1, 512>}, {transform_indices = @transform_8, window_bounds = array<i64: 512, 128>}, {pipeline_mode = #tpu.pipeline_mode<synchronous>, transform_indices = @transform_9, window_bounds = array<i64: 1, 128>}, {transform_indices = @transform_10, window_bounds = array<i64: 1, 8, 128>}]} {
    %c0_i32 = arith.constant 0 : i32
    %0 = arith.cmpi eq, %arg2, %c0_i32 : i32
    %1 = arith.extui %0 : i1 to i32
    %c0_i32_0 = arith.constant 0 : i32
    %2 = arith.cmpi ne, %1, %c0_i32_0 : i32
    scf.if %2 {
      %c0_30 = arith.constant 0 : index
      %c0_31 = arith.constant 0 : index
      %c0_32 = arith.constant 0 : index
      %c0_33 = arith.constant 0 : index
      %58 = vector.load %arg4[%c0_30, %c0_31, %c0_32, %c0_33] : memref<1x4x8x32xbf16, #tpu.memory_space<vmem>>, vector<1x1x8x32xbf16>
      %59 = vector.shape_cast %58 : vector<1x1x8x32xbf16> to vector<8x32xbf16>
      %c0_34 = arith.constant 0 : index
      %c1 = arith.constant 1 : index
      %c0_35 = arith.constant 0 : index
      %c0_36 = arith.constant 0 : index
      %60 = vector.load %arg4[%c0_34, %c1, %c0_35, %c0_36] : memref<1x4x8x32xbf16, #tpu.memory_space<vmem>>, vector<1x1x8x32xbf16>
      %61 = vector.shape_cast %60 : vector<1x1x8x32xbf16> to vector<8x32xbf16>
      %c0_37 = arith.constant 0 : index
      %c2 = arith.constant 2 : index
      %c0_38 = arith.constant 0 : index
      %c0_39 = arith.constant 0 : index
      %62 = vector.load %arg4[%c0_37, %c2, %c0_38, %c0_39] : memref<1x4x8x32xbf16, #tpu.memory_space<vmem>>, vector<1x1x8x32xbf16>
      %63 = vector.shape_cast %62 : vector<1x1x8x32xbf16> to vector<8x32xbf16>
      %c0_40 = arith.constant 0 : index
      %c3 = arith.constant 3 : index
      %c0_41 = arith.constant 0 : index
      %c0_42 = arith.constant 0 : index
      %64 = vector.load %arg4[%c0_40, %c3, %c0_41, %c0_42] : memref<1x4x8x32xbf16, #tpu.memory_space<vmem>>, vector<1x1x8x32xbf16>
      %65 = vector.shape_cast %64 : vector<1x1x8x32xbf16> to vector<8x32xbf16>
      %66 = tpu.concatenate %59, %61, %63, %65 in 1 : vector<8x32xbf16>, vector<8x32xbf16>, vector<8x32xbf16>, vector<8x32xbf16> -> vector<8x128xbf16>
      %c0_43 = arith.constant 0 : index
      %c0_44 = arith.constant 0 : index
      %67 = vector.load %arg5[%c0_43, %c0_44] : memref<128x128xbf16, #tpu.memory_space<vmem>>, vector<128x128xbf16>
      %cst_45 = arith.constant dense<0.000000e+00> : vector<8x128xf32>
      %68 = tpu.matmul %66, %67, %cst_45 {dimension_numbers = #tpu.dot_dimension_numbers<[1], [0], [0], [1], [0, 0, 1, 1], [], []>} : vector<8x128xbf16>, vector<128x128xbf16>, vector<8x128xf32> -> vector<8x128xf32>
      %c0_46 = arith.constant 0 : index
      %c0_47 = arith.constant 0 : index
      %69 = vector.load %arg6[%c0_46, %c0_47] : memref<1x128xf32, #tpu.memory_space<vmem>>, vector<1x128xf32>
      %70 = vector.broadcast %69 : vector<1x128xf32> to vector<8x128xf32>
      %71 = arith.addf %68, %70 : vector<8x128xf32>
      %c0_48 = arith.constant 0 : index
      %c0_49 = arith.constant 0 : index
      %c0_50 = arith.constant 0 : index
      %72 = vector.load %arg3[%c0_48, %c0_49, %c0_50] : memref<1x8x128xf32, #tpu.memory_space<vmem>>, vector<1x8x128xf32>
      %73 = vector.shape_cast %72 : vector<1x8x128xf32> to vector<8x128xf32>
      %74 = arith.addf %73, %71 : vector<8x128xf32>
      %c0_51 = arith.constant 0 : index
      %c0_52 = arith.constant 0 : index
      %75 = vector.load %arg16[%c0_51, %c0_52] : memref<8x128xf32, #tpu.memory_space<vmem>>, vector<8x128xf32>
      tpu.vector_store %arg16[%c0_51, %c0_52], %74 {strides = array<i32>} : memref<8x128xf32, #tpu.memory_space<vmem>>, vector<8x128xf32>,
      %c0_53 = arith.constant 0 : index
      %c0_54 = arith.constant 0 : index
      %76 = vector.load %arg7[%c0_53, %c0_54] : memref<1x128xf32, #tpu.memory_space<vmem>>, vector<1x128xf32>
      %c0_55 = arith.constant 0 : index
      %c0_56 = arith.constant 0 : index
      %77 = vector.load %arg8[%c0_55, %c0_56] : memref<1x128xf32, #tpu.memory_space<vmem>>, vector<1x128xf32>
      %cst_57 = arith.constant dense<0.000000e+00> : vector<8xf32>
      %78 = vector.multi_reduction <add>, %74, %cst_57 [1] : vector<8x128xf32> to vector<8xf32>
      %79 = vector.shape_cast %78 : vector<8xf32> to vector<8x1xf32>
      %cst_58 = arith.constant 1.280000e+02 : f32
      %80 = vector.broadcast %cst_58 : f32 to vector<8x1xf32>
      %81 = arith.divf %79, %80 : vector<8x1xf32>
      %82 = vector.broadcast %81 : vector<8x1xf32> to vector<8x128xf32>
      %83 = arith.subf %74, %82 : vector<8x128xf32>
      %84 = arith.mulf %83, %83 : vector<8x128xf32>
      %cst_59 = arith.constant dense<0.000000e+00> : vector<8xf32>
      %85 = vector.multi_reduction <add>, %84, %cst_59 [1] : vector<8x128xf32> to vector<8xf32>
      %86 = vector.shape_cast %85 : vector<8xf32> to vector<8x1xf32>
      %cst_60 = arith.constant 1.280000e+02 : f32
      %87 = vector.broadcast %cst_60 : f32 to vector<8x1xf32>
      %88 = arith.divf %86, %87 : vector<8x1xf32>
      %cst_61 = arith.constant 9.99999996E-13 : f32
      %89 = vector.broadcast %cst_61 : f32 to vector<8x1xf32>
      %90 = arith.addf %88, %89 : vector<8x1xf32>
      %91 = math.rsqrt %90 : vector<8x1xf32>
      %92 = vector.broadcast %91 : vector<8x1xf32> to vector<8x128xf32>
      %93 = arith.mulf %83, %92 : vector<8x128xf32>
      %94 = vector.broadcast %76 : vector<1x128xf32> to vector<8x128xf32>
      %95 = arith.mulf %93, %94 : vector<8x128xf32>
      %96 = vector.broadcast %77 : vector<1x128xf32> to vector<8x128xf32>
      %97 = arith.addf %95, %96 : vector<8x128xf32>
      %98 = arith.truncf %97 : vector<8x128xf32> to vector<8x128xbf16>
      %c0_62 = arith.constant 0 : index
      %c0_63 = arith.constant 0 : index
      %99 = vector.load %arg15[%c0_62, %c0_63] : memref<8x128xbf16, #tpu.memory_space<vmem>>, vector<8x128xbf16>
      tpu.vector_store %arg15[%c0_62, %c0_63], %98 {strides = array<i32>} : memref<8x128xbf16, #tpu.memory_space<vmem>>, vector<8x128xbf16>,
      %cst_64 = arith.constant 0.000000e+00 : f32
      %100 = vector.broadcast %cst_64 : f32 to vector<8x128xf32>
      %c0_65 = arith.constant 0 : index
      %c0_66 = arith.constant 0 : index
      %101 = vector.load %arg14[%c0_65, %c0_66] : memref<8x128xf32, #tpu.memory_space<vmem>>, vector<8x128xf32>
      tpu.vector_store %arg14[%c0_65, %c0_66], %100 {strides = array<i32>} : memref<8x128xf32, #tpu.memory_space<vmem>>, vector<8x128xf32>,
    } else {
    }
    %c0 = arith.constant 0 : index
    %c0_1 = arith.constant 0 : index
    %3 = vector.load %arg15[%c0, %c0_1] : memref<8x128xbf16, #tpu.memory_space<vmem>>, vector<8x128xbf16>
    %c0_2 = arith.constant 0 : index
    %c0_3 = arith.constant 0 : index
    %4 = vector.load %arg9[%c0_2, %c0_3] : memref<128x512xbf16, #tpu.memory_space<vmem>>, vector<128x512xbf16>
    %cst = arith.constant dense<0.000000e+00> : vector<8x512xf32>
    %5 = tpu.matmul %3, %4, %cst {dimension_numbers = #tpu.dot_dimension_numbers<[1], [0], [0], [1], [0, 0, 1, 1], [], []>} : vector<8x128xbf16>, vector<128x512xbf16>, vector<8x512xf32> -> vector<8x512xf32>
    %c0_4 = arith.constant 0 : index
    %c0_5 = arith.constant 0 : index
    %6 = vector.load %arg10[%c0_4, %c0_5] : memref<1x512xf32, #tpu.memory_space<vmem>>, vector<1x512xf32>
    %7 = vector.broadcast %6 : vector<1x512xf32> to vector<8x512xf32>
    %8 = arith.addf %5, %7 : vector<8x512xf32>
    %cst_6 = arith.constant 5.000000e-01 : f32
    %9 = vector.broadcast %cst_6 : f32 to vector<8x512xf32>
    %10 = arith.mulf %8, %9 : vector<8x512xf32>
    %cst_7 = arith.constant 1.41421354 : f32
    %11 = vector.broadcast %cst_7 : f32 to vector<8x512xf32>
    %12 = arith.divf %8, %11 : vector<8x512xf32>
    %cst_8 = arith.constant 0.000000e+00 : f32
    %13 = vector.broadcast %cst_8 : f32 to vector<8x512xf32>
    %14 = arith.cmpf oge, %12, %13 : vector<8x512xf32>
    %cst_9 = arith.constant 1.000000e+00 : f32
    %cst_10 = arith.constant -1.000000e+00 : f32
    %15 = vector.broadcast %cst_9 : f32 to vector<8x512xf32>
    %16 = vector.broadcast %cst_10 : f32 to vector<8x512xf32>
    %17 = arith.select %14, %15, %16 : vector<8x512xi1>, vector<8x512xf32>
    %18 = math.absf %12 : vector<8x512xf32>
    %cst_11 = arith.constant 0.327591091 : f32
    %19 = vector.broadcast %cst_11 : f32 to vector<8x512xf32>
    %20 = arith.mulf %19, %18 : vector<8x512xf32>
    %cst_12 = arith.constant 1.000000e+00 : f32
    %21 = vector.broadcast %cst_12 : f32 to vector<8x512xf32>
    %22 = arith.addf %21, %20 : vector<8x512xf32>
    %23 = tpu.reciprocal %22 {approx = true} : vector<8x512xf32> -> vector<8x512xf32>
    %cst_13 = arith.constant 1.06140542 : f32
    %24 = vector.broadcast %cst_13 : f32 to vector<8x512xf32>
    %25 = arith.mulf %24, %23 : vector<8x512xf32>
    %cst_14 = arith.constant -1.45315206 : f32
    %26 = vector.broadcast %cst_14 : f32 to vector<8x512xf32>
    %27 = arith.addf %25, %26 : vector<8x512xf32>
    %28 = arith.mulf %27, %23 : vector<8x512xf32>
    %cst_15 = arith.constant 1.42141378 : f32
    %29 = vector.broadcast %cst_15 : f32 to vector<8x512xf32>
    %30 = arith.addf %28, %29 : vector<8x512xf32>
    %31 = arith.mulf %30, %23 : vector<8x512xf32>
    %cst_16 = arith.constant -0.284496725 : f32
    %32 = vector.broadcast %cst_16 : f32 to vector<8x512xf32>
    %33 = arith.addf %31, %32 : vector<8x512xf32>
    %34 = arith.mulf %33, %23 : vector<8x512xf32>
    %cst_17 = arith.constant 0.254829586 : f32
    %35 = vector.broadcast %cst_17 : f32 to vector<8x512xf32>
    %36 = arith.addf %34, %35 : vector<8x512xf32>
    %37 = arith.mulf %36, %23 : vector<8x512xf32>
    %cst_18 = arith.constant 0.000000e+00 : f32
    %38 = vector.broadcast %cst_18 : f32 to vector<8x512xf32>
    %39 = arith.subf %38, %18 : vector<8x512xf32>
    %40 = arith.mulf %39, %18 : vector<8x512xf32>
    %41 = math.exp %40 : vector<8x512xf32>
    %42 = arith.mulf %37, %41 : vector<8x512xf32>
    %cst_19 = arith.constant 1.000000e+00 : f32
    %43 = vector.broadcast %cst_19 : f32 to vector<8x512xf32>
    %44 = arith.subf %43, %42 : vector<8x512xf32>
    %45 = arith.mulf %17, %44 : vector<8x512xf32>
    %cst_20 = arith.constant 1.000000e+00 : f32
    %46 = vector.broadcast %cst_20 : f32 to vector<8x512xf32>
    %47 = arith.addf %46, %45 : vector<8x512xf32>
    %48 = arith.mulf %10, %47 : vector<8x512xf32>
    %49 = arith.truncf %48 : vector<8x512xf32> to vector<8x512xbf16>
    %c0_21 = arith.constant 0 : index
    %c0_22 = arith.constant 0 : index
    %50 = vector.load %arg14[%c0_21, %c0_22] : memref<8x128xf32, #tpu.memory_space<vmem>>, vector<8x128xf32>
    %c0_23 = arith.constant 0 : index
    %c0_24 = arith.constant 0 : index
    %51 = vector.load %arg11[%c0_23, %c0_24] : memref<512x128xbf16, #tpu.memory_space<vmem>>, vector<512x128xbf16>
    %cst_25 = arith.constant dense<0.000000e+00> : vector<8x128xf32>
    %52 = tpu.matmul %49, %51, %cst_25 {dimension_numbers = #tpu.dot_dimension_numbers<[1], [0], [0], [1], [0, 0, 1, 1], [], []>} : vector<8x512xbf16>, vector<512x128xbf16>, vector<8x128xf32> -> vector<8x128xf32>
    %53 = arith.addf %50, %52 : vector<8x128xf32>
    %c0_26 = arith.constant 0 : index
    %c0_27 = arith.constant 0 : index
    %54 = vector.load %arg14[%c0_26, %c0_27] : memref<8x128xf32, #tpu.memory_space<vmem>>, vector<8x128xf32>
    tpu.vector_store %arg14[%c0_26, %c0_27], %53 {strides = array<i32>} : memref<8x128xf32, #tpu.memory_space<vmem>>, vector<8x128xf32>,
    %c0_i32_28 = arith.constant 0 : i32
    %55 = arith.cmpi eq, %arg2, %c0_i32_28 : i32
    %56 = arith.extui %55 : i1 to i32
    %c0_i32_29 = arith.constant 0 : i32
    %57 = arith.cmpi ne, %56, %c0_i32_29 : i32
    scf.if %57 {
      %c0_30 = arith.constant 0 : index
      %c0_31 = arith.constant 0 : index
      %58 = vector.load %arg16[%c0_30, %c0_31] : memref<8x128xf32, #tpu.memory_space<vmem>>, vector<8x128xf32>
      %c0_32 = arith.constant 0 : index
      %c0_33 = arith.constant 0 : index
      %59 = vector.load %arg14[%c0_32, %c0_33] : memref<8x128xf32, #tpu.memory_space<vmem>>, vector<8x128xf32>
      %60 = arith.addf %58, %59 : vector<8x128xf32>
      %c0_34 = arith.constant 0 : index
      %c0_35 = arith.constant 0 : index
      %61 = vector.load %arg12[%c0_34, %c0_35] : memref<1x128xf32, #tpu.memory_space<vmem>>, vector<1x128xf32>
      %62 = vector.broadcast %61 : vector<1x128xf32> to vector<8x128xf32>
      %63 = arith.addf %60, %62 : vector<8x128xf32>
      %c0_36 = arith.constant 0 : index
      %c0_37 = arith.constant 0 : index
      %c0_38 = arith.constant 0 : index
      %64 = vector.load %arg13[%c0_36, %c0_37, %c0_38] : memref<1x8x128xf32, #tpu.memory_space<vmem>>, vector<1x8x128xf32>
      %65 = vector.shape_cast %64 : vector<1x8x128xf32> to vector<8x128xf32>
      %66 = vector.shape_cast %63 : vector<8x128xf32> to vector<1x8x128xf32>
      tpu.vector_store %arg13[%c0_36, %c0_37, %c0_38], %66 {strides = array<i32>} : memref<1x8x128xf32, #tpu.memory_space<vmem>>, vector<1x8x128xf32>,
    } else {
    }
    return
  }
  func.func @transform_0(%arg0: i32, %arg1: i32, %arg2: i32) -> (i32, i32, i32) {
    %c0_i32 = arith.constant 0 : i32
    %c0_i32_0 = arith.constant 0 : i32
    return %arg0, %arg1, %c0_i32 : i32, i32, i32
  }
  func.func @transform_1(%arg0: i32, %arg1: i32, %arg2: i32) -> (i32, i32, i32, i32) {
    %c0_i32 = arith.constant 0 : i32
    %c0_i32_0 = arith.constant 0 : i32
    %c0_i32_1 = arith.constant 0 : i32
    return %arg0, %c0_i32, %arg1, %c0_i32_0 : i32, i32, i32, i32
  }
  func.func @transform_2(%arg0: i32, %arg1: i32, %arg2: i32) -> (i32, i32) {
    %c0_i32 = arith.constant 0 : i32
    %c0_i32_0 = arith.constant 0 : i32
    %c0_i32_1 = arith.constant 0 : i32
    return %c0_i32, %c0_i32_0 : i32, i32
  }
  func.func @transform_3(%arg0: i32, %arg1: i32, %arg2: i32) -> (i32, i32) {
    %c0_i32 = arith.constant 0 : i32
    %c0_i32_0 = arith.constant 0 : i32
    %c0_i32_1 = arith.constant 0 : i32
    return %c0_i32, %c0_i32_0 : i32, i32
  }
  func.func @transform_4(%arg0: i32, %arg1: i32, %arg2: i32) -> (i32, i32) {
    %c0_i32 = arith.constant 0 : i32
    %c0_i32_0 = arith.constant 0 : i32
    %c0_i32_1 = arith.constant 0 : i32
    return %c0_i32, %c0_i32_0 : i32, i32
  }
  func.func @transform_5(%arg0: i32, %arg1: i32, %arg2: i32) -> (i32, i32) {
    %c0_i32 = arith.constant 0 : i32
    %c0_i32_0 = arith.constant 0 : i32
    %c0_i32_1 = arith.constant 0 : i32
    return %c0_i32, %c0_i32_0 : i32, i32
  }
  func.func @transform_6(%arg0: i32, %arg1: i32, %arg2: i32) -> (i32, i32) {
    %c0_i32 = arith.constant 0 : i32
    %c0_i32_0 = arith.constant 0 : i32
    return %c0_i32, %arg2 : i32, i32
  }
  func.func @transform_7(%arg0: i32, %arg1: i32, %arg2: i32) -> (i32, i32) {
    %c0_i32 = arith.constant 0 : i32
    %c0_i32_0 = arith.constant 0 : i32
    return %c0_i32, %arg2 : i32, i32
  }
  func.func @transform_8(%arg0: i32, %arg1: i32, %arg2: i32) -> (i32, i32) {
    %c0_i32 = arith.constant 0 : i32
    %c0_i32_0 = arith.constant 0 : i32
    return %arg2, %c0_i32 : i32, i32
  }
  func.func @transform_9(%arg0: i32, %arg1: i32, %arg2: i32) -> (i32, i32) {
    %c0_i32 = arith.constant 0 : i32
    %c0_i32_0 = arith.constant 0 : i32
    %c0_i32_1 = arith.constant 0 : i32
    return %c0_i32, %c0_i32_0 : i32, i32
  }
  func.func @transform_10(%arg0: i32, %arg1: i32, %arg2: i32) -> (i32, i32, i32) {
    %c0_i32 = arith.constant 0 : i32
    %c0_i32_0 = arith.constant 0 : i32
    return %arg0, %arg1, %c0_i32 : i32, i32, i32
  }
}

module attributes {stable_mosaic.version = 11 : i64} {
  func.func @_qkv_kernel(%arg0: i32, %arg1: i32, %arg2: memref<1x8x128xf32, #tpu.memory_space<vmem>>, %arg3: memref<1x128xf32, #tpu.memory_space<vmem>>, %arg4: memref<1x128xf32, #tpu.memory_space<vmem>>, %arg5: memref<128x128xbf16, #tpu.memory_space<vmem>>, %arg6: memref<1x128xf32, #tpu.memory_space<vmem>>, %arg7: memref<128x128xbf16, #tpu.memory_space<vmem>>, %arg8: memref<1x128xf32, #tpu.memory_space<vmem>>, %arg9: memref<128x128xbf16, #tpu.memory_space<vmem>>, %arg10: memref<1x128xf32, #tpu.memory_space<vmem>>, %arg11: memref<8x16xf32, #tpu.memory_space<vmem>>, %arg12: memref<8x16xf32, #tpu.memory_space<vmem>>, %arg13: memref<1x4x8x32xbf16, #tpu.memory_space<vmem>>, %arg14: memref<1x4x8x32xbf16, #tpu.memory_space<vmem>>, %arg15: memref<1x4x8x32xbf16, #tpu.memory_space<vmem>>) attributes {dimension_semantics = [#tpu.dimension_semantics<parallel>, #tpu.dimension_semantics<parallel>], iteration_bounds = array<i64: 2, 1>, scalar_prefetch = 0 : i64, scratch_operands = 0 : i64, tpu.core_type = #tpu.core_type<tc>, window_params = [{transform_indices = @transform_0, window_bounds = array<i64: 1, 8, 128>}, {pipeline_mode = #tpu.pipeline_mode<synchronous>, transform_indices = @transform_1, window_bounds = array<i64: 1, 128>}, {pipeline_mode = #tpu.pipeline_mode<synchronous>, transform_indices = @transform_2, window_bounds = array<i64: 1, 128>}, {pipeline_mode = #tpu.pipeline_mode<synchronous>, transform_indices = @transform_3, window_bounds = array<i64: 128, 128>}, {pipeline_mode = #tpu.pipeline_mode<synchronous>, transform_indices = @transform_4, window_bounds = array<i64: 1, 128>}, {pipeline_mode = #tpu.pipeline_mode<synchronous>, transform_indices = @transform_5, window_bounds = array<i64: 128, 128>}, {pipeline_mode = #tpu.pipeline_mode<synchronous>, transform_indices = @transform_6, window_bounds = array<i64: 1, 128>}, {pipeline_mode = #tpu.pipeline_mode<synchronous>, transform_indices = @transform_7, window_bounds = array<i64: 128, 128>}, {pipeline_mode = #tpu.pipeline_mode<synchronous>, transform_indices = @transform_8, window_bounds = array<i64: 1, 128>}, {transform_indices = @transform_9, window_bounds = array<i64: 8, 16>}, {transform_indices = @transform_10, window_bounds = array<i64: 8, 16>}, {transform_indices = @transform_11, window_bounds = array<i64: 1, 4, 8, 32>}, {transform_indices = @transform_12, window_bounds = array<i64: 1, 4, 8, 32>}, {transform_indices = @transform_13, window_bounds = array<i64: 1, 4, 8, 32>}]} {
    %c0 = arith.constant 0 : index
    %c0_0 = arith.constant 0 : index
    %c0_1 = arith.constant 0 : index
    %0 = vector.load %arg2[%c0, %c0_0, %c0_1] : memref<1x8x128xf32, #tpu.memory_space<vmem>>, vector<1x8x128xf32>
    %1 = vector.shape_cast %0 : vector<1x8x128xf32> to vector<8x128xf32>
    %c0_2 = arith.constant 0 : index
    %c0_3 = arith.constant 0 : index
    %2 = vector.load %arg3[%c0_2, %c0_3] : memref<1x128xf32, #tpu.memory_space<vmem>>, vector<1x128xf32>
    %c0_4 = arith.constant 0 : index
    %c0_5 = arith.constant 0 : index
    %3 = vector.load %arg4[%c0_4, %c0_5] : memref<1x128xf32, #tpu.memory_space<vmem>>, vector<1x128xf32>
    %cst = arith.constant dense<0.000000e+00> : vector<8xf32>
    %4 = vector.multi_reduction <add>, %1, %cst [1] : vector<8x128xf32> to vector<8xf32>
    %5 = vector.shape_cast %4 : vector<8xf32> to vector<8x1xf32>
    %cst_6 = arith.constant 1.280000e+02 : f32
    %6 = vector.broadcast %cst_6 : f32 to vector<8x1xf32>
    %7 = arith.divf %5, %6 : vector<8x1xf32>
    %8 = vector.broadcast %7 : vector<8x1xf32> to vector<8x128xf32>
    %9 = arith.subf %1, %8 : vector<8x128xf32>
    %10 = arith.mulf %9, %9 : vector<8x128xf32>
    %cst_7 = arith.constant dense<0.000000e+00> : vector<8xf32>
    %11 = vector.multi_reduction <add>, %10, %cst_7 [1] : vector<8x128xf32> to vector<8xf32>
    %12 = vector.shape_cast %11 : vector<8xf32> to vector<8x1xf32>
    %cst_8 = arith.constant 1.280000e+02 : f32
    %13 = vector.broadcast %cst_8 : f32 to vector<8x1xf32>
    %14 = arith.divf %12, %13 : vector<8x1xf32>
    %cst_9 = arith.constant 9.99999996E-13 : f32
    %15 = vector.broadcast %cst_9 : f32 to vector<8x1xf32>
    %16 = arith.addf %14, %15 : vector<8x1xf32>
    %17 = math.rsqrt %16 : vector<8x1xf32>
    %18 = vector.broadcast %17 : vector<8x1xf32> to vector<8x128xf32>
    %19 = arith.mulf %9, %18 : vector<8x128xf32>
    %20 = vector.broadcast %2 : vector<1x128xf32> to vector<8x128xf32>
    %21 = arith.mulf %19, %20 : vector<8x128xf32>
    %22 = vector.broadcast %3 : vector<1x128xf32> to vector<8x128xf32>
    %23 = arith.addf %21, %22 : vector<8x128xf32>
    %24 = arith.truncf %23 : vector<8x128xf32> to vector<8x128xbf16>
    %c0_10 = arith.constant 0 : index
    %c0_11 = arith.constant 0 : index
    %25 = vector.load %arg5[%c0_10, %c0_11] : memref<128x128xbf16, #tpu.memory_space<vmem>>, vector<128x128xbf16>
    %cst_12 = arith.constant dense<0.000000e+00> : vector<8x128xf32>
    %26 = tpu.matmul %24, %25, %cst_12 {dimension_numbers = #tpu.dot_dimension_numbers<[1], [0], [0], [1], [0, 0, 1, 1], [], []>} : vector<8x128xbf16>, vector<128x128xbf16>, vector<8x128xf32> -> vector<8x128xf32>
    %c0_13 = arith.constant 0 : index
    %c0_14 = arith.constant 0 : index
    %27 = vector.load %arg6[%c0_13, %c0_14] : memref<1x128xf32, #tpu.memory_space<vmem>>, vector<1x128xf32>
    %28 = vector.broadcast %27 : vector<1x128xf32> to vector<8x128xf32>
    %29 = arith.addf %26, %28 : vector<8x128xf32>
    %c0_15 = arith.constant 0 : index
    %c0_16 = arith.constant 0 : index
    %30 = vector.load %arg7[%c0_15, %c0_16] : memref<128x128xbf16, #tpu.memory_space<vmem>>, vector<128x128xbf16>
    %cst_17 = arith.constant dense<0.000000e+00> : vector<8x128xf32>
    %31 = tpu.matmul %24, %30, %cst_17 {dimension_numbers = #tpu.dot_dimension_numbers<[1], [0], [0], [1], [0, 0, 1, 1], [], []>} : vector<8x128xbf16>, vector<128x128xbf16>, vector<8x128xf32> -> vector<8x128xf32>
    %c0_18 = arith.constant 0 : index
    %c0_19 = arith.constant 0 : index
    %32 = vector.load %arg8[%c0_18, %c0_19] : memref<1x128xf32, #tpu.memory_space<vmem>>, vector<1x128xf32>
    %33 = vector.broadcast %32 : vector<1x128xf32> to vector<8x128xf32>
    %34 = arith.addf %31, %33 : vector<8x128xf32>
    %c0_20 = arith.constant 0 : index
    %c0_21 = arith.constant 0 : index
    %35 = vector.load %arg9[%c0_20, %c0_21] : memref<128x128xbf16, #tpu.memory_space<vmem>>, vector<128x128xbf16>
    %cst_22 = arith.constant dense<0.000000e+00> : vector<8x128xf32>
    %36 = tpu.matmul %24, %35, %cst_22 {dimension_numbers = #tpu.dot_dimension_numbers<[1], [0], [0], [1], [0, 0, 1, 1], [], []>} : vector<8x128xbf16>, vector<128x128xbf16>, vector<8x128xf32> -> vector<8x128xf32>
    %c0_23 = arith.constant 0 : index
    %c0_24 = arith.constant 0 : index
    %37 = vector.load %arg10[%c0_23, %c0_24] : memref<1x128xf32, #tpu.memory_space<vmem>>, vector<1x128xf32>
    %38 = vector.broadcast %37 : vector<1x128xf32> to vector<8x128xf32>
    %39 = arith.addf %36, %38 : vector<8x128xf32>
    %c0_25 = arith.constant 0 : index
    %c0_26 = arith.constant 0 : index
    %40 = vector.load %arg11[%c0_25, %c0_26] : memref<8x16xf32, #tpu.memory_space<vmem>>, vector<8x16xf32>
    %c0_27 = arith.constant 0 : index
    %c0_28 = arith.constant 0 : index
    %41 = vector.load %arg12[%c0_27, %c0_28] : memref<8x16xf32, #tpu.memory_space<vmem>>, vector<8x16xf32>
    %42 = vector.extract_strided_slice %29 {offsets = [0, 0], sizes = [8, 16], strides = [1, 1]} : vector<8x128xf32> to vector<8x16xf32>
    %43 = vector.extract_strided_slice %29 {offsets = [0, 16], sizes = [8, 16], strides = [1, 1]} : vector<8x128xf32> to vector<8x16xf32>
    %44 = vector.extract_strided_slice %34 {offsets = [0, 0], sizes = [8, 16], strides = [1, 1]} : vector<8x128xf32> to vector<8x16xf32>
    %45 = vector.extract_strided_slice %34 {offsets = [0, 16], sizes = [8, 16], strides = [1, 1]} : vector<8x128xf32> to vector<8x16xf32>
    %46 = arith.mulf %42, %40 : vector<8x16xf32>
    %47 = arith.mulf %43, %41 : vector<8x16xf32>
    %48 = arith.subf %46, %47 : vector<8x16xf32>
    %49 = arith.mulf %43, %40 : vector<8x16xf32>
    %50 = arith.mulf %42, %41 : vector<8x16xf32>
    %51 = arith.addf %49, %50 : vector<8x16xf32>
    %52 = tpu.concatenate %48, %51 in 1 : vector<8x16xf32>, vector<8x16xf32> -> vector<8x32xf32>
    %53 = arith.truncf %52 : vector<8x32xf32> to vector<8x32xbf16>
    %c0_29 = arith.constant 0 : index
    %c0_30 = arith.constant 0 : index
    %c0_31 = arith.constant 0 : index
    %c0_32 = arith.constant 0 : index
    %54 = vector.load %arg13[%c0_29, %c0_30, %c0_31, %c0_32] : memref<1x4x8x32xbf16, #tpu.memory_space<vmem>>, vector<1x1x8x32xbf16>
    %55 = vector.shape_cast %54 : vector<1x1x8x32xbf16> to vector<8x32xbf16>
    %56 = vector.shape_cast %53 : vector<8x32xbf16> to vector<1x1x8x32xbf16>
    tpu.vector_store %arg13[%c0_29, %c0_30, %c0_31, %c0_32], %56 {strides = array<i32>} : memref<1x4x8x32xbf16, #tpu.memory_space<vmem>>, vector<1x1x8x32xbf16>,
    %57 = arith.mulf %44, %40 : vector<8x16xf32>
    %58 = arith.mulf %45, %41 : vector<8x16xf32>
    %59 = arith.subf %57, %58 : vector<8x16xf32>
    %60 = arith.mulf %45, %40 : vector<8x16xf32>
    %61 = arith.mulf %44, %41 : vector<8x16xf32>
    %62 = arith.addf %60, %61 : vector<8x16xf32>
    %63 = tpu.concatenate %59, %62 in 1 : vector<8x16xf32>, vector<8x16xf32> -> vector<8x32xf32>
    %64 = arith.truncf %63 : vector<8x32xf32> to vector<8x32xbf16>
    %c0_33 = arith.constant 0 : index
    %c0_34 = arith.constant 0 : index
    %c0_35 = arith.constant 0 : index
    %c0_36 = arith.constant 0 : index
    %65 = vector.load %arg14[%c0_33, %c0_34, %c0_35, %c0_36] : memref<1x4x8x32xbf16, #tpu.memory_space<vmem>>, vector<1x1x8x32xbf16>
    %66 = vector.shape_cast %65 : vector<1x1x8x32xbf16> to vector<8x32xbf16>
    %67 = vector.shape_cast %64 : vector<8x32xbf16> to vector<1x1x8x32xbf16>
    tpu.vector_store %arg14[%c0_33, %c0_34, %c0_35, %c0_36], %67 {strides = array<i32>} : memref<1x4x8x32xbf16, #tpu.memory_space<vmem>>, vector<1x1x8x32xbf16>,
    %68 = vector.extract_strided_slice %39 {offsets = [0, 0], sizes = [8, 32], strides = [1, 1]} : vector<8x128xf32> to vector<8x32xf32>
    %69 = arith.truncf %68 : vector<8x32xf32> to vector<8x32xbf16>
    %c0_37 = arith.constant 0 : index
    %c0_38 = arith.constant 0 : index
    %c0_39 = arith.constant 0 : index
    %c0_40 = arith.constant 0 : index
    %70 = vector.load %arg15[%c0_37, %c0_38, %c0_39, %c0_40] : memref<1x4x8x32xbf16, #tpu.memory_space<vmem>>, vector<1x1x8x32xbf16>
    %71 = vector.shape_cast %70 : vector<1x1x8x32xbf16> to vector<8x32xbf16>
    %72 = vector.shape_cast %69 : vector<8x32xbf16> to vector<1x1x8x32xbf16>
    tpu.vector_store %arg15[%c0_37, %c0_38, %c0_39, %c0_40], %72 {strides = array<i32>} : memref<1x4x8x32xbf16, #tpu.memory_space<vmem>>, vector<1x1x8x32xbf16>,
    %73 = vector.extract_strided_slice %29 {offsets = [0, 32], sizes = [8, 16], strides = [1, 1]} : vector<8x128xf32> to vector<8x16xf32>
    %74 = vector.extract_strided_slice %29 {offsets = [0, 48], sizes = [8, 16], strides = [1, 1]} : vector<8x128xf32> to vector<8x16xf32>
    %75 = vector.extract_strided_slice %34 {offsets = [0, 32], sizes = [8, 16], strides = [1, 1]} : vector<8x128xf32> to vector<8x16xf32>
    %76 = vector.extract_strided_slice %34 {offsets = [0, 48], sizes = [8, 16], strides = [1, 1]} : vector<8x128xf32> to vector<8x16xf32>
    %77 = arith.mulf %73, %40 : vector<8x16xf32>
    %78 = arith.mulf %74, %41 : vector<8x16xf32>
    %79 = arith.subf %77, %78 : vector<8x16xf32>
    %80 = arith.mulf %74, %40 : vector<8x16xf32>
    %81 = arith.mulf %73, %41 : vector<8x16xf32>
    %82 = arith.addf %80, %81 : vector<8x16xf32>
    %83 = tpu.concatenate %79, %82 in 1 : vector<8x16xf32>, vector<8x16xf32> -> vector<8x32xf32>
    %84 = arith.truncf %83 : vector<8x32xf32> to vector<8x32xbf16>
    %c0_41 = arith.constant 0 : index
    %c1 = arith.constant 1 : index
    %c0_42 = arith.constant 0 : index
    %c0_43 = arith.constant 0 : index
    %85 = vector.load %arg13[%c0_41, %c1, %c0_42, %c0_43] : memref<1x4x8x32xbf16, #tpu.memory_space<vmem>>, vector<1x1x8x32xbf16>
    %86 = vector.shape_cast %85 : vector<1x1x8x32xbf16> to vector<8x32xbf16>
    %87 = vector.shape_cast %84 : vector<8x32xbf16> to vector<1x1x8x32xbf16>
    tpu.vector_store %arg13[%c0_41, %c1, %c0_42, %c0_43], %87 {strides = array<i32>} : memref<1x4x8x32xbf16, #tpu.memory_space<vmem>>, vector<1x1x8x32xbf16>,
    %88 = arith.mulf %75, %40 : vector<8x16xf32>
    %89 = arith.mulf %76, %41 : vector<8x16xf32>
    %90 = arith.subf %88, %89 : vector<8x16xf32>
    %91 = arith.mulf %76, %40 : vector<8x16xf32>
    %92 = arith.mulf %75, %41 : vector<8x16xf32>
    %93 = arith.addf %91, %92 : vector<8x16xf32>
    %94 = tpu.concatenate %90, %93 in 1 : vector<8x16xf32>, vector<8x16xf32> -> vector<8x32xf32>
    %95 = arith.truncf %94 : vector<8x32xf32> to vector<8x32xbf16>
    %c0_44 = arith.constant 0 : index
    %c1_45 = arith.constant 1 : index
    %c0_46 = arith.constant 0 : index
    %c0_47 = arith.constant 0 : index
    %96 = vector.load %arg14[%c0_44, %c1_45, %c0_46, %c0_47] : memref<1x4x8x32xbf16, #tpu.memory_space<vmem>>, vector<1x1x8x32xbf16>
    %97 = vector.shape_cast %96 : vector<1x1x8x32xbf16> to vector<8x32xbf16>
    %98 = vector.shape_cast %95 : vector<8x32xbf16> to vector<1x1x8x32xbf16>
    tpu.vector_store %arg14[%c0_44, %c1_45, %c0_46, %c0_47], %98 {strides = array<i32>} : memref<1x4x8x32xbf16, #tpu.memory_space<vmem>>, vector<1x1x8x32xbf16>,
    %99 = vector.extract_strided_slice %39 {offsets = [0, 32], sizes = [8, 32], strides = [1, 1]} : vector<8x128xf32> to vector<8x32xf32>
    %100 = arith.truncf %99 : vector<8x32xf32> to vector<8x32xbf16>
    %c0_48 = arith.constant 0 : index
    %c1_49 = arith.constant 1 : index
    %c0_50 = arith.constant 0 : index
    %c0_51 = arith.constant 0 : index
    %101 = vector.load %arg15[%c0_48, %c1_49, %c0_50, %c0_51] : memref<1x4x8x32xbf16, #tpu.memory_space<vmem>>, vector<1x1x8x32xbf16>
    %102 = vector.shape_cast %101 : vector<1x1x8x32xbf16> to vector<8x32xbf16>
    %103 = vector.shape_cast %100 : vector<8x32xbf16> to vector<1x1x8x32xbf16>
    tpu.vector_store %arg15[%c0_48, %c1_49, %c0_50, %c0_51], %103 {strides = array<i32>} : memref<1x4x8x32xbf16, #tpu.memory_space<vmem>>, vector<1x1x8x32xbf16>,
    %104 = vector.extract_strided_slice %29 {offsets = [0, 64], sizes = [8, 16], strides = [1, 1]} : vector<8x128xf32> to vector<8x16xf32>
    %105 = vector.extract_strided_slice %29 {offsets = [0, 80], sizes = [8, 16], strides = [1, 1]} : vector<8x128xf32> to vector<8x16xf32>
    %106 = vector.extract_strided_slice %34 {offsets = [0, 64], sizes = [8, 16], strides = [1, 1]} : vector<8x128xf32> to vector<8x16xf32>
    %107 = vector.extract_strided_slice %34 {offsets = [0, 80], sizes = [8, 16], strides = [1, 1]} : vector<8x128xf32> to vector<8x16xf32>
    %108 = arith.mulf %104, %40 : vector<8x16xf32>
    %109 = arith.mulf %105, %41 : vector<8x16xf32>
    %110 = arith.subf %108, %109 : vector<8x16xf32>
    %111 = arith.mulf %105, %40 : vector<8x16xf32>
    %112 = arith.mulf %104, %41 : vector<8x16xf32>
    %113 = arith.addf %111, %112 : vector<8x16xf32>
    %114 = tpu.concatenate %110, %113 in 1 : vector<8x16xf32>, vector<8x16xf32> -> vector<8x32xf32>
    %115 = arith.truncf %114 : vector<8x32xf32> to vector<8x32xbf16>
    %c0_52 = arith.constant 0 : index
    %c2 = arith.constant 2 : index
    %c0_53 = arith.constant 0 : index
    %c0_54 = arith.constant 0 : index
    %116 = vector.load %arg13[%c0_52, %c2, %c0_53, %c0_54] : memref<1x4x8x32xbf16, #tpu.memory_space<vmem>>, vector<1x1x8x32xbf16>
    %117 = vector.shape_cast %116 : vector<1x1x8x32xbf16> to vector<8x32xbf16>
    %118 = vector.shape_cast %115 : vector<8x32xbf16> to vector<1x1x8x32xbf16>
    tpu.vector_store %arg13[%c0_52, %c2, %c0_53, %c0_54], %118 {strides = array<i32>} : memref<1x4x8x32xbf16, #tpu.memory_space<vmem>>, vector<1x1x8x32xbf16>,
    %119 = arith.mulf %106, %40 : vector<8x16xf32>
    %120 = arith.mulf %107, %41 : vector<8x16xf32>
    %121 = arith.subf %119, %120 : vector<8x16xf32>
    %122 = arith.mulf %107, %40 : vector<8x16xf32>
    %123 = arith.mulf %106, %41 : vector<8x16xf32>
    %124 = arith.addf %122, %123 : vector<8x16xf32>
    %125 = tpu.concatenate %121, %124 in 1 : vector<8x16xf32>, vector<8x16xf32> -> vector<8x32xf32>
    %126 = arith.truncf %125 : vector<8x32xf32> to vector<8x32xbf16>
    %c0_55 = arith.constant 0 : index
    %c2_56 = arith.constant 2 : index
    %c0_57 = arith.constant 0 : index
    %c0_58 = arith.constant 0 : index
    %127 = vector.load %arg14[%c0_55, %c2_56, %c0_57, %c0_58] : memref<1x4x8x32xbf16, #tpu.memory_space<vmem>>, vector<1x1x8x32xbf16>
    %128 = vector.shape_cast %127 : vector<1x1x8x32xbf16> to vector<8x32xbf16>
    %129 = vector.shape_cast %126 : vector<8x32xbf16> to vector<1x1x8x32xbf16>
    tpu.vector_store %arg14[%c0_55, %c2_56, %c0_57, %c0_58], %129 {strides = array<i32>} : memref<1x4x8x32xbf16, #tpu.memory_space<vmem>>, vector<1x1x8x32xbf16>,
    %130 = vector.extract_strided_slice %39 {offsets = [0, 64], sizes = [8, 32], strides = [1, 1]} : vector<8x128xf32> to vector<8x32xf32>
    %131 = arith.truncf %130 : vector<8x32xf32> to vector<8x32xbf16>
    %c0_59 = arith.constant 0 : index
    %c2_60 = arith.constant 2 : index
    %c0_61 = arith.constant 0 : index
    %c0_62 = arith.constant 0 : index
    %132 = vector.load %arg15[%c0_59, %c2_60, %c0_61, %c0_62] : memref<1x4x8x32xbf16, #tpu.memory_space<vmem>>, vector<1x1x8x32xbf16>
    %133 = vector.shape_cast %132 : vector<1x1x8x32xbf16> to vector<8x32xbf16>
    %134 = vector.shape_cast %131 : vector<8x32xbf16> to vector<1x1x8x32xbf16>
    tpu.vector_store %arg15[%c0_59, %c2_60, %c0_61, %c0_62], %134 {strides = array<i32>} : memref<1x4x8x32xbf16, #tpu.memory_space<vmem>>, vector<1x1x8x32xbf16>,
    %135 = vector.extract_strided_slice %29 {offsets = [0, 96], sizes = [8, 16], strides = [1, 1]} : vector<8x128xf32> to vector<8x16xf32>
    %136 = vector.extract_strided_slice %29 {offsets = [0, 112], sizes = [8, 16], strides = [1, 1]} : vector<8x128xf32> to vector<8x16xf32>
    %137 = vector.extract_strided_slice %34 {offsets = [0, 96], sizes = [8, 16], strides = [1, 1]} : vector<8x128xf32> to vector<8x16xf32>
    %138 = vector.extract_strided_slice %34 {offsets = [0, 112], sizes = [8, 16], strides = [1, 1]} : vector<8x128xf32> to vector<8x16xf32>
    %139 = arith.mulf %135, %40 : vector<8x16xf32>
    %140 = arith.mulf %136, %41 : vector<8x16xf32>
    %141 = arith.subf %139, %140 : vector<8x16xf32>
    %142 = arith.mulf %136, %40 : vector<8x16xf32>
    %143 = arith.mulf %135, %41 : vector<8x16xf32>
    %144 = arith.addf %142, %143 : vector<8x16xf32>
    %145 = tpu.concatenate %141, %144 in 1 : vector<8x16xf32>, vector<8x16xf32> -> vector<8x32xf32>
    %146 = arith.truncf %145 : vector<8x32xf32> to vector<8x32xbf16>
    %c0_63 = arith.constant 0 : index
    %c3 = arith.constant 3 : index
    %c0_64 = arith.constant 0 : index
    %c0_65 = arith.constant 0 : index
    %147 = vector.load %arg13[%c0_63, %c3, %c0_64, %c0_65] : memref<1x4x8x32xbf16, #tpu.memory_space<vmem>>, vector<1x1x8x32xbf16>
    %148 = vector.shape_cast %147 : vector<1x1x8x32xbf16> to vector<8x32xbf16>
    %149 = vector.shape_cast %146 : vector<8x32xbf16> to vector<1x1x8x32xbf16>
    tpu.vector_store %arg13[%c0_63, %c3, %c0_64, %c0_65], %149 {strides = array<i32>} : memref<1x4x8x32xbf16, #tpu.memory_space<vmem>>, vector<1x1x8x32xbf16>,
    %150 = arith.mulf %137, %40 : vector<8x16xf32>
    %151 = arith.mulf %138, %41 : vector<8x16xf32>
    %152 = arith.subf %150, %151 : vector<8x16xf32>
    %153 = arith.mulf %138, %40 : vector<8x16xf32>
    %154 = arith.mulf %137, %41 : vector<8x16xf32>
    %155 = arith.addf %153, %154 : vector<8x16xf32>
    %156 = tpu.concatenate %152, %155 in 1 : vector<8x16xf32>, vector<8x16xf32> -> vector<8x32xf32>
    %157 = arith.truncf %156 : vector<8x32xf32> to vector<8x32xbf16>
    %c0_66 = arith.constant 0 : index
    %c3_67 = arith.constant 3 : index
    %c0_68 = arith.constant 0 : index
    %c0_69 = arith.constant 0 : index
    %158 = vector.load %arg14[%c0_66, %c3_67, %c0_68, %c0_69] : memref<1x4x8x32xbf16, #tpu.memory_space<vmem>>, vector<1x1x8x32xbf16>
    %159 = vector.shape_cast %158 : vector<1x1x8x32xbf16> to vector<8x32xbf16>
    %160 = vector.shape_cast %157 : vector<8x32xbf16> to vector<1x1x8x32xbf16>
    tpu.vector_store %arg14[%c0_66, %c3_67, %c0_68, %c0_69], %160 {strides = array<i32>} : memref<1x4x8x32xbf16, #tpu.memory_space<vmem>>, vector<1x1x8x32xbf16>,
    %161 = vector.extract_strided_slice %39 {offsets = [0, 96], sizes = [8, 32], strides = [1, 1]} : vector<8x128xf32> to vector<8x32xf32>
    %162 = arith.truncf %161 : vector<8x32xf32> to vector<8x32xbf16>
    %c0_70 = arith.constant 0 : index
    %c3_71 = arith.constant 3 : index
    %c0_72 = arith.constant 0 : index
    %c0_73 = arith.constant 0 : index
    %163 = vector.load %arg15[%c0_70, %c3_71, %c0_72, %c0_73] : memref<1x4x8x32xbf16, #tpu.memory_space<vmem>>, vector<1x1x8x32xbf16>
    %164 = vector.shape_cast %163 : vector<1x1x8x32xbf16> to vector<8x32xbf16>
    %165 = vector.shape_cast %162 : vector<8x32xbf16> to vector<1x1x8x32xbf16>
    tpu.vector_store %arg15[%c0_70, %c3_71, %c0_72, %c0_73], %165 {strides = array<i32>} : memref<1x4x8x32xbf16, #tpu.memory_space<vmem>>, vector<1x1x8x32xbf16>,
    return
  }
  func.func @transform_0(%arg0: i32, %arg1: i32) -> (i32, i32, i32) {
    %c0_i32 = arith.constant 0 : i32
    %c0_i32_0 = arith.constant 0 : i32
    return %arg0, %arg1, %c0_i32 : i32, i32, i32
  }
  func.func @transform_1(%arg0: i32, %arg1: i32) -> (i32, i32) {
    %c0_i32 = arith.constant 0 : i32
    %c0_i32_0 = arith.constant 0 : i32
    %c0_i32_1 = arith.constant 0 : i32
    return %c0_i32, %c0_i32_0 : i32, i32
  }
  func.func @transform_2(%arg0: i32, %arg1: i32) -> (i32, i32) {
    %c0_i32 = arith.constant 0 : i32
    %c0_i32_0 = arith.constant 0 : i32
    %c0_i32_1 = arith.constant 0 : i32
    return %c0_i32, %c0_i32_0 : i32, i32
  }
  func.func @transform_3(%arg0: i32, %arg1: i32) -> (i32, i32) {
    %c0_i32 = arith.constant 0 : i32
    %c0_i32_0 = arith.constant 0 : i32
    %c0_i32_1 = arith.constant 0 : i32
    return %c0_i32, %c0_i32_0 : i32, i32
  }
  func.func @transform_4(%arg0: i32, %arg1: i32) -> (i32, i32) {
    %c0_i32 = arith.constant 0 : i32
    %c0_i32_0 = arith.constant 0 : i32
    %c0_i32_1 = arith.constant 0 : i32
    return %c0_i32, %c0_i32_0 : i32, i32
  }
  func.func @transform_5(%arg0: i32, %arg1: i32) -> (i32, i32) {
    %c0_i32 = arith.constant 0 : i32
    %c0_i32_0 = arith.constant 0 : i32
    %c0_i32_1 = arith.constant 0 : i32
    return %c0_i32, %c0_i32_0 : i32, i32
  }
  func.func @transform_6(%arg0: i32, %arg1: i32) -> (i32, i32) {
    %c0_i32 = arith.constant 0 : i32
    %c0_i32_0 = arith.constant 0 : i32
    %c0_i32_1 = arith.constant 0 : i32
    return %c0_i32, %c0_i32_0 : i32, i32
  }
  func.func @transform_7(%arg0: i32, %arg1: i32) -> (i32, i32) {
    %c0_i32 = arith.constant 0 : i32
    %c0_i32_0 = arith.constant 0 : i32
    %c0_i32_1 = arith.constant 0 : i32
    return %c0_i32, %c0_i32_0 : i32, i32
  }
  func.func @transform_8(%arg0: i32, %arg1: i32) -> (i32, i32) {
    %c0_i32 = arith.constant 0 : i32
    %c0_i32_0 = arith.constant 0 : i32
    %c0_i32_1 = arith.constant 0 : i32
    return %c0_i32, %c0_i32_0 : i32, i32
  }
  func.func @transform_9(%arg0: i32, %arg1: i32) -> (i32, i32) {
    %c0_i32 = arith.constant 0 : i32
    %c0_i32_0 = arith.constant 0 : i32
    return %arg1, %c0_i32 : i32, i32
  }
  func.func @transform_10(%arg0: i32, %arg1: i32) -> (i32, i32) {
    %c0_i32 = arith.constant 0 : i32
    %c0_i32_0 = arith.constant 0 : i32
    return %arg1, %c0_i32 : i32, i32
  }
  func.func @transform_11(%arg0: i32, %arg1: i32) -> (i32, i32, i32, i32) {
    %c0_i32 = arith.constant 0 : i32
    %c0_i32_0 = arith.constant 0 : i32
    %c0_i32_1 = arith.constant 0 : i32
    return %arg0, %c0_i32, %arg1, %c0_i32_0 : i32, i32, i32, i32
  }
  func.func @transform_12(%arg0: i32, %arg1: i32) -> (i32, i32, i32, i32) {
    %c0_i32 = arith.constant 0 : i32
    %c0_i32_0 = arith.constant 0 : i32
    %c0_i32_1 = arith.constant 0 : i32
    return %arg0, %c0_i32, %arg1, %c0_i32_0 : i32, i32, i32, i32
  }
  func.func @transform_13(%arg0: i32, %arg1: i32) -> (i32, i32, i32, i32) {
    %c0_i32 = arith.constant 0 : i32
    %c0_i32_0 = arith.constant 0 : i32
    %c0_i32_1 = arith.constant 0 : i32
    return %arg0, %c0_i32, %arg1, %c0_i32_0 : i32, i32, i32, i32
  }
}

module attributes {stable_mosaic.version = 11 : i64} {
  func.func @_outproj_ffn_kernel(%arg0: i32, %arg1: i32, %arg2: i32, %arg3: memref<1x8x128xf32, #tpu.memory_space<vmem>>, %arg4: memref<1x4x8x32xbf16, #tpu.memory_space<vmem>>, %arg5: memref<128x128xbf16, #tpu.memory_space<vmem>>, %arg6: memref<1x128xf32, #tpu.memory_space<vmem>>, %arg7: memref<1x128xf32, #tpu.memory_space<vmem>>, %arg8: memref<1x128xf32, #tpu.memory_space<vmem>>, %arg9: memref<128x512xbf16, #tpu.memory_space<vmem>>, %arg10: memref<1x512xf32, #tpu.memory_space<vmem>>, %arg11: memref<512x128xbf16, #tpu.memory_space<vmem>>, %arg12: memref<1x128xf32, #tpu.memory_space<vmem>>, %arg13: memref<1x8x128xf32, #tpu.memory_space<vmem>>, %arg14: memref<8x128xf32, #tpu.memory_space<vmem>>, %arg15: memref<8x128xbf16, #tpu.memory_space<vmem>>, %arg16: memref<8x128xf32, #tpu.memory_space<vmem>>) attributes {dimension_semantics = [#tpu.dimension_semantics<parallel>, #tpu.dimension_semantics<parallel>, #tpu.dimension_semantics<arbitrary>], iteration_bounds = array<i64: 2, 1, 1>, scalar_prefetch = 0 : i64, scratch_operands = 3 : i64, tpu.core_type = #tpu.core_type<tc>, window_params = [{transform_indices = @transform_0, window_bounds = array<i64: 1, 8, 128>}, {transform_indices = @transform_1, window_bounds = array<i64: 1, 4, 8, 32>}, {pipeline_mode = #tpu.pipeline_mode<synchronous>, transform_indices = @transform_2, window_bounds = array<i64: 128, 128>}, {pipeline_mode = #tpu.pipeline_mode<synchronous>, transform_indices = @transform_3, window_bounds = array<i64: 1, 128>}, {pipeline_mode = #tpu.pipeline_mode<synchronous>, transform_indices = @transform_4, window_bounds = array<i64: 1, 128>}, {pipeline_mode = #tpu.pipeline_mode<synchronous>, transform_indices = @transform_5, window_bounds = array<i64: 1, 128>}, {transform_indices = @transform_6, window_bounds = array<i64: 128, 512>}, {transform_indices = @transform_7, window_bounds = array<i64: 1, 512>}, {transform_indices = @transform_8, window_bounds = array<i64: 512, 128>}, {pipeline_mode = #tpu.pipeline_mode<synchronous>, transform_indices = @transform_9, window_bounds = array<i64: 1, 128>}, {transform_indices = @transform_10, window_bounds = array<i64: 1, 8, 128>}]} {
    %c0_i32 = arith.constant 0 : i32
    %0 = arith.cmpi eq, %arg2, %c0_i32 : i32
    %1 = arith.extui %0 : i1 to i32
    %c0_i32_0 = arith.constant 0 : i32
    %2 = arith.cmpi ne, %1, %c0_i32_0 : i32
    scf.if %2 {
      %c0_30 = arith.constant 0 : index
      %c0_31 = arith.constant 0 : index
      %c0_32 = arith.constant 0 : index
      %c0_33 = arith.constant 0 : index
      %58 = vector.load %arg4[%c0_30, %c0_31, %c0_32, %c0_33] : memref<1x4x8x32xbf16, #tpu.memory_space<vmem>>, vector<1x1x8x32xbf16>
      %59 = vector.shape_cast %58 : vector<1x1x8x32xbf16> to vector<8x32xbf16>
      %c0_34 = arith.constant 0 : index
      %c1 = arith.constant 1 : index
      %c0_35 = arith.constant 0 : index
      %c0_36 = arith.constant 0 : index
      %60 = vector.load %arg4[%c0_34, %c1, %c0_35, %c0_36] : memref<1x4x8x32xbf16, #tpu.memory_space<vmem>>, vector<1x1x8x32xbf16>
      %61 = vector.shape_cast %60 : vector<1x1x8x32xbf16> to vector<8x32xbf16>
      %c0_37 = arith.constant 0 : index
      %c2 = arith.constant 2 : index
      %c0_38 = arith.constant 0 : index
      %c0_39 = arith.constant 0 : index
      %62 = vector.load %arg4[%c0_37, %c2, %c0_38, %c0_39] : memref<1x4x8x32xbf16, #tpu.memory_space<vmem>>, vector<1x1x8x32xbf16>
      %63 = vector.shape_cast %62 : vector<1x1x8x32xbf16> to vector<8x32xbf16>
      %c0_40 = arith.constant 0 : index
      %c3 = arith.constant 3 : index
      %c0_41 = arith.constant 0 : index
      %c0_42 = arith.constant 0 : index
      %64 = vector.load %arg4[%c0_40, %c3, %c0_41, %c0_42] : memref<1x4x8x32xbf16, #tpu.memory_space<vmem>>, vector<1x1x8x32xbf16>
      %65 = vector.shape_cast %64 : vector<1x1x8x32xbf16> to vector<8x32xbf16>
      %66 = tpu.concatenate %59, %61, %63, %65 in 1 : vector<8x32xbf16>, vector<8x32xbf16>, vector<8x32xbf16>, vector<8x32xbf16> -> vector<8x128xbf16>
      %c0_43 = arith.constant 0 : index
      %c0_44 = arith.constant 0 : index
      %67 = vector.load %arg5[%c0_43, %c0_44] : memref<128x128xbf16, #tpu.memory_space<vmem>>, vector<128x128xbf16>
      %cst_45 = arith.constant dense<0.000000e+00> : vector<8x128xf32>
      %68 = tpu.matmul %66, %67, %cst_45 {dimension_numbers = #tpu.dot_dimension_numbers<[1], [0], [0], [1], [0, 0, 1, 1], [], []>} : vector<8x128xbf16>, vector<128x128xbf16>, vector<8x128xf32> -> vector<8x128xf32>
      %c0_46 = arith.constant 0 : index
      %c0_47 = arith.constant 0 : index
      %69 = vector.load %arg6[%c0_46, %c0_47] : memref<1x128xf32, #tpu.memory_space<vmem>>, vector<1x128xf32>
      %70 = vector.broadcast %69 : vector<1x128xf32> to vector<8x128xf32>
      %71 = arith.addf %68, %70 : vector<8x128xf32>
      %c0_48 = arith.constant 0 : index
      %c0_49 = arith.constant 0 : index
      %c0_50 = arith.constant 0 : index
      %72 = vector.load %arg3[%c0_48, %c0_49, %c0_50] : memref<1x8x128xf32, #tpu.memory_space<vmem>>, vector<1x8x128xf32>
      %73 = vector.shape_cast %72 : vector<1x8x128xf32> to vector<8x128xf32>
      %74 = arith.addf %73, %71 : vector<8x128xf32>
      %c0_51 = arith.constant 0 : index
      %c0_52 = arith.constant 0 : index
      %75 = vector.load %arg16[%c0_51, %c0_52] : memref<8x128xf32, #tpu.memory_space<vmem>>, vector<8x128xf32>
      tpu.vector_store %arg16[%c0_51, %c0_52], %74 {strides = array<i32>} : memref<8x128xf32, #tpu.memory_space<vmem>>, vector<8x128xf32>,
      %c0_53 = arith.constant 0 : index
      %c0_54 = arith.constant 0 : index
      %76 = vector.load %arg7[%c0_53, %c0_54] : memref<1x128xf32, #tpu.memory_space<vmem>>, vector<1x128xf32>
      %c0_55 = arith.constant 0 : index
      %c0_56 = arith.constant 0 : index
      %77 = vector.load %arg8[%c0_55, %c0_56] : memref<1x128xf32, #tpu.memory_space<vmem>>, vector<1x128xf32>
      %cst_57 = arith.constant dense<0.000000e+00> : vector<8xf32>
      %78 = vector.multi_reduction <add>, %74, %cst_57 [1] : vector<8x128xf32> to vector<8xf32>
      %79 = vector.shape_cast %78 : vector<8xf32> to vector<8x1xf32>
      %cst_58 = arith.constant 1.280000e+02 : f32
      %80 = vector.broadcast %cst_58 : f32 to vector<8x1xf32>
      %81 = arith.divf %79, %80 : vector<8x1xf32>
      %82 = vector.broadcast %81 : vector<8x1xf32> to vector<8x128xf32>
      %83 = arith.subf %74, %82 : vector<8x128xf32>
      %84 = arith.mulf %83, %83 : vector<8x128xf32>
      %cst_59 = arith.constant dense<0.000000e+00> : vector<8xf32>
      %85 = vector.multi_reduction <add>, %84, %cst_59 [1] : vector<8x128xf32> to vector<8xf32>
      %86 = vector.shape_cast %85 : vector<8xf32> to vector<8x1xf32>
      %cst_60 = arith.constant 1.280000e+02 : f32
      %87 = vector.broadcast %cst_60 : f32 to vector<8x1xf32>
      %88 = arith.divf %86, %87 : vector<8x1xf32>
      %cst_61 = arith.constant 9.99999996E-13 : f32
      %89 = vector.broadcast %cst_61 : f32 to vector<8x1xf32>
      %90 = arith.addf %88, %89 : vector<8x1xf32>
      %91 = math.rsqrt %90 : vector<8x1xf32>
      %92 = vector.broadcast %91 : vector<8x1xf32> to vector<8x128xf32>
      %93 = arith.mulf %83, %92 : vector<8x128xf32>
      %94 = vector.broadcast %76 : vector<1x128xf32> to vector<8x128xf32>
      %95 = arith.mulf %93, %94 : vector<8x128xf32>
      %96 = vector.broadcast %77 : vector<1x128xf32> to vector<8x128xf32>
      %97 = arith.addf %95, %96 : vector<8x128xf32>
      %98 = arith.truncf %97 : vector<8x128xf32> to vector<8x128xbf16>
      %c0_62 = arith.constant 0 : index
      %c0_63 = arith.constant 0 : index
      %99 = vector.load %arg15[%c0_62, %c0_63] : memref<8x128xbf16, #tpu.memory_space<vmem>>, vector<8x128xbf16>
      tpu.vector_store %arg15[%c0_62, %c0_63], %98 {strides = array<i32>} : memref<8x128xbf16, #tpu.memory_space<vmem>>, vector<8x128xbf16>,
      %cst_64 = arith.constant 0.000000e+00 : f32
      %100 = vector.broadcast %cst_64 : f32 to vector<8x128xf32>
      %c0_65 = arith.constant 0 : index
      %c0_66 = arith.constant 0 : index
      %101 = vector.load %arg14[%c0_65, %c0_66] : memref<8x128xf32, #tpu.memory_space<vmem>>, vector<8x128xf32>
      tpu.vector_store %arg14[%c0_65, %c0_66], %100 {strides = array<i32>} : memref<8x128xf32, #tpu.memory_space<vmem>>, vector<8x128xf32>,
    } else {
    }
    %c0 = arith.constant 0 : index
    %c0_1 = arith.constant 0 : index
    %3 = vector.load %arg15[%c0, %c0_1] : memref<8x128xbf16, #tpu.memory_space<vmem>>, vector<8x128xbf16>
    %c0_2 = arith.constant 0 : index
    %c0_3 = arith.constant 0 : index
    %4 = vector.load %arg9[%c0_2, %c0_3] : memref<128x512xbf16, #tpu.memory_space<vmem>>, vector<128x512xbf16>
    %cst = arith.constant dense<0.000000e+00> : vector<8x512xf32>
    %5 = tpu.matmul %3, %4, %cst {dimension_numbers = #tpu.dot_dimension_numbers<[1], [0], [0], [1], [0, 0, 1, 1], [], []>} : vector<8x128xbf16>, vector<128x512xbf16>, vector<8x512xf32> -> vector<8x512xf32>
    %c0_4 = arith.constant 0 : index
    %c0_5 = arith.constant 0 : index
    %6 = vector.load %arg10[%c0_4, %c0_5] : memref<1x512xf32, #tpu.memory_space<vmem>>, vector<1x512xf32>
    %7 = vector.broadcast %6 : vector<1x512xf32> to vector<8x512xf32>
    %8 = arith.addf %5, %7 : vector<8x512xf32>
    %cst_6 = arith.constant 5.000000e-01 : f32
    %9 = vector.broadcast %cst_6 : f32 to vector<8x512xf32>
    %10 = arith.mulf %8, %9 : vector<8x512xf32>
    %cst_7 = arith.constant 1.41421354 : f32
    %11 = vector.broadcast %cst_7 : f32 to vector<8x512xf32>
    %12 = arith.divf %8, %11 : vector<8x512xf32>
    %cst_8 = arith.constant 0.000000e+00 : f32
    %13 = vector.broadcast %cst_8 : f32 to vector<8x512xf32>
    %14 = arith.cmpf oge, %12, %13 : vector<8x512xf32>
    %cst_9 = arith.constant 1.000000e+00 : f32
    %cst_10 = arith.constant -1.000000e+00 : f32
    %15 = vector.broadcast %cst_9 : f32 to vector<8x512xf32>
    %16 = vector.broadcast %cst_10 : f32 to vector<8x512xf32>
    %17 = arith.select %14, %15, %16 : vector<8x512xi1>, vector<8x512xf32>
    %18 = math.absf %12 : vector<8x512xf32>
    %cst_11 = arith.constant 0.327591091 : f32
    %19 = vector.broadcast %cst_11 : f32 to vector<8x512xf32>
    %20 = arith.mulf %19, %18 : vector<8x512xf32>
    %cst_12 = arith.constant 1.000000e+00 : f32
    %21 = vector.broadcast %cst_12 : f32 to vector<8x512xf32>
    %22 = arith.addf %21, %20 : vector<8x512xf32>
    %23 = tpu.reciprocal %22 {approx = true} : vector<8x512xf32> -> vector<8x512xf32>
    %cst_13 = arith.constant 1.06140542 : f32
    %24 = vector.broadcast %cst_13 : f32 to vector<8x512xf32>
    %25 = arith.mulf %24, %23 : vector<8x512xf32>
    %cst_14 = arith.constant -1.45315206 : f32
    %26 = vector.broadcast %cst_14 : f32 to vector<8x512xf32>
    %27 = arith.addf %25, %26 : vector<8x512xf32>
    %28 = arith.mulf %27, %23 : vector<8x512xf32>
    %cst_15 = arith.constant 1.42141378 : f32
    %29 = vector.broadcast %cst_15 : f32 to vector<8x512xf32>
    %30 = arith.addf %28, %29 : vector<8x512xf32>
    %31 = arith.mulf %30, %23 : vector<8x512xf32>
    %cst_16 = arith.constant -0.284496725 : f32
    %32 = vector.broadcast %cst_16 : f32 to vector<8x512xf32>
    %33 = arith.addf %31, %32 : vector<8x512xf32>
    %34 = arith.mulf %33, %23 : vector<8x512xf32>
    %cst_17 = arith.constant 0.254829586 : f32
    %35 = vector.broadcast %cst_17 : f32 to vector<8x512xf32>
    %36 = arith.addf %34, %35 : vector<8x512xf32>
    %37 = arith.mulf %36, %23 : vector<8x512xf32>
    %cst_18 = arith.constant 0.000000e+00 : f32
    %38 = vector.broadcast %cst_18 : f32 to vector<8x512xf32>
    %39 = arith.subf %38, %18 : vector<8x512xf32>
    %40 = arith.mulf %39, %18 : vector<8x512xf32>
    %41 = math.exp %40 : vector<8x512xf32>
    %42 = arith.mulf %37, %41 : vector<8x512xf32>
    %cst_19 = arith.constant 1.000000e+00 : f32
    %43 = vector.broadcast %cst_19 : f32 to vector<8x512xf32>
    %44 = arith.subf %43, %42 : vector<8x512xf32>
    %45 = arith.mulf %17, %44 : vector<8x512xf32>
    %cst_20 = arith.constant 1.000000e+00 : f32
    %46 = vector.broadcast %cst_20 : f32 to vector<8x512xf32>
    %47 = arith.addf %46, %45 : vector<8x512xf32>
    %48 = arith.mulf %10, %47 : vector<8x512xf32>
    %49 = arith.truncf %48 : vector<8x512xf32> to vector<8x512xbf16>
    %c0_21 = arith.constant 0 : index
    %c0_22 = arith.constant 0 : index
    %50 = vector.load %arg14[%c0_21, %c0_22] : memref<8x128xf32, #tpu.memory_space<vmem>>, vector<8x128xf32>
    %c0_23 = arith.constant 0 : index
    %c0_24 = arith.constant 0 : index
    %51 = vector.load %arg11[%c0_23, %c0_24] : memref<512x128xbf16, #tpu.memory_space<vmem>>, vector<512x128xbf16>
    %cst_25 = arith.constant dense<0.000000e+00> : vector<8x128xf32>
    %52 = tpu.matmul %49, %51, %cst_25 {dimension_numbers = #tpu.dot_dimension_numbers<[1], [0], [0], [1], [0, 0, 1, 1], [], []>} : vector<8x512xbf16>, vector<512x128xbf16>, vector<8x128xf32> -> vector<8x128xf32>
    %53 = arith.addf %50, %52 : vector<8x128xf32>
    %c0_26 = arith.constant 0 : index
    %c0_27 = arith.constant 0 : index
    %54 = vector.load %arg14[%c0_26, %c0_27] : memref<8x128xf32, #tpu.memory_space<vmem>>, vector<8x128xf32>
    tpu.vector_store %arg14[%c0_26, %c0_27], %53 {strides = array<i32>} : memref<8x128xf32, #tpu.memory_space<vmem>>, vector<8x128xf32>,
    %c0_i32_28 = arith.constant 0 : i32
    %55 = arith.cmpi eq, %arg2, %c0_i32_28 : i32
    %56 = arith.extui %55 : i1 to i32
    %c0_i32_29 = arith.constant 0 : i32
    %57 = arith.cmpi ne, %56, %c0_i32_29 : i32
    scf.if %57 {
      %c0_30 = arith.constant 0 : index
      %c0_31 = arith.constant 0 : index
      %58 = vector.load %arg16[%c0_30, %c0_31] : memref<8x128xf32, #tpu.memory_space<vmem>>, vector<8x128xf32>
      %c0_32 = arith.constant 0 : index
      %c0_33 = arith.constant 0 : index
      %59 = vector.load %arg14[%c0_32, %c0_33] : memref<8x128xf32, #tpu.memory_space<vmem>>, vector<8x128xf32>
      %60 = arith.addf %58, %59 : vector<8x128xf32>
      %c0_34 = arith.constant 0 : index
      %c0_35 = arith.constant 0 : index
      %61 = vector.load %arg12[%c0_34, %c0_35] : memref<1x128xf32, #tpu.memory_space<vmem>>, vector<1x128xf32>
      %62 = vector.broadcast %61 : vector<1x128xf32> to vector<8x128xf32>
      %63 = arith.addf %60, %62 : vector<8x128xf32>
      %c0_36 = arith.constant 0 : index
      %c0_37 = arith.constant 0 : index
      %c0_38 = arith.constant 0 : index
      %64 = vector.load %arg13[%c0_36, %c0_37, %c0_38] : memref<1x8x128xf32, #tpu.memory_space<vmem>>, vector<1x8x128xf32>
      %65 = vector.shape_cast %64 : vector<1x8x128xf32> to vector<8x128xf32>
      %66 = vector.shape_cast %63 : vector<8x128xf32> to vector<1x8x128xf32>
      tpu.vector_store %arg13[%c0_36, %c0_37, %c0_38], %66 {strides = array<i32>} : memref<1x8x128xf32, #tpu.memory_space<vmem>>, vector<1x8x128xf32>,
    } else {
    }
    return
  }
  func.func @transform_0(%arg0: i32, %arg1: i32, %arg2: i32) -> (i32, i32, i32) {
    %c0_i32 = arith.constant 0 : i32
    %c0_i32_0 = arith.constant 0 : i32
    return %arg0, %arg1, %c0_i32 : i32, i32, i32
  }
  func.func @transform_1(%arg0: i32, %arg1: i32, %arg2: i32) -> (i32, i32, i32, i32) {
    %c0_i32 = arith.constant 0 : i32
    %c0_i32_0 = arith.constant 0 : i32
    %c0_i32_1 = arith.constant 0 : i32
    return %arg0, %c0_i32, %arg1, %c0_i32_0 : i32, i32, i32, i32
  }
  func.func @transform_2(%arg0: i32, %arg1: i32, %arg2: i32) -> (i32, i32) {
    %c0_i32 = arith.constant 0 : i32
    %c0_i32_0 = arith.constant 0 : i32
    %c0_i32_1 = arith.constant 0 : i32
    return %c0_i32, %c0_i32_0 : i32, i32
  }
  func.func @transform_3(%arg0: i32, %arg1: i32, %arg2: i32) -> (i32, i32) {
    %c0_i32 = arith.constant 0 : i32
    %c0_i32_0 = arith.constant 0 : i32
    %c0_i32_1 = arith.constant 0 : i32
    return %c0_i32, %c0_i32_0 : i32, i32
  }
  func.func @transform_4(%arg0: i32, %arg1: i32, %arg2: i32) -> (i32, i32) {
    %c0_i32 = arith.constant 0 : i32
    %c0_i32_0 = arith.constant 0 : i32
    %c0_i32_1 = arith.constant 0 : i32
    return %c0_i32, %c0_i32_0 : i32, i32
  }
  func.func @transform_5(%arg0: i32, %arg1: i32, %arg2: i32) -> (i32, i32) {
    %c0_i32 = arith.constant 0 : i32
    %c0_i32_0 = arith.constant 0 : i32
    %c0_i32_1 = arith.constant 0 : i32
    return %c0_i32, %c0_i32_0 : i32, i32
  }
  func.func @transform_6(%arg0: i32, %arg1: i32, %arg2: i32) -> (i32, i32) {
    %c0_i32 = arith.constant 0 : i32
    %c0_i32_0 = arith.constant 0 : i32
    return %c0_i32, %arg2 : i32, i32
  }
  func.func @transform_7(%arg0: i32, %arg1: i32, %arg2: i32) -> (i32, i32) {
    %c0_i32 = arith.constant 0 : i32
    %c0_i32_0 = arith.constant 0 : i32
    return %c0_i32, %arg2 : i32, i32
  }
  func.func @transform_8(%arg0: i32, %arg1: i32, %arg2: i32) -> (i32, i32) {
    %c0_i32 = arith.constant 0 : i32
    %c0_i32_0 = arith.constant 0 : i32
    return %arg2, %c0_i32 : i32, i32
  }
  func.func @transform_9(%arg0: i32, %arg1: i32, %arg2: i32) -> (i32, i32) {
    %c0_i32 = arith.constant 0 : i32
    %c0_i32_0 = arith.constant 0 : i32
    %c0_i32_1 = arith.constant 0 : i32
    return %c0_i32, %c0_i32_0 : i32, i32
  }
  func.func @transform_10(%arg0: i32, %arg1: i32, %arg2: i32) -> (i32, i32, i32) {
    %c0_i32 = arith.constant 0 : i32
    %c0_i32_0 = arith.constant 0 : i32
    return %arg0, %arg1, %c0_i32 : i32, i32, i32
  }
}

module attributes {stable_mosaic.version = 11 : i64} {
  func.func @_lm_head_kernel(%arg0: i32, %arg1: i32, %arg2: memref<1x8x128xf32, #tpu.memory_space<vmem>>, %arg3: memref<1x128xf32, #tpu.memory_space<vmem>>, %arg4: memref<1x128xf32, #tpu.memory_space<vmem>>, %arg5: memref<128x128xbf16, #tpu.memory_space<vmem>>, %arg6: memref<1x128xf32, #tpu.memory_space<vmem>>, %arg7: memref<1x128xf32, #tpu.memory_space<vmem>>, %arg8: memref<1x128xf32, #tpu.memory_space<vmem>>, %arg9: memref<128x128xbf16, #tpu.memory_space<vmem>>, %arg10: memref<1x128xf32, #tpu.memory_space<vmem>>, %arg11: memref<1x8x128xf32, #tpu.memory_space<vmem>>) attributes {dimension_semantics = [#tpu.dimension_semantics<parallel>, #tpu.dimension_semantics<parallel>], iteration_bounds = array<i64: 2, 1>, scalar_prefetch = 0 : i64, scratch_operands = 0 : i64, tpu.core_type = #tpu.core_type<tc>, window_params = [{transform_indices = @transform_0, window_bounds = array<i64: 1, 8, 128>}, {pipeline_mode = #tpu.pipeline_mode<synchronous>, transform_indices = @transform_1, window_bounds = array<i64: 1, 128>}, {pipeline_mode = #tpu.pipeline_mode<synchronous>, transform_indices = @transform_2, window_bounds = array<i64: 1, 128>}, {pipeline_mode = #tpu.pipeline_mode<synchronous>, transform_indices = @transform_3, window_bounds = array<i64: 128, 128>}, {pipeline_mode = #tpu.pipeline_mode<synchronous>, transform_indices = @transform_4, window_bounds = array<i64: 1, 128>}, {pipeline_mode = #tpu.pipeline_mode<synchronous>, transform_indices = @transform_5, window_bounds = array<i64: 1, 128>}, {pipeline_mode = #tpu.pipeline_mode<synchronous>, transform_indices = @transform_6, window_bounds = array<i64: 1, 128>}, {pipeline_mode = #tpu.pipeline_mode<synchronous>, transform_indices = @transform_7, window_bounds = array<i64: 128, 128>}, {pipeline_mode = #tpu.pipeline_mode<synchronous>, transform_indices = @transform_8, window_bounds = array<i64: 1, 128>}, {transform_indices = @transform_9, window_bounds = array<i64: 1, 8, 128>}]} {
    %c0 = arith.constant 0 : index
    %c0_0 = arith.constant 0 : index
    %c0_1 = arith.constant 0 : index
    %0 = vector.load %arg2[%c0, %c0_0, %c0_1] : memref<1x8x128xf32, #tpu.memory_space<vmem>>, vector<1x8x128xf32>
    %1 = vector.shape_cast %0 : vector<1x8x128xf32> to vector<8x128xf32>
    %c0_2 = arith.constant 0 : index
    %c0_3 = arith.constant 0 : index
    %2 = vector.load %arg3[%c0_2, %c0_3] : memref<1x128xf32, #tpu.memory_space<vmem>>, vector<1x128xf32>
    %c0_4 = arith.constant 0 : index
    %c0_5 = arith.constant 0 : index
    %3 = vector.load %arg4[%c0_4, %c0_5] : memref<1x128xf32, #tpu.memory_space<vmem>>, vector<1x128xf32>
    %cst = arith.constant dense<0.000000e+00> : vector<8xf32>
    %4 = vector.multi_reduction <add>, %1, %cst [1] : vector<8x128xf32> to vector<8xf32>
    %5 = vector.shape_cast %4 : vector<8xf32> to vector<8x1xf32>
    %cst_6 = arith.constant 1.280000e+02 : f32
    %6 = vector.broadcast %cst_6 : f32 to vector<8x1xf32>
    %7 = arith.divf %5, %6 : vector<8x1xf32>
    %8 = vector.broadcast %7 : vector<8x1xf32> to vector<8x128xf32>
    %9 = arith.subf %1, %8 : vector<8x128xf32>
    %10 = arith.mulf %9, %9 : vector<8x128xf32>
    %cst_7 = arith.constant dense<0.000000e+00> : vector<8xf32>
    %11 = vector.multi_reduction <add>, %10, %cst_7 [1] : vector<8x128xf32> to vector<8xf32>
    %12 = vector.shape_cast %11 : vector<8xf32> to vector<8x1xf32>
    %cst_8 = arith.constant 1.280000e+02 : f32
    %13 = vector.broadcast %cst_8 : f32 to vector<8x1xf32>
    %14 = arith.divf %12, %13 : vector<8x1xf32>
    %cst_9 = arith.constant 9.99999996E-13 : f32
    %15 = vector.broadcast %cst_9 : f32 to vector<8x1xf32>
    %16 = arith.addf %14, %15 : vector<8x1xf32>
    %17 = math.rsqrt %16 : vector<8x1xf32>
    %18 = vector.broadcast %17 : vector<8x1xf32> to vector<8x128xf32>
    %19 = arith.mulf %9, %18 : vector<8x128xf32>
    %20 = vector.broadcast %2 : vector<1x128xf32> to vector<8x128xf32>
    %21 = arith.mulf %19, %20 : vector<8x128xf32>
    %22 = vector.broadcast %3 : vector<1x128xf32> to vector<8x128xf32>
    %23 = arith.addf %21, %22 : vector<8x128xf32>
    %24 = arith.truncf %23 : vector<8x128xf32> to vector<8x128xbf16>
    %c0_10 = arith.constant 0 : index
    %c0_11 = arith.constant 0 : index
    %25 = vector.load %arg5[%c0_10, %c0_11] : memref<128x128xbf16, #tpu.memory_space<vmem>>, vector<128x128xbf16>
    %cst_12 = arith.constant dense<0.000000e+00> : vector<8x128xf32>
    %26 = tpu.matmul %24, %25, %cst_12 {dimension_numbers = #tpu.dot_dimension_numbers<[1], [0], [0], [1], [0, 0, 1, 1], [], []>} : vector<8x128xbf16>, vector<128x128xbf16>, vector<8x128xf32> -> vector<8x128xf32>
    %c0_13 = arith.constant 0 : index
    %c0_14 = arith.constant 0 : index
    %27 = vector.load %arg6[%c0_13, %c0_14] : memref<1x128xf32, #tpu.memory_space<vmem>>, vector<1x128xf32>
    %28 = vector.broadcast %27 : vector<1x128xf32> to vector<8x128xf32>
    %29 = arith.addf %26, %28 : vector<8x128xf32>
    %cst_15 = arith.constant 5.000000e-01 : f32
    %30 = vector.broadcast %cst_15 : f32 to vector<8x128xf32>
    %31 = arith.mulf %29, %30 : vector<8x128xf32>
    %cst_16 = arith.constant 1.41421354 : f32
    %32 = vector.broadcast %cst_16 : f32 to vector<8x128xf32>
    %33 = arith.divf %29, %32 : vector<8x128xf32>
    %cst_17 = arith.constant 0.000000e+00 : f32
    %34 = vector.broadcast %cst_17 : f32 to vector<8x128xf32>
    %35 = arith.cmpf oge, %33, %34 : vector<8x128xf32>
    %cst_18 = arith.constant 1.000000e+00 : f32
    %cst_19 = arith.constant -1.000000e+00 : f32
    %36 = vector.broadcast %cst_18 : f32 to vector<8x128xf32>
    %37 = vector.broadcast %cst_19 : f32 to vector<8x128xf32>
    %38 = arith.select %35, %36, %37 : vector<8x128xi1>, vector<8x128xf32>
    %39 = math.absf %33 : vector<8x128xf32>
    %cst_20 = arith.constant 0.327591091 : f32
    %40 = vector.broadcast %cst_20 : f32 to vector<8x128xf32>
    %41 = arith.mulf %40, %39 : vector<8x128xf32>
    %cst_21 = arith.constant 1.000000e+00 : f32
    %42 = vector.broadcast %cst_21 : f32 to vector<8x128xf32>
    %43 = arith.addf %42, %41 : vector<8x128xf32>
    %44 = tpu.reciprocal %43 {approx = true} : vector<8x128xf32> -> vector<8x128xf32>
    %cst_22 = arith.constant 1.06140542 : f32
    %45 = vector.broadcast %cst_22 : f32 to vector<8x128xf32>
    %46 = arith.mulf %45, %44 : vector<8x128xf32>
    %cst_23 = arith.constant -1.45315206 : f32
    %47 = vector.broadcast %cst_23 : f32 to vector<8x128xf32>
    %48 = arith.addf %46, %47 : vector<8x128xf32>
    %49 = arith.mulf %48, %44 : vector<8x128xf32>
    %cst_24 = arith.constant 1.42141378 : f32
    %50 = vector.broadcast %cst_24 : f32 to vector<8x128xf32>
    %51 = arith.addf %49, %50 : vector<8x128xf32>
    %52 = arith.mulf %51, %44 : vector<8x128xf32>
    %cst_25 = arith.constant -0.284496725 : f32
    %53 = vector.broadcast %cst_25 : f32 to vector<8x128xf32>
    %54 = arith.addf %52, %53 : vector<8x128xf32>
    %55 = arith.mulf %54, %44 : vector<8x128xf32>
    %cst_26 = arith.constant 0.254829586 : f32
    %56 = vector.broadcast %cst_26 : f32 to vector<8x128xf32>
    %57 = arith.addf %55, %56 : vector<8x128xf32>
    %58 = arith.mulf %57, %44 : vector<8x128xf32>
    %cst_27 = arith.constant 0.000000e+00 : f32
    %59 = vector.broadcast %cst_27 : f32 to vector<8x128xf32>
    %60 = arith.subf %59, %39 : vector<8x128xf32>
    %61 = arith.mulf %60, %39 : vector<8x128xf32>
    %62 = math.exp %61 : vector<8x128xf32>
    %63 = arith.mulf %58, %62 : vector<8x128xf32>
    %cst_28 = arith.constant 1.000000e+00 : f32
    %64 = vector.broadcast %cst_28 : f32 to vector<8x128xf32>
    %65 = arith.subf %64, %63 : vector<8x128xf32>
    %66 = arith.mulf %38, %65 : vector<8x128xf32>
    %cst_29 = arith.constant 1.000000e+00 : f32
    %67 = vector.broadcast %cst_29 : f32 to vector<8x128xf32>
    %68 = arith.addf %67, %66 : vector<8x128xf32>
    %69 = arith.mulf %31, %68 : vector<8x128xf32>
    %c0_30 = arith.constant 0 : index
    %c0_31 = arith.constant 0 : index
    %70 = vector.load %arg7[%c0_30, %c0_31] : memref<1x128xf32, #tpu.memory_space<vmem>>, vector<1x128xf32>
    %c0_32 = arith.constant 0 : index
    %c0_33 = arith.constant 0 : index
    %71 = vector.load %arg8[%c0_32, %c0_33] : memref<1x128xf32, #tpu.memory_space<vmem>>, vector<1x128xf32>
    %cst_34 = arith.constant dense<0.000000e+00> : vector<8xf32>
    %72 = vector.multi_reduction <add>, %69, %cst_34 [1] : vector<8x128xf32> to vector<8xf32>
    %73 = vector.shape_cast %72 : vector<8xf32> to vector<8x1xf32>
    %cst_35 = arith.constant 1.280000e+02 : f32
    %74 = vector.broadcast %cst_35 : f32 to vector<8x1xf32>
    %75 = arith.divf %73, %74 : vector<8x1xf32>
    %76 = vector.broadcast %75 : vector<8x1xf32> to vector<8x128xf32>
    %77 = arith.subf %69, %76 : vector<8x128xf32>
    %78 = arith.mulf %77, %77 : vector<8x128xf32>
    %cst_36 = arith.constant dense<0.000000e+00> : vector<8xf32>
    %79 = vector.multi_reduction <add>, %78, %cst_36 [1] : vector<8x128xf32> to vector<8xf32>
    %80 = vector.shape_cast %79 : vector<8xf32> to vector<8x1xf32>
    %cst_37 = arith.constant 1.280000e+02 : f32
    %81 = vector.broadcast %cst_37 : f32 to vector<8x1xf32>
    %82 = arith.divf %80, %81 : vector<8x1xf32>
    %cst_38 = arith.constant 9.99999996E-13 : f32
    %83 = vector.broadcast %cst_38 : f32 to vector<8x1xf32>
    %84 = arith.addf %82, %83 : vector<8x1xf32>
    %85 = math.rsqrt %84 : vector<8x1xf32>
    %86 = vector.broadcast %85 : vector<8x1xf32> to vector<8x128xf32>
    %87 = arith.mulf %77, %86 : vector<8x128xf32>
    %88 = vector.broadcast %70 : vector<1x128xf32> to vector<8x128xf32>
    %89 = arith.mulf %87, %88 : vector<8x128xf32>
    %90 = vector.broadcast %71 : vector<1x128xf32> to vector<8x128xf32>
    %91 = arith.addf %89, %90 : vector<8x128xf32>
    %92 = arith.truncf %91 : vector<8x128xf32> to vector<8x128xbf16>
    %c0_39 = arith.constant 0 : index
    %c0_40 = arith.constant 0 : index
    %93 = vector.load %arg9[%c0_39, %c0_40] : memref<128x128xbf16, #tpu.memory_space<vmem>>, vector<128x128xbf16>
    %cst_41 = arith.constant dense<0.000000e+00> : vector<8x128xf32>
    %94 = tpu.matmul %92, %93, %cst_41 {dimension_numbers = #tpu.dot_dimension_numbers<[1], [0], [0], [1], [0, 0, 1, 1], [], []>} : vector<8x128xbf16>, vector<128x128xbf16>, vector<8x128xf32> -> vector<8x128xf32>
    %c0_42 = arith.constant 0 : index
    %c0_43 = arith.constant 0 : index
    %95 = vector.load %arg10[%c0_42, %c0_43] : memref<1x128xf32, #tpu.memory_space<vmem>>, vector<1x128xf32>
    %96 = vector.broadcast %95 : vector<1x128xf32> to vector<8x128xf32>
    %97 = arith.addf %94, %96 : vector<8x128xf32>
    %c0_44 = arith.constant 0 : index
    %c0_45 = arith.constant 0 : index
    %c0_46 = arith.constant 0 : index
    %98 = vector.load %arg11[%c0_44, %c0_45, %c0_46] : memref<1x8x128xf32, #tpu.memory_space<vmem>>, vector<1x8x128xf32>
    %99 = vector.shape_cast %98 : vector<1x8x128xf32> to vector<8x128xf32>
    %100 = vector.shape_cast %97 : vector<8x128xf32> to vector<1x8x128xf32>
    tpu.vector_store %arg11[%c0_44, %c0_45, %c0_46], %100 {strides = array<i32>} : memref<1x8x128xf32, #tpu.memory_space<vmem>>, vector<1x8x128xf32>,
    return
  }
  func.func @transform_0(%arg0: i32, %arg1: i32) -> (i32, i32, i32) {
    %c0_i32 = arith.constant 0 : i32
    %c0_i32_0 = arith.constant 0 : i32
    return %arg0, %arg1, %c0_i32 : i32, i32, i32
  }
  func.func @transform_1(%arg0: i32, %arg1: i32) -> (i32, i32) {
    %c0_i32 = arith.constant 0 : i32
    %c0_i32_0 = arith.constant 0 : i32
    %c0_i32_1 = arith.constant 0 : i32
    return %c0_i32, %c0_i32_0 : i32, i32
  }
  func.func @transform_2(%arg0: i32, %arg1: i32) -> (i32, i32) {
    %c0_i32 = arith.constant 0 : i32
    %c0_i32_0 = arith.constant 0 : i32
    %c0_i32_1 = arith.constant 0 : i32
    return %c0_i32, %c0_i32_0 : i32, i32
  }
  func.func @transform_3(%arg0: i32, %arg1: i32) -> (i32, i32) {
    %c0_i32 = arith.constant 0 : i32
    %c0_i32_0 = arith.constant 0 : i32
    %c0_i32_1 = arith.constant 0 : i32
    return %c0_i32, %c0_i32_0 : i32, i32
  }
  func.func @transform_4(%arg0: i32, %arg1: i32) -> (i32, i32) {
    %c0_i32 = arith.constant 0 : i32
    %c0_i32_0 = arith.constant 0 : i32
    %c0_i32_1 = arith.constant 0 : i32
    return %c0_i32, %c0_i32_0 : i32, i32
  }
  func.func @transform_5(%arg0: i32, %arg1: i32) -> (i32, i32) {
    %c0_i32 = arith.constant 0 : i32
    %c0_i32_0 = arith.constant 0 : i32
    %c0_i32_1 = arith.constant 0 : i32
    return %c0_i32, %c0_i32_0 : i32, i32
  }
  func.func @transform_6(%arg0: i32, %arg1: i32) -> (i32, i32) {
    %c0_i32 = arith.constant 0 : i32
    %c0_i32_0 = arith.constant 0 : i32
    %c0_i32_1 = arith.constant 0 : i32
    return %c0_i32, %c0_i32_0 : i32, i32
  }
  func.func @transform_7(%arg0: i32, %arg1: i32) -> (i32, i32) {
    %c0_i32 = arith.constant 0 : i32
    %c0_i32_0 = arith.constant 0 : i32
    %c0_i32_1 = arith.constant 0 : i32
    return %c0_i32, %c0_i32_0 : i32, i32
  }
  func.func @transform_8(%arg0: i32, %arg1: i32) -> (i32, i32) {
    %c0_i32 = arith.constant 0 : i32
    %c0_i32_0 = arith.constant 0 : i32
    %c0_i32_1 = arith.constant 0 : i32
    return %c0_i32, %c0_i32_0 : i32, i32
  }
  func.func @transform_9(%arg0: i32, %arg1: i32) -> (i32, i32, i32) {
    %c0_i32 = arith.constant 0 : i32
    %c0_i32_0 = arith.constant 0 : i32
    return %arg0, %arg1, %c0_i32 : i32, i32, i32
  }
}

</mosaic_0001>

<llo_original>
// kernel: esm2_forward.8
$region0: #{esm2_forward.8}
  #allocation0 [shape = 'u32[]', space=smem, size = 0x4, offset = 0x4, fixed_abs, tag = 'smem constant byte address 0x4 - core index']
  #allocation1 [shape = 'u32[144,128]{1,0:T(1,128)}', space=vmem, size = 0x12000, scoped, tag = 'internal scratch']
  %s0 = inlined_call_operand.vmem [shape: bf16[2,4,8,32], index: 0, kind: input, shape index: {}]
  %s1 = inlined_call_operand.vmem [shape: bf16[2,4,8,32], index: 1, kind: input, shape index: {}]
  %s2 = inlined_call_operand.vmem [shape: bf16[2,4,8,32], index: 2, kind: input, shape index: {}]
  %s3 = inlined_call_operand.vmem [shape: f32[2,1,8], index: 3, kind: input, shape index: {}]
  %s4 = inlined_call_operand.vmem [shape: bf16[2,4,8,32], index: 4, kind: output, shape index: {}]
  %s5 = sld [smem:[#allocation0]]
  $region49: #{esm2_forward.8} parent=0
    _
  %s7 = ssub.s32 1, %s5
  %s8 = scalar_select 0, %s7, %s5
  loop: start=0, step=1, limit=4
  $region2: #{esm2_forward.8} parent=0 // loop_pre_header
    _
  $region3: #{esm2_forward.8} parent=0 // loop_header
    %s10 = sphi 0, %s14
    %p11 = scmp.ge.s32.totalorder %s10, 4
    %s17 = sphi 0, %s36
    %s18 = sphi 0, %s32
    %s19 = sphi 0, %s28
    %s20 = sphi 0, %s17
    %s21 = sphi 0, %s18
    %s22 = sphi 0, %s19
    %s23 = sphi 0, %s20
    %s24 = sphi 0, %s21
    %s25 = sphi 0, %s22
    %s43 = sphi 0, %s45
    %s46 = sphi 0, %s43
    %s47 = sphi 0, %s46
    %s63 = sphi 0, %s47
    %s71 = sphi 0, %s73
    %s74 = sphi 0, %s71
    %s75 = sphi 0, %s74
    %s91 = sphi 0, %s75
    %s99 = sphi 0, %s101
    %s102 = sphi 0, %s99
    %s103 = sphi 0, %s102
    %s119 = sphi 0, %s103
    %s125 = sphi 0, %s127
    %s128 = sphi 0, %s125
    %s129 = sphi 0, %s128
    %s145 = sphi 0, %s129
    %s155 = sphi 0, %s157
    %s158 = sphi 0, %s155
    %s159 = sphi 0, %s158
    %s175 = sphi 0, %s159
  $region4: #{esm2_forward.8} parent=0 // loop_header_branch
    %13 = sbr.rel (%p11) target = $region8
  $region5: #{esm2_forward.8} parent=0 // loop_body
    %s15 = ssub.s32 %s10, 1
    %s16 = ssub.s32 %s10, 2
    %s26 = sadd.s32 1, %s19
    %p27 = scmp.ge.s32.totalorder %s26, 1
    %s28 = scalar_select %p27, 0, %s26
    %s29 = sadd.s32 1, %s18
    %s30 = scalar_select %p27, %s29, %s18
    %p31 = scmp.ge.s32.totalorder %s30, 1
    %s32 = scalar_select %p31, 0, %s30
    %s33 = sadd.s32 1, %s17
    %s34 = scalar_select %p31, %s33, %s17
    %p35 = scmp.ge.s32.totalorder %s34, 2
    %s36 = scalar_select %p35, 0, %s34
    %s37 = ssub.s32 %s17, %s36
    %s38 = ssub.s32 %s18, %s32
    %s39 = sor.u32 %s37, %s38
    %s40 = ssub.s32 %s19, %s28
    %s41 = sor.u32 %s39, %s40
    %p42 = scmp.eq.s32.totalorder %s41, 0
    %s44 = sadd.s32 %s43, 1
    %s45 = scalar_select %p42, %s43, %s44
    %p48 = pneg %p42
    %p49 = scmp.eq.s32.totalorder %s10, 1
    %p50 = por %p48, %p49
    %p51 = scmp.ne.s32.totalorder %s43, %s46
    %p52 = scmp.eq.s32.totalorder %s10, 0
    %p53 = por %p51, %p52
    %p54 = scmp.ne.s32.totalorder %s43, %s46
    %p55 = scmp.eq.s32.totalorder %s15, 1
    %p56 = por %p54, %p55
    %p57 = scmp.ne.s32.totalorder %s46, %s47
    %p58 = scmp.eq.s32.totalorder %s15, 0
    %p59 = por %p57, %p58
    %p60 = scmp.ne.s32.totalorder %s46, %s47
    %p61 = scmp.eq.s32.totalorder %s16, 1
    %p62 = por %p60, %p61
    %p64 = scmp.ne.s32.totalorder %s47, %s63
    %p65 = scmp.eq.s32.totalorder %s16, 0
    %p66 = por %p64, %p65
    %s67 = ssub.s32 %s17, %s36
    %s68 = ssub.s32 %s18, %s32
    %s69 = sor.u32 %s67, %s68
    %p70 = scmp.eq.s32.totalorder %s69, 0
    %s72 = sadd.s32 %s71, 1
    %s73 = scalar_select %p70, %s71, %s72
    %p76 = pneg %p70
    %p77 = scmp.eq.s32.totalorder %s10, 1
    %p78 = por %p76, %p77
    %p79 = scmp.ne.s32.totalorder %s71, %s74
    %p80 = scmp.eq.s32.totalorder %s10, 0
    %p81 = por %p79, %p80
    %p82 = scmp.ne.s32.totalorder %s71, %s74
    %p83 = scmp.eq.s32.totalorder %s15, 1
    %p84 = por %p82, %p83
    %p85 = scmp.ne.s32.totalorder %s74, %s75
    %p86 = scmp.eq.s32.totalorder %s15, 0
    %p87 = por %p85, %p86
    %p88 = scmp.ne.s32.totalorder %s74, %s75
    %p89 = scmp.eq.s32.totalorder %s16, 1
    %p90 = por %p88, %p89
    %p92 = scmp.ne.s32.totalorder %s75, %s91
    %p93 = scmp.eq.s32.totalorder %s16, 0
    %p94 = por %p92, %p93
    %s95 = ssub.s32 %s17, %s36
    %s96 = ssub.s32 %s18, %s32
    %s97 = sor.u32 %s95, %s96
    %p98 = scmp.eq.s32.totalorder %s97, 0
    %s100 = sadd.s32 %s99, 1
    %s101 = scalar_select %p98, %s99, %s100
    %p104 = pneg %p98
    %p105 = scmp.eq.s32.totalorder %s10, 1
    %p106 = por %p104, %p105
    %p107 = scmp.ne.s32.totalorder %s99, %s102
    %p108 = scmp.eq.s32.totalorder %s10, 0
    %p109 = por %p107, %p108
    %p110 = scmp.ne.s32.totalorder %s99, %s102
    %p111 = scmp.eq.s32.totalorder %s15, 1
    %p112 = por %p110, %p111
    %p113 = scmp.ne.s32.totalorder %s102, %s103
    %p114 = scmp.eq.s32.totalorder %s15, 0
    %p115 = por %p113, %p114
    %p116 = scmp.ne.s32.totalorder %s102, %s103
    %p117 = scmp.eq.s32.totalorder %s16, 1
    %p118 = por %p116, %p117
    %p120 = scmp.ne.s32.totalorder %s103, %s119
    %p121 = scmp.eq.s32.totalorder %s16, 0
    %p122 = por %p120, %p121
    %s123 = ssub.s32 %s17, %s36
    %p124 = scmp.eq.s32.totalorder %s123, 0
    %s126 = sadd.s32 %s125, 1
    %s127 = scalar_select %p124, %s125, %s126
    %p130 = pneg %p124
    %p131 = scmp.eq.s32.totalorder %s10, 1
    %p132 = por %p130, %p131
    %p133 = scmp.ne.s32.totalorder %s125, %s128
    %p134 = scmp.eq.s32.totalorder %s10, 0
    %p135 = por %p133, %p134
    %p136 = scmp.ne.s32.totalorder %s125, %s128
    %p137 = scmp.eq.s32.totalorder %s15, 1
    %p138 = por %p136, %p137
    %p139 = scmp.ne.s32.totalorder %s128, %s129
    %p140 = scmp.eq.s32.totalorder %s15, 0
    %p141 = por %p139, %p140
    %p142 = scmp.ne.s32.totalorder %s128, %s129
    %p143 = scmp.eq.s32.totalorder %s16, 1
    %p144 = por %p142, %p143
    %p146 = scmp.ne.s32.totalorder %s129, %s145
    %p147 = scmp.eq.s32.totalorder %s16, 0
    %p148 = por %p146, %p147
    %s149 = ssub.s32 %s17, %s36
    %s150 = ssub.s32 %s18, %s32
    %s151 = sor.u32 %s149, %s150
    %s152 = ssub.s32 %s19, %s28
    %s153 = sor.u32 %s151, %s152
    %p154 = scmp.eq.s32.totalorder %s153, 0
    %s156 = sadd.s32 %s155, 1
    %s157 = scalar_select %p154, %s155, %s156
    %p160 = pneg %p154
    %p161 = scmp.eq.s32.totalorder %s10, 1
    %p162 = por %p160, %p161
    %p163 = scmp.ne.s32.totalorder %s155, %s158
    %p164 = scmp.eq.s32.totalorder %s10, 0
    %p165 = por %p163, %p164
    %p166 = scmp.ne.s32.totalorder %s155, %s158
    %p167 = scmp.eq.s32.totalorder %s15, 1
    %p168 = por %p166, %p167
    %p169 = scmp.ne.s32.totalorder %s158, %s159
    %p170 = scmp.eq.s32.totalorder %s15, 0
    %p171 = por %p169, %p170
    %p172 = scmp.ne.s32.totalorder %s158, %s159
    %p173 = scmp.eq.s32.totalorder %s16, 1
    %p174 = por %p172, %p173
    %p176 = scmp.ne.s32.totalorder %s159, %s175
    %p177 = scmp.eq.s32.totalorder %s16, 0
    %p178 = por %p176, %p177
    %p179 = scmp.le.s32.totalorder 1, %s10
    %p180 = scmp.lt.s32.totalorder %s10, 3
    %p181 = pnand %p179, %p180
    %p182 = pneg %p181
    // Predicated region
    $region9: #{esm2_forward.8} parent=5 // pred_check
      _
    $region10: #{esm2_forward.8} parent=5 // pred_check_branch
      %184 = sbr.rel (%p181) target = $region12
    $region11: #{esm2_forward.8} parent=5 // pred_region
      %s185 = ssub.s32 %s10, 1
    $region12: #{esm2_forward.8} parent=5 // pred_fallthru
      _
    %p186 = scmp.lt.s32.totalorder %s10, 2
    // Predicated region
    $region13: #{esm2_forward.8} parent=5 // pred_check
      %p187 = pneg %p186
    $region14: #{esm2_forward.8} parent=5 // pred_check_branch
      %189 = sbr.rel (%p187) target = $region16
    $region15: #{esm2_forward.8} parent=5 // pred_region
      // Predicated region
      $region17: #{esm2_forward.8} parent=15 // pred_check
        %p190 = pneg %p53
      $region18: #{esm2_forward.8} parent=15 // pred_check_branch
        %192 = sbr.rel (%p190) target = $region20
      $region19: #{esm2_forward.8} parent=15 // pred_region
        %s193 = smul.u32 4, %s18
        %p194 = scmp.lt.s32.totalorder %s17, 1
        %s195 = scalar_select %p194, %s17, 1
        %p196 = scmp.lt.s32.totalorder %s193, 3
        %s197 = scalar_select %p196, %s193, 3
        %p198 = scmp.lt.s32.totalorder %s19, 0
        %s199 = scalar_select %p198, %s19, 0
        %s200 = sadd.s32 %s199, %s197
        %s201 = smul.addr %s195, 4
        %s202 = sadd.s32 %s200, %s201
        %s203 = smul.addr %s202, 4
        %s204 = scalar_lea.vmem %s0, %s203
        %s205 = smul.u32 4, %s18
      $region20: #{esm2_forward.8} parent=15 // pred_fallthru
        _
      // Predicated region
      $region21: #{esm2_forward.8} parent=15 // pred_check
        %p206 = pneg %p81
      $region22: #{esm2_forward.8} parent=15 // pred_check_branch
        %208 = sbr.rel (%p206) target = $region24
      $region23: #{esm2_forward.8} parent=15 // pred_region
        %s209 = smul.u32 4, %s18
        %p210 = scmp.lt.s32.totalorder %s17, 1
        %s211 = scalar_select %p210, %s17, 1
        %p212 = scmp.lt.s32.totalorder %s209, 3
        %s213 = scalar_select %p212, %s209, 3
        %s214 = smul.addr %s211, 4
        %s215 = sadd.s32 %s213, %s214
        %s216 = smul.addr %s215, 4
        %s217 = scalar_lea.vmem %s1, %s216
        %s218 = smul.u32 4, %s18
      $region24: #{esm2_forward.8} parent=15 // pred_fallthru
        _
      // Predicated region
      $region25: #{esm2_forward.8} parent=15 // pred_check
        %p219 = pneg %p109
      $region26: #{esm2_forward.8} parent=15 // pred_check_branch
        %221 = sbr.rel (%p219) target = $region28
      $region27: #{esm2_forward.8} parent=15 // pred_region
        %s222 = smul.u32 4, %s18
        %p223 = scmp.lt.s32.totalorder %s17, 1
        %s224 = scalar_select %p223, %s17, 1
        %p225 = scmp.lt.s32.totalorder %s222, 3
        %s226 = scalar_select %p225, %s222, 3
        %s227 = smul.addr %s224, 4
        %s228 = sadd.s32 %s226, %s227
        %s229 = smul.addr %s228, 4
        %s230 = scalar_lea.vmem %s2, %s229
        %s231 = smul.u32 4, %s18
      $region28: #{esm2_forward.8} parent=15 // pred_fallthru
        _
      // Predicated region
      $region29: #{esm2_forward.8} parent=15 // pred_check
        %p232 = pneg %p135
      $region30: #{esm2_forward.8} parent=15 // pred_check_branch
        %234 = sbr.rel (%p232) target = $region32
      $region31: #{esm2_forward.8} parent=15 // pred_region
        %p235 = scmp.lt.s32.totalorder %s17, 1
        %s236 = scalar_select %p235, %s17, 1
        %s237 = scalar_lea.vmem %s3, %s236
      $region32: #{esm2_forward.8} parent=15 // pred_fallthru
        _
    $region16: #{esm2_forward.8} parent=5 // pred_fallthru
      _
    %p238 = scmp.le.s32.totalorder 1, %s10
    %p239 = scmp.lt.s32.totalorder %s10, 3
    %p240 = pnand %p238, %p239
    %p241 = pneg %p240
    // Predicated region
    $region33: #{esm2_forward.8} parent=5 // pred_check
      _
    $region34: #{esm2_forward.8} parent=5 // pred_check_branch
      %243 = sbr.rel (%p240) target = $region36
    $region35: #{esm2_forward.8} parent=5 // pred_region
      %s244 = ssub.s32 %s10, 1
      %s245 = smul.u32 4, %s21
      %p246 = scmp.lt.s32.totalorder %s20, 1
      %s247 = scalar_select %p246, %s20, 1
      %p248 = scmp.lt.s32.totalorder %s245, 3
      %s249 = scalar_select %p248, %s245, 3
      %p250 = scmp.lt.s32.totalorder %s22, 0
      %s251 = scalar_select %p250, %s22, 0
      %s252 = sadd.s32 %s251, %s249
      %s253 = smul.addr %s247, 4
      %s254 = sadd.s32 %s252, %s253
      %s255 = smul.addr %s254, 4
      %s256 = scalar_lea.vmem %s0, %s255
      %p257 = pneg %p59
      %p258 = pneg %p56
      %s259 = smul.u32 4, %s21
      %p260 = scmp.lt.s32.totalorder %s20, 1
      %s261 = scalar_select %p260, %s20, 1
      %p262 = scmp.lt.s32.totalorder %s259, 3
      %s263 = scalar_select %p262, %s259, 3
      %s264 = smul.addr %s261, 4
      %s265 = sadd.s32 %s263, %s264
      %s266 = smul.addr %s265, 4
      %s267 = scalar_lea.vmem %s1, %s266
      %p268 = pneg %p87
      %p269 = pneg %p84
      %s270 = smul.u32 4, %s21
      %p271 = scmp.lt.s32.totalorder %s20, 1
      %s272 = scalar_select %p271, %s20, 1
      %p273 = scmp.lt.s32.totalorder %s270, 3
      %s274 = scalar_select %p273, %s270, 3
      %s275 = smul.addr %s272, 4
      %s276 = sadd.s32 %s274, %s275
      %s277 = smul.addr %s276, 4
      %s278 = scalar_lea.vmem %s2, %s277
      %p279 = pneg %p115
      %p280 = pneg %p112
      %p281 = scmp.lt.s32.totalorder %s20, 1
      %s282 = scalar_select %p281, %s20, 1
      %s283 = scalar_lea.vmem %s3, %s282
      %p284 = pneg %p141
      %p285 = pneg %p138
      %p286 = pneg %p171
      %p287 = pneg %p168
      %s288 = smul.u32 4, %s21
      %p289 = scmp.lt.s32.totalorder %s20, 1
      %s290 = scalar_select %p289, %s20, 1
      %p291 = scmp.lt.s32.totalorder %s288, 3
      %s292 = scalar_select %p291, %s288, 3
      %p293 = scmp.lt.s32.totalorder %s22, 0
      %s294 = scalar_select %p293, %s22, 0
      %s295 = sadd.s32 %s294, %s292
      %s296 = smul.addr %s290, 4
      %s297 = sadd.s32 %s295, %s296
      %s298 = smul.addr %s297, 4
      %s299 = scalar_lea.vmem %s4, %s298
      %s300 = smul.u32 4, %s21
      %p301 = scmp.lt.s32.totalorder %s20, 1
      %s302 = scalar_select %p301, %s20, 1
      %p303 = scmp.lt.s32.totalorder %s300, 3
      %s304 = scalar_select %p303, %s300, 3
      %p305 = scmp.lt.s32.totalorder %s22, 0
      %s306 = scalar_select %p305, %s22, 0
      %s307 = sadd.s32 %s306, %s304
      %s308 = smul.addr %s302, 4
      %s309 = sadd.s32 %s307, %s308
      %s310 = smul.addr %s309, 4
      %s311 = scalar_lea.vmem %s0, %s310
      %s312 = smul.u32 4, %s21
      %s313 = smul.u32 4, %s21
      %p314 = scmp.lt.s32.totalorder %s20, 1
      %s315 = scalar_select %p314, %s20, 1
      %p316 = scmp.lt.s32.totalorder %s313, 3
      %s317 = scalar_select %p316, %s313, 3
      %s318 = smul.addr %s315, 4
      %s319 = sadd.s32 %s317, %s318
      %s320 = smul.addr %s319, 4
      %s321 = scalar_lea.vmem %s1, %s320
      %s322 = smul.u32 4, %s21
      %s323 = smul.u32 4, %s21
      %p324 = scmp.lt.s32.totalorder %s20, 1
      %s325 = scalar_select %p324, %s20, 1
      %p326 = scmp.lt.s32.totalorder %s323, 3
      %s327 = scalar_select %p326, %s323, 3
      %s328 = smul.addr %s325, 4
      %s329 = sadd.s32 %s327, %s328
      %s330 = smul.addr %s329, 4
      %s331 = scalar_lea.vmem %s2, %s330
      %s332 = smul.u32 4, %s21
      %p333 = scmp.lt.s32.totalorder %s20, 1
      %s334 = scalar_select %p333, %s20, 1
      %s335 = scalar_lea.vmem %s3, %s334
      %s336 = smul.u32 4, %s21
      %p337 = scmp.lt.s32.totalorder %s20, 1
      %s338 = scalar_select %p337, %s20, 1
      %p339 = scmp.lt.s32.totalorder %s336, 3
      %s340 = scalar_select %p339, %s336, 3
      %p341 = scmp.lt.s32.totalorder %s22, 0
      %s342 = scalar_select %p341, %s22, 0
      %s343 = sadd.s32 %s342, %s340
      %s344 = smul.addr %s338, 4
      %s345 = sadd.s32 %s343, %s344
      %s346 = smul.addr %s345, 4
      %s347 = scalar_lea.vmem %s4, %s346
      %s348 = smul.u32 4, %s21
      %v350 = vld [vmem:[%s311] sm:$0xf]
      %v351 = vld [vmem:[%s311 + $0x4] sm:$0xf]
      %v352 = vld [vmem:[%s311 + $0x8] sm:$0xf]
      %v353 = vld [vmem:[%s311 + $0xc] sm:$0xf]
      %v354 = vld [vmem:[%s321] sm:$0xf]
      %v355 = vld [vmem:[%s321 + $0x4] sm:$0xf]
      %v356 = vld [vmem:[%s321 + $0x8] sm:$0xf]
      %v357 = vld [vmem:[%s321 + $0xc] sm:$0xf]
      %v358 = vld [vmem:[%s331] sm:$0xf]
      %v359 = vld [vmem:[%s331 + $0x4] sm:$0xf]
      %v360 = vld [vmem:[%s331 + $0x8] sm:$0xf]
      %v361 = vld [vmem:[%s331 + $0xc] sm:$0xf]
      %v362 = vld [vmem:[%s335] sm:$0x1]
      %v364 = vlaneseq
      %v365 = vshrl.u32 %v364, 7
      %v366 = vsub.s32 0, %v365
      %v367 = vrot.slane %v362, %v366
      %vm369 = vcmask 261120
      %v371 = vsel %vm369, %v350, 0
      %v374 = vsel %vm369, %v354, 0
      %376 = vmatprep.subr.bf16.mxu0 0
      %377 = vmatpush1.bf16.xpose.msra.mxu0 0
      %378 = vmatprep.subr.bf16.mxu0 0
      %379 = vmatpush1.bf16.xpose.msra.mxu0 0
      %380 = vmatprep.subr.bf16.mxu0 0
      %381 = vmatpush1.bf16.xpose.msra.mxu0 0
      %382 = vmatprep.subr.bf16.mxu0 0
      %383 = vmatpush1.bf16.xpose.msra.mxu0 0
      %384 = vmatprep.subr.bf16.mxu0 0
      %385 = vmatpush1.bf16.xpose.msra.mxu0 0
      %386 = vmatprep.subr.bf16.mxu0 0
      %387 = vmatpush1.bf16.xpose.msra.mxu0 0
      %388 = vmatprep.subr.bf16.mxu0 0
      %389 = vmatpush1.bf16.xpose.msra.mxu0 0
      %390 = vmatprep.subr.bf16.mxu0 0
      %391 = vmatpush1.bf16.xpose.msra.mxu0 %v374
      %392 = vmatprep.subr.bf16.mxu0 0
      %393 = vmatpush2.bf16.xpose.msra.mxu0 0
      %394 = vmatprep.subr.bf16.mxu0 0
      %395 = vmatpush2.bf16.xpose.msra.mxu0 0
      %396 = vmatprep.subr.bf16.mxu0 0
      %397 = vmatpush2.bf16.xpose.msra.mxu0 0
      %398 = vmatprep.subr.bf16.mxu0 0
      %399 = vmatpush2.bf16.xpose.msra.mxu0 0
      %400 = vmatprep.subr.bf16.mxu0 0
      %401 = vmatpush2.bf16.xpose.msra.mxu0 0
      %402 = vmatprep.subr.bf16.mxu0 0
      %403 = vmatpush2.bf16.xpose.msra.mxu0 0
      %404 = vmatprep.subr.bf16.mxu0 0
      %405 = vmatpush2.bf16.xpose.msra.mxu0 0
      %406 = vmatprep.subr.bf16.mxu0 0
      %407 = vmatpush2.bf16.xpose.msra.mxu0 0
      %408 = vmatprep.mubr.bf16.mxu0 0
      %409 = vmatmul.mubr.bf16.gmra.mxu0 %v371
      %v410 = vpop.f32.mrf.mxu0
      %v411 = vadd.f32 %v367, %v410
      %v412 = vpop.f32.mrf.mxu0
      %v413 = vpop.f32.mrf.mxu0
      %v414 = vpop.f32.mrf.mxu0
      %415 = vdwg.mxu0
      %v417 = vsel %vm369, %v351, 0
      %v420 = vsel %vm369, %v355, 0
      %422 = vmatprep.subr.bf16.mxu0 0
      %423 = vmatpush1.bf16.xpose.msra.mxu0 0
      %424 = vmatprep.subr.bf16.mxu0 0
      %425 = vmatpush1.bf16.xpose.msra.mxu0 0
      %426 = vmatprep.subr.bf16.mxu0 0
      %427 = vmatpush1.bf16.xpose.msra.mxu0 0
      %428 = vmatprep.subr.bf16.mxu0 0
      %429 = vmatpush1.bf16.xpose.msra.mxu0 0
      %430 = vmatprep.subr.bf16.mxu0 0
      %431 = vmatpush1.bf16.xpose.msra.mxu0 0
      %432 = vmatprep.subr.bf16.mxu0 0
      %433 = vmatpush1.bf16.xpose.msra.mxu0 0
      %434 = vmatprep.subr.bf16.mxu0 0
      %435 = vmatpush1.bf16.xpose.msra.mxu0 0
      %436 = vmatprep.subr.bf16.mxu0 0
      %437 = vmatpush1.bf16.xpose.msra.mxu0 %v420
      %438 = vmatprep.subr.bf16.mxu0 0
      %439 = vmatpush2.bf16.xpose.msra.mxu0 0
      %440 = vmatprep.subr.bf16.mxu0 0
      %441 = vmatpush2.bf16.xpose.msra.mxu0 0
      %442 = vmatprep.subr.bf16.mxu0 0
      %443 = vmatpush2.bf16.xpose.msra.mxu0 0
      %444 = vmatprep.subr.bf16.mxu0 0
      %445 = vmatpush2.bf16.xpose.msra.mxu0 0
      %446 = vmatprep.subr.bf16.mxu0 0
      %447 = vmatpush2.bf16.xpose.msra.mxu0 0
      %448 = vmatprep.subr.bf16.mxu0 0
      %449 = vmatpush2.bf16.xpose.msra.mxu0 0
      %450 = vmatprep.subr.bf16.mxu0 0
      %451 = vmatpush2.bf16.xpose.msra.mxu0 0
      %452 = vmatprep.subr.bf16.mxu0 0
      %453 = vmatpush2.bf16.xpose.msra.mxu0 0
      %454 = vmatprep.mubr.bf16.mxu0 0
      %455 = vmatmul.mubr.bf16.gmra.mxu0 %v417
      %v456 = vpop.f32.mrf.mxu0
      %v457 = vadd.f32 %v367, %v456
      %v458 = vpop.f32.mrf.mxu0
      %v459 = vpop.f32.mrf.mxu0
      %v460 = vpop.f32.mrf.mxu0
      %461 = vdwg.mxu0
      %v463 = vsel %vm369, %v352, 0
      %v466 = vsel %vm369, %v356, 0
      %468 = vmatprep.subr.bf16.mxu0 0
      %469 = vmatpush1.bf16.xpose.msra.mxu0 0
      %470 = vmatprep.subr.bf16.mxu0 0
      %471 = vmatpush1.bf16.xpose.msra.mxu0 0
      %472 = vmatprep.subr.bf16.mxu0 0
      %473 = vmatpush1.bf16.xpose.msra.mxu0 0
      %474 = vmatprep.subr.bf16.mxu0 0
      %475 = vmatpush1.bf16.xpose.msra.mxu0 0
      %476 = vmatprep.subr.bf16.mxu0 0
      %477 = vmatpush1.bf16.xpose.msra.mxu0 0
      %478 = vmatprep.subr.bf16.mxu0 0
      %479 = vmatpush1.bf16.xpose.msra.mxu0 0
      %480 = vmatprep.subr.bf16.mxu0 0
      %481 = vmatpush1.bf16.xpose.msra.mxu0 0
      %482 = vmatprep.subr.bf16.mxu0 0
      %483 = vmatpush1.bf16.xpose.msra.mxu0 %v466
      %484 = vmatprep.subr.bf16.mxu0 0
      %485 = vmatpush2.bf16.xpose.msra.mxu0 0
      %486 = vmatprep.subr.bf16.mxu0 0
      %487 = vmatpush2.bf16.xpose.msra.mxu0 0
      %488 = vmatprep.subr.bf16.mxu0 0
      %489 = vmatpush2.bf16.xpose.msra.mxu0 0
      %490 = vmatprep.subr.bf16.mxu0 0
      %491 = vmatpush2.bf16.xpose.msra.mxu0 0
      %492 = vmatprep.subr.bf16.mxu0 0
      %493 = vmatpush2.bf16.xpose.msra.mxu0 0
      %494 = vmatprep.subr.bf16.mxu0 0
      %495 = vmatpush2.bf16.xpose.msra.mxu0 0
      %496 = vmatprep.subr.bf16.mxu0 0
      %497 = vmatpush2.bf16.xpose.msra.mxu0 0
      %498 = vmatprep.subr.bf16.mxu0 0
      %499 = vmatpush2.bf16.xpose.msra.mxu0 0
      %500 = vmatprep.mubr.bf16.mxu0 0
      %501 = vmatmul.mubr.bf16.gmra.mxu0 %v463
      %v502 = vpop.f32.mrf.mxu0
      %v503 = vadd.f32 %v367, %v502
      %v504 = vpop.f32.mrf.mxu0
      %v505 = vpop.f32.mrf.mxu0
      %v506 = vpop.f32.mrf.mxu0
      %507 = vdwg.mxu0
      %v509 = vsel %vm369, %v353, 0
      %v512 = vsel %vm369, %v357, 0
      %514 = vmatprep.subr.bf16.mxu0 0
      %515 = vmatpush1.bf16.xpose.msra.mxu0 0
      %516 = vmatprep.subr.bf16.mxu0 0
      %517 = vmatpush1.bf16.xpose.msra.mxu0 0
      %518 = vmatprep.subr.bf16.mxu0 0
      %519 = vmatpush1.bf16.xpose.msra.mxu0 0
      %520 = vmatprep.subr.bf16.mxu0 0
      %521 = vmatpush1.bf16.xpose.msra.mxu0 0
      %522 = vmatprep.subr.bf16.mxu0 0
      %523 = vmatpush1.bf16.xpose.msra.mxu0 0
      %524 = vmatprep.subr.bf16.mxu0 0
      %525 = vmatpush1.bf16.xpose.msra.mxu0 0
      %526 = vmatprep.subr.bf16.mxu0 0
      %527 = vmatpush1.bf16.xpose.msra.mxu0 0
      %528 = vmatprep.subr.bf16.mxu0 0
      %529 = vmatpush1.bf16.xpose.msra.mxu0 %v512
      %530 = vmatprep.subr.bf16.mxu0 0
      %531 = vmatpush2.bf16.xpose.msra.mxu0 0
      %532 = vmatprep.subr.bf16.mxu0 0
      %533 = vmatpush2.bf16.xpose.msra.mxu0 0
      %534 = vmatprep.subr.bf16.mxu0 0
      %535 = vmatpush2.bf16.xpose.msra.mxu0 0
      %536 = vmatprep.subr.bf16.mxu0 0
      %537 = vmatpush2.bf16.xpose.msra.mxu0 0
      %538 = vmatprep.subr.bf16.mxu0 0
      %539 = vmatpush2.bf16.xpose.msra.mxu0 0
      %540 = vmatprep.subr.bf16.mxu0 0
      %541 = vmatpush2.bf16.xpose.msra.mxu0 0
      %542 = vmatprep.subr.bf16.mxu0 0
      %543 = vmatpush2.bf16.xpose.msra.mxu0 0
      %544 = vmatprep.subr.bf16.mxu0 0
      %545 = vmatpush2.bf16.xpose.msra.mxu0 0
      %546 = vmatprep.mubr.bf16.mxu0 0
      %547 = vmatmul.mubr.bf16.gmra.mxu0 %v509
      %v548 = vpop.f32.mrf.mxu0
      %v549 = vadd.f32 %v367, %v548
      %v550 = vpop.f32.mrf.mxu0
      %v551 = vpop.f32.mrf.mxu0
      %v552 = vpop.f32.mrf.mxu0
      %553 = vdwg.mxu0
      %vm554 = vcmask 64512
      %v555 = vsel %vm554, %v411, -inf
      %556 = vmax.xlane.f32.xlu0 %v555
      %v557 = vpop.xlane.xlu0 %556
      %v558 = vsel %vm554, %v457, -inf
      %559 = vmax.xlane.f32.xlu0 %v558
      %v560 = vpop.xlane.xlu0 %559
      %v561 = vsel %vm554, %v503, -inf
      %562 = vmax.xlane.f32.xlu0 %v561
      %v563 = vpop.xlane.xlu0 %562
      %v564 = vsel %vm554, %v549, -inf
      %565 = vmax.xlane.f32.xlu0 %v564
      %v566 = vpop.xlane.xlu0 %565
      %v567 = vsub.f32 %v411, %v557
      %v568 = vsub.f32 %v457, %v560
      %v569 = vsub.f32 %v503, %v563
      %v570 = vsub.f32 %v549, %v566
      %v571 = vmul.f32 %v567, 1.442695
      %v572 = vpow.pop %v571
      %v573 = vmul.f32 %v568, 1.442695
      %v574 = vpow.pop %v573
      %v575 = vmul.f32 %v569, 1.442695
      %v576 = vpow.pop %v575
      %v577 = vmul.f32 %v570, 1.442695
      %v578 = vpow.pop %v577
      %v579 = vsel %vm554, %v572, 0.0
      %580 = vadd.xlane.f32.xlu0 %v579
      %v581 = vpop.xlane.xlu0 %580
      %v582 = vsel %vm554, %v574, 0.0
      %583 = vadd.xlane.f32.xlu0 %v582
      %v584 = vpop.xlane.xlu0 %583
      %v585 = vsel %vm554, %v576, 0.0
      %586 = vadd.xlane.f32.xlu0 %v585
      %v587 = vpop.xlane.xlu0 %586
      %v588 = vsel %vm554, %v578, 0.0
      %589 = vadd.xlane.f32.xlu0 %v588
      %v590 = vpop.xlane.xlu0 %589
      %v591 = vrcp.pop %v581
      %v592 = vrcp.pop %v584
      %v593 = vrcp.pop %v587
      %v594 = vrcp.pop %v590
      %v595 = vpack.c.bf16 %v572, %v572
      %v596 = vpack.c.bf16 %v574, %v574
      %v597 = vpack.c.bf16 %v576, %v576
      %v598 = vpack.c.bf16 %v578, %v578
      %v600 = vsel %vm554, %v595, 0
      %vm602 = vcmask 1043456
      %v604 = vsel %vm602, %v358, 0
      %606 = vmatprep.subr.bf16.mxu0 0
      %607 = vmatpush1.bf16.msra.mxu0 0
      %608 = vmatprep.subr.bf16.mxu0 0
      %609 = vmatpush1.bf16.msra.mxu0 0
      %610 = vmatprep.subr.bf16.mxu0 0
      %611 = vmatpush1.bf16.msra.mxu0 0
      %612 = vmatprep.subr.bf16.mxu0 0
      %613 = vmatpush1.bf16.msra.mxu0 0
      %614 = vmatprep.subr.bf16.mxu0 0
      %615 = vmatpush1.bf16.msra.mxu0 0
      %616 = vmatprep.subr.bf16.mxu0 0
      %617 = vmatpush1.bf16.msra.mxu0 0
      %618 = vmatprep.subr.bf16.mxu0 0
      %619 = vmatpush1.bf16.msra.mxu0 0
      %620 = vmatprep.subr.bf16.mxu0 0
      %621 = vmatpush1.bf16.msra.mxu0 %v604
      %622 = vmatprep.subr.bf16.mxu0 0
      %623 = vmatpush2.bf16.msra.mxu0 0
      %624 = vmatprep.subr.bf16.mxu0 0
      %625 = vmatpush2.bf16.msra.mxu0 0
      %626 = vmatprep.subr.bf16.mxu0 0
      %627 = vmatpush2.bf16.msra.mxu0 0
      %628 = vmatprep.subr.bf16.mxu0 0
      %629 = vmatpush2.bf16.msra.mxu0 0
      %630 = vmatprep.subr.bf16.mxu0 0
      %631 = vmatpush2.bf16.msra.mxu0 0
      %632 = vmatprep.subr.bf16.mxu0 0
      %633 = vmatpush2.bf16.msra.mxu0 0
      %634 = vmatprep.subr.bf16.mxu0 0
      %635 = vmatpush2.bf16.msra.mxu0 0
      %636 = vmatprep.subr.bf16.mxu0 0
      %637 = vmatpush2.bf16.msra.mxu0 0
      %638 = vmatprep.mubr.bf16.mxu0 0
      %639 = vmatmul.mubr.bf16.gmra.mxu0 %v600
      %v640 = vpop.f32.mrf.mxu0
      %v641 = vadd.f32 0.0, %v640
      %v642 = vpop.f32.mrf.mxu0
      %v643 = vpop.f32.mrf.mxu0
      %v644 = vpop.f32.mrf.mxu0
      %645 = vdwg.mxu0
      %v647 = vsel %vm554, %v596, 0
      %v650 = vsel %vm602, %v359, 0
      %652 = vmatprep.subr.bf16.mxu0 0
      %653 = vmatpush1.bf16.msra.mxu0 0
      %654 = vmatprep.subr.bf16.mxu0 0
      %655 = vmatpush1.bf16.msra.mxu0 0
      %656 = vmatprep.subr.bf16.mxu0 0
      %657 = vmatpush1.bf16.msra.mxu0 0
      %658 = vmatprep.subr.bf16.mxu0 0
      %659 = vmatpush1.bf16.msra.mxu0 0
      %660 = vmatprep.subr.bf16.mxu0 0
      %661 = vmatpush1.bf16.msra.mxu0 0
      %662 = vmatprep.subr.bf16.mxu0 0
      %663 = vmatpush1.bf16.msra.mxu0 0
      %664 = vmatprep.subr.bf16.mxu0 0
      %665 = vmatpush1.bf16.msra.mxu0 0
      %666 = vmatprep.subr.bf16.mxu0 0
      %667 = vmatpush1.bf16.msra.mxu0 %v650
      %668 = vmatprep.subr.bf16.mxu0 0
      %669 = vmatpush2.bf16.msra.mxu0 0
      %670 = vmatprep.subr.bf16.mxu0 0
      %671 = vmatpush2.bf16.msra.mxu0 0
      %672 = vmatprep.subr.bf16.mxu0 0
      %673 = vmatpush2.bf16.msra.mxu0 0
      %674 = vmatprep.subr.bf16.mxu0 0
      %675 = vmatpush2.bf16.msra.mxu0 0
      %676 = vmatprep.subr.bf16.mxu0 0
      %677 = vmatpush2.bf16.msra.mxu0 0
      %678 = vmatprep.subr.bf16.mxu0 0
      %679 = vmatpush2.bf16.msra.mxu0 0
      %680 = vmatprep.subr.bf16.mxu0 0
      %681 = vmatpush2.bf16.msra.mxu0 0
      %682 = vmatprep.subr.bf16.mxu0 0
      %683 = vmatpush2.bf16.msra.mxu0 0
      %684 = vmatprep.mubr.bf16.mxu0 0
      %685 = vmatmul.mubr.bf16.gmra.mxu0 %v647
      %v686 = vpop.f32.mrf.mxu0
      %v687 = vadd.f32 0.0, %v686
      %v688 = vpop.f32.mrf.mxu0
      %v689 = vpop.f32.mrf.mxu0
      %v690 = vpop.f32.mrf.mxu0
      %691 = vdwg.mxu0
      %v693 = vsel %vm554, %v597, 0
      %v696 = vsel %vm602, %v360, 0
      %698 = vmatprep.subr.bf16.mxu0 0
      %699 = vmatpush1.bf16.msra.mxu0 0
      %700 = vmatprep.subr.bf16.mxu0 0
      %701 = vmatpush1.bf16.msra.mxu0 0
      %702 = vmatprep.subr.bf16.mxu0 0
      %703 = vmatpush1.bf16.msra.mxu0 0
      %704 = vmatprep.subr.bf16.mxu0 0
      %705 = vmatpush1.bf16.msra.mxu0 0
      %706 = vmatprep.subr.bf16.mxu0 0
      %707 = vmatpush1.bf16.msra.mxu0 0
      %708 = vmatprep.subr.bf16.mxu0 0
      %709 = vmatpush1.bf16.msra.mxu0 0
      %710 = vmatprep.subr.bf16.mxu0 0
      %711 = vmatpush1.bf16.msra.mxu0 0
      %712 = vmatprep.subr.bf16.mxu0 0
      %713 = vmatpush1.bf16.msra.mxu0 %v696
      %714 = vmatprep.subr.bf16.mxu0 0
      %715 = vmatpush2.bf16.msra.mxu0 0
      %716 = vmatprep.subr.bf16.mxu0 0
      %717 = vmatpush2.bf16.msra.mxu0 0
      %718 = vmatprep.subr.bf16.mxu0 0
      %719 = vmatpush2.bf16.msra.mxu0 0
      %720 = vmatprep.subr.bf16.mxu0 0
      %721 = vmatpush2.bf16.msra.mxu0 0
      %722 = vmatprep.subr.bf16.mxu0 0
      %723 = vmatpush2.bf16.msra.mxu0 0
      %724 = vmatprep.subr.bf16.mxu0 0
      %725 = vmatpush2.bf16.msra.mxu0 0
      %726 = vmatprep.subr.bf16.mxu0 0
      %727 = vmatpush2.bf16.msra.mxu0 0
      %728 = vmatprep.subr.bf16.mxu0 0
      %729 = vmatpush2.bf16.msra.mxu0 0
      %730 = vmatprep.mubr.bf16.mxu0 0
      %731 = vmatmul.mubr.bf16.gmra.mxu0 %v693
      %v732 = vpop.f32.mrf.mxu0
      %v733 = vadd.f32 0.0, %v732
      %v734 = vpop.f32.mrf.mxu0
      %v735 = vpop.f32.mrf.mxu0
      %v736 = vpop.f32.mrf.mxu0
      %737 = vdwg.mxu0
      %v739 = vsel %vm554, %v598, 0
      %v742 = vsel %vm602, %v361, 0
      %744 = vmatprep.subr.bf16.mxu0 0
      %745 = vmatpush1.bf16.msra.mxu0 0
      %746 = vmatprep.subr.bf16.mxu0 0
      %747 = vmatpush1.bf16.msra.mxu0 0
      %748 = vmatprep.subr.bf16.mxu0 0
      %749 = vmatpush1.bf16.msra.mxu0 0
      %750 = vmatprep.subr.bf16.mxu0 0
      %751 = vmatpush1.bf16.msra.mxu0 0
      %752 = vmatprep.subr.bf16.mxu0 0
      %753 = vmatpush1.bf16.msra.mxu0 0
      %754 = vmatprep.subr.bf16.mxu0 0
      %755 = vmatpush1.bf16.msra.mxu0 0
      %756 = vmatprep.subr.bf16.mxu0 0
      %757 = vmatpush1.bf16.msra.mxu0 0
      %758 = vmatprep.subr.bf16.mxu0 0
      %759 = vmatpush1.bf16.msra.mxu0 %v742
      %760 = vmatprep.subr.bf16.mxu0 0
      %761 = vmatpush2.bf16.msra.mxu0 0
      %762 = vmatprep.subr.bf16.mxu0 0
      %763 = vmatpush2.bf16.msra.mxu0 0
      %764 = vmatprep.subr.bf16.mxu0 0
      %765 = vmatpush2.bf16.msra.mxu0 0
      %766 = vmatprep.subr.bf16.mxu0 0
      %767 = vmatpush2.bf16.msra.mxu0 0
      %768 = vmatprep.subr.bf16.mxu0 0
      %769 = vmatpush2.bf16.msra.mxu0 0
      %770 = vmatprep.subr.bf16.mxu0 0
      %771 = vmatpush2.bf16.msra.mxu0 0
      %772 = vmatprep.subr.bf16.mxu0 0
      %773 = vmatpush2.bf16.msra.mxu0 0
      %774 = vmatprep.subr.bf16.mxu0 0
      %775 = vmatpush2.bf16.msra.mxu0 0
      %776 = vmatprep.mubr.bf16.mxu0 0
      %777 = vmatmul.mubr.bf16.gmra.mxu0 %v739
      %v778 = vpop.f32.mrf.mxu0
      %v779 = vadd.f32 0.0, %v778
      %v780 = vpop.f32.mrf.mxu0
      %v781 = vpop.f32.mrf.mxu0
      %v782 = vpop.f32.mrf.mxu0
      %783 = vdwg.mxu0
      %v784 = vmul.f32 %v641, %v591
      %v785 = vmul.f32 %v687, %v592
      %v786 = vmul.f32 %v733, %v593
      %v787 = vmul.f32 %v779, %v594
      %v788 = vpack.c.bf16 %v784, %v784
      %v789 = vpack.c.bf16 %v785, %v785
      %v790 = vpack.c.bf16 %v786, %v786
      %v791 = vpack.c.bf16 %v787, %v787
      %vm792 = vcmask 257024
      %793 = vst.msk [vmem:[%s347] sm:$0xf] %vm792, %v788
      %794 = vst.msk [vmem:[%s347 + $0x4] sm:$0xf] %vm792, %v789
      %795 = vst.msk [vmem:[%s347 + $0x8] sm:$0xf] %vm792, %v790
      %796 = vst.msk [vmem:[%s347 + $0xc] sm:$0xf] %vm792, %v791
      %s797 = smul.u32 4, %s21
      %p798 = scmp.lt.s32.totalorder %s20, 1
      %s799 = scalar_select %p798, %s20, 1
      %p800 = scmp.lt.s32.totalorder %s797, 3
      %s801 = scalar_select %p800, %s797, 3
      %p802 = scmp.lt.s32.totalorder %s22, 0
      %s803 = scalar_select %p802, %s22, 0
      %s804 = sadd.s32 %s803, %s801
      %s805 = smul.addr %s799, 4
      %s806 = sadd.s32 %s804, %s805
      %s807 = smul.addr %s806, 4
      %s808 = scalar_lea.vmem %s4, %s807
      // Predicated region
      $region37: #{esm2_forward.8} parent=35 // pred_check
        %p809 = pneg %p168
      $region38: #{esm2_forward.8} parent=35 // pred_check_branch
        %811 = sbr.rel (%p809) target = $region40
      $region39: #{esm2_forward.8} parent=35 // pred_region
        %s812 = smul.u32 4, %s21
      $region40: #{esm2_forward.8} parent=35 // pred_fallthru
        _
    $region36: #{esm2_forward.8} parent=5 // pred_fallthru
      _
    %p813 = scmp.le.s32.totalorder 2, %s10
    // Predicated region
    $region41: #{esm2_forward.8} parent=5 // pred_check
      %p814 = pneg %p813
    $region42: #{esm2_forward.8} parent=5 // pred_check_branch
      %816 = sbr.rel (%p814) target = $region44
    $region43: #{esm2_forward.8} parent=5 // pred_region
      %s817 = ssub.s32 %s10, 2
      // Predicated region
      $region45: #{esm2_forward.8} parent=43 // pred_check
        %p818 = pneg %p174
      $region46: #{esm2_forward.8} parent=43 // pred_check_branch
        %820 = sbr.rel (%p818) target = $region48
      $region47: #{esm2_forward.8} parent=43 // pred_region
        %s821 = smul.u32 4, %s24
        %p822 = scmp.lt.s32.totalorder %s23, 1
        %s823 = scalar_select %p822, %s23, 1
        %p824 = scmp.lt.s32.totalorder %s821, 3
        %s825 = scalar_select %p824, %s821, 3
        %p826 = scmp.lt.s32.totalorder %s25, 0
        %s827 = scalar_select %p826, %s25, 0
        %s828 = sadd.s32 %s827, %s825
        %s829 = smul.addr %s823, 4
        %s830 = sadd.s32 %s828, %s829
        %s831 = smul.addr %s830, 4
        %s832 = scalar_lea.vmem %s4, %s831
      $region48: #{esm2_forward.8} parent=43 // pred_fallthru
        _
    $region44: #{esm2_forward.8} parent=5 // pred_fallthru
      _
  $region6: #{esm2_forward.8} parent=0 // loop_footer
    %s14 = sadd.s32 1, %s10
  $region7: #{esm2_forward.8} parent=0 // loop_footer_branch
    %9 = sbr.rel target = $region3
  $region8: #{esm2_forward.8} parent=0 // loop_exit
    _

// kernel: esm2_forward.7
$region0: #{esm2_forward.7}
  #allocation0 [shape = 'u32[]', space=smem, size = 0x4, offset = 0x4, fixed_abs, tag = 'smem constant byte address 0x4 - core index']
  #allocation1 [shape = 'u32[144,128]{1,0:T(1,128)}', space=vmem, size = 0x12000, scoped, tag = 'internal scratch']
  %s0 = inlined_call_operand.vmem [shape: f32[2,8,128], index: 0, kind: input, shape index: {}]
  %s1 = inlined_call_operand.vmem [shape: f32[1,128], index: 1, kind: input, shape index: {}]
  %s2 = inlined_call_operand.vmem [shape: f32[1,128], index: 2, kind: input, shape index: {}]
  %s3 = inlined_call_operand.vmem [shape: bf16[128,128], index: 3, kind: input, shape index: {}]
  %s4 = inlined_call_operand.vmem [shape: f32[1,128], index: 4, kind: input, shape index: {}]
  %s5 = inlined_call_operand.hbm [shape: bf16[128,128], index: 5, kind: input, shape index: {}]
  %s6 = inlined_call_operand.hbm [shape: f32[1,128], index: 6, kind: input, shape index: {}]
  %s7 = inlined_call_operand.hbm [shape: bf16[128,128], index: 7, kind: input, shape index: {}]
  %s8 = inlined_call_operand.vmem [shape: f32[1,128], index: 8, kind: input, shape index: {}]
  %s9 = inlined_call_operand.vmem [shape: f32[8,16], index: 9, kind: input, shape index: {}]
  %s10 = inlined_call_operand.vmem [shape: f32[8,16], index: 10, kind: input, shape index: {}]
  %s11 = inlined_call_operand.vmem [shape: bf16[2,4,8,32], index: 11, kind: output, shape index: {0}]
  %s12 = inlined_call_operand.vmem [shape: bf16[2,4,8,32], index: 12, kind: output, shape index: {1}]
  %s13 = inlined_call_operand.vmem [shape: bf16[2,4,8,32], index: 13, kind: output, shape index: {2}]
  %14 = xla_tuple %s11, %s12, %s13
  %s15 = sld [smem:[#allocation0]]
  $region105: #{esm2_forward.7} parent=0
    _
  %s17 = ssub.s32 1, %s15
  %s18 = scalar_select 0, %s17, %s15
  $region1: #{esm2_forward.7} parent=0
    #allocation2 [shape = 'u8[32768]{0}', space=vmem, size = 0x8000, scoped, tag = 'input window, operand 5, single buffered']
    #allocation3 [shape = 's32[2]{0}', space=sflag, size = 0x8, scoped, tag = 'scoped memory for esm2_forward.7']
    #allocation4 [shape = 'u8[512]{0}', space=vmem, size = 0x400, scoped, tag = 'input window, operand 6, single buffered']
    #allocation5 [shape = 's32[1]{0}', space=sflag, size = 0x4, scoped, tag = 'scoped memory for esm2_forward.7']
    #allocation6 [shape = 'u8[32768]{0}', space=vmem, size = 0x8000, scoped, tag = 'input window, operand 7, single buffered']
    %19 = vsyncpa [#allocation3], 0
    %20 = vsyncpa [#allocation5], 0
    loop: start=0, step=1, limit=4
    $region2: #{esm2_forward.7} parent=1 // loop_pre_header
      _
    $region3: #{esm2_forward.7} parent=1 // loop_header
      %s22 = sphi 0, %s26
      %p23 = scmp.ge.s32.totalorder %s22, 4
      %s29 = sphi 0, %s41
      %s30 = sphi 0, %s37
      %s31 = sphi 0, %s29
      %s32 = sphi 0, %s30
      %s33 = sphi 0, %s31
      %s34 = sphi 0, %s32
      %s46 = sphi 0, %s48
      %s49 = sphi 0, %s46
      %s50 = sphi 0, %s49
      %s66 = sphi 0, %s50
      %s70 = sphi 0, %s70
      %s72 = sphi 0, %s70
      %s73 = sphi 0, %s72
      %s87 = sphi 0, %s73
      %s91 = sphi 0, %s91
      %s93 = sphi 0, %s91
      %s94 = sphi 0, %s93
      %s108 = sphi 0, %s94
      %s112 = sphi 0, %s112
      %s114 = sphi 0, %s112
      %s115 = sphi 0, %s114
      %s129 = sphi 0, %s115
      %s133 = sphi 0, %s133
      %s135 = sphi 0, %s133
      %s136 = sphi 0, %s135
      %s150 = sphi 0, %s136
      %s154 = sphi 0, %s154
      %s156 = sphi 0, %s154
      %s157 = sphi 0, %s156
      %s171 = sphi 0, %s157
      %s175 = sphi 0, %s175
      %s177 = sphi 0, %s175
      %s178 = sphi 0, %s177
      %s192 = sphi 0, %s178
      %s196 = sphi 0, %s196
      %s198 = sphi 0, %s196
      %s199 = sphi 0, %s198
      %s213 = sphi 0, %s199
      %s217 = sphi 0, %s217
      %s219 = sphi 0, %s217
      %s220 = sphi 0, %s219
      %s234 = sphi 0, %s220
      %s240 = sphi 0, %s242
      %s243 = sphi 0, %s240
      %s244 = sphi 0, %s243
      %s260 = sphi 0, %s244
      %s266 = sphi 0, %s268
      %s269 = sphi 0, %s266
      %s270 = sphi 0, %s269
      %s286 = sphi 0, %s270
      %s294 = sphi 0, %s296
      %s297 = sphi 0, %s294
      %s298 = sphi 0, %s297
      %s314 = sphi 0, %s298
      %s322 = sphi 0, %s324
      %s325 = sphi 0, %s322
      %s326 = sphi 0, %s325
      %s342 = sphi 0, %s326
      %s350 = sphi 0, %s352
      %s353 = sphi 0, %s350
      %s354 = sphi 0, %s353
      %s370 = sphi 0, %s354
    $region4: #{esm2_forward.7} parent=1 // loop_header_branch
      %25 = sbr.rel (%p23) target = $region8
    $region5: #{esm2_forward.7} parent=1 // loop_body
      %s27 = ssub.s32 %s22, 1
      %s28 = ssub.s32 %s22, 2
      %s35 = sadd.s32 1, %s30
      %p36 = scmp.ge.s32.totalorder %s35, 1
      %s37 = scalar_select %p36, 0, %s35
      %s38 = sadd.s32 1, %s29
      %s39 = scalar_select %p36, %s38, %s29
      %p40 = scmp.ge.s32.totalorder %s39, 2
      %s41 = scalar_select %p40, 0, %s39
      %s42 = ssub.s32 %s29, %s41
      %s43 = ssub.s32 %s30, %s37
      %s44 = sor.u32 %s42, %s43
      %p45 = scmp.eq.s32.totalorder %s44, 0
      %s47 = sadd.s32 %s46, 1
      %s48 = scalar_select %p45, %s46, %s47
      %p51 = pneg %p45
      %p52 = scmp.eq.s32.totalorder %s22, 1
      %p53 = por %p51, %p52
      %p54 = scmp.ne.s32.totalorder %s46, %s49
      %p55 = scmp.eq.s32.totalorder %s22, 0
      %p56 = por %p54, %p55
      %p57 = scmp.ne.s32.totalorder %s46, %s49
      %p58 = scmp.eq.s32.totalorder %s27, 1
      %p59 = por %p57, %p58
      %p60 = scmp.ne.s32.totalorder %s49, %s50
      %p61 = scmp.eq.s32.totalorder %s27, 0
      %p62 = por %p60, %p61
      %p63 = scmp.ne.s32.totalorder %s49, %s50
      %p64 = scmp.eq.s32.totalorder %s28, 1
      %p65 = por %p63, %p64
      %p67 = scmp.ne.s32.totalorder %s50, %s66
      %p68 = scmp.eq.s32.totalorder %s28, 0
      %p69 = por %p67, %p68
      %s71 = sadd.s32 %s70, 1
      %p74 = scmp.eq.s32.totalorder %s22, 1
      %p75 = scmp.ne.s32.totalorder %s70, %s72
      %p76 = scmp.eq.s32.totalorder %s22, 0
      %p77 = por %p75, %p76
      %p78 = scmp.ne.s32.totalorder %s70, %s72
      %p79 = scmp.eq.s32.totalorder %s27, 1
      %p80 = por %p78, %p79
      %p81 = scmp.ne.s32.totalorder %s72, %s73
      %p82 = scmp.eq.s32.totalorder %s27, 0
      %p83 = por %p81, %p82
      %p84 = scmp.ne.s32.totalorder %s72, %s73
      %p85 = scmp.eq.s32.totalorder %s28, 1
      %p86 = por %p84, %p85
      %p88 = scmp.ne.s32.totalorder %s73, %s87
      %p89 = scmp.eq.s32.totalorder %s28, 0
      %p90 = por %p88, %p89
      %s92 = sadd.s32 %s91, 1
      %p95 = scmp.eq.s32.totalorder %s22, 1
      %p96 = scmp.ne.s32.totalorder %s91, %s93
      %p97 = scmp.eq.s32.totalorder %s22, 0
      %p98 = por %p96, %p97
      %p99 = scmp.ne.s32.totalorder %s91, %s93
      %p100 = scmp.eq.s32.totalorder %s27, 1
      %p101 = por %p99, %p100
      %p102 = scmp.ne.s32.totalorder %s93, %s94
      %p103 = scmp.eq.s32.totalorder %s27, 0
      %p104 = por %p102, %p103
      %p105 = scmp.ne.s32.totalorder %s93, %s94
      %p106 = scmp.eq.s32.totalorder %s28, 1
      %p107 = por %p105, %p106
      %p109 = scmp.ne.s32.totalorder %s94, %s108
      %p110 = scmp.eq.s32.totalorder %s28, 0
      %p111 = por %p109, %p110
      %s113 = sadd.s32 %s112, 1
      %p116 = scmp.eq.s32.totalorder %s22, 1
      %p117 = scmp.ne.s32.totalorder %s112, %s114
      %p118 = scmp.eq.s32.totalorder %s22, 0
      %p119 = por %p117, %p118
      %p120 = scmp.ne.s32.totalorder %s112, %s114
      %p121 = scmp.eq.s32.totalorder %s27, 1
      %p122 = por %p120, %p121
      %p123 = scmp.ne.s32.totalorder %s114, %s115
      %p124 = scmp.eq.s32.totalorder %s27, 0
      %p125 = por %p123, %p124
      %p126 = scmp.ne.s32.totalorder %s114, %s115
      %p127 = scmp.eq.s32.totalorder %s28, 1
      %p128 = por %p126, %p127
      %p130 = scmp.ne.s32.totalorder %s115, %s129
      %p131 = scmp.eq.s32.totalorder %s28, 0
      %p132 = por %p130, %p131
      %s134 = sadd.s32 %s133, 1
      %p137 = scmp.eq.s32.totalorder %s22, 1
      %p138 = scmp.ne.s32.totalorder %s133, %s135
      %p139 = scmp.eq.s32.totalorder %s22, 0
      %p140 = por %p138, %p139
      %p141 = scmp.ne.s32.totalorder %s133, %s135
      %p142 = scmp.eq.s32.totalorder %s27, 1
      %p143 = por %p141, %p142
      %p144 = scmp.ne.s32.totalorder %s135, %s136
      %p145 = scmp.eq.s32.totalorder %s27, 0
      %p146 = por %p144, %p145
      %p147 = scmp.ne.s32.totalorder %s135, %s136
      %p148 = scmp.eq.s32.totalorder %s28, 1
      %p149 = por %p147, %p148
      %p151 = scmp.ne.s32.totalorder %s136, %s150
      %p152 = scmp.eq.s32.totalorder %s28, 0
      %p153 = por %p151, %p152
      %s155 = sadd.s32 %s154, 1
      %p158 = scmp.eq.s32.totalorder %s22, 1
      %p159 = scmp.ne.s32.totalorder %s154, %s156
      %p160 = scmp.eq.s32.totalorder %s22, 0
      %p161 = por %p159, %p160
      %p162 = scmp.ne.s32.totalorder %s154, %s156
      %p163 = scmp.eq.s32.totalorder %s27, 1
      %p164 = por %p162, %p163
      %p165 = scmp.ne.s32.totalorder %s156, %s157
      %p166 = scmp.eq.s32.totalorder %s27, 0
      %p167 = por %p165, %p166
      %p168 = scmp.ne.s32.totalorder %s156, %s157
      %p169 = scmp.eq.s32.totalorder %s28, 1
      %p170 = por %p168, %p169
      %p172 = scmp.ne.s32.totalorder %s157, %s171
      %p173 = scmp.eq.s32.totalorder %s28, 0
      %p174 = por %p172, %p173
      %s176 = sadd.s32 %s175, 1
      %p179 = scmp.eq.s32.totalorder %s22, 1
      %p180 = scmp.ne.s32.totalorder %s175, %s177
      %p181 = scmp.eq.s32.totalorder %s22, 0
      %p182 = por %p180, %p181
      %p183 = scmp.ne.s32.totalorder %s175, %s177
      %p184 = scmp.eq.s32.totalorder %s27, 1
      %p185 = por %p183, %p184
      %p186 = scmp.ne.s32.totalorder %s177, %s178
      %p187 = scmp.eq.s32.totalorder %s27, 0
      %p188 = por %p186, %p187
      %p189 = scmp.ne.s32.totalorder %s177, %s178
      %p190 = scmp.eq.s32.totalorder %s28, 1
      %p191 = por %p189, %p190
      %p193 = scmp.ne.s32.totalorder %s178, %s192
      %p194 = scmp.eq.s32.totalorder %s28, 0
      %p195 = por %p193, %p194
      %s197 = sadd.s32 %s196, 1
      %p200 = scmp.eq.s32.totalorder %s22, 1
      %p201 = scmp.ne.s32.totalorder %s196, %s198
      %p202 = scmp.eq.s32.totalorder %s22, 0
      %p203 = por %p201, %p202
      %p204 = scmp.ne.s32.totalorder %s196, %s198
      %p205 = scmp.eq.s32.totalorder %s27, 1
      %p206 = por %p204, %p205
      %p207 = scmp.ne.s32.totalorder %s198, %s199
      %p208 = scmp.eq.s32.totalorder %s27, 0
      %p209 = por %p207, %p208
      %p210 = scmp.ne.s32.totalorder %s198, %s199
      %p211 = scmp.eq.s32.totalorder %s28, 1
      %p212 = por %p210, %p211
      %p214 = scmp.ne.s32.totalorder %s199, %s213
      %p215 = scmp.eq.s32.totalorder %s28, 0
      %p216 = por %p214, %p215
      %s218 = sadd.s32 %s217, 1
      %p221 = scmp.eq.s32.totalorder %s22, 1
      %p222 = scmp.ne.s32.totalorder %s217, %s219
      %p223 = scmp.eq.s32.totalorder %s22, 0
      %p224 = por %p222, %p223
      %p225 = scmp.ne.s32.totalorder %s217, %s219
      %p226 = scmp.eq.s32.totalorder %s27, 1
      %p227 = por %p225, %p226
      %p228 = scmp.ne.s32.totalorder %s219, %s220
      %p229 = scmp.eq.s32.totalorder %s27, 0
      %p230 = por %p228, %p229
      %p231 = scmp.ne.s32.totalorder %s219, %s220
      %p232 = scmp.eq.s32.totalorder %s28, 1
      %p233 = por %p231, %p232
      %p235 = scmp.ne.s32.totalorder %s220, %s234
      %p236 = scmp.eq.s32.totalorder %s28, 0
      %p237 = por %p235, %p236
      %s238 = ssub.s32 %s30, %s37
      %p239 = scmp.eq.s32.totalorder %s238, 0
      %s241 = sadd.s32 %s240, 1
      %s242 = scalar_select %p239, %s240, %s241
      %p245 = pneg %p239
      %p246 = scmp.eq.s32.totalorder %s22, 1
      %p247 = por %p245, %p246
      %p248 = scmp.ne.s32.totalorder %s240, %s243
      %p249 = scmp.eq.s32.totalorder %s22, 0
      %p250 = por %p248, %p249
      %p251 = scmp.ne.s32.totalorder %s240, %s243
      %p252 = scmp.eq.s32.totalorder %s27, 1
      %p253 = por %p251, %p252
      %p254 = scmp.ne.s32.totalorder %s243, %s244
      %p255 = scmp.eq.s32.totalorder %s27, 0
      %p256 = por %p254, %p255
      %p257 = scmp.ne.s32.totalorder %s243, %s244
      %p258 = scmp.eq.s32.totalorder %s28, 1
      %p259 = por %p257, %p258
      %p261 = scmp.ne.s32.totalorder %s244, %s260
      %p262 = scmp.eq.s32.totalorder %s28, 0
      %p263 = por %p261, %p262
      %s264 = ssub.s32 %s30, %s37
      %p265 = scmp.eq.s32.totalorder %s264, 0
      %s267 = sadd.s32 %s266, 1
      %s268 = scalar_select %p265, %s266, %s267
      %p271 = pneg %p265
      %p272 = scmp.eq.s32.totalorder %s22, 1
      %p273 = por %p271, %p272
      %p274 = scmp.ne.s32.totalorder %s266, %s269
      %p275 = scmp.eq.s32.totalorder %s22, 0
      %p276 = por %p274, %p275
      %p277 = scmp.ne.s32.totalorder %s266, %s269
      %p278 = scmp.eq.s32.totalorder %s27, 1
      %p279 = por %p277, %p278
      %p280 = scmp.ne.s32.totalorder %s269, %s270
      %p281 = scmp.eq.s32.totalorder %s27, 0
      %p282 = por %p280, %p281
      %p283 = scmp.ne.s32.totalorder %s269, %s270
      %p284 = scmp.eq.s32.totalorder %s28, 1
      %p285 = por %p283, %p284
      %p287 = scmp.ne.s32.totalorder %s270, %s286
      %p288 = scmp.eq.s32.totalorder %s28, 0
      %p289 = por %p287, %p288
      %s290 = ssub.s32 %s29, %s41
      %s291 = ssub.s32 %s30, %s37
      %s292 = sor.u32 %s290, %s291
      %p293 = scmp.eq.s32.totalorder %s292, 0
      %s295 = sadd.s32 %s294, 1
      %s296 = scalar_select %p293, %s294, %s295
      %p299 = pneg %p293
      %p300 = scmp.eq.s32.totalorder %s22, 1
      %p301 = por %p299, %p300
      %p302 = scmp.ne.s32.totalorder %s294, %s297
      %p303 = scmp.eq.s32.totalorder %s22, 0
      %p304 = por %p302, %p303
      %p305 = scmp.ne.s32.totalorder %s294, %s297
      %p306 = scmp.eq.s32.totalorder %s27, 1
      %p307 = por %p305, %p306
      %p308 = scmp.ne.s32.totalorder %s297, %s298
      %p309 = scmp.eq.s32.totalorder %s27, 0
      %p310 = por %p308, %p309
      %p311 = scmp.ne.s32.totalorder %s297, %s298
      %p312 = scmp.eq.s32.totalorder %s28, 1
      %p313 = por %p311, %p312
      %p315 = scmp.ne.s32.totalorder %s298, %s314
      %p316 = scmp.eq.s32.totalorder %s28, 0
      %p317 = por %p315, %p316
      %s318 = ssub.s32 %s29, %s41
      %s319 = ssub.s32 %s30, %s37
      %s320 = sor.u32 %s318, %s319
      %p321 = scmp.eq.s32.totalorder %s320, 0
      %s323 = sadd.s32 %s322, 1
      %s324 = scalar_select %p321, %s322, %s323
      %p327 = pneg %p321
      %p328 = scmp.eq.s32.totalorder %s22, 1
      %p329 = por %p327, %p328
      %p330 = scmp.ne.s32.totalorder %s322, %s325
      %p331 = scmp.eq.s32.totalorder %s22, 0
      %p332 = por %p330, %p331
      %p333 = scmp.ne.s32.totalorder %s322, %s325
      %p334 = scmp.eq.s32.totalorder %s27, 1
      %p335 = por %p333, %p334
      %p336 = scmp.ne.s32.totalorder %s325, %s326
      %p337 = scmp.eq.s32.totalorder %s27, 0
      %p338 = por %p336, %p337
      %p339 = scmp.ne.s32.totalorder %s325, %s326
      %p340 = scmp.eq.s32.totalorder %s28, 1
      %p341 = por %p339, %p340
      %p343 = scmp.ne.s32.totalorder %s326, %s342
      %p344 = scmp.eq.s32.totalorder %s28, 0
      %p345 = por %p343, %p344
      %s346 = ssub.s32 %s29, %s41
      %s347 = ssub.s32 %s30, %s37
      %s348 = sor.u32 %s346, %s347
      %p349 = scmp.eq.s32.totalorder %s348, 0
      %s351 = sadd.s32 %s350, 1
      %s352 = scalar_select %p349, %s350, %s351
      %p355 = pneg %p349
      %p356 = scmp.eq.s32.totalorder %s22, 1
      %p357 = por %p355, %p356
      %p358 = scmp.ne.s32.totalorder %s350, %s353
      %p359 = scmp.eq.s32.totalorder %s22, 0
      %p360 = por %p358, %p359
      %p361 = scmp.ne.s32.totalorder %s350, %s353
      %p362 = scmp.eq.s32.totalorder %s27, 1
      %p363 = por %p361, %p362
      %p364 = scmp.ne.s32.totalorder %s353, %s354
      %p365 = scmp.eq.s32.totalorder %s27, 0
      %p366 = por %p364, %p365
      %p367 = scmp.ne.s32.totalorder %s353, %s354
      %p368 = scmp.eq.s32.totalorder %s28, 1
      %p369 = por %p367, %p368
      %p371 = scmp.ne.s32.totalorder %s354, %s370
      %p372 = scmp.eq.s32.totalorder %s28, 0
      %p373 = por %p371, %p372
      %p374 = scmp.le.s32.totalorder 1, %s22
      %p375 = scmp.lt.s32.totalorder %s22, 3
      %p376 = pnand %p374, %p375
      %p377 = pneg %p376
      // Predicated region
      $region9: #{esm2_forward.7} parent=5 // pred_check
        _
      $region10: #{esm2_forward.7} parent=5 // pred_check_branch
        %379 = sbr.rel (%p376) target = $region12
      $region11: #{esm2_forward.7} parent=5 // pred_region
        %s380 = ssub.s32 %s22, 1
        // Predicated region
        $region13: #{esm2_forward.7} parent=11 // pred_check
          %p381 = pneg %p83
        $region14: #{esm2_forward.7} parent=11 // pred_check_branch
          %383 = sbr.rel (%p381) target = $region16
        $region15: #{esm2_forward.7} parent=11 // pred_region
          _
        $region16: #{esm2_forward.7} parent=11 // pred_fallthru
          _
        // Predicated region
        $region17: #{esm2_forward.7} parent=11 // pred_check
          %p384 = pneg %p104
        $region18: #{esm2_forward.7} parent=11 // pred_check_branch
          %386 = sbr.rel (%p384) target = $region20
        $region19: #{esm2_forward.7} parent=11 // pred_region
          _
        $region20: #{esm2_forward.7} parent=11 // pred_fallthru
          _
        // Predicated region
        $region21: #{esm2_forward.7} parent=11 // pred_check
          %p387 = pneg %p125
        $region22: #{esm2_forward.7} parent=11 // pred_check_branch
          %389 = sbr.rel (%p387) target = $region24
        $region23: #{esm2_forward.7} parent=11 // pred_region
          _
        $region24: #{esm2_forward.7} parent=11 // pred_fallthru
          _
        // Predicated region
        $region25: #{esm2_forward.7} parent=11 // pred_check
          %p390 = pneg %p146
        $region26: #{esm2_forward.7} parent=11 // pred_check_branch
          %392 = sbr.rel (%p390) target = $region28
        $region27: #{esm2_forward.7} parent=11 // pred_region
          _
        $region28: #{esm2_forward.7} parent=11 // pred_fallthru
          _
        // Predicated region
        $region29: #{esm2_forward.7} parent=11 // pred_check
          %p393 = pneg %p167
        $region30: #{esm2_forward.7} parent=11 // pred_check_branch
          %395 = sbr.rel (%p393) target = $region32
        $region31: #{esm2_forward.7} parent=11 // pred_region
          %s397 = ssub.s32 1024, 1024
          %398 = vsyncadd [#allocation3], %s397
          %s399 = sshll.u32 [#allocation2], 4
          %s400 = int_to_ptr.vmem [resolvable:$true] %s399
          %405 = dma.hbm_to_vmem [thread:$0]  %s5, 1024, %s400, [#allocation3], 64, 64, 4
        $region32: #{esm2_forward.7} parent=11 // pred_fallthru
          _
        // Predicated region
        $region33: #{esm2_forward.7} parent=11 // pred_check
          %p406 = pneg %p188
        $region34: #{esm2_forward.7} parent=11 // pred_check_branch
          %408 = sbr.rel (%p406) target = $region36
        $region35: #{esm2_forward.7} parent=11 // pred_region
          %s410 = ssub.s32 16, 16
          %411 = vsyncadd [#allocation5], %s410
          %s413 = sshll.u32 [#allocation4], 4
          %s414 = int_to_ptr.vmem [resolvable:$true] %s413
          %416 = dma.hbm_to_vmem [thread:$0]  %s6, 16, %s414, [#allocation5]
        $region36: #{esm2_forward.7} parent=11 // pred_fallthru
          _
        // Predicated region
        $region37: #{esm2_forward.7} parent=11 // pred_check
          %p417 = pneg %p209
        $region38: #{esm2_forward.7} parent=11 // pred_check_branch
          %419 = sbr.rel (%p417) target = $region40
        $region39: #{esm2_forward.7} parent=11 // pred_region
          %s421 = ssub.s32 1024, 1024
          %422 = vsyncadd [#allocation5], %s421
          %s423 = sshll.u32 [#allocation6], 4
          %s424 = int_to_ptr.vmem [resolvable:$true] %s423
          %429 = dma.hbm_to_vmem [thread:$0]  %s7, 1024, %s424, [#allocation5], 64, 64, 4
        $region40: #{esm2_forward.7} parent=11 // pred_fallthru
          _
        // Predicated region
        $region41: #{esm2_forward.7} parent=11 // pred_check
          %p430 = pneg %p230
        $region42: #{esm2_forward.7} parent=11 // pred_check_branch
          %432 = sbr.rel (%p430) target = $region44
        $region43: #{esm2_forward.7} parent=11 // pred_region
          _
        $region44: #{esm2_forward.7} parent=11 // pred_fallthru
          _
        // Predicated region
        $region45: #{esm2_forward.7} parent=11 // pred_check
          %p433 = pneg %p256
        $region46: #{esm2_forward.7} parent=11 // pred_check_branch
          %435 = sbr.rel (%p433) target = $region48
        $region47: #{esm2_forward.7} parent=11 // pred_region
          %p436 = scmp.lt.s32.totalorder %s32, 0
          %s437 = scalar_select %p436, %s32, 0
          %s438 = smul.addr %s437, 8
          %s439 = scalar_lea.vmem %s9, %s438
        $region48: #{esm2_forward.7} parent=11 // pred_fallthru
          _
        // Predicated region
        $region49: #{esm2_forward.7} parent=11 // pred_check
          %p440 = pneg %p282
        $region50: #{esm2_forward.7} parent=11 // pred_check_branch
          %442 = sbr.rel (%p440) target = $region52
        $region51: #{esm2_forward.7} parent=11 // pred_region
          %p443 = scmp.lt.s32.totalorder %s32, 0
          %s444 = scalar_select %p443, %s32, 0
          %s445 = smul.addr %s444, 8
          %s446 = scalar_lea.vmem %s10, %s445
        $region52: #{esm2_forward.7} parent=11 // pred_fallthru
          _
      $region12: #{esm2_forward.7} parent=5 // pred_fallthru
        _
      %p447 = scmp.lt.s32.totalorder %s22, 2
      // Predicated region
      $region53: #{esm2_forward.7} parent=5 // pred_check
        %p448 = pneg %p447
      $region54: #{esm2_forward.7} parent=5 // pred_check_branch
        %450 = sbr.rel (%p448) target = $region56
      $region55: #{esm2_forward.7} parent=5 // pred_region
        // Predicated region
        $region57: #{esm2_forward.7} parent=55 // pred_check
          %p451 = pneg %p56
        $region58: #{esm2_forward.7} parent=55 // pred_check_branch
          %453 = sbr.rel (%p451) target = $region60
        $region59: #{esm2_forward.7} parent=55 // pred_region
          %p454 = scmp.lt.s32.totalorder %s29, 1
          %s455 = scalar_select %p454, %s29, 1
          %p456 = scmp.lt.s32.totalorder %s30, 0
          %s457 = scalar_select %p456, %s30, 0
          %s458 = sadd.s32 %s457, %s455
          %s459 = smul.addr %s458, 8
          %s460 = scalar_lea.vmem %s0, %s459
        $region60: #{esm2_forward.7} parent=55 // pred_fallthru
          _
      $region56: #{esm2_forward.7} parent=5 // pred_fallthru
        _
      %p461 = scmp.le.s32.totalorder 1, %s22
      %p462 = scmp.lt.s32.totalorder %s22, 3
      %p463 = pnand %p461, %p462
      %p464 = pneg %p463
      // Predicated region
      $region61: #{esm2_forward.7} parent=5 // pred_check
        _
      $region62: #{esm2_forward.7} parent=5 // pred_check_branch
        %466 = sbr.rel (%p463) target = $region64
      $region63: #{esm2_forward.7} parent=5 // pred_region
        %s467 = ssub.s32 %s22, 1
        // Predicated region
        $region65: #{esm2_forward.7} parent=63 // pred_check
          %p468 = pneg %p167
        $region66: #{esm2_forward.7} parent=63 // pred_check_branch
          %470 = sbr.rel (%p468) target = $region68
        $region67: #{esm2_forward.7} parent=63 // pred_region
          %471 = dma.done [#allocation3], 1024
        $region68: #{esm2_forward.7} parent=63 // pred_fallthru
          _
        // Predicated region
        $region69: #{esm2_forward.7} parent=63 // pred_check
          %p472 = pneg %p188
        $region70: #{esm2_forward.7} parent=63 // pred_check_branch
          %474 = sbr.rel (%p472) target = $region72
        $region71: #{esm2_forward.7} parent=63 // pred_region
          %475 = dma.done [#allocation5], 16
        $region72: #{esm2_forward.7} parent=63 // pred_fallthru
          _
        // Predicated region
        $region73: #{esm2_forward.7} parent=63 // pred_check
          %p476 = pneg %p209
        $region74: #{esm2_forward.7} parent=63 // pred_check_branch
          %478 = sbr.rel (%p476) target = $region76
        $region75: #{esm2_forward.7} parent=63 // pred_region
          %479 = dma.done [#allocation5], 1024
        $region76: #{esm2_forward.7} parent=63 // pred_fallthru
          _
        %p480 = scmp.lt.s32.totalorder %s31, 1
        %s481 = scalar_select %p480, %s31, 1
        %p482 = scmp.lt.s32.totalorder %s32, 0
        %s483 = scalar_select %p482, %s32, 0
        %s484 = sadd.s32 %s483, %s481
        %s485 = smul.addr %s484, 8
        %s486 = scalar_lea.vmem %s0, %s485
        %p487 = pneg %p62
        %p488 = pneg %p59
        %p489 = pneg %p83
        %p490 = pneg %p80
        %p491 = pneg %p104
        %p492 = pneg %p101
        %p493 = pneg %p125
        %p494 = pneg %p122
        %p495 = pneg %p146
        %p496 = pneg %p143
        %p497 = pneg %p167
        %p498 = pneg %p164
        %p499 = pneg %p188
        %p500 = pneg %p185
        %p501 = pneg %p209
        %p502 = pneg %p206
        %p503 = pneg %p230
        %p504 = pneg %p227
        %p505 = scmp.lt.s32.totalorder %s32, 0
        %s506 = scalar_select %p505, %s32, 0
        %s507 = smul.addr %s506, 8
        %s508 = scalar_lea.vmem %s9, %s507
        %p509 = pneg %p256
        %p510 = pneg %p253
        %p511 = scmp.lt.s32.totalorder %s32, 0
        %s512 = scalar_select %p511, %s32, 0
        %s513 = smul.addr %s512, 8
        %s514 = scalar_lea.vmem %s10, %s513
        %p515 = pneg %p282
        %p516 = pneg %p279
        %p517 = pneg %p310
        %p518 = pneg %p307
        %p519 = scmp.lt.s32.totalorder %s31, 1
        %s520 = scalar_select %p519, %s31, 1
        %p521 = scmp.lt.s32.totalorder %s32, 0
        %s522 = scalar_select %p521, %s32, 0
        %s523 = smul.addr %s520, 4
        %s524 = sadd.s32 %s522, %s523
        %s525 = smul.addr %s524, 4
        %s526 = scalar_lea.vmem %s11, %s525
        %p527 = pneg %p338
        %p528 = pneg %p335
        %p529 = scmp.lt.s32.totalorder %s31, 1
        %s530 = scalar_select %p529, %s31, 1
        %p531 = scmp.lt.s32.totalorder %s32, 0
        %s532 = scalar_select %p531, %s32, 0
        %s533 = smul.addr %s530, 4
        %s534 = sadd.s32 %s532, %s533
        %s535 = smul.addr %s534, 4
        %s536 = scalar_lea.vmem %s12, %s535
        %p537 = pneg %p366
        %p538 = pneg %p363
        %p539 = scmp.lt.s32.totalorder %s31, 1
        %s540 = scalar_select %p539, %s31, 1
        %p541 = scmp.lt.s32.totalorder %s32, 0
        %s542 = scalar_select %p541, %s32, 0
        %s543 = smul.addr %s540, 4
        %s544 = sadd.s32 %s542, %s543
        %s545 = smul.addr %s544, 4
        %s546 = scalar_lea.vmem %s13, %s545
        %p547 = scmp.lt.s32.totalorder %s31, 1
        %s548 = scalar_select %p547, %s31, 1
        %p549 = scmp.lt.s32.totalorder %s32, 0
        %s550 = scalar_select %p549, %s32, 0
        %s551 = sadd.s32 %s550, %s548
        %s552 = smul.addr %s551, 8
        %s553 = scalar_lea.vmem %s0, %s552
        %p554 = scmp.lt.s32.totalorder %s32, 0
        %s555 = scalar_select %p554, %s32, 0
        %s556 = smul.addr %s555, 8
        %s557 = scalar_lea.vmem %s9, %s556
        %p558 = scmp.lt.s32.totalorder %s32, 0
        %s559 = scalar_select %p558, %s32, 0
        %s560 = smul.addr %s559, 8
        %s561 = scalar_lea.vmem %s10, %s560
        %p562 = scmp.lt.s32.totalorder %s31, 1
        %s563 = scalar_select %p562, %s31, 1
        %p564 = scmp.lt.s32.totalorder %s32, 0
        %s565 = scalar_select %p564, %s32, 0
        %s566 = smul.addr %s563, 4
        %s567 = sadd.s32 %s565, %s566
        %s568 = smul.addr %s567, 4
        %s569 = scalar_lea.vmem %s11, %s568
        %p570 = scmp.lt.s32.totalorder %s31, 1
        %s571 = scalar_select %p570, %s31, 1
        %p572 = scmp.lt.s32.totalorder %s32, 0
        %s573 = scalar_select %p572, %s32, 0
        %s574 = smul.addr %s571, 4
        %s575 = sadd.s32 %s573, %s574
        %s576 = smul.addr %s575, 4
        %s577 = scalar_lea.vmem %s12, %s576
        %p578 = scmp.lt.s32.totalorder %s31, 1
        %s579 = scalar_select %p578, %s31, 1
        %p580 = scmp.lt.s32.totalorder %s32, 0
        %s581 = scalar_select %p580, %s32, 0
        %s582 = smul.addr %s579, 4
        %s583 = sadd.s32 %s581, %s582
        %s584 = smul.addr %s583, 4
        %s585 = scalar_lea.vmem %s13, %s584
        %v587 = vld [vmem:[%s553] sm:$0xff]
        %v588 = vld [vmem:[%s1] sm:$0x1]
        %v589 = vld [vmem:[%s2] sm:$0x1]
        %590 = vadd.xlane.f32.xlu0 %v587
        %v591 = vpop.xlane.xlu0 %590
        %v592 = vrcp.pop 128.0
        %v593 = vmul.f32 %v591, %v592
        %v594 = vsub.f32 %v587, %v593
        %v595 = vmul.f32 %v594, %v594
        %596 = vadd.xlane.f32.xlu0 %v595
        %v597 = vpop.xlane.xlu0 %596
        %v598 = vmul.f32 %v597, %v592
        %v599 = vadd.f32 %v598, 1e-12
        %v600 = vrsqrt.pop %v599
        %v601 = vmul.f32 %v594, %v600
        %v603 = vlaneseq
        %v604 = vshrl.u32 %v603, 7
        %v605 = vsub.s32 0, %v604
        %v606 = vrot.slane %v588, %v605
        %v608 = vmul.f32 %v601, %v606
        %v610 = vlaneseq
        %v611 = vshrl.u32 %v610, 7
        %v612 = vsub.s32 0, %v611
        %v613 = vrot.slane %v589, %v612
        %v615 = vadd.f32 %v608, %v613
        %v616 = vpack.c.bf16 %v615, %v615
        %v617 = vld [vmem:[%s3] sm:$0xf]
        %v618 = vld [vmem:[%s3 + $0x4] sm:$0xf]
        %v619 = vld [vmem:[%s3 + $0x8] sm:$0xf]
        %v620 = vld [vmem:[%s3 + $0xc] sm:$0xf]
        %v621 = vld [vmem:[%s3 + $0x10] sm:$0xf]
        %v622 = vld [vmem:[%s3 + $0x14] sm:$0xf]
        %v623 = vld [vmem:[%s3 + $0x18] sm:$0xf]
        %v624 = vld [vmem:[%s3 + $0x1c] sm:$0xf]
        %v625 = vld [vmem:[%s3 + $0x20] sm:$0xf]
        %v626 = vld [vmem:[%s3 + $0x24] sm:$0xf]
        %v627 = vld [vmem:[%s3 + $0x28] sm:$0xf]
        %v628 = vld [vmem:[%s3 + $0x2c] sm:$0xf]
        %v629 = vld [vmem:[%s3 + $0x30] sm:$0xf]
        %v630 = vld [vmem:[%s3 + $0x34] sm:$0xf]
        %v631 = vld [vmem:[%s3 + $0x38] sm:$0xf]
        %v632 = vld [vmem:[%s3 + $0x3c] sm:$0xf]
        %v633 = vld [vmem:[%s4] sm:$0x1]
        %v635 = vlaneseq
        %v636 = vshrl.u32 %v635, 7
        %v637 = vsub.s32 0, %v636
        %v638 = vrot.slane %v633, %v637
        %v656 = vunpack.c.l.b16 %v617
        %v657 = vunpack.c.l.b16 %v618
        %v658 = vunpack.c.l.b16 %v619
        %v659 = vunpack.c.l.b16 %v620
        %v660 = vunpack.c.l.b16 %v621
        %v661 = vunpack.c.l.b16 %v622
        %v662 = vunpack.c.l.b16 %v623
        %v663 = vunpack.c.l.b16 %v624
        %v664 = vunpack.c.l.b16 %v625
        %v665 = vunpack.c.l.b16 %v626
        %v666 = vunpack.c.l.b16 %v627
        %v667 = vunpack.c.l.b16 %v628
        %v668 = vunpack.c.l.b16 %v629
        %v669 = vunpack.c.l.b16 %v630
        %v670 = vunpack.c.l.b16 %v631
        %v671 = vunpack.c.l.b16 %v632
        %v672 = vpack.c.b16 %v657, %v656
        %v673 = vpack.c.b16 %v659, %v658
        %v674 = vpack.c.b16 %v661, %v660
        %v675 = vpack.c.b16 %v663, %v662
        %v676 = vpack.c.b16 %v665, %v664
        %v677 = vpack.c.b16 %v667, %v666
        %v678 = vpack.c.b16 %v669, %v668
        %v679 = vpack.c.b16 %v671, %v670
        %688 = vmatprep.subr.bf16.mxu0 0
        %689 = vmatpush1.bf16.msra.mxu0 %v679
        %690 = vmatprep.subr.bf16.mxu0 0
        %691 = vmatpush1.bf16.msra.mxu0 %v678
        %692 = vmatprep.subr.bf16.mxu0 0
        %693 = vmatpush1.bf16.msra.mxu0 %v677
        %694 = vmatprep.subr.bf16.mxu0 0
        %695 = vmatpush1.bf16.msra.mxu0 %v676
        %696 = vmatprep.subr.bf16.mxu0 0
        %697 = vmatpush1.bf16.msra.mxu0 %v675
        %698 = vmatprep.subr.bf16.mxu0 0
        %699 = vmatpush1.bf16.msra.mxu0 %v674
        %700 = vmatprep.subr.bf16.mxu0 0
        %701 = vmatpush1.bf16.msra.mxu0 %v673
        %702 = vmatprep.subr.bf16.mxu0 0
        %703 = vmatpush1.bf16.msra.mxu0 %v672
        %704 = vmatprep.subr.bf16.mxu0 0
        %705 = vmatpush2.bf16.msra.mxu0 0
        %706 = vmatprep.subr.bf16.mxu0 0
        %707 = vmatpush2.bf16.msra.mxu0 0
        %708 = vmatprep.subr.bf16.mxu0 0
        %709 = vmatpush2.bf16.msra.mxu0 0
        %710 = vmatprep.subr.bf16.mxu0 0
        %711 = vmatpush2.bf16.msra.mxu0 0
        %712 = vmatprep.subr.bf16.mxu0 0
        %713 = vmatpush2.bf16.msra.mxu0 0
        %714 = vmatprep.subr.bf16.mxu0 0
        %715 = vmatpush2.bf16.msra.mxu0 0
        %716 = vmatprep.subr.bf16.mxu0 0
        %717 = vmatpush2.bf16.msra.mxu0 0
        %718 = vmatprep.subr.bf16.mxu0 0
        %719 = vmatpush2.bf16.msra.mxu0 0
        %720 = vmatprep.mubr.bf16.mxu0 0
        %721 = vmatmul.mubr.bf16.gmra.mxu0 %v616
        %v722 = vpop.f32.mrf.mxu0
        %v723 = vadd.f32 %v638, %v722
        %v724 = vpop.f32.mrf.mxu0
        %v725 = vpop.f32.mrf.mxu0
        %v726 = vpop.f32.mrf.mxu0
        %727 = vdwg.mxu0
        %v728 = vld [vmem:[#allocation2] sm:$0xf]
        %v729 = vld [vmem:[#allocation2 + $0x4] sm:$0xf]
        %v730 = vld [vmem:[#allocation2 + $0x8] sm:$0xf]
        %v731 = vld [vmem:[#allocation2 + $0xc] sm:$0xf]
        %v732 = vld [vmem:[#allocation2 + $0x10] sm:$0xf]
        %v733 = vld [vmem:[#allocation2 + $0x14] sm:$0xf]
        %v734 = vld [vmem:[#allocation2 + $0x18] sm:$0xf]
        %v735 = vld [vmem:[#allocation2 + $0x1c] sm:$0xf]
        %v736 = vld [vmem:[#allocation2 + $0x20] sm:$0xf]
        %v737 = vld [vmem:[#allocation2 + $0x24] sm:$0xf]
        %v738 = vld [vmem:[#allocation2 + $0x28] sm:$0xf]
        %v739 = vld [vmem:[#allocation2 + $0x2c] sm:$0xf]
        %v740 = vld [vmem:[#allocation2 + $0x30] sm:$0xf]
        %v741 = vld [vmem:[#allocation2 + $0x34] sm:$0xf]
        %v742 = vld [vmem:[#allocation2 + $0x38] sm:$0xf]
        %v743 = vld [vmem:[#allocation2 + $0x3c] sm:$0xf]
        %v744 = vld [vmem:[#allocation4] sm:$0x1]
        %v746 = vlaneseq
        %v747 = vshrl.u32 %v746, 7
        %v748 = vsub.s32 0, %v747
        %v749 = vrot.slane %v744, %v748
        %v767 = vunpack.c.l.b16 %v728
        %v768 = vunpack.c.l.b16 %v729
        %v769 = vunpack.c.l.b16 %v730
        %v770 = vunpack.c.l.b16 %v731
        %v771 = vunpack.c.l.b16 %v732
        %v772 = vunpack.c.l.b16 %v733
        %v773 = vunpack.c.l.b16 %v734
        %v774 = vunpack.c.l.b16 %v735
        %v775 = vunpack.c.l.b16 %v736
        %v776 = vunpack.c.l.b16 %v737
        %v777 = vunpack.c.l.b16 %v738
        %v778 = vunpack.c.l.b16 %v739
        %v779 = vunpack.c.l.b16 %v740
        %v780 = vunpack.c.l.b16 %v741
        %v781 = vunpack.c.l.b16 %v742
        %v782 = vunpack.c.l.b16 %v743
        %v783 = vpack.c.b16 %v768, %v767
        %v784 = vpack.c.b16 %v770, %v769
        %v785 = vpack.c.b16 %v772, %v771
        %v786 = vpack.c.b16 %v774, %v773
        %v787 = vpack.c.b16 %v776, %v775
        %v788 = vpack.c.b16 %v778, %v777
        %v789 = vpack.c.b16 %v780, %v779
        %v790 = vpack.c.b16 %v782, %v781
        %799 = vmatprep.subr.bf16.mxu0 0
        %800 = vmatpush1.bf16.msra.mxu0 %v790
        %801 = vmatprep.subr.bf16.mxu0 0
        %802 = vmatpush1.bf16.msra.mxu0 %v789
        %803 = vmatprep.subr.bf16.mxu0 0
        %804 = vmatpush1.bf16.msra.mxu0 %v788
        %805 = vmatprep.subr.bf16.mxu0 0
        %806 = vmatpush1.bf16.msra.mxu0 %v787
        %807 = vmatprep.subr.bf16.mxu0 0
        %808 = vmatpush1.bf16.msra.mxu0 %v786
        %809 = vmatprep.subr.bf16.mxu0 0
        %810 = vmatpush1.bf16.msra.mxu0 %v785
        %811 = vmatprep.subr.bf16.mxu0 0
        %812 = vmatpush1.bf16.msra.mxu0 %v784
        %813 = vmatprep.subr.bf16.mxu0 0
        %814 = vmatpush1.bf16.msra.mxu0 %v783
        %815 = vmatprep.subr.bf16.mxu0 0
        %816 = vmatpush2.bf16.msra.mxu0 0
        %817 = vmatprep.subr.bf16.mxu0 0
        %818 = vmatpush2.bf16.msra.mxu0 0
        %819 = vmatprep.subr.bf16.mxu0 0
        %820 = vmatpush2.bf16.msra.mxu0 0
        %821 = vmatprep.subr.bf16.mxu0 0
        %822 = vmatpush2.bf16.msra.mxu0 0
        %823 = vmatprep.subr.bf16.mxu0 0
        %824 = vmatpush2.bf16.msra.mxu0 0
        %825 = vmatprep.subr.bf16.mxu0 0
        %826 = vmatpush2.bf16.msra.mxu0 0
        %827 = vmatprep.subr.bf16.mxu0 0
        %828 = vmatpush2.bf16.msra.mxu0 0
        %829 = vmatprep.subr.bf16.mxu0 0
        %830 = vmatpush2.bf16.msra.mxu0 0
        %831 = vmatprep.mubr.bf16.mxu0 0
        %832 = vmatmul.mubr.bf16.gmra.mxu0 %v616
        %v833 = vpop.f32.mrf.mxu0
        %v834 = vadd.f32 %v749, %v833
        %v835 = vpop.f32.mrf.mxu0
        %v836 = vpop.f32.mrf.mxu0
        %v837 = vpop.f32.mrf.mxu0
        %838 = vdwg.mxu0
        %v839 = vld [vmem:[#allocation6] sm:$0xf]
        %v840 = vld [vmem:[#allocation6 + $0x4] sm:$0xf]
        %v841 = vld [vmem:[#allocation6 + $0x8] sm:$0xf]
        %v842 = vld [vmem:[#allocation6 + $0xc] sm:$0xf]
        %v843 = vld [vmem:[#allocation6 + $0x10] sm:$0xf]
        %v844 = vld [vmem:[#allocation6 + $0x14] sm:$0xf]
        %v845 = vld [vmem:[#allocation6 + $0x18] sm:$0xf]
        %v846 = vld [vmem:[#allocation6 + $0x1c] sm:$0xf]
        %v847 = vld [vmem:[#allocation6 + $0x20] sm:$0xf]
        %v848 = vld [vmem:[#allocation6 + $0x24] sm:$0xf]
        %v849 = vld [vmem:[#allocation6 + $0x28] sm:$0xf]
        %v850 = vld [vmem:[#allocation6 + $0x2c] sm:$0xf]
        %v851 = vld [vmem:[#allocation6 + $0x30] sm:$0xf]
        %v852 = vld [vmem:[#allocation6 + $0x34] sm:$0xf]
        %v853 = vld [vmem:[#allocation6 + $0x38] sm:$0xf]
        %v854 = vld [vmem:[#allocation6 + $0x3c] sm:$0xf]
        %v855 = vld [vmem:[%s8] sm:$0x1]
        %v857 = vlaneseq
        %v858 = vshrl.u32 %v857, 7
        %v859 = vsub.s32 0, %v858
        %v860 = vrot.slane %v855, %v859
        %v878 = vunpack.c.l.b16 %v839
        %v879 = vunpack.c.l.b16 %v840
        %v880 = vunpack.c.l.b16 %v841
        %v881 = vunpack.c.l.b16 %v842
        %v882 = vunpack.c.l.b16 %v843
        %v883 = vunpack.c.l.b16 %v844
        %v884 = vunpack.c.l.b16 %v845
        %v885 = vunpack.c.l.b16 %v846
        %v886 = vunpack.c.l.b16 %v847
        %v887 = vunpack.c.l.b16 %v848
        %v888 = vunpack.c.l.b16 %v849
        %v889 = vunpack.c.l.b16 %v850
        %v890 = vunpack.c.l.b16 %v851
        %v891 = vunpack.c.l.b16 %v852
        %v892 = vunpack.c.l.b16 %v853
        %v893 = vunpack.c.l.b16 %v854
        %v894 = vpack.c.b16 %v879, %v878
        %v895 = vpack.c.b16 %v881, %v880
        %v896 = vpack.c.b16 %v883, %v882
        %v897 = vpack.c.b16 %v885, %v884
        %v898 = vpack.c.b16 %v887, %v886
        %v899 = vpack.c.b16 %v889, %v888
        %v900 = vpack.c.b16 %v891, %v890
        %v901 = vpack.c.b16 %v893, %v892
        %910 = vmatprep.subr.bf16.mxu0 0
        %911 = vmatpush1.bf16.msra.mxu0 %v901
        %912 = vmatprep.subr.bf16.mxu0 0
        %913 = vmatpush1.bf16.msra.mxu0 %v900
        %914 = vmatprep.subr.bf16.mxu0 0
        %915 = vmatpush1.bf16.msra.mxu0 %v899
        %916 = vmatprep.subr.bf16.mxu0 0
        %917 = vmatpush1.bf16.msra.mxu0 %v898
        %918 = vmatprep.subr.bf16.mxu0 0
        %919 = vmatpush1.bf16.msra.mxu0 %v897
        %920 = vmatprep.subr.bf16.mxu0 0
        %921 = vmatpush1.bf16.msra.mxu0 %v896
        %922 = vmatprep.subr.bf16.mxu0 0
        %923 = vmatpush1.bf16.msra.mxu0 %v895
        %924 = vmatprep.subr.bf16.mxu0 0
        %925 = vmatpush1.bf16.msra.mxu0 %v894
        %926 = vmatprep.subr.bf16.mxu0 0
        %927 = vmatpush2.bf16.msra.mxu0 0
        %928 = vmatprep.subr.bf16.mxu0 0
        %929 = vmatpush2.bf16.msra.mxu0 0
        %930 = vmatprep.subr.bf16.mxu0 0
        %931 = vmatpush2.bf16.msra.mxu0 0
        %932 = vmatprep.subr.bf16.mxu0 0
        %933 = vmatpush2.bf16.msra.mxu0 0
        %934 = vmatprep.subr.bf16.mxu0 0
        %935 = vmatpush2.bf16.msra.mxu0 0
        %936 = vmatprep.subr.bf16.mxu0 0
        %937 = vmatpush2.bf16.msra.mxu0 0
        %938 = vmatprep.subr.bf16.mxu0 0
        %939 = vmatpush2.bf16.msra.mxu0 0
        %940 = vmatprep.subr.bf16.mxu0 0
        %941 = vmatpush2.bf16.msra.mxu0 0
        %942 = vmatprep.mubr.bf16.mxu0 0
        %943 = vmatmul.mubr.bf16.gmra.mxu0 %v616
        %v944 = vpop.f32.mrf.mxu0
        %v945 = vadd.f32 %v860, %v944
        %v946 = vpop.f32.mrf.mxu0
        %v947 = vpop.f32.mrf.mxu0
        %v948 = vpop.f32.mrf.mxu0
        %949 = vdwg.mxu0
        %v950 = vld [vmem:[%s557] sm:$0xff]
        %v951 = vld [vmem:[%s561] sm:$0xff]
        %v952 = vmul.f32 %v723, %v950
        %954 = vrot.lane.b32.xlu0 %v951, 16
        %v955 = vpop.permute.xlu0 %954
        %v957 = vmul.f32 %v723, %v955
        %959 = vrot.lane.b32.xlu0 %v957, 112
        %v960 = vpop.permute.xlu0 %959
        %v962 = vsub.f32 %v952, %v960
        %964 = vrot.lane.b32.xlu0 %v950, 16
        %v965 = vpop.permute.xlu0 %964
        %v967 = vmul.f32 %v723, %v965
        %v968 = vmul.f32 %v723, %v951
        %970 = vrot.lane.b32.xlu0 %v968, 16
        %v971 = vpop.permute.xlu0 %970
        %v973 = vadd.f32 %v967, %v971
        %vm974 = vcmask 130048
        %v975 = vsel %vm974, %v962, %v973
        %v976 = vpack.c.bf16 %v975, %v975
        %vm977 = vcmask 257024
        %978 = vst.msk [vmem:[%s569] sm:$0xf] %vm977, %v976
        %v979 = vmul.f32 %v834, %v950
        %v980 = vmul.f32 %v834, %v955
        %982 = vrot.lane.b32.xlu0 %v980, 112
        %v983 = vpop.permute.xlu0 %982
        %v985 = vsub.f32 %v979, %v983
        %v986 = vmul.f32 %v834, %v965
        %v987 = vmul.f32 %v834, %v951
        %989 = vrot.lane.b32.xlu0 %v987, 16
        %v990 = vpop.permute.xlu0 %989
        %v992 = vadd.f32 %v986, %v990
        %v993 = vsel %vm974, %v985, %v992
        %v994 = vpack.c.bf16 %v993, %v993
        %995 = vst.msk [vmem:[%s577] sm:$0xf] %vm977, %v994
        %v996 = vpack.c.bf16 %v945, %v945
        %997 = vst.msk [vmem:[%s585] sm:$0xf] %vm977, %v996
        %998 = vrot.lane.b32.xlu0 %v950, 32
        %v999 = vpop.permute.xlu0 %998
        %v1001 = vmul.f32 %v723, %v999
        %1002 = vrot.lane.b32.xlu0 %v951, 48
        %v1003 = vpop.permute.xlu0 %1002
        %v1005 = vmul.f32 %v723, %v1003
        %1007 = vrot.lane.b32.xlu0 %v1005, 112
        %v1008 = vpop.permute.xlu0 %1007
        %v1010 = vsub.f32 %v1001, %v1008
        %1011 = vrot.lane.b32.xlu0 %v950, 48
        %v1012 = vpop.permute.xlu0 %1011
        %v1014 = vmul.f32 %v723, %v1012
        %1015 = vrot.lane.b32.xlu0 %v951, 32
        %v1016 = vpop.permute.xlu0 %1015
        %v1018 = vmul.f32 %v723, %v1016
        %1020 = vrot.lane.b32.xlu0 %v1018, 16
        %v1021 = vpop.permute.xlu0 %1020
        %v1023 = vadd.f32 %v1014, %v1021
        %1025 = vrot.lane.b32.xlu0 %v1010, 96
        %v1026 = vpop.permute.xlu0 %1025
        %1029 = vrot.lane.b32.xlu0 %v1023, 96
        %v1030 = vpop.permute.xlu0 %1029
        %v1032 = vsel %vm974, %v1026, %v1030
        %v1033 = vpack.c.bf16 %v1032, %v1032
        %s1034 = scalar_lea.vmem %s569, 4
        %1035 = vst.msk [vmem:[%s1034] sm:$0xf] %vm977, %v1033
        %v1036 = vmul.f32 %v834, %v999
        %v1037 = vmul.f32 %v834, %v1003
        %1039 = vrot.lane.b32.xlu0 %v1037, 112
        %v1040 = vpop.permute.xlu0 %1039
        %v1042 = vsub.f32 %v1036, %v1040
        %v1043 = vmul.f32 %v834, %v1012
        %v1044 = vmul.f32 %v834, %v1016
        %1046 = vrot.lane.b32.xlu0 %v1044, 16
        %v1047 = vpop.permute.xlu0 %1046
        %v1049 = vadd.f32 %v1043, %v1047
        %1051 = vrot.lane.b32.xlu0 %v1042, 96
        %v1052 = vpop.permute.xlu0 %1051
        %1055 = vrot.lane.b32.xlu0 %v1049, 96
        %v1056 = vpop.permute.xlu0 %1055
        %v1058 = vsel %vm974, %v1052, %v1056
        %v1059 = vpack.c.bf16 %v1058, %v1058
        %s1060 = scalar_lea.vmem %s577, 4
        %1061 = vst.msk [vmem:[%s1060] sm:$0xf] %vm977, %v1059
        %v1063 = vunpack.c.l.b16 %v996
        %v1064 = vpack.c.b16 %v1063, %v1063
        %1065 = vrot.lane.b32.xlu0 %v1064, 96
        %v1066 = vpop.permute.xlu0 %1065
        %s1068 = scalar_lea.vmem %s585, 4
        %1069 = vst.msk [vmem:[%s1068] sm:$0xf] %vm977, %v1066
        %1070 = vrot.lane.b32.xlu0 %v950, 64
        %v1071 = vpop.permute.xlu0 %1070
        %v1073 = vmul.f32 %v723, %v1071
        %1074 = vrot.lane.b32.xlu0 %v951, 80
        %v1075 = vpop.permute.xlu0 %1074
        %v1077 = vmul.f32 %v723, %v1075
        %1079 = vrot.lane.b32.xlu0 %v1077, 112
        %v1080 = vpop.permute.xlu0 %1079
        %v1082 = vsub.f32 %v1073, %v1080
        %1083 = vrot.lane.b32.xlu0 %v950, 80
        %v1084 = vpop.permute.xlu0 %1083
        %v1086 = vmul.f32 %v723, %v1084
        %1087 = vrot.lane.b32.xlu0 %v951, 64
        %v1088 = vpop.permute.xlu0 %1087
        %v1090 = vmul.f32 %v723, %v1088
        %1092 = vrot.lane.b32.xlu0 %v1090, 16
        %v1093 = vpop.permute.xlu0 %1092
        %v1095 = vadd.f32 %v1086, %v1093
        %1097 = vrot.lane.b32.xlu0 %v1082, 64
        %v1098 = vpop.permute.xlu0 %1097
        %1101 = vrot.lane.b32.xlu0 %v1095, 64
        %v1102 = vpop.permute.xlu0 %1101
        %v1104 = vsel %vm974, %v1098, %v1102
        %v1105 = vpack.c.bf16 %v1104, %v1104
        %s1106 = scalar_lea.vmem %s569, 8
        %1107 = vst.msk [vmem:[%s1106] sm:$0xf] %vm977, %v1105
        %v1108 = vmul.f32 %v834, %v1071
        %v1109 = vmul.f32 %v834, %v1075
        %1111 = vrot.lane.b32.xlu0 %v1109, 112
        %v1112 = vpop.permute.xlu0 %1111
        %v1114 = vsub.f32 %v1108, %v1112
        %v1115 = vmul.f32 %v834, %v1084
        %v1116 = vmul.f32 %v834, %v1088
        %1118 = vrot.lane.b32.xlu0 %v1116, 16
        %v1119 = vpop.permute.xlu0 %1118
        %v1121 = vadd.f32 %v1115, %v1119
        %1123 = vrot.lane.b32.xlu0 %v1114, 64
        %v1124 = vpop.permute.xlu0 %1123
        %1127 = vrot.lane.b32.xlu0 %v1121, 64
        %v1128 = vpop.permute.xlu0 %1127
        %v1130 = vsel %vm974, %v1124, %v1128
        %v1131 = vpack.c.bf16 %v1130, %v1130
        %s1132 = scalar_lea.vmem %s577, 8
        %1133 = vst.msk [vmem:[%s1132] sm:$0xf] %vm977, %v1131
        %1134 = vrot.lane.b32.xlu0 %v1064, 64
        %v1135 = vpop.permute.xlu0 %1134
        %s1137 = scalar_lea.vmem %s585, 8
        %1138 = vst.msk [vmem:[%s1137] sm:$0xf] %vm977, %v1135
        %1139 = vrot.lane.b32.xlu0 %v950, 96
        %v1140 = vpop.permute.xlu0 %1139
        %v1142 = vmul.f32 %v723, %v1140
        %1143 = vrot.lane.b32.xlu0 %v951, 112
        %v1144 = vpop.permute.xlu0 %1143
        %v1146 = vmul.f32 %v723, %v1144
        %1148 = vrot.lane.b32.xlu0 %v1146, 112
        %v1149 = vpop.permute.xlu0 %1148
        %v1151 = vsub.f32 %v1142, %v1149
        %1152 = vrot.lane.b32.xlu0 %v950, 112
        %v1153 = vpop.permute.xlu0 %1152
        %v1155 = vmul.f32 %v723, %v1153
        %1156 = vrot.lane.b32.xlu0 %v951, 96
        %v1157 = vpop.permute.xlu0 %1156
        %v1159 = vmul.f32 %v723, %v1157
        %1161 = vrot.lane.b32.xlu0 %v1159, 16
        %v1162 = vpop.permute.xlu0 %1161
        %v1164 = vadd.f32 %v1155, %v1162
        %1166 = vrot.lane.b32.xlu0 %v1151, 32
        %v1167 = vpop.permute.xlu0 %1166
        %1170 = vrot.lane.b32.xlu0 %v1164, 32
        %v1171 = vpop.permute.xlu0 %1170
        %v1173 = vsel %vm974, %v1167, %v1171
        %v1174 = vpack.c.bf16 %v1173, %v1173
        %s1175 = scalar_lea.vmem %s569, 12
        %1176 = vst.msk [vmem:[%s1175] sm:$0xf] %vm977, %v1174
        %v1177 = vmul.f32 %v834, %v1140
        %v1178 = vmul.f32 %v834, %v1144
        %1180 = vrot.lane.b32.xlu0 %v1178, 112
        %v1181 = vpop.permute.xlu0 %1180
        %v1183 = vsub.f32 %v1177, %v1181
        %v1184 = vmul.f32 %v834, %v1153
        %v1185 = vmul.f32 %v834, %v1157
        %1187 = vrot.lane.b32.xlu0 %v1185, 16
        %v1188 = vpop.permute.xlu0 %1187
        %v1190 = vadd.f32 %v1184, %v1188
        %1192 = vrot.lane.b32.xlu0 %v1183, 32
        %v1193 = vpop.permute.xlu0 %1192
        %1196 = vrot.lane.b32.xlu0 %v1190, 32
        %v1197 = vpop.permute.xlu0 %1196
        %v1199 = vsel %vm974, %v1193, %v1197
        %v1200 = vpack.c.bf16 %v1199, %v1199
        %s1201 = scalar_lea.vmem %s577, 12
        %1202 = vst.msk [vmem:[%s1201] sm:$0xf] %vm977, %v1200
        %1203 = vrot.lane.b32.xlu0 %v1064, 32
        %v1204 = vpop.permute.xlu0 %1203
        %s1206 = scalar_lea.vmem %s585, 12
        %1207 = vst.msk [vmem:[%s1206] sm:$0xf] %vm977, %v1204
        %p1208 = scmp.lt.s32.totalorder %s31, 1
        %s1209 = scalar_select %p1208, %s31, 1
        %p1210 = scmp.lt.s32.totalorder %s32, 0
        %s1211 = scalar_select %p1210, %s32, 0
        %s1212 = smul.addr %s1209, 4
        %s1213 = sadd.s32 %s1211, %s1212
        %s1214 = smul.addr %s1213, 4
        %s1215 = scalar_lea.vmem %s11, %s1214
        %p1216 = scmp.lt.s32.totalorder %s31, 1
        %s1217 = scalar_select %p1216, %s31, 1
        %p1218 = scmp.lt.s32.totalorder %s32, 0
        %s1219 = scalar_select %p1218, %s32, 0
        %s1220 = smul.addr %s1217, 4
        %s1221 = sadd.s32 %s1219, %s1220
        %s1222 = smul.addr %s1221, 4
        %s1223 = scalar_lea.vmem %s12, %s1222
        %p1224 = scmp.lt.s32.totalorder %s31, 1
        %s1225 = scalar_select %p1224, %s31, 1
        %p1226 = scmp.lt.s32.totalorder %s32, 0
        %s1227 = scalar_select %p1226, %s32, 0
        %s1228 = smul.addr %s1225, 4
        %s1229 = sadd.s32 %s1227, %s1228
        %s1230 = smul.addr %s1229, 4
        %s1231 = scalar_lea.vmem %s13, %s1230
        // Predicated region
        $region77: #{esm2_forward.7} parent=63 // pred_check
          %p1232 = pneg %p307
        $region78: #{esm2_forward.7} parent=63 // pred_check_branch
          %1234 = sbr.rel (%p1232) target = $region80
        $region79: #{esm2_forward.7} parent=63 // pred_region
          _
        $region80: #{esm2_forward.7} parent=63 // pred_fallthru
          _
        // Predicated region
        $region81: #{esm2_forward.7} parent=63 // pred_check
          %p1235 = pneg %p335
        $region82: #{esm2_forward.7} parent=63 // pred_check_branch
          %1237 = sbr.rel (%p1235) target = $region84
        $region83: #{esm2_forward.7} parent=63 // pred_region
          _
        $region84: #{esm2_forward.7} parent=63 // pred_fallthru
          _
        // Predicated region
        $region85: #{esm2_forward.7} parent=63 // pred_check
          %p1238 = pneg %p363
        $region86: #{esm2_forward.7} parent=63 // pred_check_branch
          %1240 = sbr.rel (%p1238) target = $region88
        $region87: #{esm2_forward.7} parent=63 // pred_region
          _
        $region88: #{esm2_forward.7} parent=63 // pred_fallthru
          _
      $region64: #{esm2_forward.7} parent=5 // pred_fallthru
        _
      %p1241 = scmp.le.s32.totalorder 2, %s22
      // Predicated region
      $region89: #{esm2_forward.7} parent=5 // pred_check
        %p1242 = pneg %p1241
      $region90: #{esm2_forward.7} parent=5 // pred_check_branch
        %1244 = sbr.rel (%p1242) target = $region92
      $region91: #{esm2_forward.7} parent=5 // pred_region
        %s1245 = ssub.s32 %s22, 2
        // Predicated region
        $region93: #{esm2_forward.7} parent=91 // pred_check
          %p1246 = pneg %p313
        $region94: #{esm2_forward.7} parent=91 // pred_check_branch
          %1248 = sbr.rel (%p1246) target = $region96
        $region95: #{esm2_forward.7} parent=91 // pred_region
          %p1249 = scmp.lt.s32.totalorder %s33, 1
          %s1250 = scalar_select %p1249, %s33, 1
          %p1251 = scmp.lt.s32.totalorder %s34, 0
          %s1252 = scalar_select %p1251, %s34, 0
          %s1253 = smul.addr %s1250, 4
          %s1254 = sadd.s32 %s1252, %s1253
          %s1255 = smul.addr %s1254, 4
          %s1256 = scalar_lea.vmem %s11, %s1255
        $region96: #{esm2_forward.7} parent=91 // pred_fallthru
          _
        // Predicated region
        $region97: #{esm2_forward.7} parent=91 // pred_check
          %p1257 = pneg %p341
        $region98: #{esm2_forward.7} parent=91 // pred_check_branch
          %1259 = sbr.rel (%p1257) target = $region100
        $region99: #{esm2_forward.7} parent=91 // pred_region
          %p1260 = scmp.lt.s32.totalorder %s33, 1
          %s1261 = scalar_select %p1260, %s33, 1
          %p1262 = scmp.lt.s32.totalorder %s34, 0
          %s1263 = scalar_select %p1262, %s34, 0
          %s1264 = smul.addr %s1261, 4
          %s1265 = sadd.s32 %s1263, %s1264
          %s1266 = smul.addr %s1265, 4
          %s1267 = scalar_lea.vmem %s12, %s1266
        $region100: #{esm2_forward.7} parent=91 // pred_fallthru
          _
        // Predicated region
        $region101: #{esm2_forward.7} parent=91 // pred_check
          %p1268 = pneg %p369
        $region102: #{esm2_forward.7} parent=91 // pred_check_branch
          %1270 = sbr.rel (%p1268) target = $region104
        $region103: #{esm2_forward.7} parent=91 // pred_region
          %p1271 = scmp.lt.s32.totalorder %s33, 1
          %s1272 = scalar_select %p1271, %s33, 1
          %p1273 = scmp.lt.s32.totalorder %s34, 0
          %s1274 = scalar_select %p1273, %s34, 0
          %s1275 = smul.addr %s1272, 4
          %s1276 = sadd.s32 %s1274, %s1275
          %s1277 = smul.addr %s1276, 4
          %s1278 = scalar_lea.vmem %s13, %s1277
        $region104: #{esm2_forward.7} parent=91 // pred_fallthru
          _
      $region92: #{esm2_forward.7} parent=5 // pred_fallthru
        _
    $region6: #{esm2_forward.7} parent=1 // loop_footer
      %s26 = sadd.s32 1, %s22
    $region7: #{esm2_forward.7} parent=1 // loop_footer_branch
      %21 = sbr.rel target = $region3
    $region8: #{esm2_forward.7} parent=1 // loop_exit
      _
    %1279 = vsyncpa [#allocation3], 1
    %s1280 = scalar_lea.sflag [#allocation3], 1
    %1281 = vsyncpa %s1280, 1
    %1282 = vsyncpa [#allocation5], 1

// kernel: esm2_forward.10
$region0: #{esm2_forward.10}
  #allocation0 [shape = 'u32[]', space=smem, size = 0x4, offset = 0x4, fixed_abs, tag = 'smem constant byte address 0x4 - core index']
  #allocation1 [shape = 'u32[144,128]{1,0:T(1,128)}', space=vmem, size = 0x12000, scoped, tag = 'internal scratch']
  %s0 = inlined_call_operand.vmem [shape: f32[2,8,128], index: 0, kind: input, shape index: {}]
  %s1 = inlined_call_operand.vmem [shape: f32[1,128], index: 1, kind: input, shape index: {}]
  %s2 = inlined_call_operand.vmem [shape: f32[1,128], index: 2, kind: input, shape index: {}]
  %s3 = inlined_call_operand.vmem [shape: bf16[128,128], index: 3, kind: input, shape index: {}]
  %s4 = inlined_call_operand.vmem [shape: f32[1,128], index: 4, kind: input, shape index: {}]
  %s5 = inlined_call_operand.vmem [shape: bf16[128,128], index: 5, kind: input, shape index: {}]
  %s6 = inlined_call_operand.vmem [shape: f32[1,128], index: 6, kind: input, shape index: {}]
  %s7 = inlined_call_operand.vmem [shape: bf16[128,128], index: 7, kind: input, shape index: {}]
  %s8 = inlined_call_operand.vmem [shape: f32[1,128], index: 8, kind: input, shape index: {}]
  %s9 = inlined_call_operand.vmem [shape: f32[8,16], index: 9, kind: input, shape index: {}]
  %s10 = inlined_call_operand.vmem [shape: f32[8,16], index: 10, kind: input, shape index: {}]
  %s11 = inlined_call_operand.vmem [shape: bf16[2,4,8,32], index: 11, kind: output, shape index: {0}]
  %s12 = inlined_call_operand.vmem [shape: bf16[2,4,8,32], index: 12, kind: output, shape index: {1}]
  %s13 = inlined_call_operand.vmem [shape: bf16[2,4,8,32], index: 13, kind: output, shape index: {2}]
  %14 = xla_tuple %s11, %s12, %s13
  %s15 = sld [smem:[#allocation0]]
  $region93: #{esm2_forward.10} parent=0
    _
  %s17 = ssub.s32 1, %s15
  %s18 = scalar_select 0, %s17, %s15
  loop: start=0, step=1, limit=4
  $region2: #{esm2_forward.10} parent=0 // loop_pre_header
    _
  $region3: #{esm2_forward.10} parent=0 // loop_header
    %s20 = sphi 0, %s24
    %p21 = scmp.ge.s32.totalorder %s20, 4
    %s27 = sphi 0, %s39
    %s28 = sphi 0, %s35
    %s29 = sphi 0, %s27
    %s30 = sphi 0, %s28
    %s31 = sphi 0, %s29
    %s32 = sphi 0, %s30
    %s44 = sphi 0, %s46
    %s47 = sphi 0, %s44
    %s48 = sphi 0, %s47
    %s64 = sphi 0, %s48
    %s68 = sphi 0, %s68
    %s70 = sphi 0, %s68
    %s71 = sphi 0, %s70
    %s85 = sphi 0, %s71
    %s89 = sphi 0, %s89
    %s91 = sphi 0, %s89
    %s92 = sphi 0, %s91
    %s106 = sphi 0, %s92
    %s110 = sphi 0, %s110
    %s112 = sphi 0, %s110
    %s113 = sphi 0, %s112
    %s127 = sphi 0, %s113
    %s131 = sphi 0, %s131
    %s133 = sphi 0, %s131
    %s134 = sphi 0, %s133
    %s148 = sphi 0, %s134
    %s152 = sphi 0, %s152
    %s154 = sphi 0, %s152
    %s155 = sphi 0, %s154
    %s169 = sphi 0, %s155
    %s173 = sphi 0, %s173
    %s175 = sphi 0, %s173
    %s176 = sphi 0, %s175
    %s190 = sphi 0, %s176
    %s194 = sphi 0, %s194
    %s196 = sphi 0, %s194
    %s197 = sphi 0, %s196
    %s211 = sphi 0, %s197
    %s215 = sphi 0, %s215
    %s217 = sphi 0, %s215
    %s218 = sphi 0, %s217
    %s232 = sphi 0, %s218
    %s238 = sphi 0, %s240
    %s241 = sphi 0, %s238
    %s242 = sphi 0, %s241
    %s258 = sphi 0, %s242
    %s264 = sphi 0, %s266
    %s267 = sphi 0, %s264
    %s268 = sphi 0, %s267
    %s284 = sphi 0, %s268
    %s292 = sphi 0, %s294
    %s295 = sphi 0, %s292
    %s296 = sphi 0, %s295
    %s312 = sphi 0, %s296
    %s320 = sphi 0, %s322
    %s323 = sphi 0, %s320
    %s324 = sphi 0, %s323
    %s340 = sphi 0, %s324
    %s348 = sphi 0, %s350
    %s351 = sphi 0, %s348
    %s352 = sphi 0, %s351
    %s368 = sphi 0, %s352
  $region4: #{esm2_forward.10} parent=0 // loop_header_branch
    %23 = sbr.rel (%p21) target = $region8
  $region5: #{esm2_forward.10} parent=0 // loop_body
    %s25 = ssub.s32 %s20, 1
    %s26 = ssub.s32 %s20, 2
    %s33 = sadd.s32 1, %s28
    %p34 = scmp.ge.s32.totalorder %s33, 1
    %s35 = scalar_select %p34, 0, %s33
    %s36 = sadd.s32 1, %s27
    %s37 = scalar_select %p34, %s36, %s27
    %p38 = scmp.ge.s32.totalorder %s37, 2
    %s39 = scalar_select %p38, 0, %s37
    %s40 = ssub.s32 %s27, %s39
    %s41 = ssub.s32 %s28, %s35
    %s42 = sor.u32 %s40, %s41
    %p43 = scmp.eq.s32.totalorder %s42, 0
    %s45 = sadd.s32 %s44, 1
    %s46 = scalar_select %p43, %s44, %s45
    %p49 = pneg %p43
    %p50 = scmp.eq.s32.totalorder %s20, 1
    %p51 = por %p49, %p50
    %p52 = scmp.ne.s32.totalorder %s44, %s47
    %p53 = scmp.eq.s32.totalorder %s20, 0
    %p54 = por %p52, %p53
    %p55 = scmp.ne.s32.totalorder %s44, %s47
    %p56 = scmp.eq.s32.totalorder %s25, 1
    %p57 = por %p55, %p56
    %p58 = scmp.ne.s32.totalorder %s47, %s48
    %p59 = scmp.eq.s32.totalorder %s25, 0
    %p60 = por %p58, %p59
    %p61 = scmp.ne.s32.totalorder %s47, %s48
    %p62 = scmp.eq.s32.totalorder %s26, 1
    %p63 = por %p61, %p62
    %p65 = scmp.ne.s32.totalorder %s48, %s64
    %p66 = scmp.eq.s32.totalorder %s26, 0
    %p67 = por %p65, %p66
    %s69 = sadd.s32 %s68, 1
    %p72 = scmp.eq.s32.totalorder %s20, 1
    %p73 = scmp.ne.s32.totalorder %s68, %s70
    %p74 = scmp.eq.s32.totalorder %s20, 0
    %p75 = por %p73, %p74
    %p76 = scmp.ne.s32.totalorder %s68, %s70
    %p77 = scmp.eq.s32.totalorder %s25, 1
    %p78 = por %p76, %p77
    %p79 = scmp.ne.s32.totalorder %s70, %s71
    %p80 = scmp.eq.s32.totalorder %s25, 0
    %p81 = por %p79, %p80
    %p82 = scmp.ne.s32.totalorder %s70, %s71
    %p83 = scmp.eq.s32.totalorder %s26, 1
    %p84 = por %p82, %p83
    %p86 = scmp.ne.s32.totalorder %s71, %s85
    %p87 = scmp.eq.s32.totalorder %s26, 0
    %p88 = por %p86, %p87
    %s90 = sadd.s32 %s89, 1
    %p93 = scmp.eq.s32.totalorder %s20, 1
    %p94 = scmp.ne.s32.totalorder %s89, %s91
    %p95 = scmp.eq.s32.totalorder %s20, 0
    %p96 = por %p94, %p95
    %p97 = scmp.ne.s32.totalorder %s89, %s91
    %p98 = scmp.eq.s32.totalorder %s25, 1
    %p99 = por %p97, %p98
    %p100 = scmp.ne.s32.totalorder %s91, %s92
    %p101 = scmp.eq.s32.totalorder %s25, 0
    %p102 = por %p100, %p101
    %p103 = scmp.ne.s32.totalorder %s91, %s92
    %p104 = scmp.eq.s32.totalorder %s26, 1
    %p105 = por %p103, %p104
    %p107 = scmp.ne.s32.totalorder %s92, %s106
    %p108 = scmp.eq.s32.totalorder %s26, 0
    %p109 = por %p107, %p108
    %s111 = sadd.s32 %s110, 1
    %p114 = scmp.eq.s32.totalorder %s20, 1
    %p115 = scmp.ne.s32.totalorder %s110, %s112
    %p116 = scmp.eq.s32.totalorder %s20, 0
    %p117 = por %p115, %p116
    %p118 = scmp.ne.s32.totalorder %s110, %s112
    %p119 = scmp.eq.s32.totalorder %s25, 1
    %p120 = por %p118, %p119
    %p121 = scmp.ne.s32.totalorder %s112, %s113
    %p122 = scmp.eq.s32.totalorder %s25, 0
    %p123 = por %p121, %p122
    %p124 = scmp.ne.s32.totalorder %s112, %s113
    %p125 = scmp.eq.s32.totalorder %s26, 1
    %p126 = por %p124, %p125
    %p128 = scmp.ne.s32.totalorder %s113, %s127
    %p129 = scmp.eq.s32.totalorder %s26, 0
    %p130 = por %p128, %p129
    %s132 = sadd.s32 %s131, 1
    %p135 = scmp.eq.s32.totalorder %s20, 1
    %p136 = scmp.ne.s32.totalorder %s131, %s133
    %p137 = scmp.eq.s32.totalorder %s20, 0
    %p138 = por %p136, %p137
    %p139 = scmp.ne.s32.totalorder %s131, %s133
    %p140 = scmp.eq.s32.totalorder %s25, 1
    %p141 = por %p139, %p140
    %p142 = scmp.ne.s32.totalorder %s133, %s134
    %p143 = scmp.eq.s32.totalorder %s25, 0
    %p144 = por %p142, %p143
    %p145 = scmp.ne.s32.totalorder %s133, %s134
    %p146 = scmp.eq.s32.totalorder %s26, 1
    %p147 = por %p145, %p146
    %p149 = scmp.ne.s32.totalorder %s134, %s148
    %p150 = scmp.eq.s32.totalorder %s26, 0
    %p151 = por %p149, %p150
    %s153 = sadd.s32 %s152, 1
    %p156 = scmp.eq.s32.totalorder %s20, 1
    %p157 = scmp.ne.s32.totalorder %s152, %s154
    %p158 = scmp.eq.s32.totalorder %s20, 0
    %p159 = por %p157, %p158
    %p160 = scmp.ne.s32.totalorder %s152, %s154
    %p161 = scmp.eq.s32.totalorder %s25, 1
    %p162 = por %p160, %p161
    %p163 = scmp.ne.s32.totalorder %s154, %s155
    %p164 = scmp.eq.s32.totalorder %s25, 0
    %p165 = por %p163, %p164
    %p166 = scmp.ne.s32.totalorder %s154, %s155
    %p167 = scmp.eq.s32.totalorder %s26, 1
    %p168 = por %p166, %p167
    %p170 = scmp.ne.s32.totalorder %s155, %s169
    %p171 = scmp.eq.s32.totalorder %s26, 0
    %p172 = por %p170, %p171
    %s174 = sadd.s32 %s173, 1
    %p177 = scmp.eq.s32.totalorder %s20, 1
    %p178 = scmp.ne.s32.totalorder %s173, %s175
    %p179 = scmp.eq.s32.totalorder %s20, 0
    %p180 = por %p178, %p179
    %p181 = scmp.ne.s32.totalorder %s173, %s175
    %p182 = scmp.eq.s32.totalorder %s25, 1
    %p183 = por %p181, %p182
    %p184 = scmp.ne.s32.totalorder %s175, %s176
    %p185 = scmp.eq.s32.totalorder %s25, 0
    %p186 = por %p184, %p185
    %p187 = scmp.ne.s32.totalorder %s175, %s176
    %p188 = scmp.eq.s32.totalorder %s26, 1
    %p189 = por %p187, %p188
    %p191 = scmp.ne.s32.totalorder %s176, %s190
    %p192 = scmp.eq.s32.totalorder %s26, 0
    %p193 = por %p191, %p192
    %s195 = sadd.s32 %s194, 1
    %p198 = scmp.eq.s32.totalorder %s20, 1
    %p199 = scmp.ne.s32.totalorder %s194, %s196
    %p200 = scmp.eq.s32.totalorder %s20, 0
    %p201 = por %p199, %p200
    %p202 = scmp.ne.s32.totalorder %s194, %s196
    %p203 = scmp.eq.s32.totalorder %s25, 1
    %p204 = por %p202, %p203
    %p205 = scmp.ne.s32.totalorder %s196, %s197
    %p206 = scmp.eq.s32.totalorder %s25, 0
    %p207 = por %p205, %p206
    %p208 = scmp.ne.s32.totalorder %s196, %s197
    %p209 = scmp.eq.s32.totalorder %s26, 1
    %p210 = por %p208, %p209
    %p212 = scmp.ne.s32.totalorder %s197, %s211
    %p213 = scmp.eq.s32.totalorder %s26, 0
    %p214 = por %p212, %p213
    %s216 = sadd.s32 %s215, 1
    %p219 = scmp.eq.s32.totalorder %s20, 1
    %p220 = scmp.ne.s32.totalorder %s215, %s217
    %p221 = scmp.eq.s32.totalorder %s20, 0
    %p222 = por %p220, %p221
    %p223 = scmp.ne.s32.totalorder %s215, %s217
    %p224 = scmp.eq.s32.totalorder %s25, 1
    %p225 = por %p223, %p224
    %p226 = scmp.ne.s32.totalorder %s217, %s218
    %p227 = scmp.eq.s32.totalorder %s25, 0
    %p228 = por %p226, %p227
    %p229 = scmp.ne.s32.totalorder %s217, %s218
    %p230 = scmp.eq.s32.totalorder %s26, 1
    %p231 = por %p229, %p230
    %p233 = scmp.ne.s32.totalorder %s218, %s232
    %p234 = scmp.eq.s32.totalorder %s26, 0
    %p235 = por %p233, %p234
    %s236 = ssub.s32 %s28, %s35
    %p237 = scmp.eq.s32.totalorder %s236, 0
    %s239 = sadd.s32 %s238, 1
    %s240 = scalar_select %p237, %s238, %s239
    %p243 = pneg %p237
    %p244 = scmp.eq.s32.totalorder %s20, 1
    %p245 = por %p243, %p244
    %p246 = scmp.ne.s32.totalorder %s238, %s241
    %p247 = scmp.eq.s32.totalorder %s20, 0
    %p248 = por %p246, %p247
    %p249 = scmp.ne.s32.totalorder %s238, %s241
    %p250 = scmp.eq.s32.totalorder %s25, 1
    %p251 = por %p249, %p250
    %p252 = scmp.ne.s32.totalorder %s241, %s242
    %p253 = scmp.eq.s32.totalorder %s25, 0
    %p254 = por %p252, %p253
    %p255 = scmp.ne.s32.totalorder %s241, %s242
    %p256 = scmp.eq.s32.totalorder %s26, 1
    %p257 = por %p255, %p256
    %p259 = scmp.ne.s32.totalorder %s242, %s258
    %p260 = scmp.eq.s32.totalorder %s26, 0
    %p261 = por %p259, %p260
    %s262 = ssub.s32 %s28, %s35
    %p263 = scmp.eq.s32.totalorder %s262, 0
    %s265 = sadd.s32 %s264, 1
    %s266 = scalar_select %p263, %s264, %s265
    %p269 = pneg %p263
    %p270 = scmp.eq.s32.totalorder %s20, 1
    %p271 = por %p269, %p270
    %p272 = scmp.ne.s32.totalorder %s264, %s267
    %p273 = scmp.eq.s32.totalorder %s20, 0
    %p274 = por %p272, %p273
    %p275 = scmp.ne.s32.totalorder %s264, %s267
    %p276 = scmp.eq.s32.totalorder %s25, 1
    %p277 = por %p275, %p276
    %p278 = scmp.ne.s32.totalorder %s267, %s268
    %p279 = scmp.eq.s32.totalorder %s25, 0
    %p280 = por %p278, %p279
    %p281 = scmp.ne.s32.totalorder %s267, %s268
    %p282 = scmp.eq.s32.totalorder %s26, 1
    %p283 = por %p281, %p282
    %p285 = scmp.ne.s32.totalorder %s268, %s284
    %p286 = scmp.eq.s32.totalorder %s26, 0
    %p287 = por %p285, %p286
    %s288 = ssub.s32 %s27, %s39
    %s289 = ssub.s32 %s28, %s35
    %s290 = sor.u32 %s288, %s289
    %p291 = scmp.eq.s32.totalorder %s290, 0
    %s293 = sadd.s32 %s292, 1
    %s294 = scalar_select %p291, %s292, %s293
    %p297 = pneg %p291
    %p298 = scmp.eq.s32.totalorder %s20, 1
    %p299 = por %p297, %p298
    %p300 = scmp.ne.s32.totalorder %s292, %s295
    %p301 = scmp.eq.s32.totalorder %s20, 0
    %p302 = por %p300, %p301
    %p303 = scmp.ne.s32.totalorder %s292, %s295
    %p304 = scmp.eq.s32.totalorder %s25, 1
    %p305 = por %p303, %p304
    %p306 = scmp.ne.s32.totalorder %s295, %s296
    %p307 = scmp.eq.s32.totalorder %s25, 0
    %p308 = por %p306, %p307
    %p309 = scmp.ne.s32.totalorder %s295, %s296
    %p310 = scmp.eq.s32.totalorder %s26, 1
    %p311 = por %p309, %p310
    %p313 = scmp.ne.s32.totalorder %s296, %s312
    %p314 = scmp.eq.s32.totalorder %s26, 0
    %p315 = por %p313, %p314
    %s316 = ssub.s32 %s27, %s39
    %s317 = ssub.s32 %s28, %s35
    %s318 = sor.u32 %s316, %s317
    %p319 = scmp.eq.s32.totalorder %s318, 0
    %s321 = sadd.s32 %s320, 1
    %s322 = scalar_select %p319, %s320, %s321
    %p325 = pneg %p319
    %p326 = scmp.eq.s32.totalorder %s20, 1
    %p327 = por %p325, %p326
    %p328 = scmp.ne.s32.totalorder %s320, %s323
    %p329 = scmp.eq.s32.totalorder %s20, 0
    %p330 = por %p328, %p329
    %p331 = scmp.ne.s32.totalorder %s320, %s323
    %p332 = scmp.eq.s32.totalorder %s25, 1
    %p333 = por %p331, %p332
    %p334 = scmp.ne.s32.totalorder %s323, %s324
    %p335 = scmp.eq.s32.totalorder %s25, 0
    %p336 = por %p334, %p335
    %p337 = scmp.ne.s32.totalorder %s323, %s324
    %p338 = scmp.eq.s32.totalorder %s26, 1
    %p339 = por %p337, %p338
    %p341 = scmp.ne.s32.totalorder %s324, %s340
    %p342 = scmp.eq.s32.totalorder %s26, 0
    %p343 = por %p341, %p342
    %s344 = ssub.s32 %s27, %s39
    %s345 = ssub.s32 %s28, %s35
    %s346 = sor.u32 %s344, %s345
    %p347 = scmp.eq.s32.totalorder %s346, 0
    %s349 = sadd.s32 %s348, 1
    %s350 = scalar_select %p347, %s348, %s349
    %p353 = pneg %p347
    %p354 = scmp.eq.s32.totalorder %s20, 1
    %p355 = por %p353, %p354
    %p356 = scmp.ne.s32.totalorder %s348, %s351
    %p357 = scmp.eq.s32.totalorder %s20, 0
    %p358 = por %p356, %p357
    %p359 = scmp.ne.s32.totalorder %s348, %s351
    %p360 = scmp.eq.s32.totalorder %s25, 1
    %p361 = por %p359, %p360
    %p362 = scmp.ne.s32.totalorder %s351, %s352
    %p363 = scmp.eq.s32.totalorder %s25, 0
    %p364 = por %p362, %p363
    %p365 = scmp.ne.s32.totalorder %s351, %s352
    %p366 = scmp.eq.s32.totalorder %s26, 1
    %p367 = por %p365, %p366
    %p369 = scmp.ne.s32.totalorder %s352, %s368
    %p370 = scmp.eq.s32.totalorder %s26, 0
    %p371 = por %p369, %p370
    %p372 = scmp.le.s32.totalorder 1, %s20
    %p373 = scmp.lt.s32.totalorder %s20, 3
    %p374 = pnand %p372, %p373
    %p375 = pneg %p374
    // Predicated region
    $region9: #{esm2_forward.10} parent=5 // pred_check
      _
    $region10: #{esm2_forward.10} parent=5 // pred_check_branch
      %377 = sbr.rel (%p374) target = $region12
    $region11: #{esm2_forward.10} parent=5 // pred_region
      %s378 = ssub.s32 %s20, 1
      // Predicated region
      $region13: #{esm2_forward.10} parent=11 // pred_check
        %p379 = pneg %p81
      $region14: #{esm2_forward.10} parent=11 // pred_check_branch
        %381 = sbr.rel (%p379) target = $region16
      $region15: #{esm2_forward.10} parent=11 // pred_region
        _
      $region16: #{esm2_forward.10} parent=11 // pred_fallthru
        _
      // Predicated region
      $region17: #{esm2_forward.10} parent=11 // pred_check
        %p382 = pneg %p102
      $region18: #{esm2_forward.10} parent=11 // pred_check_branch
        %384 = sbr.rel (%p382) target = $region20
      $region19: #{esm2_forward.10} parent=11 // pred_region
        _
      $region20: #{esm2_forward.10} parent=11 // pred_fallthru
        _
      // Predicated region
      $region21: #{esm2_forward.10} parent=11 // pred_check
        %p385 = pneg %p123
      $region22: #{esm2_forward.10} parent=11 // pred_check_branch
        %387 = sbr.rel (%p385) target = $region24
      $region23: #{esm2_forward.10} parent=11 // pred_region
        _
      $region24: #{esm2_forward.10} parent=11 // pred_fallthru
        _
      // Predicated region
      $region25: #{esm2_forward.10} parent=11 // pred_check
        %p388 = pneg %p144
      $region26: #{esm2_forward.10} parent=11 // pred_check_branch
        %390 = sbr.rel (%p388) target = $region28
      $region27: #{esm2_forward.10} parent=11 // pred_region
        _
      $region28: #{esm2_forward.10} parent=11 // pred_fallthru
        _
      // Predicated region
      $region29: #{esm2_forward.10} parent=11 // pred_check
        %p391 = pneg %p165
      $region30: #{esm2_forward.10} parent=11 // pred_check_branch
        %393 = sbr.rel (%p391) target = $region32
      $region31: #{esm2_forward.10} parent=11 // pred_region
        _
      $region32: #{esm2_forward.10} parent=11 // pred_fallthru
        _
      // Predicated region
      $region33: #{esm2_forward.10} parent=11 // pred_check
        %p394 = pneg %p186
      $region34: #{esm2_forward.10} parent=11 // pred_check_branch
        %396 = sbr.rel (%p394) target = $region36
      $region35: #{esm2_forward.10} parent=11 // pred_region
        _
      $region36: #{esm2_forward.10} parent=11 // pred_fallthru
        _
      // Predicated region
      $region37: #{esm2_forward.10} parent=11 // pred_check
        %p397 = pneg %p207
      $region38: #{esm2_forward.10} parent=11 // pred_check_branch
        %399 = sbr.rel (%p397) target = $region40
      $region39: #{esm2_forward.10} parent=11 // pred_region
        _
      $region40: #{esm2_forward.10} parent=11 // pred_fallthru
        _
      // Predicated region
      $region41: #{esm2_forward.10} parent=11 // pred_check
        %p400 = pneg %p228
      $region42: #{esm2_forward.10} parent=11 // pred_check_branch
        %402 = sbr.rel (%p400) target = $region44
      $region43: #{esm2_forward.10} parent=11 // pred_region
        _
      $region44: #{esm2_forward.10} parent=11 // pred_fallthru
        _
      // Predicated region
      $region45: #{esm2_forward.10} parent=11 // pred_check
        %p403 = pneg %p254
      $region46: #{esm2_forward.10} parent=11 // pred_check_branch
        %405 = sbr.rel (%p403) target = $region48
      $region47: #{esm2_forward.10} parent=11 // pred_region
        %p406 = scmp.lt.s32.totalorder %s30, 0
        %s407 = scalar_select %p406, %s30, 0
        %s408 = smul.addr %s407, 8
        %s409 = scalar_lea.vmem %s9, %s408
      $region48: #{esm2_forward.10} parent=11 // pred_fallthru
        _
      // Predicated region
      $region49: #{esm2_forward.10} parent=11 // pred_check
        %p410 = pneg %p280
      $region50: #{esm2_forward.10} parent=11 // pred_check_branch
        %412 = sbr.rel (%p410) target = $region52
      $region51: #{esm2_forward.10} parent=11 // pred_region
        %p413 = scmp.lt.s32.totalorder %s30, 0
        %s414 = scalar_select %p413, %s30, 0
        %s415 = smul.addr %s414, 8
        %s416 = scalar_lea.vmem %s10, %s415
      $region52: #{esm2_forward.10} parent=11 // pred_fallthru
        _
    $region12: #{esm2_forward.10} parent=5 // pred_fallthru
      _
    %p417 = scmp.lt.s32.totalorder %s20, 2
    // Predicated region
    $region53: #{esm2_forward.10} parent=5 // pred_check
      %p418 = pneg %p417
    $region54: #{esm2_forward.10} parent=5 // pred_check_branch
      %420 = sbr.rel (%p418) target = $region56
    $region55: #{esm2_forward.10} parent=5 // pred_region
      // Predicated region
      $region57: #{esm2_forward.10} parent=55 // pred_check
        %p421 = pneg %p54
      $region58: #{esm2_forward.10} parent=55 // pred_check_branch
        %423 = sbr.rel (%p421) target = $region60
      $region59: #{esm2_forward.10} parent=55 // pred_region
        %p424 = scmp.lt.s32.totalorder %s27, 1
        %s425 = scalar_select %p424, %s27, 1
        %p426 = scmp.lt.s32.totalorder %s28, 0
        %s427 = scalar_select %p426, %s28, 0
        %s428 = sadd.s32 %s427, %s425
        %s429 = smul.addr %s428, 8
        %s430 = scalar_lea.vmem %s0, %s429
      $region60: #{esm2_forward.10} parent=55 // pred_fallthru
        _
    $region56: #{esm2_forward.10} parent=5 // pred_fallthru
      _
    %p431 = scmp.le.s32.totalorder 1, %s20
    %p432 = scmp.lt.s32.totalorder %s20, 3
    %p433 = pnand %p431, %p432
    %p434 = pneg %p433
    // Predicated region
    $region61: #{esm2_forward.10} parent=5 // pred_check
      _
    $region62: #{esm2_forward.10} parent=5 // pred_check_branch
      %436 = sbr.rel (%p433) target = $region64
    $region63: #{esm2_forward.10} parent=5 // pred_region
      %s437 = ssub.s32 %s20, 1
      %p438 = scmp.lt.s32.totalorder %s29, 1
      %s439 = scalar_select %p438, %s29, 1
      %p440 = scmp.lt.s32.totalorder %s30, 0
      %s441 = scalar_select %p440, %s30, 0
      %s442 = sadd.s32 %s441, %s439
      %s443 = smul.addr %s442, 8
      %s444 = scalar_lea.vmem %s0, %s443
      %p445 = pneg %p60
      %p446 = pneg %p57
      %p447 = pneg %p81
      %p448 = pneg %p78
      %p449 = pneg %p102
      %p450 = pneg %p99
      %p451 = pneg %p123
      %p452 = pneg %p120
      %p453 = pneg %p144
      %p454 = pneg %p141
      %p455 = pneg %p165
      %p456 = pneg %p162
      %p457 = pneg %p186
      %p458 = pneg %p183
      %p459 = pneg %p207
      %p460 = pneg %p204
      %p461 = pneg %p228
      %p462 = pneg %p225
      %p463 = scmp.lt.s32.totalorder %s30, 0
      %s464 = scalar_select %p463, %s30, 0
      %s465 = smul.addr %s464, 8
      %s466 = scalar_lea.vmem %s9, %s465
      %p467 = pneg %p254
      %p468 = pneg %p251
      %p469 = scmp.lt.s32.totalorder %s30, 0
      %s470 = scalar_select %p469, %s30, 0
      %s471 = smul.addr %s470, 8
      %s472 = scalar_lea.vmem %s10, %s471
      %p473 = pneg %p280
      %p474 = pneg %p277
      %p475 = pneg %p308
      %p476 = pneg %p305
      %p477 = scmp.lt.s32.totalorder %s29, 1
      %s478 = scalar_select %p477, %s29, 1
      %p479 = scmp.lt.s32.totalorder %s30, 0
      %s480 = scalar_select %p479, %s30, 0
      %s481 = smul.addr %s478, 4
      %s482 = sadd.s32 %s480, %s481
      %s483 = smul.addr %s482, 4
      %s484 = scalar_lea.vmem %s11, %s483
      %p485 = pneg %p336
      %p486 = pneg %p333
      %p487 = scmp.lt.s32.totalorder %s29, 1
      %s488 = scalar_select %p487, %s29, 1
      %p489 = scmp.lt.s32.totalorder %s30, 0
      %s490 = scalar_select %p489, %s30, 0
      %s491 = smul.addr %s488, 4
      %s492 = sadd.s32 %s490, %s491
      %s493 = smul.addr %s492, 4
      %s494 = scalar_lea.vmem %s12, %s493
      %p495 = pneg %p364
      %p496 = pneg %p361
      %p497 = scmp.lt.s32.totalorder %s29, 1
      %s498 = scalar_select %p497, %s29, 1
      %p499 = scmp.lt.s32.totalorder %s30, 0
      %s500 = scalar_select %p499, %s30, 0
      %s501 = smul.addr %s498, 4
      %s502 = sadd.s32 %s500, %s501
      %s503 = smul.addr %s502, 4
      %s504 = scalar_lea.vmem %s13, %s503
      %p505 = scmp.lt.s32.totalorder %s29, 1
      %s506 = scalar_select %p505, %s29, 1
      %p507 = scmp.lt.s32.totalorder %s30, 0
      %s508 = scalar_select %p507, %s30, 0
      %s509 = sadd.s32 %s508, %s506
      %s510 = smul.addr %s509, 8
      %s511 = scalar_lea.vmem %s0, %s510
      %p512 = scmp.lt.s32.totalorder %s30, 0
      %s513 = scalar_select %p512, %s30, 0
      %s514 = smul.addr %s513, 8
      %s515 = scalar_lea.vmem %s9, %s514
      %p516 = scmp.lt.s32.totalorder %s30, 0
      %s517 = scalar_select %p516, %s30, 0
      %s518 = smul.addr %s517, 8
      %s519 = scalar_lea.vmem %s10, %s518
      %p520 = scmp.lt.s32.totalorder %s29, 1
      %s521 = scalar_select %p520, %s29, 1
      %p522 = scmp.lt.s32.totalorder %s30, 0
      %s523 = scalar_select %p522, %s30, 0
      %s524 = smul.addr %s521, 4
      %s525 = sadd.s32 %s523, %s524
      %s526 = smul.addr %s525, 4
      %s527 = scalar_lea.vmem %s11, %s526
      %p528 = scmp.lt.s32.totalorder %s29, 1
      %s529 = scalar_select %p528, %s29, 1
      %p530 = scmp.lt.s32.totalorder %s30, 0
      %s531 = scalar_select %p530, %s30, 0
      %s532 = smul.addr %s529, 4
      %s533 = sadd.s32 %s531, %s532
      %s534 = smul.addr %s533, 4
      %s535 = scalar_lea.vmem %s12, %s534
      %p536 = scmp.lt.s32.totalorder %s29, 1
      %s537 = scalar_select %p536, %s29, 1
      %p538 = scmp.lt.s32.totalorder %s30, 0
      %s539 = scalar_select %p538, %s30, 0
      %s540 = smul.addr %s537, 4
      %s541 = sadd.s32 %s539, %s540
      %s542 = smul.addr %s541, 4
      %s543 = scalar_lea.vmem %s13, %s542
      %v545 = vld [vmem:[%s511] sm:$0xff]
      %v546 = vld [vmem:[%s1] sm:$0x1]
      %v547 = vld [vmem:[%s2] sm:$0x1]
      %548 = vadd.xlane.f32.xlu0 %v545
      %v549 = vpop.xlane.xlu0 %548
      %v550 = vrcp.pop 128.0
      %v551 = vmul.f32 %v549, %v550
      %v552 = vsub.f32 %v545, %v551
      %v553 = vmul.f32 %v552, %v552
      %554 = vadd.xlane.f32.xlu0 %v553
      %v555 = vpop.xlane.xlu0 %554
      %v556 = vmul.f32 %v555, %v550
      %v557 = vadd.f32 %v556, 1e-12
      %v558 = vrsqrt.pop %v557
      %v559 = vmul.f32 %v552, %v558
      %v561 = vlaneseq
      %v562 = vshrl.u32 %v561, 7
      %v563 = vsub.s32 0, %v562
      %v564 = vrot.slane %v546, %v563
      %v566 = vmul.f32 %v559, %v564
      %v568 = vlaneseq
      %v569 = vshrl.u32 %v568, 7
      %v570 = vsub.s32 0, %v569
      %v571 = vrot.slane %v547, %v570
      %v573 = vadd.f32 %v566, %v571
      %v574 = vpack.c.bf16 %v573, %v573
      %v575 = vld [vmem:[%s3] sm:$0xf]
      %v576 = vld [vmem:[%s3 + $0x4] sm:$0xf]
      %v577 = vld [vmem:[%s3 + $0x8] sm:$0xf]
      %v578 = vld [vmem:[%s3 + $0xc] sm:$0xf]
      %v579 = vld [vmem:[%s3 + $0x10] sm:$0xf]
      %v580 = vld [vmem:[%s3 + $0x14] sm:$0xf]
      %v581 = vld [vmem:[%s3 + $0x18] sm:$0xf]
      %v582 = vld [vmem:[%s3 + $0x1c] sm:$0xf]
      %v583 = vld [vmem:[%s3 + $0x20] sm:$0xf]
      %v584 = vld [vmem:[%s3 + $0x24] sm:$0xf]
      %v585 = vld [vmem:[%s3 + $0x28] sm:$0xf]
      %v586 = vld [vmem:[%s3 + $0x2c] sm:$0xf]
      %v587 = vld [vmem:[%s3 + $0x30] sm:$0xf]
      %v588 = vld [vmem:[%s3 + $0x34] sm:$0xf]
      %v589 = vld [vmem:[%s3 + $0x38] sm:$0xf]
      %v590 = vld [vmem:[%s3 + $0x3c] sm:$0xf]
      %v591 = vld [vmem:[%s4] sm:$0x1]
      %v593 = vlaneseq
      %v594 = vshrl.u32 %v593, 7
      %v595 = vsub.s32 0, %v594
      %v596 = vrot.slane %v591, %v595
      %v614 = vunpack.c.l.b16 %v575
      %v615 = vunpack.c.l.b16 %v576
      %v616 = vunpack.c.l.b16 %v577
      %v617 = vunpack.c.l.b16 %v578
      %v618 = vunpack.c.l.b16 %v579
      %v619 = vunpack.c.l.b16 %v580
      %v620 = vunpack.c.l.b16 %v581
      %v621 = vunpack.c.l.b16 %v582
      %v622 = vunpack.c.l.b16 %v583
      %v623 = vunpack.c.l.b16 %v584
      %v624 = vunpack.c.l.b16 %v585
      %v625 = vunpack.c.l.b16 %v586
      %v626 = vunpack.c.l.b16 %v587
      %v627 = vunpack.c.l.b16 %v588
      %v628 = vunpack.c.l.b16 %v589
      %v629 = vunpack.c.l.b16 %v590
      %v630 = vpack.c.b16 %v615, %v614
      %v631 = vpack.c.b16 %v617, %v616
      %v632 = vpack.c.b16 %v619, %v618
      %v633 = vpack.c.b16 %v621, %v620
      %v634 = vpack.c.b16 %v623, %v622
      %v635 = vpack.c.b16 %v625, %v624
      %v636 = vpack.c.b16 %v627, %v626
      %v637 = vpack.c.b16 %v629, %v628
      %646 = vmatprep.subr.bf16.mxu0 0
      %647 = vmatpush1.bf16.msra.mxu0 %v637
      %648 = vmatprep.subr.bf16.mxu0 0
      %649 = vmatpush1.bf16.msra.mxu0 %v636
      %650 = vmatprep.subr.bf16.mxu0 0
      %651 = vmatpush1.bf16.msra.mxu0 %v635
      %652 = vmatprep.subr.bf16.mxu0 0
      %653 = vmatpush1.bf16.msra.mxu0 %v634
      %654 = vmatprep.subr.bf16.mxu0 0
      %655 = vmatpush1.bf16.msra.mxu0 %v633
      %656 = vmatprep.subr.bf16.mxu0 0
      %657 = vmatpush1.bf16.msra.mxu0 %v632
      %658 = vmatprep.subr.bf16.mxu0 0
      %659 = vmatpush1.bf16.msra.mxu0 %v631
      %660 = vmatprep.subr.bf16.mxu0 0
      %661 = vmatpush1.bf16.msra.mxu0 %v630
      %662 = vmatprep.subr.bf16.mxu0 0
      %663 = vmatpush2.bf16.msra.mxu0 0
      %664 = vmatprep.subr.bf16.mxu0 0
      %665 = vmatpush2.bf16.msra.mxu0 0
      %666 = vmatprep.subr.bf16.mxu0 0
      %667 = vmatpush2.bf16.msra.mxu0 0
      %668 = vmatprep.subr.bf16.mxu0 0
      %669 = vmatpush2.bf16.msra.mxu0 0
      %670 = vmatprep.subr.bf16.mxu0 0
      %671 = vmatpush2.bf16.msra.mxu0 0
      %672 = vmatprep.subr.bf16.mxu0 0
      %673 = vmatpush2.bf16.msra.mxu0 0
      %674 = vmatprep.subr.bf16.mxu0 0
      %675 = vmatpush2.bf16.msra.mxu0 0
      %676 = vmatprep.subr.bf16.mxu0 0
      %677 = vmatpush2.bf16.msra.mxu0 0
      %678 = vmatprep.mubr.bf16.mxu0 0
      %679 = vmatmul.mubr.bf16.gmra.mxu0 %v574
      %v680 = vpop.f32.mrf.mxu0
      %v681 = vadd.f32 %v596, %v680
      %v682 = vpop.f32.mrf.mxu0
      %v683 = vpop.f32.mrf.mxu0
      %v684 = vpop.f32.mrf.mxu0
      %685 = vdwg.mxu0
      %v686 = vld [vmem:[%s5] sm:$0xf]
      %v687 = vld [vmem:[%s5 + $0x4] sm:$0xf]
      %v688 = vld [vmem:[%s5 + $0x8] sm:$0xf]
      %v689 = vld [vmem:[%s5 + $0xc] sm:$0xf]
      %v690 = vld [vmem:[%s5 + $0x10] sm:$0xf]
      %v691 = vld [vmem:[%s5 + $0x14] sm:$0xf]
      %v692 = vld [vmem:[%s5 + $0x18] sm:$0xf]
      %v693 = vld [vmem:[%s5 + $0x1c] sm:$0xf]
      %v694 = vld [vmem:[%s5 + $0x20] sm:$0xf]
      %v695 = vld [vmem:[%s5 + $0x24] sm:$0xf]
      %v696 = vld [vmem:[%s5 + $0x28] sm:$0xf]
      %v697 = vld [vmem:[%s5 + $0x2c] sm:$0xf]
      %v698 = vld [vmem:[%s5 + $0x30] sm:$0xf]
      %v699 = vld [vmem:[%s5 + $0x34] sm:$0xf]
      %v700 = vld [vmem:[%s5 + $0x38] sm:$0xf]
      %v701 = vld [vmem:[%s5 + $0x3c] sm:$0xf]
      %v702 = vld [vmem:[%s6] sm:$0x1]
      %v704 = vlaneseq
      %v705 = vshrl.u32 %v704, 7
      %v706 = vsub.s32 0, %v705
      %v707 = vrot.slane %v702, %v706
      %v725 = vunpack.c.l.b16 %v686
      %v726 = vunpack.c.l.b16 %v687
      %v727 = vunpack.c.l.b16 %v688
      %v728 = vunpack.c.l.b16 %v689
      %v729 = vunpack.c.l.b16 %v690
      %v730 = vunpack.c.l.b16 %v691
      %v731 = vunpack.c.l.b16 %v692
      %v732 = vunpack.c.l.b16 %v693
      %v733 = vunpack.c.l.b16 %v694
      %v734 = vunpack.c.l.b16 %v695
      %v735 = vunpack.c.l.b16 %v696
      %v736 = vunpack.c.l.b16 %v697
      %v737 = vunpack.c.l.b16 %v698
      %v738 = vunpack.c.l.b16 %v699
      %v739 = vunpack.c.l.b16 %v700
      %v740 = vunpack.c.l.b16 %v701
      %v741 = vpack.c.b16 %v726, %v725
      %v742 = vpack.c.b16 %v728, %v727
      %v743 = vpack.c.b16 %v730, %v729
      %v744 = vpack.c.b16 %v732, %v731
      %v745 = vpack.c.b16 %v734, %v733
      %v746 = vpack.c.b16 %v736, %v735
      %v747 = vpack.c.b16 %v738, %v737
      %v748 = vpack.c.b16 %v740, %v739
      %757 = vmatprep.subr.bf16.mxu0 0
      %758 = vmatpush1.bf16.msra.mxu0 %v748
      %759 = vmatprep.subr.bf16.mxu0 0
      %760 = vmatpush1.bf16.msra.mxu0 %v747
      %761 = vmatprep.subr.bf16.mxu0 0
      %762 = vmatpush1.bf16.msra.mxu0 %v746
      %763 = vmatprep.subr.bf16.mxu0 0
      %764 = vmatpush1.bf16.msra.mxu0 %v745
      %765 = vmatprep.subr.bf16.mxu0 0
      %766 = vmatpush1.bf16.msra.mxu0 %v744
      %767 = vmatprep.subr.bf16.mxu0 0
      %768 = vmatpush1.bf16.msra.mxu0 %v743
      %769 = vmatprep.subr.bf16.mxu0 0
      %770 = vmatpush1.bf16.msra.mxu0 %v742
      %771 = vmatprep.subr.bf16.mxu0 0
      %772 = vmatpush1.bf16.msra.mxu0 %v741
      %773 = vmatprep.subr.bf16.mxu0 0
      %774 = vmatpush2.bf16.msra.mxu0 0
      %775 = vmatprep.subr.bf16.mxu0 0
      %776 = vmatpush2.bf16.msra.mxu0 0
      %777 = vmatprep.subr.bf16.mxu0 0
      %778 = vmatpush2.bf16.msra.mxu0 0
      %779 = vmatprep.subr.bf16.mxu0 0
      %780 = vmatpush2.bf16.msra.mxu0 0
      %781 = vmatprep.subr.bf16.mxu0 0
      %782 = vmatpush2.bf16.msra.mxu0 0
      %783 = vmatprep.subr.bf16.mxu0 0
      %784 = vmatpush2.bf16.msra.mxu0 0
      %785 = vmatprep.subr.bf16.mxu0 0
      %786 = vmatpush2.bf16.msra.mxu0 0
      %787 = vmatprep.subr.bf16.mxu0 0
      %788 = vmatpush2.bf16.msra.mxu0 0
      %789 = vmatprep.mubr.bf16.mxu0 0
      %790 = vmatmul.mubr.bf16.gmra.mxu0 %v574
      %v791 = vpop.f32.mrf.mxu0
      %v792 = vadd.f32 %v707, %v791
      %v793 = vpop.f32.mrf.mxu0
      %v794 = vpop.f32.mrf.mxu0
      %v795 = vpop.f32.mrf.mxu0
      %796 = vdwg.mxu0
      %v797 = vld [vmem:[%s7] sm:$0xf]
      %v798 = vld [vmem:[%s7 + $0x4] sm:$0xf]
      %v799 = vld [vmem:[%s7 + $0x8] sm:$0xf]
      %v800 = vld [vmem:[%s7 + $0xc] sm:$0xf]
      %v801 = vld [vmem:[%s7 + $0x10] sm:$0xf]
      %v802 = vld [vmem:[%s7 + $0x14] sm:$0xf]
      %v803 = vld [vmem:[%s7 + $0x18] sm:$0xf]
      %v804 = vld [vmem:[%s7 + $0x1c] sm:$0xf]
      %v805 = vld [vmem:[%s7 + $0x20] sm:$0xf]
      %v806 = vld [vmem:[%s7 + $0x24] sm:$0xf]
      %v807 = vld [vmem:[%s7 + $0x28] sm:$0xf]
      %v808 = vld [vmem:[%s7 + $0x2c] sm:$0xf]
      %v809 = vld [vmem:[%s7 + $0x30] sm:$0xf]
      %v810 = vld [vmem:[%s7 + $0x34] sm:$0xf]
      %v811 = vld [vmem:[%s7 + $0x38] sm:$0xf]
      %v812 = vld [vmem:[%s7 + $0x3c] sm:$0xf]
      %v813 = vld [vmem:[%s8] sm:$0x1]
      %v815 = vlaneseq
      %v816 = vshrl.u32 %v815, 7
      %v817 = vsub.s32 0, %v816
      %v818 = vrot.slane %v813, %v817
      %v836 = vunpack.c.l.b16 %v797
      %v837 = vunpack.c.l.b16 %v798
      %v838 = vunpack.c.l.b16 %v799
      %v839 = vunpack.c.l.b16 %v800
      %v840 = vunpack.c.l.b16 %v801
      %v841 = vunpack.c.l.b16 %v802
      %v842 = vunpack.c.l.b16 %v803
      %v843 = vunpack.c.l.b16 %v804
      %v844 = vunpack.c.l.b16 %v805
      %v845 = vunpack.c.l.b16 %v806
      %v846 = vunpack.c.l.b16 %v807
      %v847 = vunpack.c.l.b16 %v808
      %v848 = vunpack.c.l.b16 %v809
      %v849 = vunpack.c.l.b16 %v810
      %v850 = vunpack.c.l.b16 %v811
      %v851 = vunpack.c.l.b16 %v812
      %v852 = vpack.c.b16 %v837, %v836
      %v853 = vpack.c.b16 %v839, %v838
      %v854 = vpack.c.b16 %v841, %v840
      %v855 = vpack.c.b16 %v843, %v842
      %v856 = vpack.c.b16 %v845, %v844
      %v857 = vpack.c.b16 %v847, %v846
      %v858 = vpack.c.b16 %v849, %v848
      %v859 = vpack.c.b16 %v851, %v850
      %868 = vmatprep.subr.bf16.mxu0 0
      %869 = vmatpush1.bf16.msra.mxu0 %v859
      %870 = vmatprep.subr.bf16.mxu0 0
      %871 = vmatpush1.bf16.msra.mxu0 %v858
      %872 = vmatprep.subr.bf16.mxu0 0
      %873 = vmatpush1.bf16.msra.mxu0 %v857
      %874 = vmatprep.subr.bf16.mxu0 0
      %875 = vmatpush1.bf16.msra.mxu0 %v856
      %876 = vmatprep.subr.bf16.mxu0 0
      %877 = vmatpush1.bf16.msra.mxu0 %v855
      %878 = vmatprep.subr.bf16.mxu0 0
      %879 = vmatpush1.bf16.msra.mxu0 %v854
      %880 = vmatprep.subr.bf16.mxu0 0
      %881 = vmatpush1.bf16.msra.mxu0 %v853
      %882 = vmatprep.subr.bf16.mxu0 0
      %883 = vmatpush1.bf16.msra.mxu0 %v852
      %884 = vmatprep.subr.bf16.mxu0 0
      %885 = vmatpush2.bf16.msra.mxu0 0
      %886 = vmatprep.subr.bf16.mxu0 0
      %887 = vmatpush2.bf16.msra.mxu0 0
      %888 = vmatprep.subr.bf16.mxu0 0
      %889 = vmatpush2.bf16.msra.mxu0 0
      %890 = vmatprep.subr.bf16.mxu0 0
      %891 = vmatpush2.bf16.msra.mxu0 0
      %892 = vmatprep.subr.bf16.mxu0 0
      %893 = vmatpush2.bf16.msra.mxu0 0
      %894 = vmatprep.subr.bf16.mxu0 0
      %895 = vmatpush2.bf16.msra.mxu0 0
      %896 = vmatprep.subr.bf16.mxu0 0
      %897 = vmatpush2.bf16.msra.mxu0 0
      %898 = vmatprep.subr.bf16.mxu0 0
      %899 = vmatpush2.bf16.msra.mxu0 0
      %900 = vmatprep.mubr.bf16.mxu0 0
      %901 = vmatmul.mubr.bf16.gmra.mxu0 %v574
      %v902 = vpop.f32.mrf.mxu0
      %v903 = vadd.f32 %v818, %v902
      %v904 = vpop.f32.mrf.mxu0
      %v905 = vpop.f32.mrf.mxu0
      %v906 = vpop.f32.mrf.mxu0
      %907 = vdwg.mxu0
      %v908 = vld [vmem:[%s515] sm:$0xff]
      %v909 = vld [vmem:[%s519] sm:$0xff]
      %v910 = vmul.f32 %v681, %v908
      %912 = vrot.lane.b32.xlu0 %v909, 16
      %v913 = vpop.permute.xlu0 %912
      %v915 = vmul.f32 %v681, %v913
      %917 = vrot.lane.b32.xlu0 %v915, 112
      %v918 = vpop.permute.xlu0 %917
      %v920 = vsub.f32 %v910, %v918
      %922 = vrot.lane.b32.xlu0 %v908, 16
      %v923 = vpop.permute.xlu0 %922
      %v925 = vmul.f32 %v681, %v923
      %v926 = vmul.f32 %v681, %v909
      %928 = vrot.lane.b32.xlu0 %v926, 16
      %v929 = vpop.permute.xlu0 %928
      %v931 = vadd.f32 %v925, %v929
      %vm932 = vcmask 130048
      %v933 = vsel %vm932, %v920, %v931
      %v934 = vpack.c.bf16 %v933, %v933
      %vm935 = vcmask 257024
      %936 = vst.msk [vmem:[%s527] sm:$0xf] %vm935, %v934
      %v937 = vmul.f32 %v792, %v908
      %v938 = vmul.f32 %v792, %v913
      %940 = vrot.lane.b32.xlu0 %v938, 112
      %v941 = vpop.permute.xlu0 %940
      %v943 = vsub.f32 %v937, %v941
      %v944 = vmul.f32 %v792, %v923
      %v945 = vmul.f32 %v792, %v909
      %947 = vrot.lane.b32.xlu0 %v945, 16
      %v948 = vpop.permute.xlu0 %947
      %v950 = vadd.f32 %v944, %v948
      %v951 = vsel %vm932, %v943, %v950
      %v952 = vpack.c.bf16 %v951, %v951
      %953 = vst.msk [vmem:[%s535] sm:$0xf] %vm935, %v952
      %v954 = vpack.c.bf16 %v903, %v903
      %955 = vst.msk [vmem:[%s543] sm:$0xf] %vm935, %v954
      %956 = vrot.lane.b32.xlu0 %v908, 32
      %v957 = vpop.permute.xlu0 %956
      %v959 = vmul.f32 %v681, %v957
      %960 = vrot.lane.b32.xlu0 %v909, 48
      %v961 = vpop.permute.xlu0 %960
      %v963 = vmul.f32 %v681, %v961
      %965 = vrot.lane.b32.xlu0 %v963, 112
      %v966 = vpop.permute.xlu0 %965
      %v968 = vsub.f32 %v959, %v966
      %969 = vrot.lane.b32.xlu0 %v908, 48
      %v970 = vpop.permute.xlu0 %969
      %v972 = vmul.f32 %v681, %v970
      %973 = vrot.lane.b32.xlu0 %v909, 32
      %v974 = vpop.permute.xlu0 %973
      %v976 = vmul.f32 %v681, %v974
      %978 = vrot.lane.b32.xlu0 %v976, 16
      %v979 = vpop.permute.xlu0 %978
      %v981 = vadd.f32 %v972, %v979
      %983 = vrot.lane.b32.xlu0 %v968, 96
      %v984 = vpop.permute.xlu0 %983
      %987 = vrot.lane.b32.xlu0 %v981, 96
      %v988 = vpop.permute.xlu0 %987
      %v990 = vsel %vm932, %v984, %v988
      %v991 = vpack.c.bf16 %v990, %v990
      %s992 = scalar_lea.vmem %s527, 4
      %993 = vst.msk [vmem:[%s992] sm:$0xf] %vm935, %v991
      %v994 = vmul.f32 %v792, %v957
      %v995 = vmul.f32 %v792, %v961
      %997 = vrot.lane.b32.xlu0 %v995, 112
      %v998 = vpop.permute.xlu0 %997
      %v1000 = vsub.f32 %v994, %v998
      %v1001 = vmul.f32 %v792, %v970
      %v1002 = vmul.f32 %v792, %v974
      %1004 = vrot.lane.b32.xlu0 %v1002, 16
      %v1005 = vpop.permute.xlu0 %1004
      %v1007 = vadd.f32 %v1001, %v1005
      %1009 = vrot.lane.b32.xlu0 %v1000, 96
      %v1010 = vpop.permute.xlu0 %1009
      %1013 = vrot.lane.b32.xlu0 %v1007, 96
      %v1014 = vpop.permute.xlu0 %1013
      %v1016 = vsel %vm932, %v1010, %v1014
      %v1017 = vpack.c.bf16 %v1016, %v1016
      %s1018 = scalar_lea.vmem %s535, 4
      %1019 = vst.msk [vmem:[%s1018] sm:$0xf] %vm935, %v1017
      %v1021 = vunpack.c.l.b16 %v954
      %v1022 = vpack.c.b16 %v1021, %v1021
      %1023 = vrot.lane.b32.xlu0 %v1022, 96
      %v1024 = vpop.permute.xlu0 %1023
      %s1026 = scalar_lea.vmem %s543, 4
      %1027 = vst.msk [vmem:[%s1026] sm:$0xf] %vm935, %v1024
      %1028 = vrot.lane.b32.xlu0 %v908, 64
      %v1029 = vpop.permute.xlu0 %1028
      %v1031 = vmul.f32 %v681, %v1029
      %1032 = vrot.lane.b32.xlu0 %v909, 80
      %v1033 = vpop.permute.xlu0 %1032
      %v1035 = vmul.f32 %v681, %v1033
      %1037 = vrot.lane.b32.xlu0 %v1035, 112
      %v1038 = vpop.permute.xlu0 %1037
      %v1040 = vsub.f32 %v1031, %v1038
      %1041 = vrot.lane.b32.xlu0 %v908, 80
      %v1042 = vpop.permute.xlu0 %1041
      %v1044 = vmul.f32 %v681, %v1042
      %1045 = vrot.lane.b32.xlu0 %v909, 64
      %v1046 = vpop.permute.xlu0 %1045
      %v1048 = vmul.f32 %v681, %v1046
      %1050 = vrot.lane.b32.xlu0 %v1048, 16
      %v1051 = vpop.permute.xlu0 %1050
      %v1053 = vadd.f32 %v1044, %v1051
      %1055 = vrot.lane.b32.xlu0 %v1040, 64
      %v1056 = vpop.permute.xlu0 %1055
      %1059 = vrot.lane.b32.xlu0 %v1053, 64
      %v1060 = vpop.permute.xlu0 %1059
      %v1062 = vsel %vm932, %v1056, %v1060
      %v1063 = vpack.c.bf16 %v1062, %v1062
      %s1064 = scalar_lea.vmem %s527, 8
      %1065 = vst.msk [vmem:[%s1064] sm:$0xf] %vm935, %v1063
      %v1066 = vmul.f32 %v792, %v1029
      %v1067 = vmul.f32 %v792, %v1033
      %1069 = vrot.lane.b32.xlu0 %v1067, 112
      %v1070 = vpop.permute.xlu0 %1069
      %v1072 = vsub.f32 %v1066, %v1070
      %v1073 = vmul.f32 %v792, %v1042
      %v1074 = vmul.f32 %v792, %v1046
      %1076 = vrot.lane.b32.xlu0 %v1074, 16
      %v1077 = vpop.permute.xlu0 %1076
      %v1079 = vadd.f32 %v1073, %v1077
      %1081 = vrot.lane.b32.xlu0 %v1072, 64
      %v1082 = vpop.permute.xlu0 %1081
      %1085 = vrot.lane.b32.xlu0 %v1079, 64
      %v1086 = vpop.permute.xlu0 %1085
      %v1088 = vsel %vm932, %v1082, %v1086
      %v1089 = vpack.c.bf16 %v1088, %v1088
      %s1090 = scalar_lea.vmem %s535, 8
      %1091 = vst.msk [vmem:[%s1090] sm:$0xf] %vm935, %v1089
      %1092 = vrot.lane.b32.xlu0 %v1022, 64
      %v1093 = vpop.permute.xlu0 %1092
      %s1095 = scalar_lea.vmem %s543, 8
      %1096 = vst.msk [vmem:[%s1095] sm:$0xf] %vm935, %v1093
      %1097 = vrot.lane.b32.xlu0 %v908, 96
      %v1098 = vpop.permute.xlu0 %1097
      %v1100 = vmul.f32 %v681, %v1098
      %1101 = vrot.lane.b32.xlu0 %v909, 112
      %v1102 = vpop.permute.xlu0 %1101
      %v1104 = vmul.f32 %v681, %v1102
      %1106 = vrot.lane.b32.xlu0 %v1104, 112
      %v1107 = vpop.permute.xlu0 %1106
      %v1109 = vsub.f32 %v1100, %v1107
      %1110 = vrot.lane.b32.xlu0 %v908, 112
      %v1111 = vpop.permute.xlu0 %1110
      %v1113 = vmul.f32 %v681, %v1111
      %1114 = vrot.lane.b32.xlu0 %v909, 96
      %v1115 = vpop.permute.xlu0 %1114
      %v1117 = vmul.f32 %v681, %v1115
      %1119 = vrot.lane.b32.xlu0 %v1117, 16
      %v1120 = vpop.permute.xlu0 %1119
      %v1122 = vadd.f32 %v1113, %v1120
      %1124 = vrot.lane.b32.xlu0 %v1109, 32
      %v1125 = vpop.permute.xlu0 %1124
      %1128 = vrot.lane.b32.xlu0 %v1122, 32
      %v1129 = vpop.permute.xlu0 %1128
      %v1131 = vsel %vm932, %v1125, %v1129
      %v1132 = vpack.c.bf16 %v1131, %v1131
      %s1133 = scalar_lea.vmem %s527, 12
      %1134 = vst.msk [vmem:[%s1133] sm:$0xf] %vm935, %v1132
      %v1135 = vmul.f32 %v792, %v1098
      %v1136 = vmul.f32 %v792, %v1102
      %1138 = vrot.lane.b32.xlu0 %v1136, 112
      %v1139 = vpop.permute.xlu0 %1138
      %v1141 = vsub.f32 %v1135, %v1139
      %v1142 = vmul.f32 %v792, %v1111
      %v1143 = vmul.f32 %v792, %v1115
      %1145 = vrot.lane.b32.xlu0 %v1143, 16
      %v1146 = vpop.permute.xlu0 %1145
      %v1148 = vadd.f32 %v1142, %v1146
      %1150 = vrot.lane.b32.xlu0 %v1141, 32
      %v1151 = vpop.permute.xlu0 %1150
      %1154 = vrot.lane.b32.xlu0 %v1148, 32
      %v1155 = vpop.permute.xlu0 %1154
      %v1157 = vsel %vm932, %v1151, %v1155
      %v1158 = vpack.c.bf16 %v1157, %v1157
      %s1159 = scalar_lea.vmem %s535, 12
      %1160 = vst.msk [vmem:[%s1159] sm:$0xf] %vm935, %v1158
      %1161 = vrot.lane.b32.xlu0 %v1022, 32
      %v1162 = vpop.permute.xlu0 %1161
      %s1164 = scalar_lea.vmem %s543, 12
      %1165 = vst.msk [vmem:[%s1164] sm:$0xf] %vm935, %v1162
      %p1166 = scmp.lt.s32.totalorder %s29, 1
      %s1167 = scalar_select %p1166, %s29, 1
      %p1168 = scmp.lt.s32.totalorder %s30, 0
      %s1169 = scalar_select %p1168, %s30, 0
      %s1170 = smul.addr %s1167, 4
      %s1171 = sadd.s32 %s1169, %s1170
      %s1172 = smul.addr %s1171, 4
      %s1173 = scalar_lea.vmem %s11, %s1172
      %p1174 = scmp.lt.s32.totalorder %s29, 1
      %s1175 = scalar_select %p1174, %s29, 1
      %p1176 = scmp.lt.s32.totalorder %s30, 0
      %s1177 = scalar_select %p1176, %s30, 0
      %s1178 = smul.addr %s1175, 4
      %s1179 = sadd.s32 %s1177, %s1178
      %s1180 = smul.addr %s1179, 4
      %s1181 = scalar_lea.vmem %s12, %s1180
      %p1182 = scmp.lt.s32.totalorder %s29, 1
      %s1183 = scalar_select %p1182, %s29, 1
      %p1184 = scmp.lt.s32.totalorder %s30, 0
      %s1185 = scalar_select %p1184, %s30, 0
      %s1186 = smul.addr %s1183, 4
      %s1187 = sadd.s32 %s1185, %s1186
      %s1188 = smul.addr %s1187, 4
      %s1189 = scalar_lea.vmem %s13, %s1188
      // Predicated region
      $region65: #{esm2_forward.10} parent=63 // pred_check
        %p1190 = pneg %p305
      $region66: #{esm2_forward.10} parent=63 // pred_check_branch
        %1192 = sbr.rel (%p1190) target = $region68
      $region67: #{esm2_forward.10} parent=63 // pred_region
        _
      $region68: #{esm2_forward.10} parent=63 // pred_fallthru
        _
      // Predicated region
      $region69: #{esm2_forward.10} parent=63 // pred_check
        %p1193 = pneg %p333
      $region70: #{esm2_forward.10} parent=63 // pred_check_branch
        %1195 = sbr.rel (%p1193) target = $region72
      $region71: #{esm2_forward.10} parent=63 // pred_region
        _
      $region72: #{esm2_forward.10} parent=63 // pred_fallthru
        _
      // Predicated region
      $region73: #{esm2_forward.10} parent=63 // pred_check
        %p1196 = pneg %p361
      $region74: #{esm2_forward.10} parent=63 // pred_check_branch
        %1198 = sbr.rel (%p1196) target = $region76
      $region75: #{esm2_forward.10} parent=63 // pred_region
        _
      $region76: #{esm2_forward.10} parent=63 // pred_fallthru
        _
    $region64: #{esm2_forward.10} parent=5 // pred_fallthru
      _
    %p1199 = scmp.le.s32.totalorder 2, %s20
    // Predicated region
    $region77: #{esm2_forward.10} parent=5 // pred_check
      %p1200 = pneg %p1199
    $region78: #{esm2_forward.10} parent=5 // pred_check_branch
      %1202 = sbr.rel (%p1200) target = $region80
    $region79: #{esm2_forward.10} parent=5 // pred_region
      %s1203 = ssub.s32 %s20, 2
      // Predicated region
      $region81: #{esm2_forward.10} parent=79 // pred_check
        %p1204 = pneg %p311
      $region82: #{esm2_forward.10} parent=79 // pred_check_branch
        %1206 = sbr.rel (%p1204) target = $region84
      $region83: #{esm2_forward.10} parent=79 // pred_region
        %p1207 = scmp.lt.s32.totalorder %s31, 1
        %s1208 = scalar_select %p1207, %s31, 1
        %p1209 = scmp.lt.s32.totalorder %s32, 0
        %s1210 = scalar_select %p1209, %s32, 0
        %s1211 = smul.addr %s1208, 4
        %s1212 = sadd.s32 %s1210, %s1211
        %s1213 = smul.addr %s1212, 4
        %s1214 = scalar_lea.vmem %s11, %s1213
      $region84: #{esm2_forward.10} parent=79 // pred_fallthru
        _
      // Predicated region
      $region85: #{esm2_forward.10} parent=79 // pred_check
        %p1215 = pneg %p339
      $region86: #{esm2_forward.10} parent=79 // pred_check_branch
        %1217 = sbr.rel (%p1215) target = $region88
      $region87: #{esm2_forward.10} parent=79 // pred_region
        %p1218 = scmp.lt.s32.totalorder %s31, 1
        %s1219 = scalar_select %p1218, %s31, 1
        %p1220 = scmp.lt.s32.totalorder %s32, 0
        %s1221 = scalar_select %p1220, %s32, 0
        %s1222 = smul.addr %s1219, 4
        %s1223 = sadd.s32 %s1221, %s1222
        %s1224 = smul.addr %s1223, 4
        %s1225 = scalar_lea.vmem %s12, %s1224
      $region88: #{esm2_forward.10} parent=79 // pred_fallthru
        _
      // Predicated region
      $region89: #{esm2_forward.10} parent=79 // pred_check
        %p1226 = pneg %p367
      $region90: #{esm2_forward.10} parent=79 // pred_check_branch
        %1228 = sbr.rel (%p1226) target = $region92
      $region91: #{esm2_forward.10} parent=79 // pred_region
        %p1229 = scmp.lt.s32.totalorder %s31, 1
        %s1230 = scalar_select %p1229, %s31, 1
        %p1231 = scmp.lt.s32.totalorder %s32, 0
        %s1232 = scalar_select %p1231, %s32, 0
        %s1233 = smul.addr %s1230, 4
        %s1234 = sadd.s32 %s1232, %s1233
        %s1235 = smul.addr %s1234, 4
        %s1236 = scalar_lea.vmem %s13, %s1235
      $region92: #{esm2_forward.10} parent=79 // pred_fallthru
        _
    $region80: #{esm2_forward.10} parent=5 // pred_fallthru
      _
  $region6: #{esm2_forward.10} parent=0 // loop_footer
    %s24 = sadd.s32 1, %s20
  $region7: #{esm2_forward.10} parent=0 // loop_footer_branch
    %19 = sbr.rel target = $region3
  $region8: #{esm2_forward.10} parent=0 // loop_exit
    _

// kernel: esm2_forward.9
$region0: #{esm2_forward.9}
  #allocation0 [shape = 'u32[]', space=smem, size = 0x4, offset = 0x4, fixed_abs, tag = 'smem constant byte address 0x4 - core index']
  #allocation1 [shape = 'u32[144,128]{1,0:T(1,128)}', space=vmem, size = 0x12000, scoped, tag = 'internal scratch']
  #allocation2 [shape = 'f32[8,128]{1,0:T(8,128)}', space=vmem, size = 0x1000, scoped, tag = 'scratch operand']
  #allocation3 [shape = 'bf16[8,128]{1,0:T(8,128)(2,1)}', space=vmem, size = 0x800, scoped, tag = 'scratch operand']
  #allocation4 [shape = 'f32[8,128]{1,0:T(8,128)}', space=vmem, size = 0x1000, scoped, tag = 'scratch operand']
  %s0 = inlined_call_operand.vmem [shape: f32[2,8,128], index: 0, kind: input, shape index: {}]
  %s1 = inlined_call_operand.vmem [shape: bf16[2,4,8,32], index: 1, kind: input, shape index: {}]
  %s2 = inlined_call_operand.hbm [shape: bf16[128,128], index: 2, kind: input, shape index: {}]
  %s3 = inlined_call_operand.hbm [shape: f32[1,128], index: 3, kind: input, shape index: {}]
  %s4 = inlined_call_operand.vmem [shape: f32[1,128], index: 4, kind: input, shape index: {}]
  %s5 = inlined_call_operand.vmem [shape: f32[1,128], index: 5, kind: input, shape index: {}]
  %s6 = inlined_call_operand.vmem [shape: bf16[128,512], index: 6, kind: input, shape index: {}]
  %s7 = inlined_call_operand.hbm [shape: f32[1,512], index: 7, kind: input, shape index: {}]
  %s8 = inlined_call_operand.vmem [shape: bf16[512,128], index: 8, kind: input, shape index: {}]
  %s9 = inlined_call_operand.hbm [shape: f32[1,128], index: 9, kind: input, shape index: {}]
  %s10 = inlined_call_operand.vmem [shape: f32[2,8,128], index: 10, kind: output, shape index: {}]
  %s11 = sld [smem:[#allocation0]]
  $region97: #{esm2_forward.9} parent=0
    _
  %s13 = ssub.s32 1, %s11
  %s14 = scalar_select 0, %s13, %s11
  $region1: #{esm2_forward.9} parent=0
    #allocation5 [shape = 'u8[32768]{0}', space=vmem, size = 0x8000, scoped, tag = 'input window, operand 2, single buffered']
    #allocation6 [shape = 's32[2]{0}', space=sflag, size = 0x8, scoped, tag = 'scoped memory for esm2_forward.9']
    #allocation7 [shape = 'u8[512]{0}', space=vmem, size = 0x400, scoped, tag = 'input window, operand 3, single buffered']
    #allocation8 [shape = 's32[1]{0}', space=sflag, size = 0x4, scoped, tag = 'scoped memory for esm2_forward.9']
    #allocation9 [shape = 'u8[2048]{0}', space=vmem, size = 0x800, scoped, tag = 'input window, operand 7, single buffered']
    #allocation10 [shape = 'u8[512]{0}', space=vmem, size = 0x400, scoped, tag = 'input window, operand 9, single buffered']
    #allocation11 [shape = 's32[1]{0}', space=sflag, size = 0x4, scoped, tag = 'scoped memory for esm2_forward.9']
    %15 = vsyncpa [#allocation6], 0
    %16 = vsyncpa [#allocation8], 0
    %17 = vsyncpa [#allocation11], 0
    loop: start=0, step=1, limit=4
    $region2: #{esm2_forward.9} parent=1 // loop_pre_header
      _
    $region3: #{esm2_forward.9} parent=1 // loop_header
      %s19 = sphi 0, %s23
      %p20 = scmp.ge.s32.totalorder %s19, 4
      %s26 = sphi 0, %s45
      %s27 = sphi 0, %s41
      %s28 = sphi 0, %s37
      %s29 = sphi 0, %s26
      %s30 = sphi 0, %s27
      %s31 = sphi 0, %s28
      %s32 = sphi 0, %s29
      %s33 = sphi 0, %s30
      %s34 = sphi 0, %s31
      %s50 = sphi 0, %s52
      %s53 = sphi 0, %s50
      %s54 = sphi 0, %s53
      %s70 = sphi 0, %s54
      %s78 = sphi 0, %s80
      %s81 = sphi 0, %s78
      %s82 = sphi 0, %s81
      %s98 = sphi 0, %s82
      %s102 = sphi 0, %s102
      %s104 = sphi 0, %s102
      %s105 = sphi 0, %s104
      %s119 = sphi 0, %s105
      %s123 = sphi 0, %s123
      %s125 = sphi 0, %s123
      %s126 = sphi 0, %s125
      %s140 = sphi 0, %s126
      %s144 = sphi 0, %s144
      %s146 = sphi 0, %s144
      %s147 = sphi 0, %s146
      %s161 = sphi 0, %s147
      %s165 = sphi 0, %s165
      %s167 = sphi 0, %s165
      %s168 = sphi 0, %s167
      %s182 = sphi 0, %s168
      %s188 = sphi 0, %s190
      %s191 = sphi 0, %s188
      %s192 = sphi 0, %s191
      %s208 = sphi 0, %s192
      %s214 = sphi 0, %s216
      %s217 = sphi 0, %s214
      %s218 = sphi 0, %s217
      %s234 = sphi 0, %s218
      %s240 = sphi 0, %s242
      %s243 = sphi 0, %s240
      %s244 = sphi 0, %s243
      %s260 = sphi 0, %s244
      %s264 = sphi 0, %s264
      %s266 = sphi 0, %s264
      %s267 = sphi 0, %s266
      %s281 = sphi 0, %s267
      %s289 = sphi 0, %s291
      %s292 = sphi 0, %s289
      %s293 = sphi 0, %s292
      %s309 = sphi 0, %s293
    $region4: #{esm2_forward.9} parent=1 // loop_header_branch
      %22 = sbr.rel (%p20) target = $region8
    $region5: #{esm2_forward.9} parent=1 // loop_body
      %s24 = ssub.s32 %s19, 1
      %s25 = ssub.s32 %s19, 2
      %s35 = sadd.s32 1, %s28
      %p36 = scmp.ge.s32.totalorder %s35, 1
      %s37 = scalar_select %p36, 0, %s35
      %s38 = sadd.s32 1, %s27
      %s39 = scalar_select %p36, %s38, %s27
      %p40 = scmp.ge.s32.totalorder %s39, 1
      %s41 = scalar_select %p40, 0, %s39
      %s42 = sadd.s32 1, %s26
      %s43 = scalar_select %p40, %s42, %s26
      %p44 = scmp.ge.s32.totalorder %s43, 2
      %s45 = scalar_select %p44, 0, %s43
      %s46 = ssub.s32 %s26, %s45
      %s47 = ssub.s32 %s27, %s41
      %s48 = sor.u32 %s46, %s47
      %p49 = scmp.eq.s32.totalorder %s48, 0
      %s51 = sadd.s32 %s50, 1
      %s52 = scalar_select %p49, %s50, %s51
      %p55 = pneg %p49
      %p56 = scmp.eq.s32.totalorder %s19, 1
      %p57 = por %p55, %p56
      %p58 = scmp.ne.s32.totalorder %s50, %s53
      %p59 = scmp.eq.s32.totalorder %s19, 0
      %p60 = por %p58, %p59
      %p61 = scmp.ne.s32.totalorder %s50, %s53
      %p62 = scmp.eq.s32.totalorder %s24, 1
      %p63 = por %p61, %p62
      %p64 = scmp.ne.s32.totalorder %s53, %s54
      %p65 = scmp.eq.s32.totalorder %s24, 0
      %p66 = por %p64, %p65
      %p67 = scmp.ne.s32.totalorder %s53, %s54
      %p68 = scmp.eq.s32.totalorder %s25, 1
      %p69 = por %p67, %p68
      %p71 = scmp.ne.s32.totalorder %s54, %s70
      %p72 = scmp.eq.s32.totalorder %s25, 0
      %p73 = por %p71, %p72
      %s74 = ssub.s32 %s26, %s45
      %s75 = ssub.s32 %s27, %s41
      %s76 = sor.u32 %s74, %s75
      %p77 = scmp.eq.s32.totalorder %s76, 0
      %s79 = sadd.s32 %s78, 1
      %s80 = scalar_select %p77, %s78, %s79
      %p83 = pneg %p77
      %p84 = scmp.eq.s32.totalorder %s19, 1
      %p85 = por %p83, %p84
      %p86 = scmp.ne.s32.totalorder %s78, %s81
      %p87 = scmp.eq.s32.totalorder %s19, 0
      %p88 = por %p86, %p87
      %p89 = scmp.ne.s32.totalorder %s78, %s81
      %p90 = scmp.eq.s32.totalorder %s24, 1
      %p91 = por %p89, %p90
      %p92 = scmp.ne.s32.totalorder %s81, %s82
      %p93 = scmp.eq.s32.totalorder %s24, 0
      %p94 = por %p92, %p93
      %p95 = scmp.ne.s32.totalorder %s81, %s82
      %p96 = scmp.eq.s32.totalorder %s25, 1
      %p97 = por %p95, %p96
      %p99 = scmp.ne.s32.totalorder %s82, %s98
      %p100 = scmp.eq.s32.totalorder %s25, 0
      %p101 = por %p99, %p100
      %s103 = sadd.s32 %s102, 1
      %p106 = scmp.eq.s32.totalorder %s19, 1
      %p107 = scmp.ne.s32.totalorder %s102, %s104
      %p108 = scmp.eq.s32.totalorder %s19, 0
      %p109 = por %p107, %p108
      %p110 = scmp.ne.s32.totalorder %s102, %s104
      %p111 = scmp.eq.s32.totalorder %s24, 1
      %p112 = por %p110, %p111
      %p113 = scmp.ne.s32.totalorder %s104, %s105
      %p114 = scmp.eq.s32.totalorder %s24, 0
      %p115 = por %p113, %p114
      %p116 = scmp.ne.s32.totalorder %s104, %s105
      %p117 = scmp.eq.s32.totalorder %s25, 1
      %p118 = por %p116, %p117
      %p120 = scmp.ne.s32.totalorder %s105, %s119
      %p121 = scmp.eq.s32.totalorder %s25, 0
      %p122 = por %p120, %p121
      %s124 = sadd.s32 %s123, 1
      %p127 = scmp.eq.s32.totalorder %s19, 1
      %p128 = scmp.ne.s32.totalorder %s123, %s125
      %p129 = scmp.eq.s32.totalorder %s19, 0
      %p130 = por %p128, %p129
      %p131 = scmp.ne.s32.totalorder %s123, %s125
      %p132 = scmp.eq.s32.totalorder %s24, 1
      %p133 = por %p131, %p132
      %p134 = scmp.ne.s32.totalorder %s125, %s126
      %p135 = scmp.eq.s32.totalorder %s24, 0
      %p136 = por %p134, %p135
      %p137 = scmp.ne.s32.totalorder %s125, %s126
      %p138 = scmp.eq.s32.totalorder %s25, 1
      %p139 = por %p137, %p138
      %p141 = scmp.ne.s32.totalorder %s126, %s140
      %p142 = scmp.eq.s32.totalorder %s25, 0
      %p143 = por %p141, %p142
      %s145 = sadd.s32 %s144, 1
      %p148 = scmp.eq.s32.totalorder %s19, 1
      %p149 = scmp.ne.s32.totalorder %s144, %s146
      %p150 = scmp.eq.s32.totalorder %s19, 0
      %p151 = por %p149, %p150
      %p152 = scmp.ne.s32.totalorder %s144, %s146
      %p153 = scmp.eq.s32.totalorder %s24, 1
      %p154 = por %p152, %p153
      %p155 = scmp.ne.s32.totalorder %s146, %s147
      %p156 = scmp.eq.s32.totalorder %s24, 0
      %p157 = por %p155, %p156
      %p158 = scmp.ne.s32.totalorder %s146, %s147
      %p159 = scmp.eq.s32.totalorder %s25, 1
      %p160 = por %p158, %p159
      %p162 = scmp.ne.s32.totalorder %s147, %s161
      %p163 = scmp.eq.s32.totalorder %s25, 0
      %p164 = por %p162, %p163
      %s166 = sadd.s32 %s165, 1
      %p169 = scmp.eq.s32.totalorder %s19, 1
      %p170 = scmp.ne.s32.totalorder %s165, %s167
      %p171 = scmp.eq.s32.totalorder %s19, 0
      %p172 = por %p170, %p171
      %p173 = scmp.ne.s32.totalorder %s165, %s167
      %p174 = scmp.eq.s32.totalorder %s24, 1
      %p175 = por %p173, %p174
      %p176 = scmp.ne.s32.totalorder %s167, %s168
      %p177 = scmp.eq.s32.totalorder %s24, 0
      %p178 = por %p176, %p177
      %p179 = scmp.ne.s32.totalorder %s167, %s168
      %p180 = scmp.eq.s32.totalorder %s25, 1
      %p181 = por %p179, %p180
      %p183 = scmp.ne.s32.totalorder %s168, %s182
      %p184 = scmp.eq.s32.totalorder %s25, 0
      %p185 = por %p183, %p184
      %s186 = ssub.s32 %s28, %s37
      %p187 = scmp.eq.s32.totalorder %s186, 0
      %s189 = sadd.s32 %s188, 1
      %s190 = scalar_select %p187, %s188, %s189
      %p193 = pneg %p187
      %p194 = scmp.eq.s32.totalorder %s19, 1
      %p195 = por %p193, %p194
      %p196 = scmp.ne.s32.totalorder %s188, %s191
      %p197 = scmp.eq.s32.totalorder %s19, 0
      %p198 = por %p196, %p197
      %p199 = scmp.ne.s32.totalorder %s188, %s191
      %p200 = scmp.eq.s32.totalorder %s24, 1
      %p201 = por %p199, %p200
      %p202 = scmp.ne.s32.totalorder %s191, %s192
      %p203 = scmp.eq.s32.totalorder %s24, 0
      %p204 = por %p202, %p203
      %p205 = scmp.ne.s32.totalorder %s191, %s192
      %p206 = scmp.eq.s32.totalorder %s25, 1
      %p207 = por %p205, %p206
      %p209 = scmp.ne.s32.totalorder %s192, %s208
      %p210 = scmp.eq.s32.totalorder %s25, 0
      %p211 = por %p209, %p210
      %s212 = ssub.s32 %s28, %s37
      %p213 = scmp.eq.s32.totalorder %s212, 0
      %s215 = sadd.s32 %s214, 1
      %s216 = scalar_select %p213, %s214, %s215
      %p219 = pneg %p213
      %p220 = scmp.eq.s32.totalorder %s19, 1
      %p221 = por %p219, %p220
      %p222 = scmp.ne.s32.totalorder %s214, %s217
      %p223 = scmp.eq.s32.totalorder %s19, 0
      %p224 = por %p222, %p223
      %p225 = scmp.ne.s32.totalorder %s214, %s217
      %p226 = scmp.eq.s32.totalorder %s24, 1
      %p227 = por %p225, %p226
      %p228 = scmp.ne.s32.totalorder %s217, %s218
      %p229 = scmp.eq.s32.totalorder %s24, 0
      %p230 = por %p228, %p229
      %p231 = scmp.ne.s32.totalorder %s217, %s218
      %p232 = scmp.eq.s32.totalorder %s25, 1
      %p233 = por %p231, %p232
      %p235 = scmp.ne.s32.totalorder %s218, %s234
      %p236 = scmp.eq.s32.totalorder %s25, 0
      %p237 = por %p235, %p236
      %s238 = ssub.s32 %s28, %s37
      %p239 = scmp.eq.s32.totalorder %s238, 0
      %s241 = sadd.s32 %s240, 1
      %s242 = scalar_select %p239, %s240, %s241
      %p245 = pneg %p239
      %p246 = scmp.eq.s32.totalorder %s19, 1
      %p247 = por %p245, %p246
      %p248 = scmp.ne.s32.totalorder %s240, %s243
      %p249 = scmp.eq.s32.totalorder %s19, 0
      %p250 = por %p248, %p249
      %p251 = scmp.ne.s32.totalorder %s240, %s243
      %p252 = scmp.eq.s32.totalorder %s24, 1
      %p253 = por %p251, %p252
      %p254 = scmp.ne.s32.totalorder %s243, %s244
      %p255 = scmp.eq.s32.totalorder %s24, 0
      %p256 = por %p254, %p255
      %p257 = scmp.ne.s32.totalorder %s243, %s244
      %p258 = scmp.eq.s32.totalorder %s25, 1
      %p259 = por %p257, %p258
      %p261 = scmp.ne.s32.totalorder %s244, %s260
      %p262 = scmp.eq.s32.totalorder %s25, 0
      %p263 = por %p261, %p262
      %s265 = sadd.s32 %s264, 1
      %p268 = scmp.eq.s32.totalorder %s19, 1
      %p269 = scmp.ne.s32.totalorder %s264, %s266
      %p270 = scmp.eq.s32.totalorder %s19, 0
      %p271 = por %p269, %p270
      %p272 = scmp.ne.s32.totalorder %s264, %s266
      %p273 = scmp.eq.s32.totalorder %s24, 1
      %p274 = por %p272, %p273
      %p275 = scmp.ne.s32.totalorder %s266, %s267
      %p276 = scmp.eq.s32.totalorder %s24, 0
      %p277 = por %p275, %p276
      %p278 = scmp.ne.s32.totalorder %s266, %s267
      %p279 = scmp.eq.s32.totalorder %s25, 1
      %p280 = por %p278, %p279
      %p282 = scmp.ne.s32.totalorder %s267, %s281
      %p283 = scmp.eq.s32.totalorder %s25, 0
      %p284 = por %p282, %p283
      %s285 = ssub.s32 %s26, %s45
      %s286 = ssub.s32 %s27, %s41
      %s287 = sor.u32 %s285, %s286
      %p288 = scmp.eq.s32.totalorder %s287, 0
      %s290 = sadd.s32 %s289, 1
      %s291 = scalar_select %p288, %s289, %s290
      %p294 = pneg %p288
      %p295 = scmp.eq.s32.totalorder %s19, 1
      %p296 = por %p294, %p295
      %p297 = scmp.ne.s32.totalorder %s289, %s292
      %p298 = scmp.eq.s32.totalorder %s19, 0
      %p299 = por %p297, %p298
      %p300 = scmp.ne.s32.totalorder %s289, %s292
      %p301 = scmp.eq.s32.totalorder %s24, 1
      %p302 = por %p300, %p301
      %p303 = scmp.ne.s32.totalorder %s292, %s293
      %p304 = scmp.eq.s32.totalorder %s24, 0
      %p305 = por %p303, %p304
      %p306 = scmp.ne.s32.totalorder %s292, %s293
      %p307 = scmp.eq.s32.totalorder %s25, 1
      %p308 = por %p306, %p307
      %p310 = scmp.ne.s32.totalorder %s293, %s309
      %p311 = scmp.eq.s32.totalorder %s25, 0
      %p312 = por %p310, %p311
      %p313 = scmp.le.s32.totalorder 1, %s19
      %p314 = scmp.lt.s32.totalorder %s19, 3
      %p315 = pnand %p313, %p314
      %p316 = pneg %p315
      // Predicated region
      $region9: #{esm2_forward.9} parent=5 // pred_check
        _
      $region10: #{esm2_forward.9} parent=5 // pred_check_branch
        %318 = sbr.rel (%p315) target = $region12
      $region11: #{esm2_forward.9} parent=5 // pred_region
        %s319 = ssub.s32 %s19, 1
        // Predicated region
        $region13: #{esm2_forward.9} parent=11 // pred_check
          %p320 = pneg %p115
        $region14: #{esm2_forward.9} parent=11 // pred_check_branch
          %322 = sbr.rel (%p320) target = $region16
        $region15: #{esm2_forward.9} parent=11 // pred_region
          %s324 = ssub.s32 1024, 1024
          %325 = vsyncadd [#allocation6], %s324
          %s326 = sshll.u32 [#allocation5], 4
          %s327 = int_to_ptr.vmem [resolvable:$true] %s326
          %332 = dma.hbm_to_vmem [thread:$0]  %s2, 1024, %s327, [#allocation6], 64, 64, 4
        $region16: #{esm2_forward.9} parent=11 // pred_fallthru
          _
        // Predicated region
        $region17: #{esm2_forward.9} parent=11 // pred_check
          %p333 = pneg %p136
        $region18: #{esm2_forward.9} parent=11 // pred_check_branch
          %335 = sbr.rel (%p333) target = $region20
        $region19: #{esm2_forward.9} parent=11 // pred_region
          %s337 = ssub.s32 16, 16
          %338 = vsyncadd [#allocation8], %s337
          %s340 = sshll.u32 [#allocation7], 4
          %s341 = int_to_ptr.vmem [resolvable:$true] %s340
          %343 = dma.hbm_to_vmem [thread:$0]  %s3, 16, %s341, [#allocation8]
        $region20: #{esm2_forward.9} parent=11 // pred_fallthru
          _
        // Predicated region
        $region21: #{esm2_forward.9} parent=11 // pred_check
          %p344 = pneg %p157
        $region22: #{esm2_forward.9} parent=11 // pred_check_branch
          %346 = sbr.rel (%p344) target = $region24
        $region23: #{esm2_forward.9} parent=11 // pred_region
          _
        $region24: #{esm2_forward.9} parent=11 // pred_fallthru
          _
        // Predicated region
        $region25: #{esm2_forward.9} parent=11 // pred_check
          %p347 = pneg %p178
        $region26: #{esm2_forward.9} parent=11 // pred_check_branch
          %349 = sbr.rel (%p347) target = $region28
        $region27: #{esm2_forward.9} parent=11 // pred_region
          _
        $region28: #{esm2_forward.9} parent=11 // pred_fallthru
          _
        // Predicated region
        $region29: #{esm2_forward.9} parent=11 // pred_check
          %p350 = pneg %p204
        $region30: #{esm2_forward.9} parent=11 // pred_check_branch
          %352 = sbr.rel (%p350) target = $region32
        $region31: #{esm2_forward.9} parent=11 // pred_region
          %s353 = smul.u32 4, %s31
          %p354 = scmp.lt.s32.totalorder %s353, 3
          %s355 = scalar_select %p354, %s353, 3
          %s356 = smul.addr %s355, 4
          %s357 = scalar_lea.vmem %s6, %s356
          %s358 = smul.u32 4, %s31
        $region32: #{esm2_forward.9} parent=11 // pred_fallthru
          _
        // Predicated region
        $region33: #{esm2_forward.9} parent=11 // pred_check
          %p359 = pneg %p230
        $region34: #{esm2_forward.9} parent=11 // pred_check_branch
          %361 = sbr.rel (%p359) target = $region36
        $region35: #{esm2_forward.9} parent=11 // pred_region
          %s362 = smul.u32 4, %s31
          %s364 = ssub.s32 64, 64
          %365 = vsyncadd [#allocation8], %s364
          %s366 = smul.addr %s362, 16
          %s367 = scalar_lea.hbm %s7, %s366
          %s369 = sshll.u32 [#allocation9], 4
          %s370 = int_to_ptr.vmem [resolvable:$true] %s369
          %372 = dma.hbm_to_vmem [thread:$0]  %s367, 64, %s370, [#allocation8]
        $region36: #{esm2_forward.9} parent=11 // pred_fallthru
          _
        // Predicated region
        $region37: #{esm2_forward.9} parent=11 // pred_check
          %p373 = pneg %p256
        $region38: #{esm2_forward.9} parent=11 // pred_check_branch
          %375 = sbr.rel (%p373) target = $region40
        $region39: #{esm2_forward.9} parent=11 // pred_region
          %s376 = smul.u32 64, %s31
          %p377 = scmp.lt.s32.totalorder %s376, 63
          %s378 = scalar_select %p377, %s376, 63
          %s379 = smul.addr %s378, 4
          %s380 = scalar_lea.vmem %s8, %s379
          %s381 = smul.u32 64, %s31
        $region40: #{esm2_forward.9} parent=11 // pred_fallthru
          _
        // Predicated region
        $region41: #{esm2_forward.9} parent=11 // pred_check
          %p382 = pneg %p277
        $region42: #{esm2_forward.9} parent=11 // pred_check_branch
          %384 = sbr.rel (%p382) target = $region44
        $region43: #{esm2_forward.9} parent=11 // pred_region
          %s386 = ssub.s32 16, 16
          %387 = vsyncadd [#allocation11], %s386
          %s389 = sshll.u32 [#allocation10], 4
          %s390 = int_to_ptr.vmem [resolvable:$true] %s389
          %392 = dma.hbm_to_vmem [thread:$0]  %s9, 16, %s390, [#allocation11]
        $region44: #{esm2_forward.9} parent=11 // pred_fallthru
          _
      $region12: #{esm2_forward.9} parent=5 // pred_fallthru
        _
      %p393 = scmp.lt.s32.totalorder %s19, 2
      // Predicated region
      $region45: #{esm2_forward.9} parent=5 // pred_check
        %p394 = pneg %p393
      $region46: #{esm2_forward.9} parent=5 // pred_check_branch
        %396 = sbr.rel (%p394) target = $region48
      $region47: #{esm2_forward.9} parent=5 // pred_region
        // Predicated region
        $region49: #{esm2_forward.9} parent=47 // pred_check
          %p397 = pneg %p60
        $region50: #{esm2_forward.9} parent=47 // pred_check_branch
          %399 = sbr.rel (%p397) target = $region52
        $region51: #{esm2_forward.9} parent=47 // pred_region
          %p400 = scmp.lt.s32.totalorder %s26, 1
          %s401 = scalar_select %p400, %s26, 1
          %p402 = scmp.lt.s32.totalorder %s27, 0
          %s403 = scalar_select %p402, %s27, 0
          %s404 = sadd.s32 %s403, %s401
          %s405 = smul.addr %s404, 8
          %s406 = scalar_lea.vmem %s0, %s405
        $region52: #{esm2_forward.9} parent=47 // pred_fallthru
          _
        // Predicated region
        $region53: #{esm2_forward.9} parent=47 // pred_check
          %p407 = pneg %p88
        $region54: #{esm2_forward.9} parent=47 // pred_check_branch
          %409 = sbr.rel (%p407) target = $region56
        $region55: #{esm2_forward.9} parent=47 // pred_region
          %p410 = scmp.lt.s32.totalorder %s26, 1
          %s411 = scalar_select %p410, %s26, 1
          %p412 = scmp.lt.s32.totalorder %s27, 0
          %s413 = scalar_select %p412, %s27, 0
          %s414 = smul.addr %s411, 4
          %s415 = sadd.s32 %s413, %s414
          %s416 = smul.addr %s415, 4
          %s417 = scalar_lea.vmem %s1, %s416
        $region56: #{esm2_forward.9} parent=47 // pred_fallthru
          _
      $region48: #{esm2_forward.9} parent=5 // pred_fallthru
        _
      %p418 = scmp.le.s32.totalorder 1, %s19
      %p419 = scmp.lt.s32.totalorder %s19, 3
      %p420 = pnand %p418, %p419
      %p421 = pneg %p420
      // Predicated region
      $region57: #{esm2_forward.9} parent=5 // pred_check
        _
      $region58: #{esm2_forward.9} parent=5 // pred_check_branch
        %423 = sbr.rel (%p420) target = $region60
      $region59: #{esm2_forward.9} parent=5 // pred_region
        %s424 = ssub.s32 %s19, 1
        // Predicated region
        $region61: #{esm2_forward.9} parent=59 // pred_check
          %p425 = pneg %p115
        $region62: #{esm2_forward.9} parent=59 // pred_check_branch
          %427 = sbr.rel (%p425) target = $region64
        $region63: #{esm2_forward.9} parent=59 // pred_region
          %428 = dma.done [#allocation6], 1024
        $region64: #{esm2_forward.9} parent=59 // pred_fallthru
          _
        // Predicated region
        $region65: #{esm2_forward.9} parent=59 // pred_check
          %p429 = pneg %p136
        $region66: #{esm2_forward.9} parent=59 // pred_check_branch
          %431 = sbr.rel (%p429) target = $region68
        $region67: #{esm2_forward.9} parent=59 // pred_region
          %432 = dma.done [#allocation8], 16
        $region68: #{esm2_forward.9} parent=59 // pred_fallthru
          _
        // Predicated region
        $region69: #{esm2_forward.9} parent=59 // pred_check
          %p433 = pneg %p230
        $region70: #{esm2_forward.9} parent=59 // pred_check_branch
          %435 = sbr.rel (%p433) target = $region72
        $region71: #{esm2_forward.9} parent=59 // pred_region
          %436 = dma.done [#allocation8], 64
        $region72: #{esm2_forward.9} parent=59 // pred_fallthru
          _
        // Predicated region
        $region73: #{esm2_forward.9} parent=59 // pred_check
          %p437 = pneg %p277
        $region74: #{esm2_forward.9} parent=59 // pred_check_branch
          %439 = sbr.rel (%p437) target = $region76
        $region75: #{esm2_forward.9} parent=59 // pred_region
          %440 = dma.done [#allocation11], 16
        $region76: #{esm2_forward.9} parent=59 // pred_fallthru
          _
        %p441 = scmp.lt.s32.totalorder %s29, 1
        %s442 = scalar_select %p441, %s29, 1
        %p443 = scmp.lt.s32.totalorder %s30, 0
        %s444 = scalar_select %p443, %s30, 0
        %s445 = sadd.s32 %s444, %s442
        %s446 = smul.addr %s445, 8
        %s447 = scalar_lea.vmem %s0, %s446
        %p448 = pneg %p66
        %p449 = pneg %p63
        %p450 = scmp.lt.s32.totalorder %s29, 1
        %s451 = scalar_select %p450, %s29, 1
        %p452 = scmp.lt.s32.totalorder %s30, 0
        %s453 = scalar_select %p452, %s30, 0
        %s454 = smul.addr %s451, 4
        %s455 = sadd.s32 %s453, %s454
        %s456 = smul.addr %s455, 4
        %s457 = scalar_lea.vmem %s1, %s456
        %p458 = pneg %p94
        %p459 = pneg %p91
        %p460 = pneg %p115
        %p461 = pneg %p112
        %p462 = pneg %p136
        %p463 = pneg %p133
        %p464 = pneg %p157
        %p465 = pneg %p154
        %p466 = pneg %p178
        %p467 = pneg %p175
        %s468 = smul.u32 4, %s31
        %p469 = scmp.lt.s32.totalorder %s468, 3
        %s470 = scalar_select %p469, %s468, 3
        %s471 = smul.addr %s470, 4
        %s472 = scalar_lea.vmem %s6, %s471
        %p473 = pneg %p204
        %p474 = pneg %p201
        %p475 = pneg %p230
        %p476 = pneg %p227
        %s477 = smul.u32 64, %s31
        %p478 = scmp.lt.s32.totalorder %s477, 63
        %s479 = scalar_select %p478, %s477, 63
        %s480 = smul.addr %s479, 4
        %s481 = scalar_lea.vmem %s8, %s480
        %p482 = pneg %p256
        %p483 = pneg %p253
        %p484 = pneg %p277
        %p485 = pneg %p274
        %p486 = pneg %p305
        %p487 = pneg %p302
        %p488 = scmp.lt.s32.totalorder %s29, 1
        %s489 = scalar_select %p488, %s29, 1
        %p490 = scmp.lt.s32.totalorder %s30, 0
        %s491 = scalar_select %p490, %s30, 0
        %s492 = sadd.s32 %s491, %s489
        %s493 = smul.addr %s492, 8
        %s494 = scalar_lea.vmem %s10, %s493
        %p495 = scmp.lt.s32.totalorder %s29, 1
        %s496 = scalar_select %p495, %s29, 1
        %p497 = scmp.lt.s32.totalorder %s30, 0
        %s498 = scalar_select %p497, %s30, 0
        %s499 = sadd.s32 %s498, %s496
        %s500 = smul.addr %s499, 8
        %s501 = scalar_lea.vmem %s0, %s500
        %p502 = scmp.lt.s32.totalorder %s29, 1
        %s503 = scalar_select %p502, %s29, 1
        %p504 = scmp.lt.s32.totalorder %s30, 0
        %s505 = scalar_select %p504, %s30, 0
        %s506 = smul.addr %s503, 4
        %s507 = sadd.s32 %s505, %s506
        %s508 = smul.addr %s507, 4
        %s509 = scalar_lea.vmem %s1, %s508
        %s510 = smul.u32 4, %s31
        %p511 = scmp.lt.s32.totalorder %s510, 3
        %s512 = scalar_select %p511, %s510, 3
        %s513 = smul.addr %s512, 4
        %s514 = scalar_lea.vmem %s6, %s513
        %s515 = smul.u32 4, %s31
        %s516 = smul.u32 4, %s31
        %s517 = smul.u32 64, %s31
        %p518 = scmp.lt.s32.totalorder %s517, 63
        %s519 = scalar_select %p518, %s517, 63
        %s520 = smul.addr %s519, 4
        %s521 = scalar_lea.vmem %s8, %s520
        %s522 = smul.u32 64, %s31
        %p523 = scmp.lt.s32.totalorder %s29, 1
        %s524 = scalar_select %p523, %s29, 1
        %p525 = scmp.lt.s32.totalorder %s30, 0
        %s526 = scalar_select %p525, %s30, 0
        %s527 = sadd.s32 %s526, %s524
        %s528 = smul.addr %s527, 8
        %s529 = scalar_lea.vmem %s10, %s528
        %p531 = scmp.eq.s32.totalorder %s31, 0
        // Predicated region
        $region77: #{esm2_forward.9} parent=59 // pred_check
          %p532 = pneg %p531
        $region78: #{esm2_forward.9} parent=59 // pred_check_branch
          %534 = sbr.rel (%p532) target = $region80
        $region79: #{esm2_forward.9} parent=59 // pred_region
          %v535 = vld [vmem:[%s509] sm:$0xf]
          %s536 = scalar_lea.vmem %s509, 4
          %v537 = vld [vmem:[%s536] sm:$0xf]
          %s538 = scalar_lea.vmem %s509, 8
          %v539 = vld [vmem:[%s538] sm:$0xf]
          %s540 = scalar_lea.vmem %s509, 12
          %v541 = vld [vmem:[%s540] sm:$0xf]
          %v543 = vunpack.c.l.b16 %v537
          %v544 = vpack.c.b16 %v543, %v543
          %545 = vrot.lane.b32.xlu0 %v544, 32
          %v546 = vpop.permute.xlu0 %545
          %v548 = vunpack.c.l.b16 %v539
          %v549 = vpack.c.b16 %v548, %v548
          %550 = vrot.lane.b32.xlu0 %v549, 64
          %v551 = vpop.permute.xlu0 %550
          %v553 = vunpack.c.l.b16 %v541
          %v554 = vpack.c.b16 %v553, %v553
          %555 = vrot.lane.b32.xlu0 %v554, 96
          %v556 = vpop.permute.xlu0 %555
          %vm557 = vcmask 261120
          %v560 = vsel %vm557, %v535, %v546
          %vm561 = vcmask 523264
          %v563 = vsel %vm561, %v560, %v551
          %vm564 = vcmask 785408
          %v566 = vsel %vm564, %v563, %v556
          %v568 = vld [vmem:[#allocation5] sm:$0xf]
          %v569 = vld [vmem:[#allocation5 + $0x4] sm:$0xf]
          %v570 = vld [vmem:[#allocation5 + $0x8] sm:$0xf]
          %v571 = vld [vmem:[#allocation5 + $0xc] sm:$0xf]
          %v572 = vld [vmem:[#allocation5 + $0x10] sm:$0xf]
          %v573 = vld [vmem:[#allocation5 + $0x14] sm:$0xf]
          %v574 = vld [vmem:[#allocation5 + $0x18] sm:$0xf]
          %v575 = vld [vmem:[#allocation5 + $0x1c] sm:$0xf]
          %v576 = vld [vmem:[#allocation5 + $0x20] sm:$0xf]
          %v577 = vld [vmem:[#allocation5 + $0x24] sm:$0xf]
          %v578 = vld [vmem:[#allocation5 + $0x28] sm:$0xf]
          %v579 = vld [vmem:[#allocation5 + $0x2c] sm:$0xf]
          %v580 = vld [vmem:[#allocation5 + $0x30] sm:$0xf]
          %v581 = vld [vmem:[#allocation5 + $0x34] sm:$0xf]
          %v582 = vld [vmem:[#allocation5 + $0x38] sm:$0xf]
          %v583 = vld [vmem:[#allocation5 + $0x3c] sm:$0xf]
          %v584 = vld [vmem:[#allocation7] sm:$0x1]
          %v586 = vlaneseq
          %v587 = vshrl.u32 %v586, 7
          %v588 = vsub.s32 0, %v587
          %v589 = vrot.slane %v584, %v588
          %v607 = vunpack.c.l.b16 %v568
          %v608 = vunpack.c.l.b16 %v569
          %v609 = vunpack.c.l.b16 %v570
          %v610 = vunpack.c.l.b16 %v571
          %v611 = vunpack.c.l.b16 %v572
          %v612 = vunpack.c.l.b16 %v573
          %v613 = vunpack.c.l.b16 %v574
          %v614 = vunpack.c.l.b16 %v575
          %v615 = vunpack.c.l.b16 %v576
          %v616 = vunpack.c.l.b16 %v577
          %v617 = vunpack.c.l.b16 %v578
          %v618 = vunpack.c.l.b16 %v579
          %v619 = vunpack.c.l.b16 %v580
          %v620 = vunpack.c.l.b16 %v581
          %v621 = vunpack.c.l.b16 %v582
          %v622 = vunpack.c.l.b16 %v583
          %v623 = vpack.c.b16 %v608, %v607
          %v624 = vpack.c.b16 %v610, %v609
          %v625 = vpack.c.b16 %v612, %v611
          %v626 = vpack.c.b16 %v614, %v613
          %v627 = vpack.c.b16 %v616, %v615
          %v628 = vpack.c.b16 %v618, %v617
          %v629 = vpack.c.b16 %v620, %v619
          %v630 = vpack.c.b16 %v622, %v621
          %639 = vmatprep.subr.bf16.mxu0 0
          %640 = vmatpush1.bf16.msra.mxu0 %v630
          %641 = vmatprep.subr.bf16.mxu0 0
          %642 = vmatpush1.bf16.msra.mxu0 %v629
          %643 = vmatprep.subr.bf16.mxu0 0
          %644 = vmatpush1.bf16.msra.mxu0 %v628
          %645 = vmatprep.subr.bf16.mxu0 0
          %646 = vmatpush1.bf16.msra.mxu0 %v627
          %647 = vmatprep.subr.bf16.mxu0 0
          %648 = vmatpush1.bf16.msra.mxu0 %v626
          %649 = vmatprep.subr.bf16.mxu0 0
          %650 = vmatpush1.bf16.msra.mxu0 %v625
          %651 = vmatprep.subr.bf16.mxu0 0
          %652 = vmatpush1.bf16.msra.mxu0 %v624
          %653 = vmatprep.subr.bf16.mxu0 0
          %654 = vmatpush1.bf16.msra.mxu0 %v623
          %655 = vmatprep.subr.bf16.mxu0 0
          %656 = vmatpush2.bf16.msra.mxu0 0
          %657 = vmatprep.subr.bf16.mxu0 0
          %658 = vmatpush2.bf16.msra.mxu0 0
          %659 = vmatprep.subr.bf16.mxu0 0
          %660 = vmatpush2.bf16.msra.mxu0 0
          %661 = vmatprep.subr.bf16.mxu0 0
          %662 = vmatpush2.bf16.msra.mxu0 0
          %663 = vmatprep.subr.bf16.mxu0 0
          %664 = vmatpush2.bf16.msra.mxu0 0
          %665 = vmatprep.subr.bf16.mxu0 0
          %666 = vmatpush2.bf16.msra.mxu0 0
          %667 = vmatprep.subr.bf16.mxu0 0
          %668 = vmatpush2.bf16.msra.mxu0 0
          %669 = vmatprep.subr.bf16.mxu0 0
          %670 = vmatpush2.bf16.msra.mxu0 0
          %671 = vmatprep.mubr.bf16.mxu0 0
          %672 = vmatmul.mubr.bf16.gmra.mxu0 %v566
          %v673 = vpop.f32.mrf.mxu0
          %v674 = vadd.f32 %v589, %v673
          %v675 = vpop.f32.mrf.mxu0
          %v676 = vpop.f32.mrf.mxu0
          %v677 = vpop.f32.mrf.mxu0
          %678 = vdwg.mxu0
          %v679 = vld [vmem:[%s501] sm:$0xff]
          %v680 = vadd.f32 %v679, %v674
          %681 = vst [vmem:[#allocation4] sm:$0xff] %v680
          %v682 = vld [vmem:[%s4] sm:$0x1]
          %v683 = vld [vmem:[%s5] sm:$0x1]
          %684 = vadd.xlane.f32.xlu0 %v680
          %v685 = vpop.xlane.xlu0 %684
          %v686 = vrcp.pop 128.0
          %v687 = vmul.f32 %v685, %v686
          %v688 = vsub.f32 %v680, %v687
          %v689 = vmul.f32 %v688, %v688
          %690 = vadd.xlane.f32.xlu0 %v689
          %v691 = vpop.xlane.xlu0 %690
          %v692 = vmul.f32 %v691, %v686
          %v693 = vadd.f32 %v692, 1e-12
          %v694 = vrsqrt.pop %v693
          %v695 = vmul.f32 %v688, %v694
          %v697 = vlaneseq
          %v698 = vshrl.u32 %v697, 7
          %v699 = vsub.s32 0, %v698
          %v700 = vrot.slane %v682, %v699
          %v702 = vmul.f32 %v695, %v700
          %v704 = vlaneseq
          %v705 = vshrl.u32 %v704, 7
          %v706 = vsub.s32 0, %v705
          %v707 = vrot.slane %v683, %v706
          %v709 = vadd.f32 %v702, %v707
          %v710 = vpack.c.bf16 %v709, %v709
          %711 = vst [vmem:[#allocation3] sm:$0xf] %v710
          %712 = vst [vmem:[#allocation2] sm:$0xff] 0.0
        $region80: #{esm2_forward.9} parent=59 // pred_fallthru
          _
        %v713 = vld [vmem:[#allocation3] sm:$0xf]
        %v714 = vld [vmem:[%s514] sm:$0xff]
        %v715 = vld [vmem:[%s514 + $0x8] sm:$0xff]
        %v716 = vld [vmem:[%s514 + $0x10] sm:$0xff]
        %v717 = vld [vmem:[%s514 + $0x18] sm:$0xff]
        %v718 = vld [vmem:[%s514 + $0x20] sm:$0xff]
        %v719 = vld [vmem:[%s514 + $0x28] sm:$0xff]
        %v720 = vld [vmem:[%s514 + $0x30] sm:$0xff]
        %v721 = vld [vmem:[%s514 + $0x38] sm:$0xff]
        %v722 = vld [vmem:[%s514 + $0x40] sm:$0xff]
        %v723 = vld [vmem:[%s514 + $0x48] sm:$0xff]
        %v724 = vld [vmem:[%s514 + $0x50] sm:$0xff]
        %v725 = vld [vmem:[%s514 + $0x58] sm:$0xff]
        %v726 = vld [vmem:[%s514 + $0x60] sm:$0xff]
        %v727 = vld [vmem:[%s514 + $0x68] sm:$0xff]
        %v728 = vld [vmem:[%s514 + $0x70] sm:$0xff]
        %v729 = vld [vmem:[%s514 + $0x78] sm:$0xff]
        %v730 = vld [vmem:[%s514 + $0x80] sm:$0xff]
        %v731 = vld [vmem:[%s514 + $0x88] sm:$0xff]
        %v732 = vld [vmem:[%s514 + $0x90] sm:$0xff]
        %v733 = vld [vmem:[%s514 + $0x98] sm:$0xff]
        %v734 = vld [vmem:[%s514 + $0xa0] sm:$0xff]
        %v735 = vld [vmem:[%s514 + $0xa8] sm:$0xff]
        %v736 = vld [vmem:[%s514 + $0xb0] sm:$0xff]
        %v737 = vld [vmem:[%s514 + $0xb8] sm:$0xff]
        %v738 = vld [vmem:[%s514 + $0xc0] sm:$0xff]
        %v739 = vld [vmem:[%s514 + $0xc8] sm:$0xff]
        %v740 = vld [vmem:[%s514 + $0xd0] sm:$0xff]
        %v741 = vld [vmem:[%s514 + $0xd8] sm:$0xff]
        %v742 = vld [vmem:[%s514 + $0xe0] sm:$0xff]
        %v743 = vld [vmem:[%s514 + $0xe8] sm:$0xff]
        %v744 = vld [vmem:[%s514 + $0xf0] sm:$0xff]
        %v745 = vld [vmem:[%s514 + $0xf8] sm:$0xff]
        %v746 = vld [vmem:[#allocation9] sm:$0xf]
        %v748 = vlaneseq
        %v749 = vshrl.u32 %v748, 7
        %v750 = vsub.s32 0, %v749
        %v751 = vrot.slane %v746, %v750
        %v752 = vlaneseq
        %v753 = vshrl.u32 %v752, 7
        %v754 = vsub.s32 1, %v753
        %v755 = vrot.slane %v746, %v754
        %v756 = vlaneseq
        %v757 = vshrl.u32 %v756, 7
        %v758 = vsub.s32 2, %v757
        %v759 = vrot.slane %v746, %v758
        %v760 = vlaneseq
        %v761 = vshrl.u32 %v760, 7
        %v762 = vsub.s32 3, %v761
        %v763 = vrot.slane %v746, %v762
        %v800 = vunpack.c.l.b16 %v714
        %v801 = vunpack.c.h.b16 %v714
        %v802 = vunpack.c.l.b16 %v715
        %v803 = vunpack.c.h.b16 %v715
        %v804 = vunpack.c.l.b16 %v716
        %v805 = vunpack.c.h.b16 %v716
        %v806 = vunpack.c.l.b16 %v717
        %v807 = vunpack.c.h.b16 %v717
        %v808 = vunpack.c.l.b16 %v718
        %v809 = vunpack.c.h.b16 %v718
        %v810 = vunpack.c.l.b16 %v719
        %v811 = vunpack.c.h.b16 %v719
        %v812 = vunpack.c.l.b16 %v720
        %v813 = vunpack.c.h.b16 %v720
        %v814 = vunpack.c.l.b16 %v721
        %v815 = vunpack.c.h.b16 %v721
        %v816 = vunpack.c.l.b16 %v722
        %v817 = vunpack.c.h.b16 %v722
        %v818 = vunpack.c.l.b16 %v723
        %v819 = vunpack.c.h.b16 %v723
        %v820 = vunpack.c.l.b16 %v724
        %v821 = vunpack.c.h.b16 %v724
        %v822 = vunpack.c.l.b16 %v725
        %v823 = vunpack.c.h.b16 %v725
        %v824 = vunpack.c.l.b16 %v726
        %v825 = vunpack.c.h.b16 %v726
        %v826 = vunpack.c.l.b16 %v727
        %v827 = vunpack.c.h.b16 %v727
        %v828 = vunpack.c.l.b16 %v728
        %v829 = vunpack.c.h.b16 %v728
        %v830 = vunpack.c.l.b16 %v729
        %v831 = vunpack.c.h.b16 %v729
        %v832 = vunpack.c.l.b16 %v730
        %v833 = vunpack.c.h.b16 %v730
        %v834 = vunpack.c.l.b16 %v731
        %v835 = vunpack.c.h.b16 %v731
        %v836 = vunpack.c.l.b16 %v732
        %v837 = vunpack.c.h.b16 %v732
        %v838 = vunpack.c.l.b16 %v733
        %v839 = vunpack.c.h.b16 %v733
        %v840 = vunpack.c.l.b16 %v734
        %v841 = vunpack.c.h.b16 %v734
        %v842 = vunpack.c.l.b16 %v735
        %v843 = vunpack.c.h.b16 %v735
        %v844 = vunpack.c.l.b16 %v736
        %v845 = vunpack.c.h.b16 %v736
        %v846 = vunpack.c.l.b16 %v737
        %v847 = vunpack.c.h.b16 %v737
        %v848 = vunpack.c.l.b16 %v738
        %v849 = vunpack.c.h.b16 %v738
        %v850 = vunpack.c.l.b16 %v739
        %v851 = vunpack.c.h.b16 %v739
        %v852 = vunpack.c.l.b16 %v740
        %v853 = vunpack.c.h.b16 %v740
        %v854 = vunpack.c.l.b16 %v741
        %v855 = vunpack.c.h.b16 %v741
        %v856 = vunpack.c.l.b16 %v742
        %v857 = vunpack.c.h.b16 %v742
        %v858 = vunpack.c.l.b16 %v743
        %v859 = vunpack.c.h.b16 %v743
        %v860 = vunpack.c.l.b16 %v744
        %v861 = vunpack.c.h.b16 %v744
        %v862 = vunpack.c.l.b16 %v745
        %v863 = vunpack.c.h.b16 %v745
        %v864 = vpack.c.b16 %v804, %v800
        %v865 = vpack.c.b16 %v805, %v801
        %v866 = vpack.c.b16 %v806, %v802
        %v867 = vpack.c.b16 %v807, %v803
        %v868 = vpack.c.b16 %v812, %v808
        %v869 = vpack.c.b16 %v813, %v809
        %v870 = vpack.c.b16 %v814, %v810
        %v871 = vpack.c.b16 %v815, %v811
        %v872 = vpack.c.b16 %v820, %v816
        %v873 = vpack.c.b16 %v821, %v817
        %v874 = vpack.c.b16 %v822, %v818
        %v875 = vpack.c.b16 %v823, %v819
        %v876 = vpack.c.b16 %v828, %v824
        %v877 = vpack.c.b16 %v829, %v825
        %v878 = vpack.c.b16 %v830, %v826
        %v879 = vpack.c.b16 %v831, %v827
        %v880 = vpack.c.b16 %v836, %v832
        %v881 = vpack.c.b16 %v837, %v833
        %v882 = vpack.c.b16 %v838, %v834
        %v883 = vpack.c.b16 %v839, %v835
        %v884 = vpack.c.b16 %v844, %v840
        %v885 = vpack.c.b16 %v845, %v841
        %v886 = vpack.c.b16 %v846, %v842
        %v887 = vpack.c.b16 %v847, %v843
        %v888 = vpack.c.b16 %v852, %v848
        %v889 = vpack.c.b16 %v853, %v849
        %v890 = vpack.c.b16 %v854, %v850
        %v891 = vpack.c.b16 %v855, %v851
        %v892 = vpack.c.b16 %v860, %v856
        %v893 = vpack.c.b16 %v861, %v857
        %v894 = vpack.c.b16 %v862, %v858
        %v895 = vpack.c.b16 %v863, %v859
        %928 = vmatprep.subr.bf16.mxu0 %v893
        %929 = vmatpush1.bf16.msra.mxu0 %v892
        %930 = vmatprep.subr.bf16.mxu0 %v889
        %931 = vmatpush1.bf16.msra.mxu0 %v888
        %932 = vmatprep.subr.bf16.mxu0 %v885
        %933 = vmatpush1.bf16.msra.mxu0 %v884
        %934 = vmatprep.subr.bf16.mxu0 %v881
        %935 = vmatpush1.bf16.msra.mxu0 %v880
        %936 = vmatprep.subr.bf16.mxu0 %v877
        %937 = vmatpush1.bf16.msra.mxu0 %v876
        %938 = vmatprep.subr.bf16.mxu0 %v873
        %939 = vmatpush1.bf16.msra.mxu0 %v872
        %940 = vmatprep.subr.bf16.mxu0 %v869
        %941 = vmatpush1.bf16.msra.mxu0 %v868
        %942 = vmatprep.subr.bf16.mxu0 %v865
        %943 = vmatpush1.bf16.msra.mxu0 %v864
        %944 = vmatprep.subr.bf16.mxu0 0
        %945 = vmatpush2.bf16.msra.mxu0 0
        %946 = vmatprep.subr.bf16.mxu0 0
        %947 = vmatpush2.bf16.msra.mxu0 0
        %948 = vmatprep.subr.bf16.mxu0 0
        %949 = vmatpush2.bf16.msra.mxu0 0
        %950 = vmatprep.subr.bf16.mxu0 0
        %951 = vmatpush2.bf16.msra.mxu0 0
        %952 = vmatprep.subr.bf16.mxu0 0
        %953 = vmatpush2.bf16.msra.mxu0 0
        %954 = vmatprep.subr.bf16.mxu0 0
        %955 = vmatpush2.bf16.msra.mxu0 0
        %956 = vmatprep.subr.bf16.mxu0 0
        %957 = vmatpush2.bf16.msra.mxu0 0
        %958 = vmatprep.subr.bf16.mxu0 0
        %959 = vmatpush2.bf16.msra.mxu0 0
        %960 = vmatprep.mubr.bf16.mxu0 0
        %961 = vmatmul.mubr.bf16.gmra.mxu0 %v713
        %v962 = vpop.f32.mrf.mxu0
        %v963 = vadd.f32 %v751, %v962
        %v964 = vpop.f32.mrf.mxu0
        %v965 = vadd.f32 %v755, %v964
        %v966 = vpop.f32.mrf.mxu0
        %v967 = vpop.f32.mrf.mxu0
        %968 = vdwg.mxu0
        %969 = vmatprep.subr.bf16.mxu0 %v895
        %970 = vmatpush1.bf16.msra.mxu0 %v894
        %971 = vmatprep.subr.bf16.mxu0 %v891
        %972 = vmatpush1.bf16.msra.mxu0 %v890
        %973 = vmatprep.subr.bf16.mxu0 %v887
        %974 = vmatpush1.bf16.msra.mxu0 %v886
        %975 = vmatprep.subr.bf16.mxu0 %v883
        %976 = vmatpush1.bf16.msra.mxu0 %v882
        %977 = vmatprep.subr.bf16.mxu0 %v879
        %978 = vmatpush1.bf16.msra.mxu0 %v878
        %979 = vmatprep.subr.bf16.mxu0 %v875
        %980 = vmatpush1.bf16.msra.mxu0 %v874
        %981 = vmatprep.subr.bf16.mxu0 %v871
        %982 = vmatpush1.bf16.msra.mxu0 %v870
        %983 = vmatprep.subr.bf16.mxu0 %v867
        %984 = vmatpush1.bf16.msra.mxu0 %v866
        %985 = vmatprep.subr.bf16.mxu0 0
        %986 = vmatpush2.bf16.msra.mxu0 0
        %987 = vmatprep.subr.bf16.mxu0 0
        %988 = vmatpush2.bf16.msra.mxu0 0
        %989 = vmatprep.subr.bf16.mxu0 0
        %990 = vmatpush2.bf16.msra.mxu0 0
        %991 = vmatprep.subr.bf16.mxu0 0
        %992 = vmatpush2.bf16.msra.mxu0 0
        %993 = vmatprep.subr.bf16.mxu0 0
        %994 = vmatpush2.bf16.msra.mxu0 0
        %995 = vmatprep.subr.bf16.mxu0 0
        %996 = vmatpush2.bf16.msra.mxu0 0
        %997 = vmatprep.subr.bf16.mxu0 0
        %998 = vmatpush2.bf16.msra.mxu0 0
        %999 = vmatprep.subr.bf16.mxu0 0
        %1000 = vmatpush2.bf16.msra.mxu0 0
        %1001 = vmatprep.mubr.bf16.mxu0 0
        %1002 = vmatmul.mubr.bf16.gmra.mxu0 %v713
        %v1003 = vpop.f32.mrf.mxu0
        %v1004 = vadd.f32 %v759, %v1003
        %v1005 = vpop.f32.mrf.mxu0
        %v1006 = vadd.f32 %v763, %v1005
        %v1007 = vpop.f32.mrf.mxu0
        %v1008 = vpop.f32.mrf.mxu0
        %1009 = vdwg.mxu0
        %v1010 = vmul.f32 %v963, 0.5
        %v1011 = vmul.f32 %v965, 0.5
        %v1012 = vmul.f32 %v1004, 0.5
        %v1013 = vmul.f32 %v1006, 0.5
        %v1014 = vrcp.pop 1.4142135
        %v1015 = vmul.f32 %v963, %v1014
        %v1016 = vmul.f32 %v965, %v1014
        %v1017 = vmul.f32 %v1004, %v1014
        %v1018 = vmul.f32 %v1006, %v1014
        %vm1019 = vcmp.ge.f32.partialorder %v1015, 0.0
        %vm1020 = vcmp.ge.f32.partialorder %v1016, 0.0
        %vm1021 = vcmp.ge.f32.partialorder %v1017, 0.0
        %vm1022 = vcmp.ge.f32.partialorder %v1018, 0.0
        %v1023 = vsel %vm1019, 1.0, -1.0
        %v1024 = vsel %vm1020, 1.0, -1.0
        %v1025 = vsel %vm1021, 1.0, -1.0
        %v1026 = vsel %vm1022, 1.0, -1.0
        %v1027 = vand.u32 2147483647, %v1015
        %v1028 = vand.u32 2147483647, %v1016
        %v1029 = vand.u32 2147483647, %v1017
        %v1030 = vand.u32 2147483647, %v1018
        %v1031 = vmul.f32 %v1027, 0.3275911
        %v1032 = vmul.f32 %v1028, 0.3275911
        %v1033 = vmul.f32 %v1029, 0.3275911
        %v1034 = vmul.f32 %v1030, 0.3275911
        %v1035 = vadd.f32 %v1031, 1.0
        %v1036 = vadd.f32 %v1032, 1.0
        %v1037 = vadd.f32 %v1033, 1.0
        %v1038 = vadd.f32 %v1034, 1.0
        %v1039 = vrcp.pop %v1035
        %v1040 = vrcp.pop %v1036
        %v1041 = vrcp.pop %v1037
        %v1042 = vrcp.pop %v1038
        %v1043 = vmul.f32 %v1039, 1.0614054
        %v1044 = vmul.f32 %v1040, 1.0614054
        %v1045 = vmul.f32 %v1041, 1.0614054
        %v1046 = vmul.f32 %v1042, 1.0614054
        %v1047 = vadd.f32 %v1043, -1.4531521
        %v1048 = vadd.f32 %v1044, -1.4531521
        %v1049 = vadd.f32 %v1045, -1.4531521
        %v1050 = vadd.f32 %v1046, -1.4531521
        %v1051 = vmul.f32 %v1047, %v1039
        %v1052 = vmul.f32 %v1048, %v1040
        %v1053 = vmul.f32 %v1049, %v1041
        %v1054 = vmul.f32 %v1050, %v1042
        %v1055 = vadd.f32 %v1051, 1.4214138
        %v1056 = vadd.f32 %v1052, 1.4214138
        %v1057 = vadd.f32 %v1053, 1.4214138
        %v1058 = vadd.f32 %v1054, 1.4214138
        %v1059 = vmul.f32 %v1055, %v1039
        %v1060 = vmul.f32 %v1056, %v1040
        %v1061 = vmul.f32 %v1057, %v1041
        %v1062 = vmul.f32 %v1058, %v1042
        %v1063 = vadd.f32 %v1059, -0.28449672
        %v1064 = vadd.f32 %v1060, -0.28449672
        %v1065 = vadd.f32 %v1061, -0.28449672
        %v1066 = vadd.f32 %v1062, -0.28449672
        %v1067 = vmul.f32 %v1063, %v1039
        %v1068 = vmul.f32 %v1064, %v1040
        %v1069 = vmul.f32 %v1065, %v1041
        %v1070 = vmul.f32 %v1066, %v1042
        %v1071 = vadd.f32 %v1067, 0.2548296
        %v1072 = vadd.f32 %v1068, 0.2548296
        %v1073 = vadd.f32 %v1069, 0.2548296
        %v1074 = vadd.f32 %v1070, 0.2548296
        %v1075 = vmul.f32 %v1071, %v1039
        %v1076 = vmul.f32 %v1072, %v1040
        %v1077 = vmul.f32 %v1073, %v1041
        %v1078 = vmul.f32 %v1074, %v1042
        %v1079 = vsub.f32 0.0, %v1027
        %v1080 = vsub.f32 0.0, %v1028
        %v1081 = vsub.f32 0.0, %v1029
        %v1082 = vsub.f32 0.0, %v1030
        %v1083 = vmul.f32 %v1079, %v1027
        %v1084 = vmul.f32 %v1080, %v1028
        %v1085 = vmul.f32 %v1081, %v1029
        %v1086 = vmul.f32 %v1082, %v1030
        %v1087 = vmul.f32 %v1083, 1.442695
        %v1088 = vpow.pop %v1087
        %v1089 = vmul.f32 %v1084, 1.442695
        %v1090 = vpow.pop %v1089
        %v1091 = vmul.f32 %v1085, 1.442695
        %v1092 = vpow.pop %v1091
        %v1093 = vmul.f32 %v1086, 1.442695
        %v1094 = vpow.pop %v1093
        %v1095 = vmul.f32 %v1075, %v1088
        %v1096 = vmul.f32 %v1076, %v1090
        %v1097 = vmul.f32 %v1077, %v1092
        %v1098 = vmul.f32 %v1078, %v1094
        %v1099 = vsub.f32 1.0, %v1095
        %v1100 = vsub.f32 1.0, %v1096
        %v1101 = vsub.f32 1.0, %v1097
        %v1102 = vsub.f32 1.0, %v1098
        %v1103 = vmul.f32 %v1023, %v1099
        %v1104 = vmul.f32 %v1024, %v1100
        %v1105 = vmul.f32 %v1025, %v1101
        %v1106 = vmul.f32 %v1026, %v1102
        %v1107 = vadd.f32 %v1103, 1.0
        %v1108 = vadd.f32 %v1104, 1.0
        %v1109 = vadd.f32 %v1105, 1.0
        %v1110 = vadd.f32 %v1106, 1.0
        %v1111 = vmul.f32 %v1010, %v1107
        %v1112 = vmul.f32 %v1011, %v1108
        %v1113 = vmul.f32 %v1012, %v1109
        %v1114 = vmul.f32 %v1013, %v1110
        %v1115 = vpack.c.bf16 %v1111, %v1111
        %v1116 = vpack.c.bf16 %v1112, %v1112
        %v1117 = vpack.c.bf16 %v1113, %v1113
        %v1118 = vpack.c.bf16 %v1114, %v1114
        %v1119 = vld [vmem:[#allocation2] sm:$0xff]
        %v1120 = vld [vmem:[%s521] sm:$0xf]
        %v1121 = vld [vmem:[%s521 + $0x4] sm:$0xf]
        %v1122 = vld [vmem:[%s521 + $0x8] sm:$0xf]
        %v1123 = vld [vmem:[%s521 + $0xc] sm:$0xf]
        %v1124 = vld [vmem:[%s521 + $0x10] sm:$0xf]
        %v1125 = vld [vmem:[%s521 + $0x14] sm:$0xf]
        %v1126 = vld [vmem:[%s521 + $0x18] sm:$0xf]
        %v1127 = vld [vmem:[%s521 + $0x1c] sm:$0xf]
        %v1128 = vld [vmem:[%s521 + $0x20] sm:$0xf]
        %v1129 = vld [vmem:[%s521 + $0x24] sm:$0xf]
        %v1130 = vld [vmem:[%s521 + $0x28] sm:$0xf]
        %v1131 = vld [vmem:[%s521 + $0x2c] sm:$0xf]
        %v1132 = vld [vmem:[%s521 + $0x30] sm:$0xf]
        %v1133 = vld [vmem:[%s521 + $0x34] sm:$0xf]
        %v1134 = vld [vmem:[%s521 + $0x38] sm:$0xf]
        %v1135 = vld [vmem:[%s521 + $0x3c] sm:$0xf]
        %v1136 = vld [vmem:[%s521 + $0x40] sm:$0xf]
        %v1137 = vld [vmem:[%s521 + $0x44] sm:$0xf]
        %v1138 = vld [vmem:[%s521 + $0x48] sm:$0xf]
        %v1139 = vld [vmem:[%s521 + $0x4c] sm:$0xf]
        %v1140 = vld [vmem:[%s521 + $0x50] sm:$0xf]
        %v1141 = vld [vmem:[%s521 + $0x54] sm:$0xf]
        %v1142 = vld [vmem:[%s521 + $0x58] sm:$0xf]
        %v1143 = vld [vmem:[%s521 + $0x5c] sm:$0xf]
        %v1144 = vld [vmem:[%s521 + $0x60] sm:$0xf]
        %v1145 = vld [vmem:[%s521 + $0x64] sm:$0xf]
        %v1146 = vld [vmem:[%s521 + $0x68] sm:$0xf]
        %v1147 = vld [vmem:[%s521 + $0x6c] sm:$0xf]
        %v1148 = vld [vmem:[%s521 + $0x70] sm:$0xf]
        %v1149 = vld [vmem:[%s521 + $0x74] sm:$0xf]
        %v1150 = vld [vmem:[%s521 + $0x78] sm:$0xf]
        %v1151 = vld [vmem:[%s521 + $0x7c] sm:$0xf]
        %v1152 = vld [vmem:[%s521 + $0x80] sm:$0xf]
        %v1153 = vld [vmem:[%s521 + $0x84] sm:$0xf]
        %v1154 = vld [vmem:[%s521 + $0x88] sm:$0xf]
        %v1155 = vld [vmem:[%s521 + $0x8c] sm:$0xf]
        %v1156 = vld [vmem:[%s521 + $0x90] sm:$0xf]
        %v1157 = vld [vmem:[%s521 + $0x94] sm:$0xf]
        %v1158 = vld [vmem:[%s521 + $0x98] sm:$0xf]
        %v1159 = vld [vmem:[%s521 + $0x9c] sm:$0xf]
        %v1160 = vld [vmem:[%s521 + $0xa0] sm:$0xf]
        %v1161 = vld [vmem:[%s521 + $0xa4] sm:$0xf]
        %v1162 = vld [vmem:[%s521 + $0xa8] sm:$0xf]
        %v1163 = vld [vmem:[%s521 + $0xac] sm:$0xf]
        %v1164 = vld [vmem:[%s521 + $0xb0] sm:$0xf]
        %v1165 = vld [vmem:[%s521 + $0xb4] sm:$0xf]
        %v1166 = vld [vmem:[%s521 + $0xb8] sm:$0xf]
        %v1167 = vld [vmem:[%s521 + $0xbc] sm:$0xf]
        %v1168 = vld [vmem:[%s521 + $0xc0] sm:$0xf]
        %v1169 = vld [vmem:[%s521 + $0xc4] sm:$0xf]
        %v1170 = vld [vmem:[%s521 + $0xc8] sm:$0xf]
        %v1171 = vld [vmem:[%s521 + $0xcc] sm:$0xf]
        %v1172 = vld [vmem:[%s521 + $0xd0] sm:$0xf]
        %v1173 = vld [vmem:[%s521 + $0xd4] sm:$0xf]
        %v1174 = vld [vmem:[%s521 + $0xd8] sm:$0xf]
        %v1175 = vld [vmem:[%s521 + $0xdc] sm:$0xf]
        %v1176 = vld [vmem:[%s521 + $0xe0] sm:$0xf]
        %v1177 = vld [vmem:[%s521 + $0xe4] sm:$0xf]
        %v1178 = vld [vmem:[%s521 + $0xe8] sm:$0xf]
        %v1179 = vld [vmem:[%s521 + $0xec] sm:$0xf]
        %v1180 = vld [vmem:[%s521 + $0xf0] sm:$0xf]
        %v1181 = vld [vmem:[%s521 + $0xf4] sm:$0xf]
        %v1182 = vld [vmem:[%s521 + $0xf8] sm:$0xf]
        %v1183 = vld [vmem:[%s521 + $0xfc] sm:$0xf]
        %v1248 = vunpack.c.l.b16 %v1120
        %v1249 = vunpack.c.l.b16 %v1121
        %v1250 = vunpack.c.l.b16 %v1122
        %v1251 = vunpack.c.l.b16 %v1123
        %v1252 = vunpack.c.l.b16 %v1124
        %v1253 = vunpack.c.l.b16 %v1125
        %v1254 = vunpack.c.l.b16 %v1126
        %v1255 = vunpack.c.l.b16 %v1127
        %v1256 = vunpack.c.l.b16 %v1128
        %v1257 = vunpack.c.l.b16 %v1129
        %v1258 = vunpack.c.l.b16 %v1130
        %v1259 = vunpack.c.l.b16 %v1131
        %v1260 = vunpack.c.l.b16 %v1132
        %v1261 = vunpack.c.l.b16 %v1133
        %v1262 = vunpack.c.l.b16 %v1134
        %v1263 = vunpack.c.l.b16 %v1135
        %v1264 = vunpack.c.l.b16 %v1136
        %v1265 = vunpack.c.l.b16 %v1137
        %v1266 = vunpack.c.l.b16 %v1138
        %v1267 = vunpack.c.l.b16 %v1139
        %v1268 = vunpack.c.l.b16 %v1140
        %v1269 = vunpack.c.l.b16 %v1141
        %v1270 = vunpack.c.l.b16 %v1142
        %v1271 = vunpack.c.l.b16 %v1143
        %v1272 = vunpack.c.l.b16 %v1144
        %v1273 = vunpack.c.l.b16 %v1145
        %v1274 = vunpack.c.l.b16 %v1146
        %v1275 = vunpack.c.l.b16 %v1147
        %v1276 = vunpack.c.l.b16 %v1148
        %v1277 = vunpack.c.l.b16 %v1149
        %v1278 = vunpack.c.l.b16 %v1150
        %v1279 = vunpack.c.l.b16 %v1151
        %v1280 = vunpack.c.l.b16 %v1152
        %v1281 = vunpack.c.l.b16 %v1153
        %v1282 = vunpack.c.l.b16 %v1154
        %v1283 = vunpack.c.l.b16 %v1155
        %v1284 = vunpack.c.l.b16 %v1156
        %v1285 = vunpack.c.l.b16 %v1157
        %v1286 = vunpack.c.l.b16 %v1158
        %v1287 = vunpack.c.l.b16 %v1159
        %v1288 = vunpack.c.l.b16 %v1160
        %v1289 = vunpack.c.l.b16 %v1161
        %v1290 = vunpack.c.l.b16 %v1162
        %v1291 = vunpack.c.l.b16 %v1163
        %v1292 = vunpack.c.l.b16 %v1164
        %v1293 = vunpack.c.l.b16 %v1165
        %v1294 = vunpack.c.l.b16 %v1166
        %v1295 = vunpack.c.l.b16 %v1167
        %v1296 = vunpack.c.l.b16 %v1168
        %v1297 = vunpack.c.l.b16 %v1169
        %v1298 = vunpack.c.l.b16 %v1170
        %v1299 = vunpack.c.l.b16 %v1171
        %v1300 = vunpack.c.l.b16 %v1172
        %v1301 = vunpack.c.l.b16 %v1173
        %v1302 = vunpack.c.l.b16 %v1174
        %v1303 = vunpack.c.l.b16 %v1175
        %v1304 = vunpack.c.l.b16 %v1176
        %v1305 = vunpack.c.l.b16 %v1177
        %v1306 = vunpack.c.l.b16 %v1178
        %v1307 = vunpack.c.l.b16 %v1179
        %v1308 = vunpack.c.l.b16 %v1180
        %v1309 = vunpack.c.l.b16 %v1181
        %v1310 = vunpack.c.l.b16 %v1182
        %v1311 = vunpack.c.l.b16 %v1183
        %v1312 = vpack.c.b16 %v1249, %v1248
        %v1313 = vpack.c.b16 %v1251, %v1250
        %v1314 = vpack.c.b16 %v1253, %v1252
        %v1315 = vpack.c.b16 %v1255, %v1254
        %v1316 = vpack.c.b16 %v1257, %v1256
        %v1317 = vpack.c.b16 %v1259, %v1258
        %v1318 = vpack.c.b16 %v1261, %v1260
        %v1319 = vpack.c.b16 %v1263, %v1262
        %v1320 = vpack.c.b16 %v1265, %v1264
        %v1321 = vpack.c.b16 %v1267, %v1266
        %v1322 = vpack.c.b16 %v1269, %v1268
        %v1323 = vpack.c.b16 %v1271, %v1270
        %v1324 = vpack.c.b16 %v1273, %v1272
        %v1325 = vpack.c.b16 %v1275, %v1274
        %v1326 = vpack.c.b16 %v1277, %v1276
        %v1327 = vpack.c.b16 %v1279, %v1278
        %v1328 = vpack.c.b16 %v1281, %v1280
        %v1329 = vpack.c.b16 %v1283, %v1282
        %v1330 = vpack.c.b16 %v1285, %v1284
        %v1331 = vpack.c.b16 %v1287, %v1286
        %v1332 = vpack.c.b16 %v1289, %v1288
        %v1333 = vpack.c.b16 %v1291, %v1290
        %v1334 = vpack.c.b16 %v1293, %v1292
        %v1335 = vpack.c.b16 %v1295, %v1294
        %v1336 = vpack.c.b16 %v1297, %v1296
        %v1337 = vpack.c.b16 %v1299, %v1298
        %v1338 = vpack.c.b16 %v1301, %v1300
        %v1339 = vpack.c.b16 %v1303, %v1302
        %v1340 = vpack.c.b16 %v1305, %v1304
        %v1341 = vpack.c.b16 %v1307, %v1306
        %v1342 = vpack.c.b16 %v1309, %v1308
        %v1343 = vpack.c.b16 %v1311, %v1310
        %1376 = vmatprep.subr.bf16.mxu0 0
        %1377 = vmatpush1.bf16.msra.mxu0 %v1319
        %1378 = vmatprep.subr.bf16.mxu0 0
        %1379 = vmatpush1.bf16.msra.mxu0 %v1318
        %1380 = vmatprep.subr.bf16.mxu0 0
        %1381 = vmatpush1.bf16.msra.mxu0 %v1317
        %1382 = vmatprep.subr.bf16.mxu0 0
        %1383 = vmatpush1.bf16.msra.mxu0 %v1316
        %1384 = vmatprep.subr.bf16.mxu0 0
        %1385 = vmatpush1.bf16.msra.mxu0 %v1315
        %1386 = vmatprep.subr.bf16.mxu0 0
        %1387 = vmatpush1.bf16.msra.mxu0 %v1314
        %1388 = vmatprep.subr.bf16.mxu0 0
        %1389 = vmatpush1.bf16.msra.mxu0 %v1313
        %1390 = vmatprep.subr.bf16.mxu0 0
        %1391 = vmatpush1.bf16.msra.mxu0 %v1312
        %1392 = vmatprep.subr.bf16.mxu0 0
        %1393 = vmatpush2.bf16.msra.mxu0 %v1327
        %1394 = vmatprep.subr.bf16.mxu0 0
        %1395 = vmatpush2.bf16.msra.mxu0 %v1326
        %1396 = vmatprep.subr.bf16.mxu0 0
        %1397 = vmatpush2.bf16.msra.mxu0 %v1325
        %1398 = vmatprep.subr.bf16.mxu0 0
        %1399 = vmatpush2.bf16.msra.mxu0 %v1324
        %1400 = vmatprep.subr.bf16.mxu0 0
        %1401 = vmatpush2.bf16.msra.mxu0 %v1323
        %1402 = vmatprep.subr.bf16.mxu0 0
        %1403 = vmatpush2.bf16.msra.mxu0 %v1322
        %1404 = vmatprep.subr.bf16.mxu0 0
        %1405 = vmatpush2.bf16.msra.mxu0 %v1321
        %1406 = vmatprep.subr.bf16.mxu0 0
        %1407 = vmatpush2.bf16.msra.mxu0 %v1320
        %1408 = vmatprep.mubr.bf16.mxu0 %v1116
        %1409 = vmatmul.mubr.bf16.gmra.mxu0 %v1115
        %v1410 = vpop.f32.mrf.mxu0
        %v1411 = vadd.f32 0.0, %v1410
        %v1412 = vpop.f32.mrf.mxu0
        %v1413 = vpop.f32.mrf.mxu0
        %v1414 = vpop.f32.mrf.mxu0
        %1415 = vdwg.mxu0
        %1416 = vmatprep.subr.bf16.mxu0 0
        %1417 = vmatpush1.bf16.msra.mxu0 %v1335
        %1418 = vmatprep.subr.bf16.mxu0 0
        %1419 = vmatpush1.bf16.msra.mxu0 %v1334
        %1420 = vmatprep.subr.bf16.mxu0 0
        %1421 = vmatpush1.bf16.msra.mxu0 %v1333
        %1422 = vmatprep.subr.bf16.mxu0 0
        %1423 = vmatpush1.bf16.msra.mxu0 %v1332
        %1424 = vmatprep.subr.bf16.mxu0 0
        %1425 = vmatpush1.bf16.msra.mxu0 %v1331
        %1426 = vmatprep.subr.bf16.mxu0 0
        %1427 = vmatpush1.bf16.msra.mxu0 %v1330
        %1428 = vmatprep.subr.bf16.mxu0 0
        %1429 = vmatpush1.bf16.msra.mxu0 %v1329
        %1430 = vmatprep.subr.bf16.mxu0 0
        %1431 = vmatpush1.bf16.msra.mxu0 %v1328
        %1432 = vmatprep.subr.bf16.mxu0 0
        %1433 = vmatpush2.bf16.msra.mxu0 %v1343
        %1434 = vmatprep.subr.bf16.mxu0 0
        %1435 = vmatpush2.bf16.msra.mxu0 %v1342
        %1436 = vmatprep.subr.bf16.mxu0 0
        %1437 = vmatpush2.bf16.msra.mxu0 %v1341
        %1438 = vmatprep.subr.bf16.mxu0 0
        %1439 = vmatpush2.bf16.msra.mxu0 %v1340
        %1440 = vmatprep.subr.bf16.mxu0 0
        %1441 = vmatpush2.bf16.msra.mxu0 %v1339
        %1442 = vmatprep.subr.bf16.mxu0 0
        %1443 = vmatpush2.bf16.msra.mxu0 %v1338
        %1444 = vmatprep.subr.bf16.mxu0 0
        %1445 = vmatpush2.bf16.msra.mxu0 %v1337
        %1446 = vmatprep.subr.bf16.mxu0 0
        %1447 = vmatpush2.bf16.msra.mxu0 %v1336
        %1448 = vmatprep.mubr.bf16.mxu0 %v1118
        %1449 = vmatmul.mubr.bf16.gmra.mxu0 %v1117
        %v1450 = vpop.f32.mrf.mxu0
        %v1451 = vadd.f32 %v1411, %v1450
        %v1452 = vpop.f32.mrf.mxu0
        %v1453 = vpop.f32.mrf.mxu0
        %v1454 = vpop.f32.mrf.mxu0
        %1455 = vdwg.mxu0
        %v1456 = vadd.f32 %v1119, %v1451
        %1457 = vst [vmem:[#allocation2] sm:$0xff] %v1456
        // Predicated region
        $region81: #{esm2_forward.9} parent=59 // pred_check
          %p1458 = pneg %p531
        $region82: #{esm2_forward.9} parent=59 // pred_check_branch
          %1460 = sbr.rel (%p1458) target = $region84
        $region83: #{esm2_forward.9} parent=59 // pred_region
          %v1461 = vld [vmem:[#allocation4] sm:$0xff]
          %v1462 = vld [vmem:[#allocation2] sm:$0xff]
          %v1463 = vadd.f32 %v1461, %v1462
          %v1464 = vld [vmem:[#allocation10] sm:$0x1]
          %v1466 = vlaneseq
          %v1467 = vshrl.u32 %v1466, 7
          %v1468 = vsub.s32 0, %v1467
          %v1469 = vrot.slane %v1464, %v1468
          %v1471 = vadd.f32 %v1463, %v1469
          %1472 = vst [vmem:[%s529] sm:$0xff] %v1471
        $region84: #{esm2_forward.9} parent=59 // pred_fallthru
          _
        %p1473 = scmp.lt.s32.totalorder %s29, 1
        %s1474 = scalar_select %p1473, %s29, 1
        %p1475 = scmp.lt.s32.totalorder %s30, 0
        %s1476 = scalar_select %p1475, %s30, 0
        %s1477 = sadd.s32 %s1476, %s1474
        %s1478 = smul.addr %s1477, 8
        %s1479 = scalar_lea.vmem %s10, %s1478
        // Predicated region
        $region85: #{esm2_forward.9} parent=59 // pred_check
          %p1480 = pneg %p302
        $region86: #{esm2_forward.9} parent=59 // pred_check_branch
          %1482 = sbr.rel (%p1480) target = $region88
        $region87: #{esm2_forward.9} parent=59 // pred_region
          _
        $region88: #{esm2_forward.9} parent=59 // pred_fallthru
          _
      $region60: #{esm2_forward.9} parent=5 // pred_fallthru
        _
      %p1483 = scmp.le.s32.totalorder 2, %s19
      // Predicated region
      $region89: #{esm2_forward.9} parent=5 // pred_check
        %p1484 = pneg %p1483
      $region90: #{esm2_forward.9} parent=5 // pred_check_branch
        %1486 = sbr.rel (%p1484) target = $region92
      $region91: #{esm2_forward.9} parent=5 // pred_region
        %s1487 = ssub.s32 %s19, 2
        // Predicated region
        $region93: #{esm2_forward.9} parent=91 // pred_check
          %p1488 = pneg %p308
        $region94: #{esm2_forward.9} parent=91 // pred_check_branch
          %1490 = sbr.rel (%p1488) target = $region96
        $region95: #{esm2_forward.9} parent=91 // pred_region
          %p1491 = scmp.lt.s32.totalorder %s32, 1
          %s1492 = scalar_select %p1491, %s32, 1
          %p1493 = scmp.lt.s32.totalorder %s33, 0
          %s1494 = scalar_select %p1493, %s33, 0
          %s1495 = sadd.s32 %s1494, %s1492
          %s1496 = smul.addr %s1495, 8
          %s1497 = scalar_lea.vmem %s10, %s1496
        $region96: #{esm2_forward.9} parent=91 // pred_fallthru
          _
      $region92: #{esm2_forward.9} parent=5 // pred_fallthru
        _
    $region6: #{esm2_forward.9} parent=1 // loop_footer
      %s23 = sadd.s32 1, %s19
    $region7: #{esm2_forward.9} parent=1 // loop_footer_branch
      %18 = sbr.rel target = $region3
    $region8: #{esm2_forward.9} parent=1 // loop_exit
      _
    %1498 = vsyncpa [#allocation6], 1
    %s1499 = scalar_lea.sflag [#allocation6], 1
    %1500 = vsyncpa %s1499, 1
    %1501 = vsyncpa [#allocation8], 1
    %1502 = vsyncpa [#allocation11], 1

// kernel: esm2_forward.13
$region0: #{esm2_forward.13}
  #allocation0 [shape = 'u32[]', space=smem, size = 0x4, offset = 0x4, fixed_abs, tag = 'smem constant byte address 0x4 - core index']
  #allocation1 [shape = 'u32[144,128]{1,0:T(1,128)}', space=vmem, size = 0x12000, scoped, tag = 'internal scratch']
  %s0 = inlined_call_operand.vmem [shape: f32[2,8,128], index: 0, kind: input, shape index: {}]
  %s1 = inlined_call_operand.vmem [shape: f32[1,128], index: 1, kind: input, shape index: {}]
  %s2 = inlined_call_operand.vmem [shape: f32[1,128], index: 2, kind: input, shape index: {}]
  %s3 = inlined_call_operand.vmem [shape: bf16[128,128], index: 3, kind: input, shape index: {}]
  %s4 = inlined_call_operand.vmem [shape: f32[1,128], index: 4, kind: input, shape index: {}]
  %s5 = inlined_call_operand.vmem [shape: f32[1,128], index: 5, kind: input, shape index: {}]
  %s6 = inlined_call_operand.vmem [shape: f32[1,128], index: 6, kind: input, shape index: {}]
  %s7 = inlined_call_operand.vmem [shape: bf16[128,128], index: 7, kind: input, shape index: {}]
  %s8 = inlined_call_operand.vmem [shape: f32[1,128], index: 8, kind: input, shape index: {}]
  %s9 = inlined_call_operand.hbm [shape: f32[2,8,128], index: 9, kind: output, shape index: {}]
  %s10 = sld [smem:[#allocation0]]
  $region69: #{esm2_forward.13} parent=0
    _
  %s12 = ssub.s32 1, %s10
  %s13 = scalar_select 0, %s12, %s10
  $region1: #{esm2_forward.13} parent=0
    #allocation2 [shape = 'u8[8192]{0}', space=vmem, size = 0x2000, scoped, tag = 'output window, operand 0']
    #allocation3 [shape = 's32[2]{0}', space=sflag, size = 0x8, scoped, tag = 'scoped memory for esm2_forward.13']
    %14 = vsyncpa [#allocation3], 0
    %s15 = scalar_lea.sflag [#allocation3], 1
    %16 = vsyncpa %s15, 0
    loop: start=0, step=1, limit=4
    $region2: #{esm2_forward.13} parent=1 // loop_pre_header
      _
    $region3: #{esm2_forward.13} parent=1 // loop_header
      %s18 = sphi 0, %s22
      %p19 = scmp.ge.s32.totalorder %s18, 4
      %s25 = sphi 0, %s37
      %s26 = sphi 0, %s33
      %s27 = sphi 0, %s25
      %s28 = sphi 0, %s26
      %s29 = sphi 0, %s27
      %s30 = sphi 0, %s28
      %s42 = sphi 0, %s44
      %s45 = sphi 0, %s42
      %s46 = sphi 0, %s45
      %s62 = sphi 0, %s46
      %s66 = sphi 0, %s66
      %s68 = sphi 0, %s66
      %s69 = sphi 0, %s68
      %s83 = sphi 0, %s69
      %s87 = sphi 0, %s87
      %s89 = sphi 0, %s87
      %s90 = sphi 0, %s89
      %s104 = sphi 0, %s90
      %s108 = sphi 0, %s108
      %s110 = sphi 0, %s108
      %s111 = sphi 0, %s110
      %s125 = sphi 0, %s111
      %s129 = sphi 0, %s129
      %s131 = sphi 0, %s129
      %s132 = sphi 0, %s131
      %s146 = sphi 0, %s132
      %s150 = sphi 0, %s150
      %s152 = sphi 0, %s150
      %s153 = sphi 0, %s152
      %s167 = sphi 0, %s153
      %s171 = sphi 0, %s171
      %s173 = sphi 0, %s171
      %s174 = sphi 0, %s173
      %s188 = sphi 0, %s174
      %s192 = sphi 0, %s192
      %s194 = sphi 0, %s192
      %s195 = sphi 0, %s194
      %s209 = sphi 0, %s195
      %s213 = sphi 0, %s213
      %s215 = sphi 0, %s213
      %s216 = sphi 0, %s215
      %s230 = sphi 0, %s216
      %s238 = sphi 0, %s240
      %s241 = sphi 0, %s238
      %s242 = sphi 0, %s241
      %s258 = sphi 0, %s242
    $region4: #{esm2_forward.13} parent=1 // loop_header_branch
      %21 = sbr.rel (%p19) target = $region8
    $region5: #{esm2_forward.13} parent=1 // loop_body
      %s23 = ssub.s32 %s18, 1
      %s24 = ssub.s32 %s18, 2
      %s31 = sadd.s32 1, %s26
      %p32 = scmp.ge.s32.totalorder %s31, 1
      %s33 = scalar_select %p32, 0, %s31
      %s34 = sadd.s32 1, %s25
      %s35 = scalar_select %p32, %s34, %s25
      %p36 = scmp.ge.s32.totalorder %s35, 2
      %s37 = scalar_select %p36, 0, %s35
      %s38 = ssub.s32 %s25, %s37
      %s39 = ssub.s32 %s26, %s33
      %s40 = sor.u32 %s38, %s39
      %p41 = scmp.eq.s32.totalorder %s40, 0
      %s43 = sadd.s32 %s42, 1
      %s44 = scalar_select %p41, %s42, %s43
      %p47 = pneg %p41
      %p48 = scmp.eq.s32.totalorder %s18, 1
      %p49 = por %p47, %p48
      %p50 = scmp.ne.s32.totalorder %s42, %s45
      %p51 = scmp.eq.s32.totalorder %s18, 0
      %p52 = por %p50, %p51
      %p53 = scmp.ne.s32.totalorder %s42, %s45
      %p54 = scmp.eq.s32.totalorder %s23, 1
      %p55 = por %p53, %p54
      %p56 = scmp.ne.s32.totalorder %s45, %s46
      %p57 = scmp.eq.s32.totalorder %s23, 0
      %p58 = por %p56, %p57
      %p59 = scmp.ne.s32.totalorder %s45, %s46
      %p60 = scmp.eq.s32.totalorder %s24, 1
      %p61 = por %p59, %p60
      %p63 = scmp.ne.s32.totalorder %s46, %s62
      %p64 = scmp.eq.s32.totalorder %s24, 0
      %p65 = por %p63, %p64
      %s67 = sadd.s32 %s66, 1
      %p70 = scmp.eq.s32.totalorder %s18, 1
      %p71 = scmp.ne.s32.totalorder %s66, %s68
      %p72 = scmp.eq.s32.totalorder %s18, 0
      %p73 = por %p71, %p72
      %p74 = scmp.ne.s32.totalorder %s66, %s68
      %p75 = scmp.eq.s32.totalorder %s23, 1
      %p76 = por %p74, %p75
      %p77 = scmp.ne.s32.totalorder %s68, %s69
      %p78 = scmp.eq.s32.totalorder %s23, 0
      %p79 = por %p77, %p78
      %p80 = scmp.ne.s32.totalorder %s68, %s69
      %p81 = scmp.eq.s32.totalorder %s24, 1
      %p82 = por %p80, %p81
      %p84 = scmp.ne.s32.totalorder %s69, %s83
      %p85 = scmp.eq.s32.totalorder %s24, 0
      %p86 = por %p84, %p85
      %s88 = sadd.s32 %s87, 1
      %p91 = scmp.eq.s32.totalorder %s18, 1
      %p92 = scmp.ne.s32.totalorder %s87, %s89
      %p93 = scmp.eq.s32.totalorder %s18, 0
      %p94 = por %p92, %p93
      %p95 = scmp.ne.s32.totalorder %s87, %s89
      %p96 = scmp.eq.s32.totalorder %s23, 1
      %p97 = por %p95, %p96
      %p98 = scmp.ne.s32.totalorder %s89, %s90
      %p99 = scmp.eq.s32.totalorder %s23, 0
      %p100 = por %p98, %p99
      %p101 = scmp.ne.s32.totalorder %s89, %s90
      %p102 = scmp.eq.s32.totalorder %s24, 1
      %p103 = por %p101, %p102
      %p105 = scmp.ne.s32.totalorder %s90, %s104
      %p106 = scmp.eq.s32.totalorder %s24, 0
      %p107 = por %p105, %p106
      %s109 = sadd.s32 %s108, 1
      %p112 = scmp.eq.s32.totalorder %s18, 1
      %p113 = scmp.ne.s32.totalorder %s108, %s110
      %p114 = scmp.eq.s32.totalorder %s18, 0
      %p115 = por %p113, %p114
      %p116 = scmp.ne.s32.totalorder %s108, %s110
      %p117 = scmp.eq.s32.totalorder %s23, 1
      %p118 = por %p116, %p117
      %p119 = scmp.ne.s32.totalorder %s110, %s111
      %p120 = scmp.eq.s32.totalorder %s23, 0
      %p121 = por %p119, %p120
      %p122 = scmp.ne.s32.totalorder %s110, %s111
      %p123 = scmp.eq.s32.totalorder %s24, 1
      %p124 = por %p122, %p123
      %p126 = scmp.ne.s32.totalorder %s111, %s125
      %p127 = scmp.eq.s32.totalorder %s24, 0
      %p128 = por %p126, %p127
      %s130 = sadd.s32 %s129, 1
      %p133 = scmp.eq.s32.totalorder %s18, 1
      %p134 = scmp.ne.s32.totalorder %s129, %s131
      %p135 = scmp.eq.s32.totalorder %s18, 0
      %p136 = por %p134, %p135
      %p137 = scmp.ne.s32.totalorder %s129, %s131
      %p138 = scmp.eq.s32.totalorder %s23, 1
      %p139 = por %p137, %p138
      %p140 = scmp.ne.s32.totalorder %s131, %s132
      %p141 = scmp.eq.s32.totalorder %s23, 0
      %p142 = por %p140, %p141
      %p143 = scmp.ne.s32.totalorder %s131, %s132
      %p144 = scmp.eq.s32.totalorder %s24, 1
      %p145 = por %p143, %p144
      %p147 = scmp.ne.s32.totalorder %s132, %s146
      %p148 = scmp.eq.s32.totalorder %s24, 0
      %p149 = por %p147, %p148
      %s151 = sadd.s32 %s150, 1
      %p154 = scmp.eq.s32.totalorder %s18, 1
      %p155 = scmp.ne.s32.totalorder %s150, %s152
      %p156 = scmp.eq.s32.totalorder %s18, 0
      %p157 = por %p155, %p156
      %p158 = scmp.ne.s32.totalorder %s150, %s152
      %p159 = scmp.eq.s32.totalorder %s23, 1
      %p160 = por %p158, %p159
      %p161 = scmp.ne.s32.totalorder %s152, %s153
      %p162 = scmp.eq.s32.totalorder %s23, 0
      %p163 = por %p161, %p162
      %p164 = scmp.ne.s32.totalorder %s152, %s153
      %p165 = scmp.eq.s32.totalorder %s24, 1
      %p166 = por %p164, %p165
      %p168 = scmp.ne.s32.totalorder %s153, %s167
      %p169 = scmp.eq.s32.totalorder %s24, 0
      %p170 = por %p168, %p169
      %s172 = sadd.s32 %s171, 1
      %p175 = scmp.eq.s32.totalorder %s18, 1
      %p176 = scmp.ne.s32.totalorder %s171, %s173
      %p177 = scmp.eq.s32.totalorder %s18, 0
      %p178 = por %p176, %p177
      %p179 = scmp.ne.s32.totalorder %s171, %s173
      %p180 = scmp.eq.s32.totalorder %s23, 1
      %p181 = por %p179, %p180
      %p182 = scmp.ne.s32.totalorder %s173, %s174
      %p183 = scmp.eq.s32.totalorder %s23, 0
      %p184 = por %p182, %p183
      %p185 = scmp.ne.s32.totalorder %s173, %s174
      %p186 = scmp.eq.s32.totalorder %s24, 1
      %p187 = por %p185, %p186
      %p189 = scmp.ne.s32.totalorder %s174, %s188
      %p190 = scmp.eq.s32.totalorder %s24, 0
      %p191 = por %p189, %p190
      %s193 = sadd.s32 %s192, 1
      %p196 = scmp.eq.s32.totalorder %s18, 1
      %p197 = scmp.ne.s32.totalorder %s192, %s194
      %p198 = scmp.eq.s32.totalorder %s18, 0
      %p199 = por %p197, %p198
      %p200 = scmp.ne.s32.totalorder %s192, %s194
      %p201 = scmp.eq.s32.totalorder %s23, 1
      %p202 = por %p200, %p201
      %p203 = scmp.ne.s32.totalorder %s194, %s195
      %p204 = scmp.eq.s32.totalorder %s23, 0
      %p205 = por %p203, %p204
      %p206 = scmp.ne.s32.totalorder %s194, %s195
      %p207 = scmp.eq.s32.totalorder %s24, 1
      %p208 = por %p206, %p207
      %p210 = scmp.ne.s32.totalorder %s195, %s209
      %p211 = scmp.eq.s32.totalorder %s24, 0
      %p212 = por %p210, %p211
      %s214 = sadd.s32 %s213, 1
      %p217 = scmp.eq.s32.totalorder %s18, 1
      %p218 = scmp.ne.s32.totalorder %s213, %s215
      %p219 = scmp.eq.s32.totalorder %s18, 0
      %p220 = por %p218, %p219
      %p221 = scmp.ne.s32.totalorder %s213, %s215
      %p222 = scmp.eq.s32.totalorder %s23, 1
      %p223 = por %p221, %p222
      %p224 = scmp.ne.s32.totalorder %s215, %s216
      %p225 = scmp.eq.s32.totalorder %s23, 0
      %p226 = por %p224, %p225
      %p227 = scmp.ne.s32.totalorder %s215, %s216
      %p228 = scmp.eq.s32.totalorder %s24, 1
      %p229 = por %p227, %p228
      %p231 = scmp.ne.s32.totalorder %s216, %s230
      %p232 = scmp.eq.s32.totalorder %s24, 0
      %p233 = por %p231, %p232
      %s234 = ssub.s32 %s25, %s37
      %s235 = ssub.s32 %s26, %s33
      %s236 = sor.u32 %s234, %s235
      %p237 = scmp.eq.s32.totalorder %s236, 0
      %s239 = sadd.s32 %s238, 1
      %s240 = scalar_select %p237, %s238, %s239
      %p243 = pneg %p237
      %p244 = scmp.eq.s32.totalorder %s18, 1
      %p245 = por %p243, %p244
      %p246 = scmp.ne.s32.totalorder %s238, %s241
      %p247 = scmp.eq.s32.totalorder %s18, 0
      %p248 = por %p246, %p247
      %p249 = scmp.ne.s32.totalorder %s238, %s241
      %p250 = scmp.eq.s32.totalorder %s23, 1
      %p251 = por %p249, %p250
      %p252 = scmp.ne.s32.totalorder %s241, %s242
      %p253 = scmp.eq.s32.totalorder %s23, 0
      %p254 = por %p252, %p253
      %p255 = scmp.ne.s32.totalorder %s241, %s242
      %p256 = scmp.eq.s32.totalorder %s24, 1
      %p257 = por %p255, %p256
      %p259 = scmp.ne.s32.totalorder %s242, %s258
      %p260 = scmp.eq.s32.totalorder %s24, 0
      %p261 = por %p259, %p260
      %p262 = scmp.le.s32.totalorder 1, %s18
      %p263 = scmp.lt.s32.totalorder %s18, 3
      %p264 = pnand %p262, %p263
      %p265 = pneg %p264
      // Predicated region
      $region9: #{esm2_forward.13} parent=5 // pred_check
        _
      $region10: #{esm2_forward.13} parent=5 // pred_check_branch
        %267 = sbr.rel (%p264) target = $region12
      $region11: #{esm2_forward.13} parent=5 // pred_region
        %s268 = ssub.s32 %s18, 1
        // Predicated region
        $region13: #{esm2_forward.13} parent=11 // pred_check
          %p269 = pneg %p79
        $region14: #{esm2_forward.13} parent=11 // pred_check_branch
          %271 = sbr.rel (%p269) target = $region16
        $region15: #{esm2_forward.13} parent=11 // pred_region
          _
        $region16: #{esm2_forward.13} parent=11 // pred_fallthru
          _
        // Predicated region
        $region17: #{esm2_forward.13} parent=11 // pred_check
          %p272 = pneg %p100
        $region18: #{esm2_forward.13} parent=11 // pred_check_branch
          %274 = sbr.rel (%p272) target = $region20
        $region19: #{esm2_forward.13} parent=11 // pred_region
          _
        $region20: #{esm2_forward.13} parent=11 // pred_fallthru
          _
        // Predicated region
        $region21: #{esm2_forward.13} parent=11 // pred_check
          %p275 = pneg %p121
        $region22: #{esm2_forward.13} parent=11 // pred_check_branch
          %277 = sbr.rel (%p275) target = $region24
        $region23: #{esm2_forward.13} parent=11 // pred_region
          _
        $region24: #{esm2_forward.13} parent=11 // pred_fallthru
          _
        // Predicated region
        $region25: #{esm2_forward.13} parent=11 // pred_check
          %p278 = pneg %p142
        $region26: #{esm2_forward.13} parent=11 // pred_check_branch
          %280 = sbr.rel (%p278) target = $region28
        $region27: #{esm2_forward.13} parent=11 // pred_region
          _
        $region28: #{esm2_forward.13} parent=11 // pred_fallthru
          _
        // Predicated region
        $region29: #{esm2_forward.13} parent=11 // pred_check
          %p281 = pneg %p163
        $region30: #{esm2_forward.13} parent=11 // pred_check_branch
          %283 = sbr.rel (%p281) target = $region32
        $region31: #{esm2_forward.13} parent=11 // pred_region
          _
        $region32: #{esm2_forward.13} parent=11 // pred_fallthru
          _
        // Predicated region
        $region33: #{esm2_forward.13} parent=11 // pred_check
          %p284 = pneg %p184
        $region34: #{esm2_forward.13} parent=11 // pred_check_branch
          %286 = sbr.rel (%p284) target = $region36
        $region35: #{esm2_forward.13} parent=11 // pred_region
          _
        $region36: #{esm2_forward.13} parent=11 // pred_fallthru
          _
        // Predicated region
        $region37: #{esm2_forward.13} parent=11 // pred_check
          %p287 = pneg %p205
        $region38: #{esm2_forward.13} parent=11 // pred_check_branch
          %289 = sbr.rel (%p287) target = $region40
        $region39: #{esm2_forward.13} parent=11 // pred_region
          _
        $region40: #{esm2_forward.13} parent=11 // pred_fallthru
          _
        // Predicated region
        $region41: #{esm2_forward.13} parent=11 // pred_check
          %p290 = pneg %p226
        $region42: #{esm2_forward.13} parent=11 // pred_check_branch
          %292 = sbr.rel (%p290) target = $region44
        $region43: #{esm2_forward.13} parent=11 // pred_region
          _
        $region44: #{esm2_forward.13} parent=11 // pred_fallthru
          _
      $region12: #{esm2_forward.13} parent=5 // pred_fallthru
        _
      %p293 = scmp.lt.s32.totalorder %s18, 2
      // Predicated region
      $region45: #{esm2_forward.13} parent=5 // pred_check
        %p294 = pneg %p293
      $region46: #{esm2_forward.13} parent=5 // pred_check_branch
        %296 = sbr.rel (%p294) target = $region48
      $region47: #{esm2_forward.13} parent=5 // pred_region
        // Predicated region
        $region49: #{esm2_forward.13} parent=47 // pred_check
          %p297 = pneg %p52
        $region50: #{esm2_forward.13} parent=47 // pred_check_branch
          %299 = sbr.rel (%p297) target = $region52
        $region51: #{esm2_forward.13} parent=47 // pred_region
          %p300 = scmp.lt.s32.totalorder %s25, 1
          %s301 = scalar_select %p300, %s25, 1
          %p302 = scmp.lt.s32.totalorder %s26, 0
          %s303 = scalar_select %p302, %s26, 0
          %s304 = sadd.s32 %s303, %s301
          %s305 = smul.addr %s304, 8
          %s306 = scalar_lea.vmem %s0, %s305
        $region52: #{esm2_forward.13} parent=47 // pred_fallthru
          _
      $region48: #{esm2_forward.13} parent=5 // pred_fallthru
        _
      %p307 = scmp.le.s32.totalorder 1, %s18
      %p308 = scmp.lt.s32.totalorder %s18, 3
      %p309 = pnand %p307, %p308
      %p310 = pneg %p309
      // Predicated region
      $region53: #{esm2_forward.13} parent=5 // pred_check
        _
      $region54: #{esm2_forward.13} parent=5 // pred_check_branch
        %312 = sbr.rel (%p309) target = $region56
      $region55: #{esm2_forward.13} parent=5 // pred_region
        %s313 = ssub.s32 %s18, 1
        %p314 = scmp.lt.s32.totalorder %s27, 1
        %s315 = scalar_select %p314, %s27, 1
        %p316 = scmp.lt.s32.totalorder %s28, 0
        %s317 = scalar_select %p316, %s28, 0
        %s318 = sadd.s32 %s317, %s315
        %s319 = smul.addr %s318, 8
        %s320 = scalar_lea.vmem %s0, %s319
        %p321 = pneg %p58
        %p322 = pneg %p55
        %p323 = pneg %p79
        %p324 = pneg %p76
        %p325 = pneg %p100
        %p326 = pneg %p97
        %p327 = pneg %p121
        %p328 = pneg %p118
        %p329 = pneg %p142
        %p330 = pneg %p139
        %p331 = pneg %p163
        %p332 = pneg %p160
        %p333 = pneg %p184
        %p334 = pneg %p181
        %p335 = pneg %p205
        %p336 = pneg %p202
        %p337 = pneg %p226
        %p338 = pneg %p223
        %p339 = pneg %p254
        %p340 = pneg %p251
        %s341 = sand.u32 %s241, 1
        %s342 = scalar_lea.sflag [#allocation3], %s341
        %s343 = sand.u32 %s241, 1
        %s344 = smul.addr %s343, 8
        %s345 = scalar_lea.vmem [#allocation2], %s344
        %p346 = scmp.lt.s32.totalorder %s27, 1
        %s347 = scalar_select %p346, %s27, 1
        %p348 = scmp.lt.s32.totalorder %s28, 0
        %s349 = scalar_select %p348, %s28, 0
        %s350 = sadd.s32 %s349, %s347
        %s351 = smul.addr %s350, 8
        %s352 = scalar_lea.vmem %s0, %s351
        %v354 = vld [vmem:[%s352] sm:$0xff]
        %v355 = vld [vmem:[%s1] sm:$0x1]
        %v356 = vld [vmem:[%s2] sm:$0x1]
        %357 = vadd.xlane.f32.xlu0 %v354
        %v358 = vpop.xlane.xlu0 %357
        %v359 = vrcp.pop 128.0
        %v360 = vmul.f32 %v358, %v359
        %v361 = vsub.f32 %v354, %v360
        %v362 = vmul.f32 %v361, %v361
        %363 = vadd.xlane.f32.xlu0 %v362
        %v364 = vpop.xlane.xlu0 %363
        %v365 = vmul.f32 %v364, %v359
        %v366 = vadd.f32 %v365, 1e-12
        %v367 = vrsqrt.pop %v366
        %v368 = vmul.f32 %v361, %v367
        %v370 = vlaneseq
        %v371 = vshrl.u32 %v370, 7
        %v372 = vsub.s32 0, %v371
        %v373 = vrot.slane %v355, %v372
        %v375 = vmul.f32 %v368, %v373
        %v377 = vlaneseq
        %v378 = vshrl.u32 %v377, 7
        %v379 = vsub.s32 0, %v378
        %v380 = vrot.slane %v356, %v379
        %v382 = vadd.f32 %v375, %v380
        %v383 = vpack.c.bf16 %v382, %v382
        %v384 = vld [vmem:[%s3] sm:$0xf]
        %v385 = vld [vmem:[%s3 + $0x4] sm:$0xf]
        %v386 = vld [vmem:[%s3 + $0x8] sm:$0xf]
        %v387 = vld [vmem:[%s3 + $0xc] sm:$0xf]
        %v388 = vld [vmem:[%s3 + $0x10] sm:$0xf]
        %v389 = vld [vmem:[%s3 + $0x14] sm:$0xf]
        %v390 = vld [vmem:[%s3 + $0x18] sm:$0xf]
        %v391 = vld [vmem:[%s3 + $0x1c] sm:$0xf]
        %v392 = vld [vmem:[%s3 + $0x20] sm:$0xf]
        %v393 = vld [vmem:[%s3 + $0x24] sm:$0xf]
        %v394 = vld [vmem:[%s3 + $0x28] sm:$0xf]
        %v395 = vld [vmem:[%s3 + $0x2c] sm:$0xf]
        %v396 = vld [vmem:[%s3 + $0x30] sm:$0xf]
        %v397 = vld [vmem:[%s3 + $0x34] sm:$0xf]
        %v398 = vld [vmem:[%s3 + $0x38] sm:$0xf]
        %v399 = vld [vmem:[%s3 + $0x3c] sm:$0xf]
        %v400 = vld [vmem:[%s4] sm:$0x1]
        %v402 = vlaneseq
        %v403 = vshrl.u32 %v402, 7
        %v404 = vsub.s32 0, %v403
        %v405 = vrot.slane %v400, %v404
        %v423 = vunpack.c.l.b16 %v384
        %v424 = vunpack.c.l.b16 %v385
        %v425 = vunpack.c.l.b16 %v386
        %v426 = vunpack.c.l.b16 %v387
        %v427 = vunpack.c.l.b16 %v388
        %v428 = vunpack.c.l.b16 %v389
        %v429 = vunpack.c.l.b16 %v390
        %v430 = vunpack.c.l.b16 %v391
        %v431 = vunpack.c.l.b16 %v392
        %v432 = vunpack.c.l.b16 %v393
        %v433 = vunpack.c.l.b16 %v394
        %v434 = vunpack.c.l.b16 %v395
        %v435 = vunpack.c.l.b16 %v396
        %v436 = vunpack.c.l.b16 %v397
        %v437 = vunpack.c.l.b16 %v398
        %v438 = vunpack.c.l.b16 %v399
        %v439 = vpack.c.b16 %v424, %v423
        %v440 = vpack.c.b16 %v426, %v425
        %v441 = vpack.c.b16 %v428, %v427
        %v442 = vpack.c.b16 %v430, %v429
        %v443 = vpack.c.b16 %v432, %v431
        %v444 = vpack.c.b16 %v434, %v433
        %v445 = vpack.c.b16 %v436, %v435
        %v446 = vpack.c.b16 %v438, %v437
        %455 = vmatprep.subr.bf16.mxu0 0
        %456 = vmatpush1.bf16.msra.mxu0 %v446
        %457 = vmatprep.subr.bf16.mxu0 0
        %458 = vmatpush1.bf16.msra.mxu0 %v445
        %459 = vmatprep.subr.bf16.mxu0 0
        %460 = vmatpush1.bf16.msra.mxu0 %v444
        %461 = vmatprep.subr.bf16.mxu0 0
        %462 = vmatpush1.bf16.msra.mxu0 %v443
        %463 = vmatprep.subr.bf16.mxu0 0
        %464 = vmatpush1.bf16.msra.mxu0 %v442
        %465 = vmatprep.subr.bf16.mxu0 0
        %466 = vmatpush1.bf16.msra.mxu0 %v441
        %467 = vmatprep.subr.bf16.mxu0 0
        %468 = vmatpush1.bf16.msra.mxu0 %v440
        %469 = vmatprep.subr.bf16.mxu0 0
        %470 = vmatpush1.bf16.msra.mxu0 %v439
        %471 = vmatprep.subr.bf16.mxu0 0
        %472 = vmatpush2.bf16.msra.mxu0 0
        %473 = vmatprep.subr.bf16.mxu0 0
        %474 = vmatpush2.bf16.msra.mxu0 0
        %475 = vmatprep.subr.bf16.mxu0 0
        %476 = vmatpush2.bf16.msra.mxu0 0
        %477 = vmatprep.subr.bf16.mxu0 0
        %478 = vmatpush2.bf16.msra.mxu0 0
        %479 = vmatprep.subr.bf16.mxu0 0
        %480 = vmatpush2.bf16.msra.mxu0 0
        %481 = vmatprep.subr.bf16.mxu0 0
        %482 = vmatpush2.bf16.msra.mxu0 0
        %483 = vmatprep.subr.bf16.mxu0 0
        %484 = vmatpush2.bf16.msra.mxu0 0
        %485 = vmatprep.subr.bf16.mxu0 0
        %486 = vmatpush2.bf16.msra.mxu0 0
        %487 = vmatprep.mubr.bf16.mxu0 0
        %488 = vmatmul.mubr.bf16.gmra.mxu0 %v383
        %v489 = vpop.f32.mrf.mxu0
        %v490 = vadd.f32 %v405, %v489
        %v491 = vpop.f32.mrf.mxu0
        %v492 = vpop.f32.mrf.mxu0
        %v493 = vpop.f32.mrf.mxu0
        %494 = vdwg.mxu0
        %v495 = vmul.f32 %v490, 0.5
        %v496 = vrcp.pop 1.4142135
        %v497 = vmul.f32 %v490, %v496
        %vm498 = vcmp.ge.f32.partialorder %v497, 0.0
        %v499 = vsel %vm498, 1.0, -1.0
        %v500 = vand.u32 2147483647, %v497
        %v501 = vmul.f32 %v500, 0.3275911
        %v502 = vadd.f32 %v501, 1.0
        %v503 = vrcp.pop %v502
        %v504 = vmul.f32 %v503, 1.0614054
        %v505 = vadd.f32 %v504, -1.4531521
        %v506 = vmul.f32 %v505, %v503
        %v507 = vadd.f32 %v506, 1.4214138
        %v508 = vmul.f32 %v507, %v503
        %v509 = vadd.f32 %v508, -0.28449672
        %v510 = vmul.f32 %v509, %v503
        %v511 = vadd.f32 %v510, 0.2548296
        %v512 = vmul.f32 %v511, %v503
        %v513 = vsub.f32 0.0, %v500
        %v514 = vmul.f32 %v513, %v500
        %v515 = vmul.f32 %v514, 1.442695
        %v516 = vpow.pop %v515
        %v517 = vmul.f32 %v512, %v516
        %v518 = vsub.f32 1.0, %v517
        %v519 = vmul.f32 %v499, %v518
        %v520 = vadd.f32 %v519, 1.0
        %v521 = vmul.f32 %v495, %v520
        %v522 = vld [vmem:[%s5] sm:$0x1]
        %v523 = vld [vmem:[%s6] sm:$0x1]
        %524 = vadd.xlane.f32.xlu0 %v521
        %v525 = vpop.xlane.xlu0 %524
        %v526 = vmul.f32 %v525, %v359
        %v527 = vsub.f32 %v521, %v526
        %v528 = vmul.f32 %v527, %v527
        %529 = vadd.xlane.f32.xlu0 %v528
        %v530 = vpop.xlane.xlu0 %529
        %v531 = vmul.f32 %v530, %v359
        %v532 = vadd.f32 %v531, 1e-12
        %v533 = vrsqrt.pop %v532
        %v534 = vmul.f32 %v527, %v533
        %v536 = vlaneseq
        %v537 = vshrl.u32 %v536, 7
        %v538 = vsub.s32 0, %v537
        %v539 = vrot.slane %v522, %v538
        %v541 = vmul.f32 %v534, %v539
        %v543 = vlaneseq
        %v544 = vshrl.u32 %v543, 7
        %v545 = vsub.s32 0, %v544
        %v546 = vrot.slane %v523, %v545
        %v548 = vadd.f32 %v541, %v546
        %v549 = vpack.c.bf16 %v548, %v548
        %v550 = vld [vmem:[%s7] sm:$0xf]
        %v551 = vld [vmem:[%s7 + $0x4] sm:$0xf]
        %v552 = vld [vmem:[%s7 + $0x8] sm:$0xf]
        %v553 = vld [vmem:[%s7 + $0xc] sm:$0xf]
        %v554 = vld [vmem:[%s7 + $0x10] sm:$0xf]
        %v555 = vld [vmem:[%s7 + $0x14] sm:$0xf]
        %v556 = vld [vmem:[%s7 + $0x18] sm:$0xf]
        %v557 = vld [vmem:[%s7 + $0x1c] sm:$0xf]
        %v558 = vld [vmem:[%s7 + $0x20] sm:$0xf]
        %v559 = vld [vmem:[%s7 + $0x24] sm:$0xf]
        %v560 = vld [vmem:[%s7 + $0x28] sm:$0xf]
        %v561 = vld [vmem:[%s7 + $0x2c] sm:$0xf]
        %v562 = vld [vmem:[%s7 + $0x30] sm:$0xf]
        %v563 = vld [vmem:[%s7 + $0x34] sm:$0xf]
        %v564 = vld [vmem:[%s7 + $0x38] sm:$0xf]
        %v565 = vld [vmem:[%s7 + $0x3c] sm:$0xf]
        %v566 = vld [vmem:[%s8] sm:$0x1]
        %v568 = vlaneseq
        %v569 = vshrl.u32 %v568, 7
        %v570 = vsub.s32 0, %v569
        %v571 = vrot.slane %v566, %v570
        %v589 = vunpack.c.l.b16 %v550
        %v590 = vunpack.c.l.b16 %v551
        %v591 = vunpack.c.l.b16 %v552
        %v592 = vunpack.c.l.b16 %v553
        %v593 = vunpack.c.l.b16 %v554
        %v594 = vunpack.c.l.b16 %v555
        %v595 = vunpack.c.l.b16 %v556
        %v596 = vunpack.c.l.b16 %v557
        %v597 = vunpack.c.l.b16 %v558
        %v598 = vunpack.c.l.b16 %v559
        %v599 = vunpack.c.l.b16 %v560
        %v600 = vunpack.c.l.b16 %v561
        %v601 = vunpack.c.l.b16 %v562
        %v602 = vunpack.c.l.b16 %v563
        %v603 = vunpack.c.l.b16 %v564
        %v604 = vunpack.c.l.b16 %v565
        %v605 = vpack.c.b16 %v590, %v589
        %v606 = vpack.c.b16 %v592, %v591
        %v607 = vpack.c.b16 %v594, %v593
        %v608 = vpack.c.b16 %v596, %v595
        %v609 = vpack.c.b16 %v598, %v597
        %v610 = vpack.c.b16 %v600, %v599
        %v611 = vpack.c.b16 %v602, %v601
        %v612 = vpack.c.b16 %v604, %v603
        %621 = vmatprep.subr.bf16.mxu0 0
        %622 = vmatpush1.bf16.msra.mxu0 %v612
        %623 = vmatprep.subr.bf16.mxu0 0
        %624 = vmatpush1.bf16.msra.mxu0 %v611
        %625 = vmatprep.subr.bf16.mxu0 0
        %626 = vmatpush1.bf16.msra.mxu0 %v610
        %627 = vmatprep.subr.bf16.mxu0 0
        %628 = vmatpush1.bf16.msra.mxu0 %v609
        %629 = vmatprep.subr.bf16.mxu0 0
        %630 = vmatpush1.bf16.msra.mxu0 %v608
        %631 = vmatprep.subr.bf16.mxu0 0
        %632 = vmatpush1.bf16.msra.mxu0 %v607
        %633 = vmatprep.subr.bf16.mxu0 0
        %634 = vmatpush1.bf16.msra.mxu0 %v606
        %635 = vmatprep.subr.bf16.mxu0 0
        %636 = vmatpush1.bf16.msra.mxu0 %v605
        %637 = vmatprep.subr.bf16.mxu0 0
        %638 = vmatpush2.bf16.msra.mxu0 0
        %639 = vmatprep.subr.bf16.mxu0 0
        %640 = vmatpush2.bf16.msra.mxu0 0
        %641 = vmatprep.subr.bf16.mxu0 0
        %642 = vmatpush2.bf16.msra.mxu0 0
        %643 = vmatprep.subr.bf16.mxu0 0
        %644 = vmatpush2.bf16.msra.mxu0 0
        %645 = vmatprep.subr.bf16.mxu0 0
        %646 = vmatpush2.bf16.msra.mxu0 0
        %647 = vmatprep.subr.bf16.mxu0 0
        %648 = vmatpush2.bf16.msra.mxu0 0
        %649 = vmatprep.subr.bf16.mxu0 0
        %650 = vmatpush2.bf16.msra.mxu0 0
        %651 = vmatprep.subr.bf16.mxu0 0
        %652 = vmatpush2.bf16.msra.mxu0 0
        %653 = vmatprep.mubr.bf16.mxu0 0
        %654 = vmatmul.mubr.bf16.gmra.mxu0 %v549
        %v655 = vpop.f32.mrf.mxu0
        %v656 = vadd.f32 %v571, %v655
        %v657 = vpop.f32.mrf.mxu0
        %v658 = vpop.f32.mrf.mxu0
        %v659 = vpop.f32.mrf.mxu0
        %660 = vdwg.mxu0
        %661 = vst [vmem:[%s345] sm:$0xff] %v656
        %s662 = sand.u32 %s241, 1
        %s663 = scalar_lea.sflag [#allocation3], %s662
        %s664 = sand.u32 %s241, 1
        %s665 = smul.addr %s664, 8
        %s666 = scalar_lea.vmem [#allocation2], %s665
        // Predicated region
        $region57: #{esm2_forward.13} parent=55 // pred_check
          %p667 = pneg %p251
        $region58: #{esm2_forward.13} parent=55 // pred_check_branch
          %669 = sbr.rel (%p667) target = $region60
        $region59: #{esm2_forward.13} parent=55 // pred_region
          %s671 = ssub.s32 128, 128
          %672 = vsyncadd %s663, %s671
          %s673 = sadd.s32 %s28, %s27
          %s674 = smul.addr %s673, 128
          %s675 = scalar_lea.hbm %s9, %s674
          %s677 = sshll.u32 %s666, 4
          %s678 = int_to_ptr.vmem [resolvable:$true] %s677
          %680 = dma.vmem_to_hbm [thread:$0]  %s678, 128, %s675, %s663
        $region60: #{esm2_forward.13} parent=55 // pred_fallthru
          _
      $region56: #{esm2_forward.13} parent=5 // pred_fallthru
        _
      %p681 = scmp.le.s32.totalorder 2, %s18
      // Predicated region
      $region61: #{esm2_forward.13} parent=5 // pred_check
        %p682 = pneg %p681
      $region62: #{esm2_forward.13} parent=5 // pred_check_branch
        %684 = sbr.rel (%p682) target = $region64
      $region63: #{esm2_forward.13} parent=5 // pred_region
        %s685 = ssub.s32 %s18, 2
        // Predicated region
        $region65: #{esm2_forward.13} parent=63 // pred_check
          %p686 = pneg %p257
        $region66: #{esm2_forward.13} parent=63 // pred_check_branch
          %688 = sbr.rel (%p686) target = $region68
        $region67: #{esm2_forward.13} parent=63 // pred_region
          %s689 = sand.u32 %s242, 1
          %s690 = scalar_lea.sflag [#allocation3], %s689
          %s691 = sand.u32 %s242, 1
          %s692 = smul.addr %s691, 8
          %s693 = scalar_lea.vmem [#allocation2], %s692
          %694 = dma.done %s690, 128
        $region68: #{esm2_forward.13} parent=63 // pred_fallthru
          _
      $region64: #{esm2_forward.13} parent=5 // pred_fallthru
        _
    $region6: #{esm2_forward.13} parent=1 // loop_footer
      %s22 = sadd.s32 1, %s18
    $region7: #{esm2_forward.13} parent=1 // loop_footer_branch
      %17 = sbr.rel target = $region3
    $region8: #{esm2_forward.13} parent=1 // loop_exit
      _
    %695 = vsyncpa [#allocation3], 1
    %s696 = scalar_lea.sflag [#allocation3], 1
    %697 = vsyncpa %s696, 1

// kernel: esm2_forward.12
$region0: #{esm2_forward.12}
  #allocation0 [shape = 'u32[]', space=smem, size = 0x4, offset = 0x4, fixed_abs, tag = 'smem constant byte address 0x4 - core index']
  #allocation1 [shape = 'u32[144,128]{1,0:T(1,128)}', space=vmem, size = 0x12000, scoped, tag = 'internal scratch']
  #allocation2 [shape = 'f32[8,128]{1,0:T(8,128)}', space=vmem, size = 0x1000, scoped, tag = 'scratch operand']
  #allocation3 [shape = 'bf16[8,128]{1,0:T(8,128)(2,1)}', space=vmem, size = 0x800, scoped, tag = 'scratch operand']
  #allocation4 [shape = 'f32[8,128]{1,0:T(8,128)}', space=vmem, size = 0x1000, scoped, tag = 'scratch operand']
  %s0 = inlined_call_operand.vmem [shape: f32[2,8,128], index: 0, kind: input, shape index: {}]
  %s1 = inlined_call_operand.vmem [shape: bf16[2,4,8,32], index: 1, kind: input, shape index: {}]
  %s2 = inlined_call_operand.vmem [shape: bf16[128,128], index: 2, kind: input, shape index: {}]
  %s3 = inlined_call_operand.vmem [shape: f32[1,128], index: 3, kind: input, shape index: {}]
  %s4 = inlined_call_operand.vmem [shape: f32[1,128], index: 4, kind: input, shape index: {}]
  %s5 = inlined_call_operand.vmem [shape: f32[1,128], index: 5, kind: input, shape index: {}]
  %s6 = inlined_call_operand.vmem [shape: bf16[128,512], index: 6, kind: input, shape index: {}]
  %s7 = inlined_call_operand.vmem [shape: f32[1,512], index: 7, kind: input, shape index: {}]
  %s8 = inlined_call_operand.vmem [shape: bf16[512,128], index: 8, kind: input, shape index: {}]
  %s9 = inlined_call_operand.vmem [shape: f32[1,128], index: 9, kind: input, shape index: {}]
  %s10 = inlined_call_operand.vmem [shape: f32[2,8,128], index: 10, kind: output, shape index: {}]
  %s11 = sld [smem:[#allocation0]]
  $region81: #{esm2_forward.12} parent=0
    _
  %s13 = ssub.s32 1, %s11
  %s14 = scalar_select 0, %s13, %s11
  loop: start=0, step=1, limit=4
  $region2: #{esm2_forward.12} parent=0 // loop_pre_header
    _
  $region3: #{esm2_forward.12} parent=0 // loop_header
    %s16 = sphi 0, %s20
    %p17 = scmp.ge.s32.totalorder %s16, 4
    %s23 = sphi 0, %s42
    %s24 = sphi 0, %s38
    %s25 = sphi 0, %s34
    %s26 = sphi 0, %s23
    %s27 = sphi 0, %s24
    %s28 = sphi 0, %s25
    %s29 = sphi 0, %s26
    %s30 = sphi 0, %s27
    %s31 = sphi 0, %s28
    %s47 = sphi 0, %s49
    %s50 = sphi 0, %s47
    %s51 = sphi 0, %s50
    %s67 = sphi 0, %s51
    %s75 = sphi 0, %s77
    %s78 = sphi 0, %s75
    %s79 = sphi 0, %s78
    %s95 = sphi 0, %s79
    %s99 = sphi 0, %s99
    %s101 = sphi 0, %s99
    %s102 = sphi 0, %s101
    %s116 = sphi 0, %s102
    %s120 = sphi 0, %s120
    %s122 = sphi 0, %s120
    %s123 = sphi 0, %s122
    %s137 = sphi 0, %s123
    %s141 = sphi 0, %s141
    %s143 = sphi 0, %s141
    %s144 = sphi 0, %s143
    %s158 = sphi 0, %s144
    %s162 = sphi 0, %s162
    %s164 = sphi 0, %s162
    %s165 = sphi 0, %s164
    %s179 = sphi 0, %s165
    %s185 = sphi 0, %s187
    %s188 = sphi 0, %s185
    %s189 = sphi 0, %s188
    %s205 = sphi 0, %s189
    %s211 = sphi 0, %s213
    %s214 = sphi 0, %s211
    %s215 = sphi 0, %s214
    %s231 = sphi 0, %s215
    %s237 = sphi 0, %s239
    %s240 = sphi 0, %s237
    %s241 = sphi 0, %s240
    %s257 = sphi 0, %s241
    %s261 = sphi 0, %s261
    %s263 = sphi 0, %s261
    %s264 = sphi 0, %s263
    %s278 = sphi 0, %s264
    %s286 = sphi 0, %s288
    %s289 = sphi 0, %s286
    %s290 = sphi 0, %s289
    %s306 = sphi 0, %s290
  $region4: #{esm2_forward.12} parent=0 // loop_header_branch
    %19 = sbr.rel (%p17) target = $region8
  $region5: #{esm2_forward.12} parent=0 // loop_body
    %s21 = ssub.s32 %s16, 1
    %s22 = ssub.s32 %s16, 2
    %s32 = sadd.s32 1, %s25
    %p33 = scmp.ge.s32.totalorder %s32, 1
    %s34 = scalar_select %p33, 0, %s32
    %s35 = sadd.s32 1, %s24
    %s36 = scalar_select %p33, %s35, %s24
    %p37 = scmp.ge.s32.totalorder %s36, 1
    %s38 = scalar_select %p37, 0, %s36
    %s39 = sadd.s32 1, %s23
    %s40 = scalar_select %p37, %s39, %s23
    %p41 = scmp.ge.s32.totalorder %s40, 2
    %s42 = scalar_select %p41, 0, %s40
    %s43 = ssub.s32 %s23, %s42
    %s44 = ssub.s32 %s24, %s38
    %s45 = sor.u32 %s43, %s44
    %p46 = scmp.eq.s32.totalorder %s45, 0
    %s48 = sadd.s32 %s47, 1
    %s49 = scalar_select %p46, %s47, %s48
    %p52 = pneg %p46
    %p53 = scmp.eq.s32.totalorder %s16, 1
    %p54 = por %p52, %p53
    %p55 = scmp.ne.s32.totalorder %s47, %s50
    %p56 = scmp.eq.s32.totalorder %s16, 0
    %p57 = por %p55, %p56
    %p58 = scmp.ne.s32.totalorder %s47, %s50
    %p59 = scmp.eq.s32.totalorder %s21, 1
    %p60 = por %p58, %p59
    %p61 = scmp.ne.s32.totalorder %s50, %s51
    %p62 = scmp.eq.s32.totalorder %s21, 0
    %p63 = por %p61, %p62
    %p64 = scmp.ne.s32.totalorder %s50, %s51
    %p65 = scmp.eq.s32.totalorder %s22, 1
    %p66 = por %p64, %p65
    %p68 = scmp.ne.s32.totalorder %s51, %s67
    %p69 = scmp.eq.s32.totalorder %s22, 0
    %p70 = por %p68, %p69
    %s71 = ssub.s32 %s23, %s42
    %s72 = ssub.s32 %s24, %s38
    %s73 = sor.u32 %s71, %s72
    %p74 = scmp.eq.s32.totalorder %s73, 0
    %s76 = sadd.s32 %s75, 1
    %s77 = scalar_select %p74, %s75, %s76
    %p80 = pneg %p74
    %p81 = scmp.eq.s32.totalorder %s16, 1
    %p82 = por %p80, %p81
    %p83 = scmp.ne.s32.totalorder %s75, %s78
    %p84 = scmp.eq.s32.totalorder %s16, 0
    %p85 = por %p83, %p84
    %p86 = scmp.ne.s32.totalorder %s75, %s78
    %p87 = scmp.eq.s32.totalorder %s21, 1
    %p88 = por %p86, %p87
    %p89 = scmp.ne.s32.totalorder %s78, %s79
    %p90 = scmp.eq.s32.totalorder %s21, 0
    %p91 = por %p89, %p90
    %p92 = scmp.ne.s32.totalorder %s78, %s79
    %p93 = scmp.eq.s32.totalorder %s22, 1
    %p94 = por %p92, %p93
    %p96 = scmp.ne.s32.totalorder %s79, %s95
    %p97 = scmp.eq.s32.totalorder %s22, 0
    %p98 = por %p96, %p97
    %s100 = sadd.s32 %s99, 1
    %p103 = scmp.eq.s32.totalorder %s16, 1
    %p104 = scmp.ne.s32.totalorder %s99, %s101
    %p105 = scmp.eq.s32.totalorder %s16, 0
    %p106 = por %p104, %p105
    %p107 = scmp.ne.s32.totalorder %s99, %s101
    %p108 = scmp.eq.s32.totalorder %s21, 1
    %p109 = por %p107, %p108
    %p110 = scmp.ne.s32.totalorder %s101, %s102
    %p111 = scmp.eq.s32.totalorder %s21, 0
    %p112 = por %p110, %p111
    %p113 = scmp.ne.s32.totalorder %s101, %s102
    %p114 = scmp.eq.s32.totalorder %s22, 1
    %p115 = por %p113, %p114
    %p117 = scmp.ne.s32.totalorder %s102, %s116
    %p118 = scmp.eq.s32.totalorder %s22, 0
    %p119 = por %p117, %p118
    %s121 = sadd.s32 %s120, 1
    %p124 = scmp.eq.s32.totalorder %s16, 1
    %p125 = scmp.ne.s32.totalorder %s120, %s122
    %p126 = scmp.eq.s32.totalorder %s16, 0
    %p127 = por %p125, %p126
    %p128 = scmp.ne.s32.totalorder %s120, %s122
    %p129 = scmp.eq.s32.totalorder %s21, 1
    %p130 = por %p128, %p129
    %p131 = scmp.ne.s32.totalorder %s122, %s123
    %p132 = scmp.eq.s32.totalorder %s21, 0
    %p133 = por %p131, %p132
    %p134 = scmp.ne.s32.totalorder %s122, %s123
    %p135 = scmp.eq.s32.totalorder %s22, 1
    %p136 = por %p134, %p135
    %p138 = scmp.ne.s32.totalorder %s123, %s137
    %p139 = scmp.eq.s32.totalorder %s22, 0
    %p140 = por %p138, %p139
    %s142 = sadd.s32 %s141, 1
    %p145 = scmp.eq.s32.totalorder %s16, 1
    %p146 = scmp.ne.s32.totalorder %s141, %s143
    %p147 = scmp.eq.s32.totalorder %s16, 0
    %p148 = por %p146, %p147
    %p149 = scmp.ne.s32.totalorder %s141, %s143
    %p150 = scmp.eq.s32.totalorder %s21, 1
    %p151 = por %p149, %p150
    %p152 = scmp.ne.s32.totalorder %s143, %s144
    %p153 = scmp.eq.s32.totalorder %s21, 0
    %p154 = por %p152, %p153
    %p155 = scmp.ne.s32.totalorder %s143, %s144
    %p156 = scmp.eq.s32.totalorder %s22, 1
    %p157 = por %p155, %p156
    %p159 = scmp.ne.s32.totalorder %s144, %s158
    %p160 = scmp.eq.s32.totalorder %s22, 0
    %p161 = por %p159, %p160
    %s163 = sadd.s32 %s162, 1
    %p166 = scmp.eq.s32.totalorder %s16, 1
    %p167 = scmp.ne.s32.totalorder %s162, %s164
    %p168 = scmp.eq.s32.totalorder %s16, 0
    %p169 = por %p167, %p168
    %p170 = scmp.ne.s32.totalorder %s162, %s164
    %p171 = scmp.eq.s32.totalorder %s21, 1
    %p172 = por %p170, %p171
    %p173 = scmp.ne.s32.totalorder %s164, %s165
    %p174 = scmp.eq.s32.totalorder %s21, 0
    %p175 = por %p173, %p174
    %p176 = scmp.ne.s32.totalorder %s164, %s165
    %p177 = scmp.eq.s32.totalorder %s22, 1
    %p178 = por %p176, %p177
    %p180 = scmp.ne.s32.totalorder %s165, %s179
    %p181 = scmp.eq.s32.totalorder %s22, 0
    %p182 = por %p180, %p181
    %s183 = ssub.s32 %s25, %s34
    %p184 = scmp.eq.s32.totalorder %s183, 0
    %s186 = sadd.s32 %s185, 1
    %s187 = scalar_select %p184, %s185, %s186
    %p190 = pneg %p184
    %p191 = scmp.eq.s32.totalorder %s16, 1
    %p192 = por %p190, %p191
    %p193 = scmp.ne.s32.totalorder %s185, %s188
    %p194 = scmp.eq.s32.totalorder %s16, 0
    %p195 = por %p193, %p194
    %p196 = scmp.ne.s32.totalorder %s185, %s188
    %p197 = scmp.eq.s32.totalorder %s21, 1
    %p198 = por %p196, %p197
    %p199 = scmp.ne.s32.totalorder %s188, %s189
    %p200 = scmp.eq.s32.totalorder %s21, 0
    %p201 = por %p199, %p200
    %p202 = scmp.ne.s32.totalorder %s188, %s189
    %p203 = scmp.eq.s32.totalorder %s22, 1
    %p204 = por %p202, %p203
    %p206 = scmp.ne.s32.totalorder %s189, %s205
    %p207 = scmp.eq.s32.totalorder %s22, 0
    %p208 = por %p206, %p207
    %s209 = ssub.s32 %s25, %s34
    %p210 = scmp.eq.s32.totalorder %s209, 0
    %s212 = sadd.s32 %s211, 1
    %s213 = scalar_select %p210, %s211, %s212
    %p216 = pneg %p210
    %p217 = scmp.eq.s32.totalorder %s16, 1
    %p218 = por %p216, %p217
    %p219 = scmp.ne.s32.totalorder %s211, %s214
    %p220 = scmp.eq.s32.totalorder %s16, 0
    %p221 = por %p219, %p220
    %p222 = scmp.ne.s32.totalorder %s211, %s214
    %p223 = scmp.eq.s32.totalorder %s21, 1
    %p224 = por %p222, %p223
    %p225 = scmp.ne.s32.totalorder %s214, %s215
    %p226 = scmp.eq.s32.totalorder %s21, 0
    %p227 = por %p225, %p226
    %p228 = scmp.ne.s32.totalorder %s214, %s215
    %p229 = scmp.eq.s32.totalorder %s22, 1
    %p230 = por %p228, %p229
    %p232 = scmp.ne.s32.totalorder %s215, %s231
    %p233 = scmp.eq.s32.totalorder %s22, 0
    %p234 = por %p232, %p233
    %s235 = ssub.s32 %s25, %s34
    %p236 = scmp.eq.s32.totalorder %s235, 0
    %s238 = sadd.s32 %s237, 1
    %s239 = scalar_select %p236, %s237, %s238
    %p242 = pneg %p236
    %p243 = scmp.eq.s32.totalorder %s16, 1
    %p244 = por %p242, %p243
    %p245 = scmp.ne.s32.totalorder %s237, %s240
    %p246 = scmp.eq.s32.totalorder %s16, 0
    %p247 = por %p245, %p246
    %p248 = scmp.ne.s32.totalorder %s237, %s240
    %p249 = scmp.eq.s32.totalorder %s21, 1
    %p250 = por %p248, %p249
    %p251 = scmp.ne.s32.totalorder %s240, %s241
    %p252 = scmp.eq.s32.totalorder %s21, 0
    %p253 = por %p251, %p252
    %p254 = scmp.ne.s32.totalorder %s240, %s241
    %p255 = scmp.eq.s32.totalorder %s22, 1
    %p256 = por %p254, %p255
    %p258 = scmp.ne.s32.totalorder %s241, %s257
    %p259 = scmp.eq.s32.totalorder %s22, 0
    %p260 = por %p258, %p259
    %s262 = sadd.s32 %s261, 1
    %p265 = scmp.eq.s32.totalorder %s16, 1
    %p266 = scmp.ne.s32.totalorder %s261, %s263
    %p267 = scmp.eq.s32.totalorder %s16, 0
    %p268 = por %p266, %p267
    %p269 = scmp.ne.s32.totalorder %s261, %s263
    %p270 = scmp.eq.s32.totalorder %s21, 1
    %p271 = por %p269, %p270
    %p272 = scmp.ne.s32.totalorder %s263, %s264
    %p273 = scmp.eq.s32.totalorder %s21, 0
    %p274 = por %p272, %p273
    %p275 = scmp.ne.s32.totalorder %s263, %s264
    %p276 = scmp.eq.s32.totalorder %s22, 1
    %p277 = por %p275, %p276
    %p279 = scmp.ne.s32.totalorder %s264, %s278
    %p280 = scmp.eq.s32.totalorder %s22, 0
    %p281 = por %p279, %p280
    %s282 = ssub.s32 %s23, %s42
    %s283 = ssub.s32 %s24, %s38
    %s284 = sor.u32 %s282, %s283
    %p285 = scmp.eq.s32.totalorder %s284, 0
    %s287 = sadd.s32 %s286, 1
    %s288 = scalar_select %p285, %s286, %s287
    %p291 = pneg %p285
    %p292 = scmp.eq.s32.totalorder %s16, 1
    %p293 = por %p291, %p292
    %p294 = scmp.ne.s32.totalorder %s286, %s289
    %p295 = scmp.eq.s32.totalorder %s16, 0
    %p296 = por %p294, %p295
    %p297 = scmp.ne.s32.totalorder %s286, %s289
    %p298 = scmp.eq.s32.totalorder %s21, 1
    %p299 = por %p297, %p298
    %p300 = scmp.ne.s32.totalorder %s289, %s290
    %p301 = scmp.eq.s32.totalorder %s21, 0
    %p302 = por %p300, %p301
    %p303 = scmp.ne.s32.totalorder %s289, %s290
    %p304 = scmp.eq.s32.totalorder %s22, 1
    %p305 = por %p303, %p304
    %p307 = scmp.ne.s32.totalorder %s290, %s306
    %p308 = scmp.eq.s32.totalorder %s22, 0
    %p309 = por %p307, %p308
    %p310 = scmp.le.s32.totalorder 1, %s16
    %p311 = scmp.lt.s32.totalorder %s16, 3
    %p312 = pnand %p310, %p311
    %p313 = pneg %p312
    // Predicated region
    $region9: #{esm2_forward.12} parent=5 // pred_check
      _
    $region10: #{esm2_forward.12} parent=5 // pred_check_branch
      %315 = sbr.rel (%p312) target = $region12
    $region11: #{esm2_forward.12} parent=5 // pred_region
      %s316 = ssub.s32 %s16, 1
      // Predicated region
      $region13: #{esm2_forward.12} parent=11 // pred_check
        %p317 = pneg %p112
      $region14: #{esm2_forward.12} parent=11 // pred_check_branch
        %319 = sbr.rel (%p317) target = $region16
      $region15: #{esm2_forward.12} parent=11 // pred_region
        _
      $region16: #{esm2_forward.12} parent=11 // pred_fallthru
        _
      // Predicated region
      $region17: #{esm2_forward.12} parent=11 // pred_check
        %p320 = pneg %p133
      $region18: #{esm2_forward.12} parent=11 // pred_check_branch
        %322 = sbr.rel (%p320) target = $region20
      $region19: #{esm2_forward.12} parent=11 // pred_region
        _
      $region20: #{esm2_forward.12} parent=11 // pred_fallthru
        _
      // Predicated region
      $region21: #{esm2_forward.12} parent=11 // pred_check
        %p323 = pneg %p154
      $region22: #{esm2_forward.12} parent=11 // pred_check_branch
        %325 = sbr.rel (%p323) target = $region24
      $region23: #{esm2_forward.12} parent=11 // pred_region
        _
      $region24: #{esm2_forward.12} parent=11 // pred_fallthru
        _
      // Predicated region
      $region25: #{esm2_forward.12} parent=11 // pred_check
        %p326 = pneg %p175
      $region26: #{esm2_forward.12} parent=11 // pred_check_branch
        %328 = sbr.rel (%p326) target = $region28
      $region27: #{esm2_forward.12} parent=11 // pred_region
        _
      $region28: #{esm2_forward.12} parent=11 // pred_fallthru
        _
      // Predicated region
      $region29: #{esm2_forward.12} parent=11 // pred_check
        %p329 = pneg %p201
      $region30: #{esm2_forward.12} parent=11 // pred_check_branch
        %331 = sbr.rel (%p329) target = $region32
      $region31: #{esm2_forward.12} parent=11 // pred_region
        %s332 = smul.u32 4, %s28
        %p333 = scmp.lt.s32.totalorder %s332, 3
        %s334 = scalar_select %p333, %s332, 3
        %s335 = smul.addr %s334, 4
        %s336 = scalar_lea.vmem %s6, %s335
        %s337 = smul.u32 4, %s28
      $region32: #{esm2_forward.12} parent=11 // pred_fallthru
        _
      // Predicated region
      $region33: #{esm2_forward.12} parent=11 // pred_check
        %p338 = pneg %p227
      $region34: #{esm2_forward.12} parent=11 // pred_check_branch
        %340 = sbr.rel (%p338) target = $region36
      $region35: #{esm2_forward.12} parent=11 // pred_region
        %s341 = smul.u32 4, %s28
        %p342 = scmp.lt.s32.totalorder %s341, 3
        %s343 = scalar_select %p342, %s341, 3
        %s344 = scalar_lea.vmem %s7, %s343
        %s345 = smul.u32 4, %s28
      $region36: #{esm2_forward.12} parent=11 // pred_fallthru
        _
      // Predicated region
      $region37: #{esm2_forward.12} parent=11 // pred_check
        %p346 = pneg %p253
      $region38: #{esm2_forward.12} parent=11 // pred_check_branch
        %348 = sbr.rel (%p346) target = $region40
      $region39: #{esm2_forward.12} parent=11 // pred_region
        %s349 = smul.u32 64, %s28
        %p350 = scmp.lt.s32.totalorder %s349, 63
        %s351 = scalar_select %p350, %s349, 63
        %s352 = smul.addr %s351, 4
        %s353 = scalar_lea.vmem %s8, %s352
        %s354 = smul.u32 64, %s28
      $region40: #{esm2_forward.12} parent=11 // pred_fallthru
        _
      // Predicated region
      $region41: #{esm2_forward.12} parent=11 // pred_check
        %p355 = pneg %p274
      $region42: #{esm2_forward.12} parent=11 // pred_check_branch
        %357 = sbr.rel (%p355) target = $region44
      $region43: #{esm2_forward.12} parent=11 // pred_region
        _
      $region44: #{esm2_forward.12} parent=11 // pred_fallthru
        _
    $region12: #{esm2_forward.12} parent=5 // pred_fallthru
      _
    %p358 = scmp.lt.s32.totalorder %s16, 2
    // Predicated region
    $region45: #{esm2_forward.12} parent=5 // pred_check
      %p359 = pneg %p358
    $region46: #{esm2_forward.12} parent=5 // pred_check_branch
      %361 = sbr.rel (%p359) target = $region48
    $region47: #{esm2_forward.12} parent=5 // pred_region
      // Predicated region
      $region49: #{esm2_forward.12} parent=47 // pred_check
        %p362 = pneg %p57
      $region50: #{esm2_forward.12} parent=47 // pred_check_branch
        %364 = sbr.rel (%p362) target = $region52
      $region51: #{esm2_forward.12} parent=47 // pred_region
        %p365 = scmp.lt.s32.totalorder %s23, 1
        %s366 = scalar_select %p365, %s23, 1
        %p367 = scmp.lt.s32.totalorder %s24, 0
        %s368 = scalar_select %p367, %s24, 0
        %s369 = sadd.s32 %s368, %s366
        %s370 = smul.addr %s369, 8
        %s371 = scalar_lea.vmem %s0, %s370
      $region52: #{esm2_forward.12} parent=47 // pred_fallthru
        _
      // Predicated region
      $region53: #{esm2_forward.12} parent=47 // pred_check
        %p372 = pneg %p85
      $region54: #{esm2_forward.12} parent=47 // pred_check_branch
        %374 = sbr.rel (%p372) target = $region56
      $region55: #{esm2_forward.12} parent=47 // pred_region
        %p375 = scmp.lt.s32.totalorder %s23, 1
        %s376 = scalar_select %p375, %s23, 1
        %p377 = scmp.lt.s32.totalorder %s24, 0
        %s378 = scalar_select %p377, %s24, 0
        %s379 = smul.addr %s376, 4
        %s380 = sadd.s32 %s378, %s379
        %s381 = smul.addr %s380, 4
        %s382 = scalar_lea.vmem %s1, %s381
      $region56: #{esm2_forward.12} parent=47 // pred_fallthru
        _
    $region48: #{esm2_forward.12} parent=5 // pred_fallthru
      _
    %p383 = scmp.le.s32.totalorder 1, %s16
    %p384 = scmp.lt.s32.totalorder %s16, 3
    %p385 = pnand %p383, %p384
    %p386 = pneg %p385
    // Predicated region
    $region57: #{esm2_forward.12} parent=5 // pred_check
      _
    $region58: #{esm2_forward.12} parent=5 // pred_check_branch
      %388 = sbr.rel (%p385) target = $region60
    $region59: #{esm2_forward.12} parent=5 // pred_region
      %s389 = ssub.s32 %s16, 1
      %p390 = scmp.lt.s32.totalorder %s26, 1
      %s391 = scalar_select %p390, %s26, 1
      %p392 = scmp.lt.s32.totalorder %s27, 0
      %s393 = scalar_select %p392, %s27, 0
      %s394 = sadd.s32 %s393, %s391
      %s395 = smul.addr %s394, 8
      %s396 = scalar_lea.vmem %s0, %s395
      %p397 = pneg %p63
      %p398 = pneg %p60
      %p399 = scmp.lt.s32.totalorder %s26, 1
      %s400 = scalar_select %p399, %s26, 1
      %p401 = scmp.lt.s32.totalorder %s27, 0
      %s402 = scalar_select %p401, %s27, 0
      %s403 = smul.addr %s400, 4
      %s404 = sadd.s32 %s402, %s403
      %s405 = smul.addr %s404, 4
      %s406 = scalar_lea.vmem %s1, %s405
      %p407 = pneg %p91
      %p408 = pneg %p88
      %p409 = pneg %p112
      %p410 = pneg %p109
      %p411 = pneg %p133
      %p412 = pneg %p130
      %p413 = pneg %p154
      %p414 = pneg %p151
      %p415 = pneg %p175
      %p416 = pneg %p172
      %s417 = smul.u32 4, %s28
      %p418 = scmp.lt.s32.totalorder %s417, 3
      %s419 = scalar_select %p418, %s417, 3
      %s420 = smul.addr %s419, 4
      %s421 = scalar_lea.vmem %s6, %s420
      %p422 = pneg %p201
      %p423 = pneg %p198
      %s424 = smul.u32 4, %s28
      %p425 = scmp.lt.s32.totalorder %s424, 3
      %s426 = scalar_select %p425, %s424, 3
      %s427 = scalar_lea.vmem %s7, %s426
      %p428 = pneg %p227
      %p429 = pneg %p224
      %s430 = smul.u32 64, %s28
      %p431 = scmp.lt.s32.totalorder %s430, 63
      %s432 = scalar_select %p431, %s430, 63
      %s433 = smul.addr %s432, 4
      %s434 = scalar_lea.vmem %s8, %s433
      %p435 = pneg %p253
      %p436 = pneg %p250
      %p437 = pneg %p274
      %p438 = pneg %p271
      %p439 = pneg %p302
      %p440 = pneg %p299
      %p441 = scmp.lt.s32.totalorder %s26, 1
      %s442 = scalar_select %p441, %s26, 1
      %p443 = scmp.lt.s32.totalorder %s27, 0
      %s444 = scalar_select %p443, %s27, 0
      %s445 = sadd.s32 %s444, %s442
      %s446 = smul.addr %s445, 8
      %s447 = scalar_lea.vmem %s10, %s446
      %p448 = scmp.lt.s32.totalorder %s26, 1
      %s449 = scalar_select %p448, %s26, 1
      %p450 = scmp.lt.s32.totalorder %s27, 0
      %s451 = scalar_select %p450, %s27, 0
      %s452 = sadd.s32 %s451, %s449
      %s453 = smul.addr %s452, 8
      %s454 = scalar_lea.vmem %s0, %s453
      %p455 = scmp.lt.s32.totalorder %s26, 1
      %s456 = scalar_select %p455, %s26, 1
      %p457 = scmp.lt.s32.totalorder %s27, 0
      %s458 = scalar_select %p457, %s27, 0
      %s459 = smul.addr %s456, 4
      %s460 = sadd.s32 %s458, %s459
      %s461 = smul.addr %s460, 4
      %s462 = scalar_lea.vmem %s1, %s461
      %s463 = smul.u32 4, %s28
      %p464 = scmp.lt.s32.totalorder %s463, 3
      %s465 = scalar_select %p464, %s463, 3
      %s466 = smul.addr %s465, 4
      %s467 = scalar_lea.vmem %s6, %s466
      %s468 = smul.u32 4, %s28
      %s469 = smul.u32 4, %s28
      %p470 = scmp.lt.s32.totalorder %s469, 3
      %s471 = scalar_select %p470, %s469, 3
      %s472 = scalar_lea.vmem %s7, %s471
      %s473 = smul.u32 4, %s28
      %s474 = smul.u32 64, %s28
      %p475 = scmp.lt.s32.totalorder %s474, 63
      %s476 = scalar_select %p475, %s474, 63
      %s477 = smul.addr %s476, 4
      %s478 = scalar_lea.vmem %s8, %s477
      %s479 = smul.u32 64, %s28
      %p480 = scmp.lt.s32.totalorder %s26, 1
      %s481 = scalar_select %p480, %s26, 1
      %p482 = scmp.lt.s32.totalorder %s27, 0
      %s483 = scalar_select %p482, %s27, 0
      %s484 = sadd.s32 %s483, %s481
      %s485 = smul.addr %s484, 8
      %s486 = scalar_lea.vmem %s10, %s485
      %p488 = scmp.eq.s32.totalorder %s28, 0
      // Predicated region
      $region61: #{esm2_forward.12} parent=59 // pred_check
        %p489 = pneg %p488
      $region62: #{esm2_forward.12} parent=59 // pred_check_branch
        %491 = sbr.rel (%p489) target = $region64
      $region63: #{esm2_forward.12} parent=59 // pred_region
        %v492 = vld [vmem:[%s462] sm:$0xf]
        %s493 = scalar_lea.vmem %s462, 4
        %v494 = vld [vmem:[%s493] sm:$0xf]
        %s495 = scalar_lea.vmem %s462, 8
        %v496 = vld [vmem:[%s495] sm:$0xf]
        %s497 = scalar_lea.vmem %s462, 12
        %v498 = vld [vmem:[%s497] sm:$0xf]
        %v500 = vunpack.c.l.b16 %v494
        %v501 = vpack.c.b16 %v500, %v500
        %502 = vrot.lane.b32.xlu0 %v501, 32
        %v503 = vpop.permute.xlu0 %502
        %v505 = vunpack.c.l.b16 %v496
        %v506 = vpack.c.b16 %v505, %v505
        %507 = vrot.lane.b32.xlu0 %v506, 64
        %v508 = vpop.permute.xlu0 %507
        %v510 = vunpack.c.l.b16 %v498
        %v511 = vpack.c.b16 %v510, %v510
        %512 = vrot.lane.b32.xlu0 %v511, 96
        %v513 = vpop.permute.xlu0 %512
        %vm514 = vcmask 261120
        %v517 = vsel %vm514, %v492, %v503
        %vm518 = vcmask 523264
        %v520 = vsel %vm518, %v517, %v508
        %vm521 = vcmask 785408
        %v523 = vsel %vm521, %v520, %v513
        %v525 = vld [vmem:[%s2] sm:$0xf]
        %v526 = vld [vmem:[%s2 + $0x4] sm:$0xf]
        %v527 = vld [vmem:[%s2 + $0x8] sm:$0xf]
        %v528 = vld [vmem:[%s2 + $0xc] sm:$0xf]
        %v529 = vld [vmem:[%s2 + $0x10] sm:$0xf]
        %v530 = vld [vmem:[%s2 + $0x14] sm:$0xf]
        %v531 = vld [vmem:[%s2 + $0x18] sm:$0xf]
        %v532 = vld [vmem:[%s2 + $0x1c] sm:$0xf]
        %v533 = vld [vmem:[%s2 + $0x20] sm:$0xf]
        %v534 = vld [vmem:[%s2 + $0x24] sm:$0xf]
        %v535 = vld [vmem:[%s2 + $0x28] sm:$0xf]
        %v536 = vld [vmem:[%s2 + $0x2c] sm:$0xf]
        %v537 = vld [vmem:[%s2 + $0x30] sm:$0xf]
        %v538 = vld [vmem:[%s2 + $0x34] sm:$0xf]
        %v539 = vld [vmem:[%s2 + $0x38] sm:$0xf]
        %v540 = vld [vmem:[%s2 + $0x3c] sm:$0xf]
        %v541 = vld [vmem:[%s3] sm:$0x1]
        %v543 = vlaneseq
        %v544 = vshrl.u32 %v543, 7
        %v545 = vsub.s32 0, %v544
        %v546 = vrot.slane %v541, %v545
        %v564 = vunpack.c.l.b16 %v525
        %v565 = vunpack.c.l.b16 %v526
        %v566 = vunpack.c.l.b16 %v527
        %v567 = vunpack.c.l.b16 %v528
        %v568 = vunpack.c.l.b16 %v529
        %v569 = vunpack.c.l.b16 %v530
        %v570 = vunpack.c.l.b16 %v531
        %v571 = vunpack.c.l.b16 %v532
        %v572 = vunpack.c.l.b16 %v533
        %v573 = vunpack.c.l.b16 %v534
        %v574 = vunpack.c.l.b16 %v535
        %v575 = vunpack.c.l.b16 %v536
        %v576 = vunpack.c.l.b16 %v537
        %v577 = vunpack.c.l.b16 %v538
        %v578 = vunpack.c.l.b16 %v539
        %v579 = vunpack.c.l.b16 %v540
        %v580 = vpack.c.b16 %v565, %v564
        %v581 = vpack.c.b16 %v567, %v566
        %v582 = vpack.c.b16 %v569, %v568
        %v583 = vpack.c.b16 %v571, %v570
        %v584 = vpack.c.b16 %v573, %v572
        %v585 = vpack.c.b16 %v575, %v574
        %v586 = vpack.c.b16 %v577, %v576
        %v587 = vpack.c.b16 %v579, %v578
        %596 = vmatprep.subr.bf16.mxu0 0
        %597 = vmatpush1.bf16.msra.mxu0 %v587
        %598 = vmatprep.subr.bf16.mxu0 0
        %599 = vmatpush1.bf16.msra.mxu0 %v586
        %600 = vmatprep.subr.bf16.mxu0 0
        %601 = vmatpush1.bf16.msra.mxu0 %v585
        %602 = vmatprep.subr.bf16.mxu0 0
        %603 = vmatpush1.bf16.msra.mxu0 %v584
        %604 = vmatprep.subr.bf16.mxu0 0
        %605 = vmatpush1.bf16.msra.mxu0 %v583
        %606 = vmatprep.subr.bf16.mxu0 0
        %607 = vmatpush1.bf16.msra.mxu0 %v582
        %608 = vmatprep.subr.bf16.mxu0 0
        %609 = vmatpush1.bf16.msra.mxu0 %v581
        %610 = vmatprep.subr.bf16.mxu0 0
        %611 = vmatpush1.bf16.msra.mxu0 %v580
        %612 = vmatprep.subr.bf16.mxu0 0
        %613 = vmatpush2.bf16.msra.mxu0 0
        %614 = vmatprep.subr.bf16.mxu0 0
        %615 = vmatpush2.bf16.msra.mxu0 0
        %616 = vmatprep.subr.bf16.mxu0 0
        %617 = vmatpush2.bf16.msra.mxu0 0
        %618 = vmatprep.subr.bf16.mxu0 0
        %619 = vmatpush2.bf16.msra.mxu0 0
        %620 = vmatprep.subr.bf16.mxu0 0
        %621 = vmatpush2.bf16.msra.mxu0 0
        %622 = vmatprep.subr.bf16.mxu0 0
        %623 = vmatpush2.bf16.msra.mxu0 0
        %624 = vmatprep.subr.bf16.mxu0 0
        %625 = vmatpush2.bf16.msra.mxu0 0
        %626 = vmatprep.subr.bf16.mxu0 0
        %627 = vmatpush2.bf16.msra.mxu0 0
        %628 = vmatprep.mubr.bf16.mxu0 0
        %629 = vmatmul.mubr.bf16.gmra.mxu0 %v523
        %v630 = vpop.f32.mrf.mxu0
        %v631 = vadd.f32 %v546, %v630
        %v632 = vpop.f32.mrf.mxu0
        %v633 = vpop.f32.mrf.mxu0
        %v634 = vpop.f32.mrf.mxu0
        %635 = vdwg.mxu0
        %v636 = vld [vmem:[%s454] sm:$0xff]
        %v637 = vadd.f32 %v636, %v631
        %638 = vst [vmem:[#allocation4] sm:$0xff] %v637
        %v639 = vld [vmem:[%s4] sm:$0x1]
        %v640 = vld [vmem:[%s5] sm:$0x1]
        %641 = vadd.xlane.f32.xlu0 %v637
        %v642 = vpop.xlane.xlu0 %641
        %v643 = vrcp.pop 128.0
        %v644 = vmul.f32 %v642, %v643
        %v645 = vsub.f32 %v637, %v644
        %v646 = vmul.f32 %v645, %v645
        %647 = vadd.xlane.f32.xlu0 %v646
        %v648 = vpop.xlane.xlu0 %647
        %v649 = vmul.f32 %v648, %v643
        %v650 = vadd.f32 %v649, 1e-12
        %v651 = vrsqrt.pop %v650
        %v652 = vmul.f32 %v645, %v651
        %v654 = vlaneseq
        %v655 = vshrl.u32 %v654, 7
        %v656 = vsub.s32 0, %v655
        %v657 = vrot.slane %v639, %v656
        %v659 = vmul.f32 %v652, %v657
        %v661 = vlaneseq
        %v662 = vshrl.u32 %v661, 7
        %v663 = vsub.s32 0, %v662
        %v664 = vrot.slane %v640, %v663
        %v666 = vadd.f32 %v659, %v664
        %v667 = vpack.c.bf16 %v666, %v666
        %668 = vst [vmem:[#allocation3] sm:$0xf] %v667
        %669 = vst [vmem:[#allocation2] sm:$0xff] 0.0
      $region64: #{esm2_forward.12} parent=59 // pred_fallthru
        _
      %v670 = vld [vmem:[#allocation3] sm:$0xf]
      %v671 = vld [vmem:[%s467] sm:$0xff]
      %v672 = vld [vmem:[%s467 + $0x8] sm:$0xff]
      %v673 = vld [vmem:[%s467 + $0x10] sm:$0xff]
      %v674 = vld [vmem:[%s467 + $0x18] sm:$0xff]
      %v675 = vld [vmem:[%s467 + $0x20] sm:$0xff]
      %v676 = vld [vmem:[%s467 + $0x28] sm:$0xff]
      %v677 = vld [vmem:[%s467 + $0x30] sm:$0xff]
      %v678 = vld [vmem:[%s467 + $0x38] sm:$0xff]
      %v679 = vld [vmem:[%s467 + $0x40] sm:$0xff]
      %v680 = vld [vmem:[%s467 + $0x48] sm:$0xff]
      %v681 = vld [vmem:[%s467 + $0x50] sm:$0xff]
      %v682 = vld [vmem:[%s467 + $0x58] sm:$0xff]
      %v683 = vld [vmem:[%s467 + $0x60] sm:$0xff]
      %v684 = vld [vmem:[%s467 + $0x68] sm:$0xff]
      %v685 = vld [vmem:[%s467 + $0x70] sm:$0xff]
      %v686 = vld [vmem:[%s467 + $0x78] sm:$0xff]
      %v687 = vld [vmem:[%s467 + $0x80] sm:$0xff]
      %v688 = vld [vmem:[%s467 + $0x88] sm:$0xff]
      %v689 = vld [vmem:[%s467 + $0x90] sm:$0xff]
      %v690 = vld [vmem:[%s467 + $0x98] sm:$0xff]
      %v691 = vld [vmem:[%s467 + $0xa0] sm:$0xff]
      %v692 = vld [vmem:[%s467 + $0xa8] sm:$0xff]
      %v693 = vld [vmem:[%s467 + $0xb0] sm:$0xff]
      %v694 = vld [vmem:[%s467 + $0xb8] sm:$0xff]
      %v695 = vld [vmem:[%s467 + $0xc0] sm:$0xff]
      %v696 = vld [vmem:[%s467 + $0xc8] sm:$0xff]
      %v697 = vld [vmem:[%s467 + $0xd0] sm:$0xff]
      %v698 = vld [vmem:[%s467 + $0xd8] sm:$0xff]
      %v699 = vld [vmem:[%s467 + $0xe0] sm:$0xff]
      %v700 = vld [vmem:[%s467 + $0xe8] sm:$0xff]
      %v701 = vld [vmem:[%s467 + $0xf0] sm:$0xff]
      %v702 = vld [vmem:[%s467 + $0xf8] sm:$0xff]
      %v703 = vld [vmem:[%s472] sm:$0xf]
      %v705 = vlaneseq
      %v706 = vshrl.u32 %v705, 7
      %v707 = vsub.s32 0, %v706
      %v708 = vrot.slane %v703, %v707
      %v709 = vlaneseq
      %v710 = vshrl.u32 %v709, 7
      %v711 = vsub.s32 1, %v710
      %v712 = vrot.slane %v703, %v711
      %v713 = vlaneseq
      %v714 = vshrl.u32 %v713, 7
      %v715 = vsub.s32 2, %v714
      %v716 = vrot.slane %v703, %v715
      %v717 = vlaneseq
      %v718 = vshrl.u32 %v717, 7
      %v719 = vsub.s32 3, %v718
      %v720 = vrot.slane %v703, %v719
      %v757 = vunpack.c.l.b16 %v671
      %v758 = vunpack.c.h.b16 %v671
      %v759 = vunpack.c.l.b16 %v672
      %v760 = vunpack.c.h.b16 %v672
      %v761 = vunpack.c.l.b16 %v673
      %v762 = vunpack.c.h.b16 %v673
      %v763 = vunpack.c.l.b16 %v674
      %v764 = vunpack.c.h.b16 %v674
      %v765 = vunpack.c.l.b16 %v675
      %v766 = vunpack.c.h.b16 %v675
      %v767 = vunpack.c.l.b16 %v676
      %v768 = vunpack.c.h.b16 %v676
      %v769 = vunpack.c.l.b16 %v677
      %v770 = vunpack.c.h.b16 %v677
      %v771 = vunpack.c.l.b16 %v678
      %v772 = vunpack.c.h.b16 %v678
      %v773 = vunpack.c.l.b16 %v679
      %v774 = vunpack.c.h.b16 %v679
      %v775 = vunpack.c.l.b16 %v680
      %v776 = vunpack.c.h.b16 %v680
      %v777 = vunpack.c.l.b16 %v681
      %v778 = vunpack.c.h.b16 %v681
      %v779 = vunpack.c.l.b16 %v682
      %v780 = vunpack.c.h.b16 %v682
      %v781 = vunpack.c.l.b16 %v683
      %v782 = vunpack.c.h.b16 %v683
      %v783 = vunpack.c.l.b16 %v684
      %v784 = vunpack.c.h.b16 %v684
      %v785 = vunpack.c.l.b16 %v685
      %v786 = vunpack.c.h.b16 %v685
      %v787 = vunpack.c.l.b16 %v686
      %v788 = vunpack.c.h.b16 %v686
      %v789 = vunpack.c.l.b16 %v687
      %v790 = vunpack.c.h.b16 %v687
      %v791 = vunpack.c.l.b16 %v688
      %v792 = vunpack.c.h.b16 %v688
      %v793 = vunpack.c.l.b16 %v689
      %v794 = vunpack.c.h.b16 %v689
      %v795 = vunpack.c.l.b16 %v690
      %v796 = vunpack.c.h.b16 %v690
      %v797 = vunpack.c.l.b16 %v691
      %v798 = vunpack.c.h.b16 %v691
      %v799 = vunpack.c.l.b16 %v692
      %v800 = vunpack.c.h.b16 %v692
      %v801 = vunpack.c.l.b16 %v693
      %v802 = vunpack.c.h.b16 %v693
      %v803 = vunpack.c.l.b16 %v694
      %v804 = vunpack.c.h.b16 %v694
      %v805 = vunpack.c.l.b16 %v695
      %v806 = vunpack.c.h.b16 %v695
      %v807 = vunpack.c.l.b16 %v696
      %v808 = vunpack.c.h.b16 %v696
      %v809 = vunpack.c.l.b16 %v697
      %v810 = vunpack.c.h.b16 %v697
      %v811 = vunpack.c.l.b16 %v698
      %v812 = vunpack.c.h.b16 %v698
      %v813 = vunpack.c.l.b16 %v699
      %v814 = vunpack.c.h.b16 %v699
      %v815 = vunpack.c.l.b16 %v700
      %v816 = vunpack.c.h.b16 %v700
      %v817 = vunpack.c.l.b16 %v701
      %v818 = vunpack.c.h.b16 %v701
      %v819 = vunpack.c.l.b16 %v702
      %v820 = vunpack.c.h.b16 %v702
      %v821 = vpack.c.b16 %v761, %v757
      %v822 = vpack.c.b16 %v762, %v758
      %v823 = vpack.c.b16 %v763, %v759
      %v824 = vpack.c.b16 %v764, %v760
      %v825 = vpack.c.b16 %v769, %v765
      %v826 = vpack.c.b16 %v770, %v766
      %v827 = vpack.c.b16 %v771, %v767
      %v828 = vpack.c.b16 %v772, %v768
      %v829 = vpack.c.b16 %v777, %v773
      %v830 = vpack.c.b16 %v778, %v774
      %v831 = vpack.c.b16 %v779, %v775
      %v832 = vpack.c.b16 %v780, %v776
      %v833 = vpack.c.b16 %v785, %v781
      %v834 = vpack.c.b16 %v786, %v782
      %v835 = vpack.c.b16 %v787, %v783
      %v836 = vpack.c.b16 %v788, %v784
      %v837 = vpack.c.b16 %v793, %v789
      %v838 = vpack.c.b16 %v794, %v790
      %v839 = vpack.c.b16 %v795, %v791
      %v840 = vpack.c.b16 %v796, %v792
      %v841 = vpack.c.b16 %v801, %v797
      %v842 = vpack.c.b16 %v802, %v798
      %v843 = vpack.c.b16 %v803, %v799
      %v844 = vpack.c.b16 %v804, %v800
      %v845 = vpack.c.b16 %v809, %v805
      %v846 = vpack.c.b16 %v810, %v806
      %v847 = vpack.c.b16 %v811, %v807
      %v848 = vpack.c.b16 %v812, %v808
      %v849 = vpack.c.b16 %v817, %v813
      %v850 = vpack.c.b16 %v818, %v814
      %v851 = vpack.c.b16 %v819, %v815
      %v852 = vpack.c.b16 %v820, %v816
      %885 = vmatprep.subr.bf16.mxu0 %v850
      %886 = vmatpush1.bf16.msra.mxu0 %v849
      %887 = vmatprep.subr.bf16.mxu0 %v846
      %888 = vmatpush1.bf16.msra.mxu0 %v845
      %889 = vmatprep.subr.bf16.mxu0 %v842
      %890 = vmatpush1.bf16.msra.mxu0 %v841
      %891 = vmatprep.subr.bf16.mxu0 %v838
      %892 = vmatpush1.bf16.msra.mxu0 %v837
      %893 = vmatprep.subr.bf16.mxu0 %v834
      %894 = vmatpush1.bf16.msra.mxu0 %v833
      %895 = vmatprep.subr.bf16.mxu0 %v830
      %896 = vmatpush1.bf16.msra.mxu0 %v829
      %897 = vmatprep.subr.bf16.mxu0 %v826
      %898 = vmatpush1.bf16.msra.mxu0 %v825
      %899 = vmatprep.subr.bf16.mxu0 %v822
      %900 = vmatpush1.bf16.msra.mxu0 %v821
      %901 = vmatprep.subr.bf16.mxu0 0
      %902 = vmatpush2.bf16.msra.mxu0 0
      %903 = vmatprep.subr.bf16.mxu0 0
      %904 = vmatpush2.bf16.msra.mxu0 0
      %905 = vmatprep.subr.bf16.mxu0 0
      %906 = vmatpush2.bf16.msra.mxu0 0
      %907 = vmatprep.subr.bf16.mxu0 0
      %908 = vmatpush2.bf16.msra.mxu0 0
      %909 = vmatprep.subr.bf16.mxu0 0
      %910 = vmatpush2.bf16.msra.mxu0 0
      %911 = vmatprep.subr.bf16.mxu0 0
      %912 = vmatpush2.bf16.msra.mxu0 0
      %913 = vmatprep.subr.bf16.mxu0 0
      %914 = vmatpush2.bf16.msra.mxu0 0
      %915 = vmatprep.subr.bf16.mxu0 0
      %916 = vmatpush2.bf16.msra.mxu0 0
      %917 = vmatprep.mubr.bf16.mxu0 0
      %918 = vmatmul.mubr.bf16.gmra.mxu0 %v670
      %v919 = vpop.f32.mrf.mxu0
      %v920 = vadd.f32 %v708, %v919
      %v921 = vpop.f32.mrf.mxu0
      %v922 = vadd.f32 %v712, %v921
      %v923 = vpop.f32.mrf.mxu0
      %v924 = vpop.f32.mrf.mxu0
      %925 = vdwg.mxu0
      %926 = vmatprep.subr.bf16.mxu0 %v852
      %927 = vmatpush1.bf16.msra.mxu0 %v851
      %928 = vmatprep.subr.bf16.mxu0 %v848
      %929 = vmatpush1.bf16.msra.mxu0 %v847
      %930 = vmatprep.subr.bf16.mxu0 %v844
      %931 = vmatpush1.bf16.msra.mxu0 %v843
      %932 = vmatprep.subr.bf16.mxu0 %v840
      %933 = vmatpush1.bf16.msra.mxu0 %v839
      %934 = vmatprep.subr.bf16.mxu0 %v836
      %935 = vmatpush1.bf16.msra.mxu0 %v835
      %936 = vmatprep.subr.bf16.mxu0 %v832
      %937 = vmatpush1.bf16.msra.mxu0 %v831
      %938 = vmatprep.subr.bf16.mxu0 %v828
      %939 = vmatpush1.bf16.msra.mxu0 %v827
      %940 = vmatprep.subr.bf16.mxu0 %v824
      %941 = vmatpush1.bf16.msra.mxu0 %v823
      %942 = vmatprep.subr.bf16.mxu0 0
      %943 = vmatpush2.bf16.msra.mxu0 0
      %944 = vmatprep.subr.bf16.mxu0 0
      %945 = vmatpush2.bf16.msra.mxu0 0
      %946 = vmatprep.subr.bf16.mxu0 0
      %947 = vmatpush2.bf16.msra.mxu0 0
      %948 = vmatprep.subr.bf16.mxu0 0
      %949 = vmatpush2.bf16.msra.mxu0 0
      %950 = vmatprep.subr.bf16.mxu0 0
      %951 = vmatpush2.bf16.msra.mxu0 0
      %952 = vmatprep.subr.bf16.mxu0 0
      %953 = vmatpush2.bf16.msra.mxu0 0
      %954 = vmatprep.subr.bf16.mxu0 0
      %955 = vmatpush2.bf16.msra.mxu0 0
      %956 = vmatprep.subr.bf16.mxu0 0
      %957 = vmatpush2.bf16.msra.mxu0 0
      %958 = vmatprep.mubr.bf16.mxu0 0
      %959 = vmatmul.mubr.bf16.gmra.mxu0 %v670
      %v960 = vpop.f32.mrf.mxu0
      %v961 = vadd.f32 %v716, %v960
      %v962 = vpop.f32.mrf.mxu0
      %v963 = vadd.f32 %v720, %v962
      %v964 = vpop.f32.mrf.mxu0
      %v965 = vpop.f32.mrf.mxu0
      %966 = vdwg.mxu0
      %v967 = vmul.f32 %v920, 0.5
      %v968 = vmul.f32 %v922, 0.5
      %v969 = vmul.f32 %v961, 0.5
      %v970 = vmul.f32 %v963, 0.5
      %v971 = vrcp.pop 1.4142135
      %v972 = vmul.f32 %v920, %v971
      %v973 = vmul.f32 %v922, %v971
      %v974 = vmul.f32 %v961, %v971
      %v975 = vmul.f32 %v963, %v971
      %vm976 = vcmp.ge.f32.partialorder %v972, 0.0
      %vm977 = vcmp.ge.f32.partialorder %v973, 0.0
      %vm978 = vcmp.ge.f32.partialorder %v974, 0.0
      %vm979 = vcmp.ge.f32.partialorder %v975, 0.0
      %v980 = vsel %vm976, 1.0, -1.0
      %v981 = vsel %vm977, 1.0, -1.0
      %v982 = vsel %vm978, 1.0, -1.0
      %v983 = vsel %vm979, 1.0, -1.0
      %v984 = vand.u32 2147483647, %v972
      %v985 = vand.u32 2147483647, %v973
      %v986 = vand.u32 2147483647, %v974
      %v987 = vand.u32 2147483647, %v975
      %v988 = vmul.f32 %v984, 0.3275911
      %v989 = vmul.f32 %v985, 0.3275911
      %v990 = vmul.f32 %v986, 0.3275911
      %v991 = vmul.f32 %v987, 0.3275911
      %v992 = vadd.f32 %v988, 1.0
      %v993 = vadd.f32 %v989, 1.0
      %v994 = vadd.f32 %v990, 1.0
      %v995 = vadd.f32 %v991, 1.0
      %v996 = vrcp.pop %v992
      %v997 = vrcp.pop %v993
      %v998 = vrcp.pop %v994
      %v999 = vrcp.pop %v995
      %v1000 = vmul.f32 %v996, 1.0614054
      %v1001 = vmul.f32 %v997, 1.0614054
      %v1002 = vmul.f32 %v998, 1.0614054
      %v1003 = vmul.f32 %v999, 1.0614054
      %v1004 = vadd.f32 %v1000, -1.4531521
      %v1005 = vadd.f32 %v1001, -1.4531521
      %v1006 = vadd.f32 %v1002, -1.4531521
      %v1007 = vadd.f32 %v1003, -1.4531521
      %v1008 = vmul.f32 %v1004, %v996
      %v1009 = vmul.f32 %v1005, %v997
      %v1010 = vmul.f32 %v1006, %v998
      %v1011 = vmul.f32 %v1007, %v999
      %v1012 = vadd.f32 %v1008, 1.4214138
      %v1013 = vadd.f32 %v1009, 1.4214138
      %v1014 = vadd.f32 %v1010, 1.4214138
      %v1015 = vadd.f32 %v1011, 1.4214138
      %v1016 = vmul.f32 %v1012, %v996
      %v1017 = vmul.f32 %v1013, %v997
      %v1018 = vmul.f32 %v1014, %v998
      %v1019 = vmul.f32 %v1015, %v999
      %v1020 = vadd.f32 %v1016, -0.28449672
      %v1021 = vadd.f32 %v1017, -0.28449672
      %v1022 = vadd.f32 %v1018, -0.28449672
      %v1023 = vadd.f32 %v1019, -0.28449672
      %v1024 = vmul.f32 %v1020, %v996
      %v1025 = vmul.f32 %v1021, %v997
      %v1026 = vmul.f32 %v1022, %v998
      %v1027 = vmul.f32 %v1023, %v999
      %v1028 = vadd.f32 %v1024, 0.2548296
      %v1029 = vadd.f32 %v1025, 0.2548296
      %v1030 = vadd.f32 %v1026, 0.2548296
      %v1031 = vadd.f32 %v1027, 0.2548296
      %v1032 = vmul.f32 %v1028, %v996
      %v1033 = vmul.f32 %v1029, %v997
      %v1034 = vmul.f32 %v1030, %v998
      %v1035 = vmul.f32 %v1031, %v999
      %v1036 = vsub.f32 0.0, %v984
      %v1037 = vsub.f32 0.0, %v985
      %v1038 = vsub.f32 0.0, %v986
      %v1039 = vsub.f32 0.0, %v987
      %v1040 = vmul.f32 %v1036, %v984
      %v1041 = vmul.f32 %v1037, %v985
      %v1042 = vmul.f32 %v1038, %v986
      %v1043 = vmul.f32 %v1039, %v987
      %v1044 = vmul.f32 %v1040, 1.442695
      %v1045 = vpow.pop %v1044
      %v1046 = vmul.f32 %v1041, 1.442695
      %v1047 = vpow.pop %v1046
      %v1048 = vmul.f32 %v1042, 1.442695
      %v1049 = vpow.pop %v1048
      %v1050 = vmul.f32 %v1043, 1.442695
      %v1051 = vpow.pop %v1050
      %v1052 = vmul.f32 %v1032, %v1045
      %v1053 = vmul.f32 %v1033, %v1047
      %v1054 = vmul.f32 %v1034, %v1049
      %v1055 = vmul.f32 %v1035, %v1051
      %v1056 = vsub.f32 1.0, %v1052
      %v1057 = vsub.f32 1.0, %v1053
      %v1058 = vsub.f32 1.0, %v1054
      %v1059 = vsub.f32 1.0, %v1055
      %v1060 = vmul.f32 %v980, %v1056
      %v1061 = vmul.f32 %v981, %v1057
      %v1062 = vmul.f32 %v982, %v1058
      %v1063 = vmul.f32 %v983, %v1059
      %v1064 = vadd.f32 %v1060, 1.0
      %v1065 = vadd.f32 %v1061, 1.0
      %v1066 = vadd.f32 %v1062, 1.0
      %v1067 = vadd.f32 %v1063, 1.0
      %v1068 = vmul.f32 %v967, %v1064
      %v1069 = vmul.f32 %v968, %v1065
      %v1070 = vmul.f32 %v969, %v1066
      %v1071 = vmul.f32 %v970, %v1067
      %v1072 = vpack.c.bf16 %v1068, %v1068
      %v1073 = vpack.c.bf16 %v1069, %v1069
      %v1074 = vpack.c.bf16 %v1070, %v1070
      %v1075 = vpack.c.bf16 %v1071, %v1071
      %v1076 = vld [vmem:[#allocation2] sm:$0xff]
      %v1077 = vld [vmem:[%s478] sm:$0xf]
      %v1078 = vld [vmem:[%s478 + $0x4] sm:$0xf]
      %v1079 = vld [vmem:[%s478 + $0x8] sm:$0xf]
      %v1080 = vld [vmem:[%s478 + $0xc] sm:$0xf]
      %v1081 = vld [vmem:[%s478 + $0x10] sm:$0xf]
      %v1082 = vld [vmem:[%s478 + $0x14] sm:$0xf]
      %v1083 = vld [vmem:[%s478 + $0x18] sm:$0xf]
      %v1084 = vld [vmem:[%s478 + $0x1c] sm:$0xf]
      %v1085 = vld [vmem:[%s478 + $0x20] sm:$0xf]
      %v1086 = vld [vmem:[%s478 + $0x24] sm:$0xf]
      %v1087 = vld [vmem:[%s478 + $0x28] sm:$0xf]
      %v1088 = vld [vmem:[%s478 + $0x2c] sm:$0xf]
      %v1089 = vld [vmem:[%s478 + $0x30] sm:$0xf]
      %v1090 = vld [vmem:[%s478 + $0x34] sm:$0xf]
      %v1091 = vld [vmem:[%s478 + $0x38] sm:$0xf]
      %v1092 = vld [vmem:[%s478 + $0x3c] sm:$0xf]
      %v1093 = vld [vmem:[%s478 + $0x40] sm:$0xf]
      %v1094 = vld [vmem:[%s478 + $0x44] sm:$0xf]
      %v1095 = vld [vmem:[%s478 + $0x48] sm:$0xf]
      %v1096 = vld [vmem:[%s478 + $0x4c] sm:$0xf]
      %v1097 = vld [vmem:[%s478 + $0x50] sm:$0xf]
      %v1098 = vld [vmem:[%s478 + $0x54] sm:$0xf]
      %v1099 = vld [vmem:[%s478 + $0x58] sm:$0xf]
      %v1100 = vld [vmem:[%s478 + $0x5c] sm:$0xf]
      %v1101 = vld [vmem:[%s478 + $0x60] sm:$0xf]
      %v1102 = vld [vmem:[%s478 + $0x64] sm:$0xf]
      %v1103 = vld [vmem:[%s478 + $0x68] sm:$0xf]
      %v1104 = vld [vmem:[%s478 + $0x6c] sm:$0xf]
      %v1105 = vld [vmem:[%s478 + $0x70] sm:$0xf]
      %v1106 = vld [vmem:[%s478 + $0x74] sm:$0xf]
      %v1107 = vld [vmem:[%s478 + $0x78] sm:$0xf]
      %v1108 = vld [vmem:[%s478 + $0x7c] sm:$0xf]
      %v1109 = vld [vmem:[%s478 + $0x80] sm:$0xf]
      %v1110 = vld [vmem:[%s478 + $0x84] sm:$0xf]
      %v1111 = vld [vmem:[%s478 + $0x88] sm:$0xf]
      %v1112 = vld [vmem:[%s478 + $0x8c] sm:$0xf]
      %v1113 = vld [vmem:[%s478 + $0x90] sm:$0xf]
      %v1114 = vld [vmem:[%s478 + $0x94] sm:$0xf]
      %v1115 = vld [vmem:[%s478 + $0x98] sm:$0xf]
      %v1116 = vld [vmem:[%s478 + $0x9c] sm:$0xf]
      %v1117 = vld [vmem:[%s478 + $0xa0] sm:$0xf]
      %v1118 = vld [vmem:[%s478 + $0xa4] sm:$0xf]
      %v1119 = vld [vmem:[%s478 + $0xa8] sm:$0xf]
      %v1120 = vld [vmem:[%s478 + $0xac] sm:$0xf]
      %v1121 = vld [vmem:[%s478 + $0xb0] sm:$0xf]
      %v1122 = vld [vmem:[%s478 + $0xb4] sm:$0xf]
      %v1123 = vld [vmem:[%s478 + $0xb8] sm:$0xf]
      %v1124 = vld [vmem:[%s478 + $0xbc] sm:$0xf]
      %v1125 = vld [vmem:[%s478 + $0xc0] sm:$0xf]
      %v1126 = vld [vmem:[%s478 + $0xc4] sm:$0xf]
      %v1127 = vld [vmem:[%s478 + $0xc8] sm:$0xf]
      %v1128 = vld [vmem:[%s478 + $0xcc] sm:$0xf]
      %v1129 = vld [vmem:[%s478 + $0xd0] sm:$0xf]
      %v1130 = vld [vmem:[%s478 + $0xd4] sm:$0xf]
      %v1131 = vld [vmem:[%s478 + $0xd8] sm:$0xf]
      %v1132 = vld [vmem:[%s478 + $0xdc] sm:$0xf]
      %v1133 = vld [vmem:[%s478 + $0xe0] sm:$0xf]
      %v1134 = vld [vmem:[%s478 + $0xe4] sm:$0xf]
      %v1135 = vld [vmem:[%s478 + $0xe8] sm:$0xf]
      %v1136 = vld [vmem:[%s478 + $0xec] sm:$0xf]
      %v1137 = vld [vmem:[%s478 + $0xf0] sm:$0xf]
      %v1138 = vld [vmem:[%s478 + $0xf4] sm:$0xf]
      %v1139 = vld [vmem:[%s478 + $0xf8] sm:$0xf]
      %v1140 = vld [vmem:[%s478 + $0xfc] sm:$0xf]
      %v1205 = vunpack.c.l.b16 %v1077
      %v1206 = vunpack.c.l.b16 %v1078
      %v1207 = vunpack.c.l.b16 %v1079
      %v1208 = vunpack.c.l.b16 %v1080
      %v1209 = vunpack.c.l.b16 %v1081
      %v1210 = vunpack.c.l.b16 %v1082
      %v1211 = vunpack.c.l.b16 %v1083
      %v1212 = vunpack.c.l.b16 %v1084
      %v1213 = vunpack.c.l.b16 %v1085
      %v1214 = vunpack.c.l.b16 %v1086
      %v1215 = vunpack.c.l.b16 %v1087
      %v1216 = vunpack.c.l.b16 %v1088
      %v1217 = vunpack.c.l.b16 %v1089
      %v1218 = vunpack.c.l.b16 %v1090
      %v1219 = vunpack.c.l.b16 %v1091
      %v1220 = vunpack.c.l.b16 %v1092
      %v1221 = vunpack.c.l.b16 %v1093
      %v1222 = vunpack.c.l.b16 %v1094
      %v1223 = vunpack.c.l.b16 %v1095
      %v1224 = vunpack.c.l.b16 %v1096
      %v1225 = vunpack.c.l.b16 %v1097
      %v1226 = vunpack.c.l.b16 %v1098
      %v1227 = vunpack.c.l.b16 %v1099
      %v1228 = vunpack.c.l.b16 %v1100
      %v1229 = vunpack.c.l.b16 %v1101
      %v1230 = vunpack.c.l.b16 %v1102
      %v1231 = vunpack.c.l.b16 %v1103
      %v1232 = vunpack.c.l.b16 %v1104
      %v1233 = vunpack.c.l.b16 %v1105
      %v1234 = vunpack.c.l.b16 %v1106
      %v1235 = vunpack.c.l.b16 %v1107
      %v1236 = vunpack.c.l.b16 %v1108
      %v1237 = vunpack.c.l.b16 %v1109
      %v1238 = vunpack.c.l.b16 %v1110
      %v1239 = vunpack.c.l.b16 %v1111
      %v1240 = vunpack.c.l.b16 %v1112
      %v1241 = vunpack.c.l.b16 %v1113
      %v1242 = vunpack.c.l.b16 %v1114
      %v1243 = vunpack.c.l.b16 %v1115
      %v1244 = vunpack.c.l.b16 %v1116
      %v1245 = vunpack.c.l.b16 %v1117
      %v1246 = vunpack.c.l.b16 %v1118
      %v1247 = vunpack.c.l.b16 %v1119
      %v1248 = vunpack.c.l.b16 %v1120
      %v1249 = vunpack.c.l.b16 %v1121
      %v1250 = vunpack.c.l.b16 %v1122
      %v1251 = vunpack.c.l.b16 %v1123
      %v1252 = vunpack.c.l.b16 %v1124
      %v1253 = vunpack.c.l.b16 %v1125
      %v1254 = vunpack.c.l.b16 %v1126
      %v1255 = vunpack.c.l.b16 %v1127
      %v1256 = vunpack.c.l.b16 %v1128
      %v1257 = vunpack.c.l.b16 %v1129
      %v1258 = vunpack.c.l.b16 %v1130
      %v1259 = vunpack.c.l.b16 %v1131
      %v1260 = vunpack.c.l.b16 %v1132
      %v1261 = vunpack.c.l.b16 %v1133
      %v1262 = vunpack.c.l.b16 %v1134
      %v1263 = vunpack.c.l.b16 %v1135
      %v1264 = vunpack.c.l.b16 %v1136
      %v1265 = vunpack.c.l.b16 %v1137
      %v1266 = vunpack.c.l.b16 %v1138
      %v1267 = vunpack.c.l.b16 %v1139
      %v1268 = vunpack.c.l.b16 %v1140
      %v1269 = vpack.c.b16 %v1206, %v1205
      %v1270 = vpack.c.b16 %v1208, %v1207
      %v1271 = vpack.c.b16 %v1210, %v1209
      %v1272 = vpack.c.b16 %v1212, %v1211
      %v1273 = vpack.c.b16 %v1214, %v1213
      %v1274 = vpack.c.b16 %v1216, %v1215
      %v1275 = vpack.c.b16 %v1218, %v1217
      %v1276 = vpack.c.b16 %v1220, %v1219
      %v1277 = vpack.c.b16 %v1222, %v1221
      %v1278 = vpack.c.b16 %v1224, %v1223
      %v1279 = vpack.c.b16 %v1226, %v1225
      %v1280 = vpack.c.b16 %v1228, %v1227
      %v1281 = vpack.c.b16 %v1230, %v1229
      %v1282 = vpack.c.b16 %v1232, %v1231
      %v1283 = vpack.c.b16 %v1234, %v1233
      %v1284 = vpack.c.b16 %v1236, %v1235
      %v1285 = vpack.c.b16 %v1238, %v1237
      %v1286 = vpack.c.b16 %v1240, %v1239
      %v1287 = vpack.c.b16 %v1242, %v1241
      %v1288 = vpack.c.b16 %v1244, %v1243
      %v1289 = vpack.c.b16 %v1246, %v1245
      %v1290 = vpack.c.b16 %v1248, %v1247
      %v1291 = vpack.c.b16 %v1250, %v1249
      %v1292 = vpack.c.b16 %v1252, %v1251
      %v1293 = vpack.c.b16 %v1254, %v1253
      %v1294 = vpack.c.b16 %v1256, %v1255
      %v1295 = vpack.c.b16 %v1258, %v1257
      %v1296 = vpack.c.b16 %v1260, %v1259
      %v1297 = vpack.c.b16 %v1262, %v1261
      %v1298 = vpack.c.b16 %v1264, %v1263
      %v1299 = vpack.c.b16 %v1266, %v1265
      %v1300 = vpack.c.b16 %v1268, %v1267
      %1333 = vmatprep.subr.bf16.mxu0 0
      %1334 = vmatpush1.bf16.msra.mxu0 %v1276
      %1335 = vmatprep.subr.bf16.mxu0 0
      %1336 = vmatpush1.bf16.msra.mxu0 %v1275
      %1337 = vmatprep.subr.bf16.mxu0 0
      %1338 = vmatpush1.bf16.msra.mxu0 %v1274
      %1339 = vmatprep.subr.bf16.mxu0 0
      %1340 = vmatpush1.bf16.msra.mxu0 %v1273
      %1341 = vmatprep.subr.bf16.mxu0 0
      %1342 = vmatpush1.bf16.msra.mxu0 %v1272
      %1343 = vmatprep.subr.bf16.mxu0 0
      %1344 = vmatpush1.bf16.msra.mxu0 %v1271
      %1345 = vmatprep.subr.bf16.mxu0 0
      %1346 = vmatpush1.bf16.msra.mxu0 %v1270
      %1347 = vmatprep.subr.bf16.mxu0 0
      %1348 = vmatpush1.bf16.msra.mxu0 %v1269
      %1349 = vmatprep.subr.bf16.mxu0 0
      %1350 = vmatpush2.bf16.msra.mxu0 %v1284
      %1351 = vmatprep.subr.bf16.mxu0 0
      %1352 = vmatpush2.bf16.msra.mxu0 %v1283
      %1353 = vmatprep.subr.bf16.mxu0 0
      %1354 = vmatpush2.bf16.msra.mxu0 %v1282
      %1355 = vmatprep.subr.bf16.mxu0 0
      %1356 = vmatpush2.bf16.msra.mxu0 %v1281
      %1357 = vmatprep.subr.bf16.mxu0 0
      %1358 = vmatpush2.bf16.msra.mxu0 %v1280
      %1359 = vmatprep.subr.bf16.mxu0 0
      %1360 = vmatpush2.bf16.msra.mxu0 %v1279
      %1361 = vmatprep.subr.bf16.mxu0 0
      %1362 = vmatpush2.bf16.msra.mxu0 %v1278
      %1363 = vmatprep.subr.bf16.mxu0 0
      %1364 = vmatpush2.bf16.msra.mxu0 %v1277
      %1365 = vmatprep.mubr.bf16.mxu0 %v1073
      %1366 = vmatmul.mubr.bf16.gmra.mxu0 %v1072
      %v1367 = vpop.f32.mrf.mxu0
      %v1368 = vadd.f32 0.0, %v1367
      %v1369 = vpop.f32.mrf.mxu0
      %v1370 = vpop.f32.mrf.mxu0
      %v1371 = vpop.f32.mrf.mxu0
      %1372 = vdwg.mxu0
      %1373 = vmatprep.subr.bf16.mxu0 0
      %1374 = vmatpush1.bf16.msra.mxu0 %v1292
      %1375 = vmatprep.subr.bf16.mxu0 0
      %1376 = vmatpush1.bf16.msra.mxu0 %v1291
      %1377 = vmatprep.subr.bf16.mxu0 0
      %1378 = vmatpush1.bf16.msra.mxu0 %v1290
      %1379 = vmatprep.subr.bf16.mxu0 0
      %1380 = vmatpush1.bf16.msra.mxu0 %v1289
      %1381 = vmatprep.subr.bf16.mxu0 0
      %1382 = vmatpush1.bf16.msra.mxu0 %v1288
      %1383 = vmatprep.subr.bf16.mxu0 0
      %1384 = vmatpush1.bf16.msra.mxu0 %v1287
      %1385 = vmatprep.subr.bf16.mxu0 0
      %1386 = vmatpush1.bf16.msra.mxu0 %v1286
      %1387 = vmatprep.subr.bf16.mxu0 0
      %1388 = vmatpush1.bf16.msra.mxu0 %v1285
      %1389 = vmatprep.subr.bf16.mxu0 0
      %1390 = vmatpush2.bf16.msra.mxu0 %v1300
      %1391 = vmatprep.subr.bf16.mxu0 0
      %1392 = vmatpush2.bf16.msra.mxu0 %v1299
      %1393 = vmatprep.subr.bf16.mxu0 0
      %1394 = vmatpush2.bf16.msra.mxu0 %v1298
      %1395 = vmatprep.subr.bf16.mxu0 0
      %1396 = vmatpush2.bf16.msra.mxu0 %v1297
      %1397 = vmatprep.subr.bf16.mxu0 0
      %1398 = vmatpush2.bf16.msra.mxu0 %v1296
      %1399 = vmatprep.subr.bf16.mxu0 0
      %1400 = vmatpush2.bf16.msra.mxu0 %v1295
      %1401 = vmatprep.subr.bf16.mxu0 0
      %1402 = vmatpush2.bf16.msra.mxu0 %v1294
      %1403 = vmatprep.subr.bf16.mxu0 0
      %1404 = vmatpush2.bf16.msra.mxu0 %v1293
      %1405 = vmatprep.mubr.bf16.mxu0 %v1075
      %1406 = vmatmul.mubr.bf16.gmra.mxu0 %v1074
      %v1407 = vpop.f32.mrf.mxu0
      %v1408 = vadd.f32 %v1368, %v1407
      %v1409 = vpop.f32.mrf.mxu0
      %v1410 = vpop.f32.mrf.mxu0
      %v1411 = vpop.f32.mrf.mxu0
      %1412 = vdwg.mxu0
      %v1413 = vadd.f32 %v1076, %v1408
      %1414 = vst [vmem:[#allocation2] sm:$0xff] %v1413
      // Predicated region
      $region65: #{esm2_forward.12} parent=59 // pred_check
        %p1415 = pneg %p488
      $region66: #{esm2_forward.12} parent=59 // pred_check_branch
        %1417 = sbr.rel (%p1415) target = $region68
      $region67: #{esm2_forward.12} parent=59 // pred_region
        %v1418 = vld [vmem:[#allocation4] sm:$0xff]
        %v1419 = vld [vmem:[#allocation2] sm:$0xff]
        %v1420 = vadd.f32 %v1418, %v1419
        %v1421 = vld [vmem:[%s9] sm:$0x1]
        %v1423 = vlaneseq
        %v1424 = vshrl.u32 %v1423, 7
        %v1425 = vsub.s32 0, %v1424
        %v1426 = vrot.slane %v1421, %v1425
        %v1428 = vadd.f32 %v1420, %v1426
        %1429 = vst [vmem:[%s486] sm:$0xff] %v1428
      $region68: #{esm2_forward.12} parent=59 // pred_fallthru
        _
      %p1430 = scmp.lt.s32.totalorder %s26, 1
      %s1431 = scalar_select %p1430, %s26, 1
      %p1432 = scmp.lt.s32.totalorder %s27, 0
      %s1433 = scalar_select %p1432, %s27, 0
      %s1434 = sadd.s32 %s1433, %s1431
      %s1435 = smul.addr %s1434, 8
      %s1436 = scalar_lea.vmem %s10, %s1435
      // Predicated region
      $region69: #{esm2_forward.12} parent=59 // pred_check
        %p1437 = pneg %p299
      $region70: #{esm2_forward.12} parent=59 // pred_check_branch
        %1439 = sbr.rel (%p1437) target = $region72
      $region71: #{esm2_forward.12} parent=59 // pred_region
        _
      $region72: #{esm2_forward.12} parent=59 // pred_fallthru
        _
    $region60: #{esm2_forward.12} parent=5 // pred_fallthru
      _
    %p1440 = scmp.le.s32.totalorder 2, %s16
    // Predicated region
    $region73: #{esm2_forward.12} parent=5 // pred_check
      %p1441 = pneg %p1440
    $region74: #{esm2_forward.12} parent=5 // pred_check_branch
      %1443 = sbr.rel (%p1441) target = $region76
    $region75: #{esm2_forward.12} parent=5 // pred_region
      %s1444 = ssub.s32 %s16, 2
      // Predicated region
      $region77: #{esm2_forward.12} parent=75 // pred_check
        %p1445 = pneg %p305
      $region78: #{esm2_forward.12} parent=75 // pred_check_branch
        %1447 = sbr.rel (%p1445) target = $region80
      $region79: #{esm2_forward.12} parent=75 // pred_region
        %p1448 = scmp.lt.s32.totalorder %s29, 1
        %s1449 = scalar_select %p1448, %s29, 1
        %p1450 = scmp.lt.s32.totalorder %s30, 0
        %s1451 = scalar_select %p1450, %s30, 0
        %s1452 = sadd.s32 %s1451, %s1449
        %s1453 = smul.addr %s1452, 8
        %s1454 = scalar_lea.vmem %s10, %s1453
      $region80: #{esm2_forward.12} parent=75 // pred_fallthru
        _
    $region76: #{esm2_forward.12} parent=5 // pred_fallthru
      _
  $region6: #{esm2_forward.12} parent=0 // loop_footer
    %s20 = sadd.s32 1, %s16
  $region7: #{esm2_forward.12} parent=0 // loop_footer_branch
    %15 = sbr.rel target = $region3
  $region8: #{esm2_forward.12} parent=0 // loop_exit
    _

</llo_original>
